<compile_context>
chip_gen: v5e
topology: v5e:2x2
jax: 0.10.0
libtpu: 0.0.40
codegen_flags: <defaults>
</compile_context>

<pallas_src>
import functools

import jax
import jax.numpy as jnp
from jax import lax
from jax.experimental import pallas as pl
from jax.experimental.pallas import tpu as pltpu

LRELU_SLOPE = 0.2


def _round_up(x, m):
    return ((x + m - 1) // m) * m


def _vmem_capacity_bytes():
    # Conservative default (v7x per-TC VMEM) if the query is unavailable.
    try:
        info = pltpu.get_tpu_info()
        return int(getattr(info, "vmem_capacity_bytes", 64 * 2**20))
    except Exception:  # pragma: no cover - defensive
        return 64 * 2**20


_VMEM_CAP = _vmem_capacity_bytes()
if _VMEM_CAP >= 100 * 2**20:           # v5e / v6e: 128 MiB physical VMEM
    VMEM_LIMIT = min(64 * 2**20, _VMEM_CAP // 2)
    ROW_TILE_PREF = 1024               # proj / edge-reduce / globleConv row tiles
    MLP_TILE_PREF = 1024               # lane-dense N tile for the fused MLP
else:                                   # v7x: 64 MiB per TensorCore
    VMEM_LIMIT = min(32 * 2**20, _VMEM_CAP // 2)
    ROW_TILE_PREF = 512
    MLP_TILE_PREF = 512


def _lrelu(y):
    # max(y, 0.2*y) == LeakyReLU(0.2) for slope in (0,1): 2 VALU ops.
    return jnp.maximum(y, LRELU_SLOPE * y)


def _pick_tile(total, pref, quantum):
    """Largest tile <= pref that divides `total` and is a multiple of `quantum`;
    falls back to the full extent (always layout-legal).
    TODO(synk): for huge N with no quantum-aligned divisor, pad N instead of
    falling back to a full-extent block."""
    if total <= pref:
        return total
    t = (pref // quantum) * quantum
    while t >= quantum:
        if total % t == 0:
            return t
        t -= quantum
    return total


# --------------------------- Pallas kernels ---------------------------------

def _proj_kernel(x_ref, w_ref, pq_ref):
    """Fused EdgeConv per-point projection: [p | q] = x @ [Wa' | Wb'-Wa'].
    One wide MXU pass, lane-dense bf16 output."""
    pq_ref[...] = jnp.dot(x_ref[...], w_ref[...],
                          preferred_element_type=jnp.float32).astype(pq_ref.dtype)


def _edge_reduce_kernel(pn_ref, q_ref, b_ref, o_ref, *, k):
    """max over k gathered neighbor projections + center term + bias + LeakyReLU.
    pn_ref is (k, tn, Cout) bf16; the max is an unrolled chain of jnp.maximum
    over contiguous slabs (pure VPU, no reshape / XLU reduce).
    LeakyReLU is monotone, so max and activation commute per channel."""
    m = pn_ref[0]
    for kk in range(1, k):
        m = jnp.maximum(m, pn_ref[kk])
    y = m.astype(jnp.float32) + q_ref[...].astype(jnp.float32) + b_ref[...]
    o_ref[...] = _lrelu(y)


def _global_conv_kernel(x_ref, w_ref, b_ref, max_ref, mean_ref, *, inv_n):
    """globleConv on one N-tile, fused running max / mean over the point axis."""
    t = pl.program_id(1)
    y = jnp.dot(x_ref[...], w_ref[...], preferred_element_type=jnp.float32)
    y = _lrelu(y + b_ref[...])
    tmax = jnp.max(y, axis=0, keepdims=True)       # (1, 512)
    tmean = jnp.sum(y, axis=0, keepdims=True) * inv_n

    @pl.when(t == 0)
    def _():
        max_ref[...] = tmax
        mean_ref[...] = tmean

    @pl.when(t > 0)
    def _():
        max_ref[...] = jnp.maximum(max_ref[...], tmax)
        mean_ref[...] = mean_ref[...] + tmean


def _mlp_fused_kernel(local_ref, be_ref, w1_ref, w2_ref, b2_ref,
                      w3_ref, b3_ref, w4t_ref, b4_ref, o_ref):
    """wm1->wm2->wm3->wm4 fused per row tile; bias' carries the vmax/vmean part.
    Final dot contracts w4^T against h's channel axis so the (J, tn) block is
    produced directly (lane-dense, already transposed; no y.T in the epilogue)."""
    h = jnp.dot(local_ref[...], w1_ref[...], preferred_element_type=jnp.float32)
    h = _lrelu(h + be_ref[...])
    h = jnp.dot(h.astype(jnp.bfloat16), w2_ref[...],
                preferred_element_type=jnp.float32) + b2_ref[...]
    h = _lrelu(h)
    h = jnp.dot(h.astype(jnp.bfloat16), w3_ref[...],
                preferred_element_type=jnp.float32) + b3_ref[...]
    h = _lrelu(h)
    y = lax.dot_general(w4t_ref[...], h.astype(jnp.bfloat16),
                        dimension_numbers=(((1,), (1,)), ((), ())),
                        preferred_element_type=jnp.float32)      # (J, tn)
    o_ref[...] = y + b4_ref[...]


# --------------------------- kernel wrappers ---------------------------------

def edge_projection(x2d_bf16, w_pq):
    m, cin = x2d_bf16.shape
    cout2 = w_pq.shape[1]
    tm = _pick_tile(m, ROW_TILE_PREF, 8)
    return pl.pallas_call(
        _proj_kernel,
        out_shape=jax.ShapeDtypeStruct((m, cout2), jnp.bfloat16),
        grid=(m // tm,),
        in_specs=[
            pl.BlockSpec((tm, cin), lambda i: (i, 0)),
            pl.BlockSpec((cin, cout2), lambda i: (0, 0)),
        ],
        out_specs=pl.BlockSpec((tm, cout2), lambda i: (i, 0)),
        compiler_params=pltpu.CompilerParams(
            dimension_semantics=("parallel",),
            vmem_limit_bytes=VMEM_LIMIT),
    )(x2d_bf16, w_pq)


def edge_reduce(pn, q, bias, n, k):
    b = q.shape[0]
    cout = q.shape[-1]
    tn = _pick_tile(n, ROW_TILE_PREF, 8)
    kern = functools.partial(_edge_reduce_kernel, k=k)
    return pl.pallas_call(
        kern,
        out_shape=jax.ShapeDtypeStruct((b, n, cout), jnp.float32),
        grid=(b, n // tn),
        in_specs=[
            pl.BlockSpec((None, k, tn, cout), lambda i, t: (i, 0, t, 0)),
            pl.BlockSpec((None, tn, cout), lambda i, t: (i, t, 0)),
            pl.BlockSpec((1, cout), lambda i, t: (0, 0)),
        ],
        out_specs=pl.BlockSpec((None, tn, cout), lambda i, t: (i, t, 0)),
        compiler_params=pltpu.CompilerParams(
            dimension_semantics=("parallel", "parallel"),
            vmem_limit_bytes=VMEM_LIMIT),
    )(pn, q, bias.reshape(1, cout))


def global_conv_maxmean(local_bf, w, bias):
    b, n, cin = local_bf.shape
    cout = w.shape[1]
    tn = _pick_tile(n, ROW_TILE_PREF, 8)
    kern = functools.partial(_global_conv_kernel, inv_n=1.0 / n)
    return pl.pallas_call(
        kern,
        out_shape=(jax.ShapeDtypeStruct((b, 1, cout), jnp.float32),
                   jax.ShapeDtypeStruct((b, 1, cout), jnp.float32)),
        grid=(b, n // tn),
        in_specs=[
            pl.BlockSpec((None, tn, cin), lambda i, t: (i, t, 0)),
            pl.BlockSpec((cin, cout), lambda i, t: (0, 0)),
            pl.BlockSpec((1, cout), lambda i, t: (0, 0)),
        ],
        out_specs=(pl.BlockSpec((None, 1, cout), lambda i, t: (i, 0, 0)),
                   pl.BlockSpec((None, 1, cout), lambda i, t: (i, 0, 0))),
        compiler_params=pltpu.CompilerParams(
            dimension_semantics=("parallel", "arbitrary"),
            vmem_limit_bytes=VMEM_LIMIT),
    )(local_bf, w, bias.reshape(1, cout))


def fused_mlp(local_bf, bias_eff, w1_local, wm2, wm3, wm4):
    b, n, cin = local_bf.shape           # n is already a multiple of 128
    c1 = w1_local.shape[1]               # 1024
    c2 = wm2['w'].shape[1]               # 256
    c3 = wm3['w'].shape[1]               # 64
    j = wm4['w_t'].shape[0]              # jointNum
    tn = _pick_tile(n, MLP_TILE_PREF, 128)   # lane-dense output tile
    return pl.pallas_call(
        _mlp_fused_kernel,
        out_shape=jax.ShapeDtypeStruct((b, j, n), jnp.float32),
        grid=(b, n // tn),
        in_specs=[
            pl.BlockSpec((None, tn, cin), lambda i, t: (i, t, 0)),
            pl.BlockSpec((None, 1, c1), lambda i, t: (i, 0, 0)),
            pl.BlockSpec((cin, c1), lambda i, t: (0, 0)),
            pl.BlockSpec((c1, c2), lambda i, t: (0, 0)),
            pl.BlockSpec((1, c2), lambda i, t: (0, 0)),
            pl.BlockSpec((c2, c3), lambda i, t: (0, 0)),
            pl.BlockSpec((1, c3), lambda i, t: (0, 0)),
            pl.BlockSpec((j, c3), lambda i, t: (0, 0)),
            pl.BlockSpec((j, 1), lambda i, t: (0, 0)),
        ],
        out_specs=pl.BlockSpec((None, j, tn), lambda i, t: (i, 0, t)),
        compiler_params=pltpu.CompilerParams(
            dimension_semantics=("parallel", "parallel"),
            vmem_limit_bytes=VMEM_LIMIT),
    )(local_bf, bias_eff, w1_local,
      wm2['w'], wm2['bias'].reshape(1, c2),
      wm3['w'], wm3['bias'].reshape(1, c3),
      wm4['w_t'], wm4['bias'].reshape(j, 1))


# --------------------------- JAX glue ----------------------------------------

def knn_indices(feat, k):
    # feat: (B, N, C); same metric as DGCNN's knn (self is its own nearest nbr).
    # Computed in f32 to match the PyTorch reference neighbor selection.
    # TODO(synk): for large N, tile the distance matrix and keep a running
    # top-k (lax.top_k has no Pallas TPU primitive); full (B,N,N) done in XLA.
    inner = jnp.einsum('bnc,bmc->bnm', feat, feat,
                       preferred_element_type=jnp.float32)
    sq = jnp.sum(jnp.square(feat), axis=-1)
    neg_dist = 2.0 * inner - sq[:, :, None] - sq[:, None, :]
    _, idx = lax.top_k(neg_dist, k)
    return idx  # (B, N, k) int32


# --------------------------- parameters --------------------------------------

def init_params(key, joint_num, dgcnn_layers=(64, 128, 256)):
    def folded_bn(k_, cout):
        kg, kb, km, kv = jax.random.split(k_, 4)
        gamma = 1.0 + 0.1 * jax.random.normal(kg, (cout,), jnp.float32)
        beta = 0.1 * jax.random.normal(kb, (cout,), jnp.float32)
        rmean = 0.1 * jax.random.normal(km, (cout,), jnp.float32)
        rvar = 1.0 + 0.1 * jax.random.uniform(kv, (cout,), jnp.float32)
        scale = gamma / jnp.sqrt(rvar + 1e-5)      # folded eval-mode BN
        bias = beta - rmean * scale
        return scale, bias

    keys = jax.random.split(key, 8)
    params = {'edge': []}
    prev = 3
    for i, c in enumerate(dgcnn_layers):
        kw, kbn = jax.random.split(keys[i])
        w = 0.05 * jax.random.normal(kw, (2 * prev, c), jnp.float32)
        scale, bias = folded_bn(kbn, c)
        wf = w * scale[None, :]                    # BN scale folded into weight
        wa, wb = wf[:prev], wf[prev:]              # rows: [x_j - x_i | x_i]
        # (x_j - x_i)@Wa + x_i@Wb = x_j@Wa + x_i@(Wb - Wa); fused weight [p|q].
        w_pq = jnp.concatenate([wa, wb - wa], axis=1)       # (prev, 2c)
        params['edge'].append({'w_pq': w_pq.astype(jnp.bfloat16), 'bias': bias})
        prev = c

    sum_l = sum(dgcnn_layers)
    c_local = 3 + sum_l                            # 451
    c_pad = _round_up(c_local, 128)                # 512 (lane-aligned local)
    pad_rows = c_pad - c_local

    kw, kbn = jax.random.split(keys[3])
    w = 0.05 * jax.random.normal(kw, (c_local, 512), jnp.float32)
    scale, bias = folded_bn(kbn, 512)
    wg = jnp.pad(w * scale[None, :], ((0, pad_rows), (0, 0)))   # zero pad rows
    params['glob'] = {'w': wg.astype(jnp.bfloat16), 'bias': bias}

    # wm1: split rows into [VMax(512) | VMean(512) | local(451 -> pad 512)].
    kw, kbn = jax.random.split(keys[4])
    w = 0.05 * jax.random.normal(kw, (1024 + c_local, 1024), jnp.float32)
    scale, bias = folded_bn(kbn, 1024)
    wf = w * scale[None, :]
    params['wm1'] = {
        'w_vmax': wf[:512],                        # used in per-batch bias'
        'w_vmean': wf[512:1024],
        'w_local': jnp.pad(wf[1024:], ((0, pad_rows), (0, 0))
                           ).astype(jnp.bfloat16),  # used in the fused MLP
        'bias': bias,
    }

    def conv_bn(k_, cin, cout):
        kw_, kbn_ = jax.random.split(k_)
        w_ = 0.05 * jax.random.normal(kw_, (cin, cout), jnp.float32)
        scale_, bias_ = folded_bn(kbn_, cout)
        return {'w': (w_ * scale_[None, :]).astype(jnp.bfloat16), 'bias': bias_}

    params['wm2'] = conv_bn(keys[5], 1024, 256)
    params['wm3'] = conv_bn(keys[6], 256, 64)
    kw, kb = jax.random.split(keys[7])
    w4 = 0.05 * jax.random.normal(kw, (64, joint_num), jnp.float32)
    params['wm4'] = {
        'w_t': w4.T.astype(jnp.bfloat16),          # (J, 64) — already transposed
        'bias': 0.05 * jax.random.normal(kb, (joint_num,), jnp.float32),
    }
    return params


# --------------------------- forward pass ------------------------------------

def weight_binding_net_forward(params, V, k=8):
    """V: (B, N, 3) points; returns attention (B, jointNum, N) like PyTorch."""
    b, n, _ = V.shape
    x = V.astype(jnp.float32)

    # geoNet (DGCNN): 3 EdgeConv blocks via the linearity rewrite.
    feats = [x]
    for lp in params['edge']:
        idx = knn_indices(x, k)                               # (B, N, k)
        cout = lp['bias'].shape[0]
        xb = x.astype(jnp.bfloat16).reshape(b * n, -1)
        pq = edge_projection(xb, lp['w_pq'])                  # (B*N, 2*Cout) bf16
        pq = pq.reshape(b, n, 2 * cout)
        p = pq[:, :, :cout]                                   # neighbor term, bf16
        q = pq[:, :, cout:]                                   # center term, bf16
        # TODO(synk): neighbor gather stays in XLA (no Pallas TPU gather
        # primitive); gather in (B, k, N, Cout) layout, bf16 (half the traffic).
        idx_t = jnp.transpose(idx, (0, 2, 1))                 # (B, k, N)
        pn = jax.vmap(lambda pb, ib: pb[ib])(p, idx_t)        # (B, k, N, Cout)
        x = edge_reduce(pn, q, lp['bias'], n, k)              # (B, N, Cout) f32
        feats.append(x)

    # Concatenate directly in bf16 and zero-pad channels 451 -> 512 so both
    # consumers read lane-aligned (tn, 512) blocks.
    c_local = sum(f.shape[-1] for f in feats)                 # 451
    c_pad = params['glob']['w'].shape[0]                      # 512
    feats_bf = [f.astype(jnp.bfloat16) for f in feats]
    if c_pad > c_local:
        feats_bf.append(jnp.zeros((b, n, c_pad - c_local), jnp.bfloat16))
    local_bf = jnp.concatenate(feats_bf, axis=-1)             # (B, N, 512)

    # globleConv + global max / mean over points (fused, tiled, accumulated).
    gp = params['glob']
    vmax, vmean = global_conv_maxmean(local_bf, gp['w'], gp['bias'])  # (B,1,512)

    # Fold the per-batch-constant VMax/VMean contribution of wm1 into a bias.
    w1 = params['wm1']
    bias_eff = (vmax[:, 0, :] @ w1['w_vmax']
                + vmean[:, 0, :] @ w1['w_vmean']
                + w1['bias'][None, :])                        # (B, 1024)
    bias_eff = bias_eff[:, None, :]                           # (B, 1, 1024)

    # Pad the point axis to a multiple of 128 so the lane-dense transposed
    # output tiles of the fused MLP never need a full-extent fallback.
    n_mlp = _round_up(n, 128)
    local_mlp = local_bf if n_mlp == n else jnp.pad(
        local_bf, ((0, 0), (0, n_mlp - n), (0, 0)))

    # Fused wm1..wm4 over row tiles; output already (B, jointNum, n_mlp).
    attention = fused_mlp(local_mlp, bias_eff, w1['w_local'],
                          params['wm2'], params['wm3'], params['wm4'])
    return attention[:, :, :n]


# --------------------------- main ---------------------------------------------

if __name__ == "__main__":
    key = jax.random.PRNGKey(0)
    k_params, k_pts = jax.random.split(key)

    B, N, K_NBRS = 2, 64, 8
    JOINT_NUM = 16

    params = init_params(k_params, JOINT_NUM)
    V = jax.random.normal(k_pts, (B, N, 3), jnp.float32)

    fwd = jax.jit(functools.partial(weight_binding_net_forward, k=K_NBRS))
    attention = jax.block_until_ready(fwd(params, V))

    assert attention.shape == (B, JOINT_NUM, N), attention.shape
    assert bool(jnp.all(jnp.isfinite(attention)))
    print("KERNEL_OK")
</pallas_src>

<mosaic_0001>
module attributes {stable_mosaic.version = 11 : i64} {
  func.func @_proj_kernel(%arg0: i32, %arg1: memref<128x3xbf16, #tpu.memory_space<vmem>>, %arg2: memref<3x128xbf16, #tpu.memory_space<vmem>>, %arg3: memref<128x128xbf16, #tpu.memory_space<vmem>>) attributes {dimension_semantics = [#tpu.dimension_semantics<parallel>], iteration_bounds = array<i64: 1>, scalar_prefetch = 0 : i64, scratch_operands = 0 : i64, tpu.core_type = #tpu.core_type<tc>, window_params = [{transform_indices = @transform_0, window_bounds = array<i64: 128, 3>}, {pipeline_mode = #tpu.pipeline_mode<synchronous>, transform_indices = @transform_1, window_bounds = array<i64: 3, 128>}, {transform_indices = @transform_2, window_bounds = array<i64: 128, 128>}]} {
    %c0 = arith.constant 0 : index
    %c0_0 = arith.constant 0 : index
    %0 = vector.load %arg1[%c0, %c0_0] : memref<128x3xbf16, #tpu.memory_space<vmem>>, vector<128x3xbf16>
    %c0_1 = arith.constant 0 : index
    %c0_2 = arith.constant 0 : index
    %1 = vector.load %arg2[%c0_1, %c0_2] : memref<3x128xbf16, #tpu.memory_space<vmem>>, vector<3x128xbf16>
    %cst = arith.constant dense<0.000000e+00> : vector<128x128xf32>
    %2 = tpu.matmul %0, %1, %cst {dimension_numbers = #tpu.dot_dimension_numbers<[1], [0], [0], [1], [0, 0, 1, 1], [], []>} : vector<128x3xbf16>, vector<3x128xbf16>, vector<128x128xf32> -> vector<128x128xf32>
    %3 = arith.truncf %2 : vector<128x128xf32> to vector<128x128xbf16>
    %c0_3 = arith.constant 0 : index
    %c0_4 = arith.constant 0 : index
    %4 = vector.load %arg3[%c0_3, %c0_4] : memref<128x128xbf16, #tpu.memory_space<vmem>>, vector<128x128xbf16>
    tpu.vector_store %arg3[%c0_3, %c0_4], %3 {strides = array<i32>} : memref<128x128xbf16, #tpu.memory_space<vmem>>, vector<128x128xbf16>,
    return
  }
  func.func @transform_0(%arg0: i32) -> (i32, i32) {
    %c0_i32 = arith.constant 0 : i32
    %c0_i32_0 = arith.constant 0 : i32
    return %arg0, %c0_i32 : i32, i32
  }
  func.func @transform_1(%arg0: i32) -> (i32, i32) {
    %c0_i32 = arith.constant 0 : i32
    %c0_i32_0 = arith.constant 0 : i32
    %c0_i32_1 = arith.constant 0 : i32
    return %c0_i32, %c0_i32_0 : i32, i32
  }
  func.func @transform_2(%arg0: i32) -> (i32, i32) {
    %c0_i32 = arith.constant 0 : i32
    %c0_i32_0 = arith.constant 0 : i32
    return %arg0, %c0_i32 : i32, i32
  }
}

module attributes {stable_mosaic.version = 11 : i64} {
  func.func @_edge_reduce_kernel(%arg0: i32, %arg1: i32, %arg2: memref<1x8x64x64xbf16, #tpu.memory_space<vmem>>, %arg3: memref<1x64x64xbf16, #tpu.memory_space<vmem>>, %arg4: memref<1x64xf32, #tpu.memory_space<vmem>>, %arg5: memref<1x64x64xf32, #tpu.memory_space<vmem>>) attributes {dimension_semantics = [#tpu.dimension_semantics<parallel>, #tpu.dimension_semantics<parallel>], iteration_bounds = array<i64: 2, 1>, scalar_prefetch = 0 : i64, scratch_operands = 0 : i64, tpu.core_type = #tpu.core_type<tc>, window_params = [{transform_indices = @transform_0, window_bounds = array<i64: 1, 8, 64, 64>}, {transform_indices = @transform_1, window_bounds = array<i64: 1, 64, 64>}, {pipeline_mode = #tpu.pipeline_mode<synchronous>, transform_indices = @transform_2, window_bounds = array<i64: 1, 64>}, {transform_indices = @transform_3, window_bounds = array<i64: 1, 64, 64>}]} {
    %c0 = arith.constant 0 : index
    %c0_0 = arith.constant 0 : index
    %c0_1 = arith.constant 0 : index
    %c0_2 = arith.constant 0 : index
    %0 = vector.load %arg2[%c0, %c0_0, %c0_1, %c0_2] : memref<1x8x64x64xbf16, #tpu.memory_space<vmem>>, vector<1x1x64x64xbf16>
    %1 = vector.shape_cast %0 : vector<1x1x64x64xbf16> to vector<64x64xbf16>
    %c0_3 = arith.constant 0 : index
    %c1 = arith.constant 1 : index
    %c0_4 = arith.constant 0 : index
    %c0_5 = arith.constant 0 : index
    %2 = vector.load %arg2[%c0_3, %c1, %c0_4, %c0_5] : memref<1x8x64x64xbf16, #tpu.memory_space<vmem>>, vector<1x1x64x64xbf16>
    %3 = vector.shape_cast %2 : vector<1x1x64x64xbf16> to vector<64x64xbf16>
    %4 = arith.maximumf %1, %3 : vector<64x64xbf16>
    %c0_6 = arith.constant 0 : index
    %c2 = arith.constant 2 : index
    %c0_7 = arith.constant 0 : index
    %c0_8 = arith.constant 0 : index
    %5 = vector.load %arg2[%c0_6, %c2, %c0_7, %c0_8] : memref<1x8x64x64xbf16, #tpu.memory_space<vmem>>, vector<1x1x64x64xbf16>
    %6 = vector.shape_cast %5 : vector<1x1x64x64xbf16> to vector<64x64xbf16>
    %7 = arith.maximumf %4, %6 : vector<64x64xbf16>
    %c0_9 = arith.constant 0 : index
    %c3 = arith.constant 3 : index
    %c0_10 = arith.constant 0 : index
    %c0_11 = arith.constant 0 : index
    %8 = vector.load %arg2[%c0_9, %c3, %c0_10, %c0_11] : memref<1x8x64x64xbf16, #tpu.memory_space<vmem>>, vector<1x1x64x64xbf16>
    %9 = vector.shape_cast %8 : vector<1x1x64x64xbf16> to vector<64x64xbf16>
    %10 = arith.maximumf %7, %9 : vector<64x64xbf16>
    %c0_12 = arith.constant 0 : index
    %c4 = arith.constant 4 : index
    %c0_13 = arith.constant 0 : index
    %c0_14 = arith.constant 0 : index
    %11 = vector.load %arg2[%c0_12, %c4, %c0_13, %c0_14] : memref<1x8x64x64xbf16, #tpu.memory_space<vmem>>, vector<1x1x64x64xbf16>
    %12 = vector.shape_cast %11 : vector<1x1x64x64xbf16> to vector<64x64xbf16>
    %13 = arith.maximumf %10, %12 : vector<64x64xbf16>
    %c0_15 = arith.constant 0 : index
    %c5 = arith.constant 5 : index
    %c0_16 = arith.constant 0 : index
    %c0_17 = arith.constant 0 : index
    %14 = vector.load %arg2[%c0_15, %c5, %c0_16, %c0_17] : memref<1x8x64x64xbf16, #tpu.memory_space<vmem>>, vector<1x1x64x64xbf16>
    %15 = vector.shape_cast %14 : vector<1x1x64x64xbf16> to vector<64x64xbf16>
    %16 = arith.maximumf %13, %15 : vector<64x64xbf16>
    %c0_18 = arith.constant 0 : index
    %c6 = arith.constant 6 : index
    %c0_19 = arith.constant 0 : index
    %c0_20 = arith.constant 0 : index
    %17 = vector.load %arg2[%c0_18, %c6, %c0_19, %c0_20] : memref<1x8x64x64xbf16, #tpu.memory_space<vmem>>, vector<1x1x64x64xbf16>
    %18 = vector.shape_cast %17 : vector<1x1x64x64xbf16> to vector<64x64xbf16>
    %19 = arith.maximumf %16, %18 : vector<64x64xbf16>
    %c0_21 = arith.constant 0 : index
    %c7 = arith.constant 7 : index
    %c0_22 = arith.constant 0 : index
    %c0_23 = arith.constant 0 : index
    %20 = vector.load %arg2[%c0_21, %c7, %c0_22, %c0_23] : memref<1x8x64x64xbf16, #tpu.memory_space<vmem>>, vector<1x1x64x64xbf16>
    %21 = vector.shape_cast %20 : vector<1x1x64x64xbf16> to vector<64x64xbf16>
    %22 = arith.maximumf %19, %21 : vector<64x64xbf16>
    %23 = arith.extf %22 : vector<64x64xbf16> to vector<64x64xf32>
    %c0_24 = arith.constant 0 : index
    %c0_25 = arith.constant 0 : index
    %c0_26 = arith.constant 0 : index
    %24 = vector.load %arg3[%c0_24, %c0_25, %c0_26] : memref<1x64x64xbf16, #tpu.memory_space<vmem>>, vector<1x64x64xbf16>
    %25 = vector.shape_cast %24 : vector<1x64x64xbf16> to vector<64x64xbf16>
    %26 = arith.extf %25 : vector<64x64xbf16> to vector<64x64xf32>
    %27 = arith.addf %23, %26 : vector<64x64xf32>
    %c0_27 = arith.constant 0 : index
    %c0_28 = arith.constant 0 : index
    %28 = vector.load %arg4[%c0_27, %c0_28] : memref<1x64xf32, #tpu.memory_space<vmem>>, vector<1x64xf32>
    %29 = vector.broadcast %28 : vector<1x64xf32> to vector<64x64xf32>
    %30 = arith.addf %27, %29 : vector<64x64xf32>
    %cst = arith.constant 2.000000e-01 : f32
    %31 = vector.broadcast %cst : f32 to vector<64x64xf32>
    %32 = arith.mulf %31, %30 : vector<64x64xf32>
    %33 = arith.maximumf %30, %32 : vector<64x64xf32>
    %c0_29 = arith.constant 0 : index
    %c0_30 = arith.constant 0 : index
    %c0_31 = arith.constant 0 : index
    %34 = vector.load %arg5[%c0_29, %c0_30, %c0_31] : memref<1x64x64xf32, #tpu.memory_space<vmem>>, vector<1x64x64xf32>
    %35 = vector.shape_cast %34 : vector<1x64x64xf32> to vector<64x64xf32>
    %36 = vector.shape_cast %33 : vector<64x64xf32> to vector<1x64x64xf32>
    tpu.vector_store %arg5[%c0_29, %c0_30, %c0_31], %36 {strides = array<i32>} : memref<1x64x64xf32, #tpu.memory_space<vmem>>, vector<1x64x64xf32>,
    return
  }
  func.func @transform_0(%arg0: i32, %arg1: i32) -> (i32, i32, i32, i32) {
    %c0_i32 = arith.constant 0 : i32
    %c0_i32_0 = arith.constant 0 : i32
    %c0_i32_1 = arith.constant 0 : i32
    return %arg0, %c0_i32, %arg1, %c0_i32_0 : i32, i32, i32, i32
  }
  func.func @transform_1(%arg0: i32, %arg1: i32) -> (i32, i32, i32) {
    %c0_i32 = arith.constant 0 : i32
    %c0_i32_0 = arith.constant 0 : i32
    return %arg0, %arg1, %c0_i32 : i32, i32, i32
  }
  func.func @transform_2(%arg0: i32, %arg1: i32) -> (i32, i32) {
    %c0_i32 = arith.constant 0 : i32
    %c0_i32_0 = arith.constant 0 : i32
    %c0_i32_1 = arith.constant 0 : i32
    return %c0_i32, %c0_i32_0 : i32, i32
  }
  func.func @transform_3(%arg0: i32, %arg1: i32) -> (i32, i32, i32) {
    %c0_i32 = arith.constant 0 : i32
    %c0_i32_0 = arith.constant 0 : i32
    return %arg0, %arg1, %c0_i32 : i32, i32, i32
  }
}

module attributes {stable_mosaic.version = 11 : i64} {
  func.func @_proj_kernel(%arg0: i32, %arg1: memref<128x64xbf16, #tpu.memory_space<vmem>>, %arg2: memref<64x256xbf16, #tpu.memory_space<vmem>>, %arg3: memref<128x256xbf16, #tpu.memory_space<vmem>>) attributes {dimension_semantics = [#tpu.dimension_semantics<parallel>], iteration_bounds = array<i64: 1>, scalar_prefetch = 0 : i64, scratch_operands = 0 : i64, tpu.core_type = #tpu.core_type<tc>, window_params = [{transform_indices = @transform_0, window_bounds = array<i64: 128, 64>}, {pipeline_mode = #tpu.pipeline_mode<synchronous>, transform_indices = @transform_1, window_bounds = array<i64: 64, 256>}, {transform_indices = @transform_2, window_bounds = array<i64: 128, 256>}]} {
    %c0 = arith.constant 0 : index
    %c0_0 = arith.constant 0 : index
    %0 = vector.load %arg1[%c0, %c0_0] : memref<128x64xbf16, #tpu.memory_space<vmem>>, vector<128x64xbf16>
    %c0_1 = arith.constant 0 : index
    %c0_2 = arith.constant 0 : index
    %1 = vector.load %arg2[%c0_1, %c0_2] : memref<64x256xbf16, #tpu.memory_space<vmem>>, vector<64x256xbf16>
    %cst = arith.constant dense<0.000000e+00> : vector<128x256xf32>
    %2 = tpu.matmul %0, %1, %cst {dimension_numbers = #tpu.dot_dimension_numbers<[1], [0], [0], [1], [0, 0, 1, 1], [], []>} : vector<128x64xbf16>, vector<64x256xbf16>, vector<128x256xf32> -> vector<128x256xf32>
    %3 = arith.truncf %2 : vector<128x256xf32> to vector<128x256xbf16>
    %c0_3 = arith.constant 0 : index
    %c0_4 = arith.constant 0 : index
    %4 = vector.load %arg3[%c0_3, %c0_4] : memref<128x256xbf16, #tpu.memory_space<vmem>>, vector<128x256xbf16>
    tpu.vector_store %arg3[%c0_3, %c0_4], %3 {strides = array<i32>} : memref<128x256xbf16, #tpu.memory_space<vmem>>, vector<128x256xbf16>,
    return
  }
  func.func @transform_0(%arg0: i32) -> (i32, i32) {
    %c0_i32 = arith.constant 0 : i32
    %c0_i32_0 = arith.constant 0 : i32
    return %arg0, %c0_i32 : i32, i32
  }
  func.func @transform_1(%arg0: i32) -> (i32, i32) {
    %c0_i32 = arith.constant 0 : i32
    %c0_i32_0 = arith.constant 0 : i32
    %c0_i32_1 = arith.constant 0 : i32
    return %c0_i32, %c0_i32_0 : i32, i32
  }
  func.func @transform_2(%arg0: i32) -> (i32, i32) {
    %c0_i32 = arith.constant 0 : i32
    %c0_i32_0 = arith.constant 0 : i32
    return %arg0, %c0_i32 : i32, i32
  }
}

module attributes {stable_mosaic.version = 11 : i64} {
  func.func @_edge_reduce_kernel(%arg0: i32, %arg1: i32, %arg2: memref<1x8x64x128xbf16, #tpu.memory_space<vmem>>, %arg3: memref<1x64x128xbf16, #tpu.memory_space<vmem>>, %arg4: memref<1x128xf32, #tpu.memory_space<vmem>>, %arg5: memref<1x64x128xf32, #tpu.memory_space<vmem>>) attributes {dimension_semantics = [#tpu.dimension_semantics<parallel>, #tpu.dimension_semantics<parallel>], iteration_bounds = array<i64: 2, 1>, scalar_prefetch = 0 : i64, scratch_operands = 0 : i64, tpu.core_type = #tpu.core_type<tc>, window_params = [{transform_indices = @transform_0, window_bounds = array<i64: 1, 8, 64, 128>}, {transform_indices = @transform_1, window_bounds = array<i64: 1, 64, 128>}, {pipeline_mode = #tpu.pipeline_mode<synchronous>, transform_indices = @transform_2, window_bounds = array<i64: 1, 128>}, {transform_indices = @transform_3, window_bounds = array<i64: 1, 64, 128>}]} {
    %c0 = arith.constant 0 : index
    %c0_0 = arith.constant 0 : index
    %c0_1 = arith.constant 0 : index
    %c0_2 = arith.constant 0 : index
    %0 = vector.load %arg2[%c0, %c0_0, %c0_1, %c0_2] : memref<1x8x64x128xbf16, #tpu.memory_space<vmem>>, vector<1x1x64x128xbf16>
    %1 = vector.shape_cast %0 : vector<1x1x64x128xbf16> to vector<64x128xbf16>
    %c0_3 = arith.constant 0 : index
    %c1 = arith.constant 1 : index
    %c0_4 = arith.constant 0 : index
    %c0_5 = arith.constant 0 : index
    %2 = vector.load %arg2[%c0_3, %c1, %c0_4, %c0_5] : memref<1x8x64x128xbf16, #tpu.memory_space<vmem>>, vector<1x1x64x128xbf16>
    %3 = vector.shape_cast %2 : vector<1x1x64x128xbf16> to vector<64x128xbf16>
    %4 = arith.maximumf %1, %3 : vector<64x128xbf16>
    %c0_6 = arith.constant 0 : index
    %c2 = arith.constant 2 : index
    %c0_7 = arith.constant 0 : index
    %c0_8 = arith.constant 0 : index
    %5 = vector.load %arg2[%c0_6, %c2, %c0_7, %c0_8] : memref<1x8x64x128xbf16, #tpu.memory_space<vmem>>, vector<1x1x64x128xbf16>
    %6 = vector.shape_cast %5 : vector<1x1x64x128xbf16> to vector<64x128xbf16>
    %7 = arith.maximumf %4, %6 : vector<64x128xbf16>
    %c0_9 = arith.constant 0 : index
    %c3 = arith.constant 3 : index
    %c0_10 = arith.constant 0 : index
    %c0_11 = arith.constant 0 : index
    %8 = vector.load %arg2[%c0_9, %c3, %c0_10, %c0_11] : memref<1x8x64x128xbf16, #tpu.memory_space<vmem>>, vector<1x1x64x128xbf16>
    %9 = vector.shape_cast %8 : vector<1x1x64x128xbf16> to vector<64x128xbf16>
    %10 = arith.maximumf %7, %9 : vector<64x128xbf16>
    %c0_12 = arith.constant 0 : index
    %c4 = arith.constant 4 : index
    %c0_13 = arith.constant 0 : index
    %c0_14 = arith.constant 0 : index
    %11 = vector.load %arg2[%c0_12, %c4, %c0_13, %c0_14] : memref<1x8x64x128xbf16, #tpu.memory_space<vmem>>, vector<1x1x64x128xbf16>
    %12 = vector.shape_cast %11 : vector<1x1x64x128xbf16> to vector<64x128xbf16>
    %13 = arith.maximumf %10, %12 : vector<64x128xbf16>
    %c0_15 = arith.constant 0 : index
    %c5 = arith.constant 5 : index
    %c0_16 = arith.constant 0 : index
    %c0_17 = arith.constant 0 : index
    %14 = vector.load %arg2[%c0_15, %c5, %c0_16, %c0_17] : memref<1x8x64x128xbf16, #tpu.memory_space<vmem>>, vector<1x1x64x128xbf16>
    %15 = vector.shape_cast %14 : vector<1x1x64x128xbf16> to vector<64x128xbf16>
    %16 = arith.maximumf %13, %15 : vector<64x128xbf16>
    %c0_18 = arith.constant 0 : index
    %c6 = arith.constant 6 : index
    %c0_19 = arith.constant 0 : index
    %c0_20 = arith.constant 0 : index
    %17 = vector.load %arg2[%c0_18, %c6, %c0_19, %c0_20] : memref<1x8x64x128xbf16, #tpu.memory_space<vmem>>, vector<1x1x64x128xbf16>
    %18 = vector.shape_cast %17 : vector<1x1x64x128xbf16> to vector<64x128xbf16>
    %19 = arith.maximumf %16, %18 : vector<64x128xbf16>
    %c0_21 = arith.constant 0 : index
    %c7 = arith.constant 7 : index
    %c0_22 = arith.constant 0 : index
    %c0_23 = arith.constant 0 : index
    %20 = vector.load %arg2[%c0_21, %c7, %c0_22, %c0_23] : memref<1x8x64x128xbf16, #tpu.memory_space<vmem>>, vector<1x1x64x128xbf16>
    %21 = vector.shape_cast %20 : vector<1x1x64x128xbf16> to vector<64x128xbf16>
    %22 = arith.maximumf %19, %21 : vector<64x128xbf16>
    %23 = arith.extf %22 : vector<64x128xbf16> to vector<64x128xf32>
    %c0_24 = arith.constant 0 : index
    %c0_25 = arith.constant 0 : index
    %c0_26 = arith.constant 0 : index
    %24 = vector.load %arg3[%c0_24, %c0_25, %c0_26] : memref<1x64x128xbf16, #tpu.memory_space<vmem>>, vector<1x64x128xbf16>
    %25 = vector.shape_cast %24 : vector<1x64x128xbf16> to vector<64x128xbf16>
    %26 = arith.extf %25 : vector<64x128xbf16> to vector<64x128xf32>
    %27 = arith.addf %23, %26 : vector<64x128xf32>
    %c0_27 = arith.constant 0 : index
    %c0_28 = arith.constant 0 : index
    %28 = vector.load %arg4[%c0_27, %c0_28] : memref<1x128xf32, #tpu.memory_space<vmem>>, vector<1x128xf32>
    %29 = vector.broadcast %28 : vector<1x128xf32> to vector<64x128xf32>
    %30 = arith.addf %27, %29 : vector<64x128xf32>
    %cst = arith.constant 2.000000e-01 : f32
    %31 = vector.broadcast %cst : f32 to vector<64x128xf32>
    %32 = arith.mulf %31, %30 : vector<64x128xf32>
    %33 = arith.maximumf %30, %32 : vector<64x128xf32>
    %c0_29 = arith.constant 0 : index
    %c0_30 = arith.constant 0 : index
    %c0_31 = arith.constant 0 : index
    %34 = vector.load %arg5[%c0_29, %c0_30, %c0_31] : memref<1x64x128xf32, #tpu.memory_space<vmem>>, vector<1x64x128xf32>
    %35 = vector.shape_cast %34 : vector<1x64x128xf32> to vector<64x128xf32>
    %36 = vector.shape_cast %33 : vector<64x128xf32> to vector<1x64x128xf32>
    tpu.vector_store %arg5[%c0_29, %c0_30, %c0_31], %36 {strides = array<i32>} : memref<1x64x128xf32, #tpu.memory_space<vmem>>, vector<1x64x128xf32>,
    return
  }
  func.func @transform_0(%arg0: i32, %arg1: i32) -> (i32, i32, i32, i32) {
    %c0_i32 = arith.constant 0 : i32
    %c0_i32_0 = arith.constant 0 : i32
    %c0_i32_1 = arith.constant 0 : i32
    return %arg0, %c0_i32, %arg1, %c0_i32_0 : i32, i32, i32, i32
  }
  func.func @transform_1(%arg0: i32, %arg1: i32) -> (i32, i32, i32) {
    %c0_i32 = arith.constant 0 : i32
    %c0_i32_0 = arith.constant 0 : i32
    return %arg0, %arg1, %c0_i32 : i32, i32, i32
  }
  func.func @transform_2(%arg0: i32, %arg1: i32) -> (i32, i32) {
    %c0_i32 = arith.constant 0 : i32
    %c0_i32_0 = arith.constant 0 : i32
    %c0_i32_1 = arith.constant 0 : i32
    return %c0_i32, %c0_i32_0 : i32, i32
  }
  func.func @transform_3(%arg0: i32, %arg1: i32) -> (i32, i32, i32) {
    %c0_i32 = arith.constant 0 : i32
    %c0_i32_0 = arith.constant 0 : i32
    return %arg0, %arg1, %c0_i32 : i32, i32, i32
  }
}

module attributes {stable_mosaic.version = 11 : i64} {
  func.func @_proj_kernel(%arg0: i32, %arg1: memref<128x128xbf16, #tpu.memory_space<vmem>>, %arg2: memref<128x512xbf16, #tpu.memory_space<vmem>>, %arg3: memref<128x512xbf16, #tpu.memory_space<vmem>>) attributes {dimension_semantics = [#tpu.dimension_semantics<parallel>], iteration_bounds = array<i64: 1>, scalar_prefetch = 0 : i64, scratch_operands = 0 : i64, tpu.core_type = #tpu.core_type<tc>, window_params = [{transform_indices = @transform_0, window_bounds = array<i64: 128, 128>}, {pipeline_mode = #tpu.pipeline_mode<synchronous>, transform_indices = @transform_1, window_bounds = array<i64: 128, 512>}, {transform_indices = @transform_2, window_bounds = array<i64: 128, 512>}]} {
    %c0 = arith.constant 0 : index
    %c0_0 = arith.constant 0 : index
    %0 = vector.load %arg1[%c0, %c0_0] : memref<128x128xbf16, #tpu.memory_space<vmem>>, vector<128x128xbf16>
    %c0_1 = arith.constant 0 : index
    %c0_2 = arith.constant 0 : index
    %1 = vector.load %arg2[%c0_1, %c0_2] : memref<128x512xbf16, #tpu.memory_space<vmem>>, vector<128x512xbf16>
    %cst = arith.constant dense<0.000000e+00> : vector<128x512xf32>
    %2 = tpu.matmul %0, %1, %cst {dimension_numbers = #tpu.dot_dimension_numbers<[1], [0], [0], [1], [0, 0, 1, 1], [], []>} : vector<128x128xbf16>, vector<128x512xbf16>, vector<128x512xf32> -> vector<128x512xf32>
    %3 = arith.truncf %2 : vector<128x512xf32> to vector<128x512xbf16>
    %c0_3 = arith.constant 0 : index
    %c0_4 = arith.constant 0 : index
    %4 = vector.load %arg3[%c0_3, %c0_4] : memref<128x512xbf16, #tpu.memory_space<vmem>>, vector<128x512xbf16>
    tpu.vector_store %arg3[%c0_3, %c0_4], %3 {strides = array<i32>} : memref<128x512xbf16, #tpu.memory_space<vmem>>, vector<128x512xbf16>,
    return
  }
  func.func @transform_0(%arg0: i32) -> (i32, i32) {
    %c0_i32 = arith.constant 0 : i32
    %c0_i32_0 = arith.constant 0 : i32
    return %arg0, %c0_i32 : i32, i32
  }
  func.func @transform_1(%arg0: i32) -> (i32, i32) {
    %c0_i32 = arith.constant 0 : i32
    %c0_i32_0 = arith.constant 0 : i32
    %c0_i32_1 = arith.constant 0 : i32
    return %c0_i32, %c0_i32_0 : i32, i32
  }
  func.func @transform_2(%arg0: i32) -> (i32, i32) {
    %c0_i32 = arith.constant 0 : i32
    %c0_i32_0 = arith.constant 0 : i32
    return %arg0, %c0_i32 : i32, i32
  }
}

module attributes {stable_mosaic.version = 11 : i64} {
  func.func @_edge_reduce_kernel(%arg0: i32, %arg1: i32, %arg2: memref<1x8x64x256xbf16, #tpu.memory_space<vmem>>, %arg3: memref<1x64x256xbf16, #tpu.memory_space<vmem>>, %arg4: memref<1x256xf32, #tpu.memory_space<vmem>>, %arg5: memref<1x64x256xf32, #tpu.memory_space<vmem>>) attributes {dimension_semantics = [#tpu.dimension_semantics<parallel>, #tpu.dimension_semantics<parallel>], iteration_bounds = array<i64: 2, 1>, scalar_prefetch = 0 : i64, scratch_operands = 0 : i64, tpu.core_type = #tpu.core_type<tc>, window_params = [{transform_indices = @transform_0, window_bounds = array<i64: 1, 8, 64, 256>}, {transform_indices = @transform_1, window_bounds = array<i64: 1, 64, 256>}, {pipeline_mode = #tpu.pipeline_mode<synchronous>, transform_indices = @transform_2, window_bounds = array<i64: 1, 256>}, {transform_indices = @transform_3, window_bounds = array<i64: 1, 64, 256>}]} {
    %c0 = arith.constant 0 : index
    %c0_0 = arith.constant 0 : index
    %c0_1 = arith.constant 0 : index
    %c0_2 = arith.constant 0 : index
    %0 = vector.load %arg2[%c0, %c0_0, %c0_1, %c0_2] : memref<1x8x64x256xbf16, #tpu.memory_space<vmem>>, vector<1x1x64x256xbf16>
    %1 = vector.shape_cast %0 : vector<1x1x64x256xbf16> to vector<64x256xbf16>
    %c0_3 = arith.constant 0 : index
    %c1 = arith.constant 1 : index
    %c0_4 = arith.constant 0 : index
    %c0_5 = arith.constant 0 : index
    %2 = vector.load %arg2[%c0_3, %c1, %c0_4, %c0_5] : memref<1x8x64x256xbf16, #tpu.memory_space<vmem>>, vector<1x1x64x256xbf16>
    %3 = vector.shape_cast %2 : vector<1x1x64x256xbf16> to vector<64x256xbf16>
    %4 = arith.maximumf %1, %3 : vector<64x256xbf16>
    %c0_6 = arith.constant 0 : index
    %c2 = arith.constant 2 : index
    %c0_7 = arith.constant 0 : index
    %c0_8 = arith.constant 0 : index
    %5 = vector.load %arg2[%c0_6, %c2, %c0_7, %c0_8] : memref<1x8x64x256xbf16, #tpu.memory_space<vmem>>, vector<1x1x64x256xbf16>
    %6 = vector.shape_cast %5 : vector<1x1x64x256xbf16> to vector<64x256xbf16>
    %7 = arith.maximumf %4, %6 : vector<64x256xbf16>
    %c0_9 = arith.constant 0 : index
    %c3 = arith.constant 3 : index
    %c0_10 = arith.constant 0 : index
    %c0_11 = arith.constant 0 : index
    %8 = vector.load %arg2[%c0_9, %c3, %c0_10, %c0_11] : memref<1x8x64x256xbf16, #tpu.memory_space<vmem>>, vector<1x1x64x256xbf16>
    %9 = vector.shape_cast %8 : vector<1x1x64x256xbf16> to vector<64x256xbf16>
    %10 = arith.maximumf %7, %9 : vector<64x256xbf16>
    %c0_12 = arith.constant 0 : index
    %c4 = arith.constant 4 : index
    %c0_13 = arith.constant 0 : index
    %c0_14 = arith.constant 0 : index
    %11 = vector.load %arg2[%c0_12, %c4, %c0_13, %c0_14] : memref<1x8x64x256xbf16, #tpu.memory_space<vmem>>, vector<1x1x64x256xbf16>
    %12 = vector.shape_cast %11 : vector<1x1x64x256xbf16> to vector<64x256xbf16>
    %13 = arith.maximumf %10, %12 : vector<64x256xbf16>
    %c0_15 = arith.constant 0 : index
    %c5 = arith.constant 5 : index
    %c0_16 = arith.constant 0 : index
    %c0_17 = arith.constant 0 : index
    %14 = vector.load %arg2[%c0_15, %c5, %c0_16, %c0_17] : memref<1x8x64x256xbf16, #tpu.memory_space<vmem>>, vector<1x1x64x256xbf16>
    %15 = vector.shape_cast %14 : vector<1x1x64x256xbf16> to vector<64x256xbf16>
    %16 = arith.maximumf %13, %15 : vector<64x256xbf16>
    %c0_18 = arith.constant 0 : index
    %c6 = arith.constant 6 : index
    %c0_19 = arith.constant 0 : index
    %c0_20 = arith.constant 0 : index
    %17 = vector.load %arg2[%c0_18, %c6, %c0_19, %c0_20] : memref<1x8x64x256xbf16, #tpu.memory_space<vmem>>, vector<1x1x64x256xbf16>
    %18 = vector.shape_cast %17 : vector<1x1x64x256xbf16> to vector<64x256xbf16>
    %19 = arith.maximumf %16, %18 : vector<64x256xbf16>
    %c0_21 = arith.constant 0 : index
    %c7 = arith.constant 7 : index
    %c0_22 = arith.constant 0 : index
    %c0_23 = arith.constant 0 : index
    %20 = vector.load %arg2[%c0_21, %c7, %c0_22, %c0_23] : memref<1x8x64x256xbf16, #tpu.memory_space<vmem>>, vector<1x1x64x256xbf16>
    %21 = vector.shape_cast %20 : vector<1x1x64x256xbf16> to vector<64x256xbf16>
    %22 = arith.maximumf %19, %21 : vector<64x256xbf16>
    %23 = arith.extf %22 : vector<64x256xbf16> to vector<64x256xf32>
    %c0_24 = arith.constant 0 : index
    %c0_25 = arith.constant 0 : index
    %c0_26 = arith.constant 0 : index
    %24 = vector.load %arg3[%c0_24, %c0_25, %c0_26] : memref<1x64x256xbf16, #tpu.memory_space<vmem>>, vector<1x64x256xbf16>
    %25 = vector.shape_cast %24 : vector<1x64x256xbf16> to vector<64x256xbf16>
    %26 = arith.extf %25 : vector<64x256xbf16> to vector<64x256xf32>
    %27 = arith.addf %23, %26 : vector<64x256xf32>
    %c0_27 = arith.constant 0 : index
    %c0_28 = arith.constant 0 : index
    %28 = vector.load %arg4[%c0_27, %c0_28] : memref<1x256xf32, #tpu.memory_space<vmem>>, vector<1x256xf32>
    %29 = vector.broadcast %28 : vector<1x256xf32> to vector<64x256xf32>
    %30 = arith.addf %27, %29 : vector<64x256xf32>
    %cst = arith.constant 2.000000e-01 : f32
    %31 = vector.broadcast %cst : f32 to vector<64x256xf32>
    %32 = arith.mulf %31, %30 : vector<64x256xf32>
    %33 = arith.maximumf %30, %32 : vector<64x256xf32>
    %c0_29 = arith.constant 0 : index
    %c0_30 = arith.constant 0 : index
    %c0_31 = arith.constant 0 : index
    %34 = vector.load %arg5[%c0_29, %c0_30, %c0_31] : memref<1x64x256xf32, #tpu.memory_space<vmem>>, vector<1x64x256xf32>
    %35 = vector.shape_cast %34 : vector<1x64x256xf32> to vector<64x256xf32>
    %36 = vector.shape_cast %33 : vector<64x256xf32> to vector<1x64x256xf32>
    tpu.vector_store %arg5[%c0_29, %c0_30, %c0_31], %36 {strides = array<i32>} : memref<1x64x256xf32, #tpu.memory_space<vmem>>, vector<1x64x256xf32>,
    return
  }
  func.func @transform_0(%arg0: i32, %arg1: i32) -> (i32, i32, i32, i32) {
    %c0_i32 = arith.constant 0 : i32
    %c0_i32_0 = arith.constant 0 : i32
    %c0_i32_1 = arith.constant 0 : i32
    return %arg0, %c0_i32, %arg1, %c0_i32_0 : i32, i32, i32, i32
  }
  func.func @transform_1(%arg0: i32, %arg1: i32) -> (i32, i32, i32) {
    %c0_i32 = arith.constant 0 : i32
    %c0_i32_0 = arith.constant 0 : i32
    return %arg0, %arg1, %c0_i32 : i32, i32, i32
  }
  func.func @transform_2(%arg0: i32, %arg1: i32) -> (i32, i32) {
    %c0_i32 = arith.constant 0 : i32
    %c0_i32_0 = arith.constant 0 : i32
    %c0_i32_1 = arith.constant 0 : i32
    return %c0_i32, %c0_i32_0 : i32, i32
  }
  func.func @transform_3(%arg0: i32, %arg1: i32) -> (i32, i32, i32) {
    %c0_i32 = arith.constant 0 : i32
    %c0_i32_0 = arith.constant 0 : i32
    return %arg0, %arg1, %c0_i32 : i32, i32, i32
  }
}

module attributes {stable_mosaic.version = 11 : i64} {
  func.func @_global_conv_kernel(%arg0: i32, %arg1: i32, %arg2: memref<1x64x512xbf16, #tpu.memory_space<vmem>>, %arg3: memref<512x512xbf16, #tpu.memory_space<vmem>>, %arg4: memref<1x512xf32, #tpu.memory_space<vmem>>, %arg5: memref<1x1x512xf32, #tpu.memory_space<vmem>>, %arg6: memref<1x1x512xf32, #tpu.memory_space<vmem>>) attributes {dimension_semantics = [#tpu.dimension_semantics<parallel>, #tpu.dimension_semantics<arbitrary>], iteration_bounds = array<i64: 2, 1>, scalar_prefetch = 0 : i64, scratch_operands = 0 : i64, tpu.core_type = #tpu.core_type<tc>, window_params = [{transform_indices = @transform_0, window_bounds = array<i64: 1, 64, 512>}, {pipeline_mode = #tpu.pipeline_mode<synchronous>, transform_indices = @transform_1, window_bounds = array<i64: 512, 512>}, {pipeline_mode = #tpu.pipeline_mode<synchronous>, transform_indices = @transform_2, window_bounds = array<i64: 1, 512>}, {transform_indices = @transform_3, window_bounds = array<i64: 1, 1, 512>}, {transform_indices = @transform_4, window_bounds = array<i64: 1, 1, 512>}]} {
    %c0 = arith.constant 0 : index
    %c0_0 = arith.constant 0 : index
    %c0_1 = arith.constant 0 : index
    %0 = vector.load %arg2[%c0, %c0_0, %c0_1] : memref<1x64x512xbf16, #tpu.memory_space<vmem>>, vector<1x64x512xbf16>
    %1 = vector.shape_cast %0 : vector<1x64x512xbf16> to vector<64x512xbf16>
    %c0_2 = arith.constant 0 : index
    %c0_3 = arith.constant 0 : index
    %2 = vector.load %arg3[%c0_2, %c0_3] : memref<512x512xbf16, #tpu.memory_space<vmem>>, vector<512x512xbf16>
    %cst = arith.constant dense<0.000000e+00> : vector<64x512xf32>
    %3 = tpu.matmul %1, %2, %cst {dimension_numbers = #tpu.dot_dimension_numbers<[1], [0], [0], [1], [0, 0, 1, 1], [], []>} : vector<64x512xbf16>, vector<512x512xbf16>, vector<64x512xf32> -> vector<64x512xf32>
    %c0_4 = arith.constant 0 : index
    %c0_5 = arith.constant 0 : index
    %4 = vector.load %arg4[%c0_4, %c0_5] : memref<1x512xf32, #tpu.memory_space<vmem>>, vector<1x512xf32>
    %5 = vector.broadcast %4 : vector<1x512xf32> to vector<64x512xf32>
    %6 = arith.addf %3, %5 : vector<64x512xf32>
    %cst_6 = arith.constant 2.000000e-01 : f32
    %7 = vector.broadcast %cst_6 : f32 to vector<64x512xf32>
    %8 = arith.mulf %7, %6 : vector<64x512xf32>
    %9 = arith.maximumf %6, %8 : vector<64x512xf32>
    %cst_7 = arith.constant dense<0xFF800000> : vector<512xf32>
    %10 = vector.multi_reduction <maximumf>, %9, %cst_7 [0] : vector<64x512xf32> to vector<512xf32>
    %11 = vector.shape_cast %10 : vector<512xf32> to vector<1x512xf32>
    %cst_8 = arith.constant dense<0.000000e+00> : vector<512xf32>
    %12 = vector.multi_reduction <add>, %9, %cst_8 [0] : vector<64x512xf32> to vector<512xf32>
    %13 = vector.shape_cast %12 : vector<512xf32> to vector<1x512xf32>
    %cst_9 = arith.constant 1.562500e-02 : f32
    %14 = vector.broadcast %cst_9 : f32 to vector<1x512xf32>
    %15 = arith.mulf %13, %14 : vector<1x512xf32>
    %c0_i32 = arith.constant 0 : i32
    %16 = arith.cmpi eq, %arg1, %c0_i32 : i32
    %17 = arith.extui %16 : i1 to i32
    %c0_i32_10 = arith.constant 0 : i32
    %18 = arith.cmpi ne, %17, %c0_i32_10 : i32
    scf.if %18 {
      %c0_13 = arith.constant 0 : index
      %c0_14 = arith.constant 0 : index
      %c0_15 = arith.constant 0 : index
      %22 = vector.load %arg5[%c0_13, %c0_14, %c0_15] : memref<1x1x512xf32, #tpu.memory_space<vmem>>, vector<1x1x512xf32>
      %23 = vector.shape_cast %22 : vector<1x1x512xf32> to vector<1x512xf32>
      %24 = vector.shape_cast %11 : vector<1x512xf32> to vector<1x1x512xf32>
      tpu.vector_store %arg5[%c0_13, %c0_14, %c0_15], %24 {strides = array<i32>} : memref<1x1x512xf32, #tpu.memory_space<vmem>>, vector<1x1x512xf32>,
      %c0_16 = arith.constant 0 : index
      %c0_17 = arith.constant 0 : index
      %c0_18 = arith.constant 0 : index
      %25 = vector.load %arg6[%c0_16, %c0_17, %c0_18] : memref<1x1x512xf32, #tpu.memory_space<vmem>>, vector<1x1x512xf32>
      %26 = vector.shape_cast %25 : vector<1x1x512xf32> to vector<1x512xf32>
      %27 = vector.shape_cast %15 : vector<1x512xf32> to vector<1x1x512xf32>
      tpu.vector_store %arg6[%c0_16, %c0_17, %c0_18], %27 {strides = array<i32>} : memref<1x1x512xf32, #tpu.memory_space<vmem>>, vector<1x1x512xf32>,
    } else {
    }
    %c0_i32_11 = arith.constant 0 : i32
    %19 = arith.cmpi sgt, %arg1, %c0_i32_11 : i32
    %20 = arith.extui %19 : i1 to i32
    %c0_i32_12 = arith.constant 0 : i32
    %21 = arith.cmpi ne, %20, %c0_i32_12 : i32
    scf.if %21 {
      %c0_13 = arith.constant 0 : index
      %c0_14 = arith.constant 0 : index
      %c0_15 = arith.constant 0 : index
      %22 = vector.load %arg5[%c0_13, %c0_14, %c0_15] : memref<1x1x512xf32, #tpu.memory_space<vmem>>, vector<1x1x512xf32>
      %23 = vector.shape_cast %22 : vector<1x1x512xf32> to vector<1x512xf32>
      %24 = arith.maximumf %23, %11 : vector<1x512xf32>
      %c0_16 = arith.constant 0 : index
      %c0_17 = arith.constant 0 : index
      %c0_18 = arith.constant 0 : index
      %25 = vector.load %arg5[%c0_16, %c0_17, %c0_18] : memref<1x1x512xf32, #tpu.memory_space<vmem>>, vector<1x1x512xf32>
      %26 = vector.shape_cast %25 : vector<1x1x512xf32> to vector<1x512xf32>
      %27 = vector.shape_cast %24 : vector<1x512xf32> to vector<1x1x512xf32>
      tpu.vector_store %arg5[%c0_16, %c0_17, %c0_18], %27 {strides = array<i32>} : memref<1x1x512xf32, #tpu.memory_space<vmem>>, vector<1x1x512xf32>,
      %c0_19 = arith.constant 0 : index
      %c0_20 = arith.constant 0 : index
      %c0_21 = arith.constant 0 : index
      %28 = vector.load %arg6[%c0_19, %c0_20, %c0_21] : memref<1x1x512xf32, #tpu.memory_space<vmem>>, vector<1x1x512xf32>
      %29 = vector.shape_cast %28 : vector<1x1x512xf32> to vector<1x512xf32>
      %30 = arith.addf %29, %15 : vector<1x512xf32>
      %c0_22 = arith.constant 0 : index
      %c0_23 = arith.constant 0 : index
      %c0_24 = arith.constant 0 : index
      %31 = vector.load %arg6[%c0_22, %c0_23, %c0_24] : memref<1x1x512xf32, #tpu.memory_space<vmem>>, vector<1x1x512xf32>
      %32 = vector.shape_cast %31 : vector<1x1x512xf32> to vector<1x512xf32>
      %33 = vector.shape_cast %30 : vector<1x512xf32> to vector<1x1x512xf32>
      tpu.vector_store %arg6[%c0_22, %c0_23, %c0_24], %33 {strides = array<i32>} : memref<1x1x512xf32, #tpu.memory_space<vmem>>, vector<1x1x512xf32>,
    } else {
    }
    return
  }
  func.func @transform_0(%arg0: i32, %arg1: i32) -> (i32, i32, i32) {
    %c0_i32 = arith.constant 0 : i32
    %c0_i32_0 = arith.constant 0 : i32
    return %arg0, %arg1, %c0_i32 : i32, i32, i32
  }
  func.func @transform_1(%arg0: i32, %arg1: i32) -> (i32, i32) {
    %c0_i32 = arith.constant 0 : i32
    %c0_i32_0 = arith.constant 0 : i32
    %c0_i32_1 = arith.constant 0 : i32
    return %c0_i32, %c0_i32_0 : i32, i32
  }
  func.func @transform_2(%arg0: i32, %arg1: i32) -> (i32, i32) {
    %c0_i32 = arith.constant 0 : i32
    %c0_i32_0 = arith.constant 0 : i32
    %c0_i32_1 = arith.constant 0 : i32
    return %c0_i32, %c0_i32_0 : i32, i32
  }
  func.func @transform_3(%arg0: i32, %arg1: i32) -> (i32, i32, i32) {
    %c0_i32 = arith.constant 0 : i32
    %c0_i32_0 = arith.constant 0 : i32
    %c0_i32_1 = arith.constant 0 : i32
    return %arg0, %c0_i32, %c0_i32_0 : i32, i32, i32
  }
  func.func @transform_4(%arg0: i32, %arg1: i32) -> (i32, i32, i32) {
    %c0_i32 = arith.constant 0 : i32
    %c0_i32_0 = arith.constant 0 : i32
    %c0_i32_1 = arith.constant 0 : i32
    return %arg0, %c0_i32, %c0_i32_0 : i32, i32, i32
  }
}

module attributes {stable_mosaic.version = 11 : i64} {
  func.func @_mlp_fused_kernel(%arg0: i32, %arg1: i32, %arg2: memref<1x128x512xbf16, #tpu.memory_space<vmem>>, %arg3: memref<1x1x1024xf32, #tpu.memory_space<vmem>>, %arg4: memref<512x1024xbf16, #tpu.memory_space<vmem>>, %arg5: memref<1024x256xbf16, #tpu.memory_space<vmem>>, %arg6: memref<1x256xf32, #tpu.memory_space<vmem>>, %arg7: memref<256x64xbf16, #tpu.memory_space<vmem>>, %arg8: memref<1x64xf32, #tpu.memory_space<vmem>>, %arg9: memref<16x64xbf16, #tpu.memory_space<vmem>>, %arg10: memref<16x1xf32, #tpu.memory_space<vmem>>, %arg11: memref<1x16x128xf32, #tpu.memory_space<vmem>>) attributes {dimension_semantics = [#tpu.dimension_semantics<parallel>, #tpu.dimension_semantics<parallel>], iteration_bounds = array<i64: 2, 1>, scalar_prefetch = 0 : i64, scratch_operands = 0 : i64, tpu.core_type = #tpu.core_type<tc>, window_params = [{transform_indices = @transform_0, window_bounds = array<i64: 1, 128, 512>}, {transform_indices = @transform_1, window_bounds = array<i64: 1, 1, 1024>}, {pipeline_mode = #tpu.pipeline_mode<synchronous>, transform_indices = @transform_2, window_bounds = array<i64: 512, 1024>}, {pipeline_mode = #tpu.pipeline_mode<synchronous>, transform_indices = @transform_3, window_bounds = array<i64: 1024, 256>}, {pipeline_mode = #tpu.pipeline_mode<synchronous>, transform_indices = @transform_4, window_bounds = array<i64: 1, 256>}, {pipeline_mode = #tpu.pipeline_mode<synchronous>, transform_indices = @transform_5, window_bounds = array<i64: 256, 64>}, {pipeline_mode = #tpu.pipeline_mode<synchronous>, transform_indices = @transform_6, window_bounds = array<i64: 1, 64>}, {pipeline_mode = #tpu.pipeline_mode<synchronous>, transform_indices = @transform_7, window_bounds = array<i64: 16, 64>}, {pipeline_mode = #tpu.pipeline_mode<synchronous>, transform_indices = @transform_8, window_bounds = array<i64: 16, 1>}, {transform_indices = @transform_9, window_bounds = array<i64: 1, 16, 128>}]} {
    %c0 = arith.constant 0 : index
    %c0_0 = arith.constant 0 : index
    %c0_1 = arith.constant 0 : index
    %0 = vector.load %arg2[%c0, %c0_0, %c0_1] : memref<1x128x512xbf16, #tpu.memory_space<vmem>>, vector<1x128x512xbf16>
    %1 = vector.shape_cast %0 : vector<1x128x512xbf16> to vector<128x512xbf16>
    %c0_2 = arith.constant 0 : index
    %c0_3 = arith.constant 0 : index
    %2 = vector.load %arg4[%c0_2, %c0_3] : memref<512x1024xbf16, #tpu.memory_space<vmem>>, vector<512x1024xbf16>
    %cst = arith.constant dense<0.000000e+00> : vector<128x1024xf32>
    %3 = tpu.matmul %1, %2, %cst {dimension_numbers = #tpu.dot_dimension_numbers<[1], [0], [0], [1], [0, 0, 1, 1], [], []>} : vector<128x512xbf16>, vector<512x1024xbf16>, vector<128x1024xf32> -> vector<128x1024xf32>
    %c0_4 = arith.constant 0 : index
    %c0_5 = arith.constant 0 : index
    %c0_6 = arith.constant 0 : index
    %4 = vector.load %arg3[%c0_4, %c0_5, %c0_6] : memref<1x1x1024xf32, #tpu.memory_space<vmem>>, vector<1x1x1024xf32>
    %5 = vector.shape_cast %4 : vector<1x1x1024xf32> to vector<1x1024xf32>
    %6 = vector.broadcast %5 : vector<1x1024xf32> to vector<128x1024xf32>
    %7 = arith.addf %3, %6 : vector<128x1024xf32>
    %cst_7 = arith.constant 2.000000e-01 : f32
    %8 = vector.broadcast %cst_7 : f32 to vector<128x1024xf32>
    %9 = arith.mulf %8, %7 : vector<128x1024xf32>
    %10 = arith.maximumf %7, %9 : vector<128x1024xf32>
    %11 = arith.truncf %10 : vector<128x1024xf32> to vector<128x1024xbf16>
    %c0_8 = arith.constant 0 : index
    %c0_9 = arith.constant 0 : index
    %12 = vector.load %arg5[%c0_8, %c0_9] : memref<1024x256xbf16, #tpu.memory_space<vmem>>, vector<1024x256xbf16>
    %cst_10 = arith.constant dense<0.000000e+00> : vector<128x256xf32>
    %13 = tpu.matmul %11, %12, %cst_10 {dimension_numbers = #tpu.dot_dimension_numbers<[1], [0], [0], [1], [0, 0, 1, 1], [], []>} : vector<128x1024xbf16>, vector<1024x256xbf16>, vector<128x256xf32> -> vector<128x256xf32>
    %c0_11 = arith.constant 0 : index
    %c0_12 = arith.constant 0 : index
    %14 = vector.load %arg6[%c0_11, %c0_12] : memref<1x256xf32, #tpu.memory_space<vmem>>, vector<1x256xf32>
    %15 = vector.broadcast %14 : vector<1x256xf32> to vector<128x256xf32>
    %16 = arith.addf %13, %15 : vector<128x256xf32>
    %cst_13 = arith.constant 2.000000e-01 : f32
    %17 = vector.broadcast %cst_13 : f32 to vector<128x256xf32>
    %18 = arith.mulf %17, %16 : vector<128x256xf32>
    %19 = arith.maximumf %16, %18 : vector<128x256xf32>
    %20 = arith.truncf %19 : vector<128x256xf32> to vector<128x256xbf16>
    %c0_14 = arith.constant 0 : index
    %c0_15 = arith.constant 0 : index
    %21 = vector.load %arg7[%c0_14, %c0_15] : memref<256x64xbf16, #tpu.memory_space<vmem>>, vector<256x64xbf16>
    %cst_16 = arith.constant dense<0.000000e+00> : vector<128x64xf32>
    %22 = tpu.matmul %20, %21, %cst_16 {dimension_numbers = #tpu.dot_dimension_numbers<[1], [0], [0], [1], [0, 0, 1, 1], [], []>} : vector<128x256xbf16>, vector<256x64xbf16>, vector<128x64xf32> -> vector<128x64xf32>
    %c0_17 = arith.constant 0 : index
    %c0_18 = arith.constant 0 : index
    %23 = vector.load %arg8[%c0_17, %c0_18] : memref<1x64xf32, #tpu.memory_space<vmem>>, vector<1x64xf32>
    %24 = vector.broadcast %23 : vector<1x64xf32> to vector<128x64xf32>
    %25 = arith.addf %22, %24 : vector<128x64xf32>
    %cst_19 = arith.constant 2.000000e-01 : f32
    %26 = vector.broadcast %cst_19 : f32 to vector<128x64xf32>
    %27 = arith.mulf %26, %25 : vector<128x64xf32>
    %28 = arith.maximumf %25, %27 : vector<128x64xf32>
    %c0_20 = arith.constant 0 : index
    %c0_21 = arith.constant 0 : index
    %29 = vector.load %arg9[%c0_20, %c0_21] : memref<16x64xbf16, #tpu.memory_space<vmem>>, vector<16x64xbf16>
    %30 = arith.truncf %28 : vector<128x64xf32> to vector<128x64xbf16>
    %cst_22 = arith.constant dense<0.000000e+00> : vector<16x128xf32>
    %31 = tpu.matmul %29, %30, %cst_22 {dimension_numbers = #tpu.dot_dimension_numbers<[1], [1], [0], [0], [0, 0, 1, 0], [], []>} : vector<16x64xbf16>, vector<128x64xbf16>, vector<16x128xf32> -> vector<16x128xf32>
    %c0_23 = arith.constant 0 : index
    %c0_24 = arith.constant 0 : index
    %32 = vector.load %arg10[%c0_23, %c0_24] : memref<16x1xf32, #tpu.memory_space<vmem>>, vector<16x1xf32>
    %33 = vector.broadcast %32 : vector<16x1xf32> to vector<16x128xf32>
    %34 = arith.addf %31, %33 : vector<16x128xf32>
    %c0_25 = arith.constant 0 : index
    %c0_26 = arith.constant 0 : index
    %c0_27 = arith.constant 0 : index
    %35 = vector.load %arg11[%c0_25, %c0_26, %c0_27] : memref<1x16x128xf32, #tpu.memory_space<vmem>>, vector<1x16x128xf32>
    %36 = vector.shape_cast %35 : vector<1x16x128xf32> to vector<16x128xf32>
    %37 = vector.shape_cast %34 : vector<16x128xf32> to vector<1x16x128xf32>
    tpu.vector_store %arg11[%c0_25, %c0_26, %c0_27], %37 {strides = array<i32>} : memref<1x16x128xf32, #tpu.memory_space<vmem>>, vector<1x16x128xf32>,
    return
  }
  func.func @transform_0(%arg0: i32, %arg1: i32) -> (i32, i32, i32) {
    %c0_i32 = arith.constant 0 : i32
    %c0_i32_0 = arith.constant 0 : i32
    return %arg0, %arg1, %c0_i32 : i32, i32, i32
  }
  func.func @transform_1(%arg0: i32, %arg1: i32) -> (i32, i32, i32) {
    %c0_i32 = arith.constant 0 : i32
    %c0_i32_0 = arith.constant 0 : i32
    %c0_i32_1 = arith.constant 0 : i32
    return %arg0, %c0_i32, %c0_i32_0 : i32, i32, i32
  }
  func.func @transform_2(%arg0: i32, %arg1: i32) -> (i32, i32) {
    %c0_i32 = arith.constant 0 : i32
    %c0_i32_0 = arith.constant 0 : i32
    %c0_i32_1 = arith.constant 0 : i32
    return %c0_i32, %c0_i32_0 : i32, i32
  }
  func.func @transform_3(%arg0: i32, %arg1: i32) -> (i32, i32) {
    %c0_i32 = arith.constant 0 : i32
    %c0_i32_0 = arith.constant 0 : i32
    %c0_i32_1 = arith.constant 0 : i32
    return %c0_i32, %c0_i32_0 : i32, i32
  }
  func.func @transform_4(%arg0: i32, %arg1: i32) -> (i32, i32) {
    %c0_i32 = arith.constant 0 : i32
    %c0_i32_0 = arith.constant 0 : i32
    %c0_i32_1 = arith.constant 0 : i32
    return %c0_i32, %c0_i32_0 : i32, i32
  }
  func.func @transform_5(%arg0: i32, %arg1: i32) -> (i32, i32) {
    %c0_i32 = arith.constant 0 : i32
    %c0_i32_0 = arith.constant 0 : i32
    %c0_i32_1 = arith.constant 0 : i32
    return %c0_i32, %c0_i32_0 : i32, i32
  }
  func.func @transform_6(%arg0: i32, %arg1: i32) -> (i32, i32) {
    %c0_i32 = arith.constant 0 : i32
    %c0_i32_0 = arith.constant 0 : i32
    %c0_i32_1 = arith.constant 0 : i32
    return %c0_i32, %c0_i32_0 : i32, i32
  }
  func.func @transform_7(%arg0: i32, %arg1: i32) -> (i32, i32) {
    %c0_i32 = arith.constant 0 : i32
    %c0_i32_0 = arith.constant 0 : i32
    %c0_i32_1 = arith.constant 0 : i32
    return %c0_i32, %c0_i32_0 : i32, i32
  }
  func.func @transform_8(%arg0: i32, %arg1: i32) -> (i32, i32) {
    %c0_i32 = arith.constant 0 : i32
    %c0_i32_0 = arith.constant 0 : i32
    %c0_i32_1 = arith.constant 0 : i32
    return %c0_i32, %c0_i32_0 : i32, i32
  }
  func.func @transform_9(%arg0: i32, %arg1: i32) -> (i32, i32, i32) {
    %c0_i32 = arith.constant 0 : i32
    %c0_i32_0 = arith.constant 0 : i32
    return %arg0, %c0_i32, %arg1 : i32, i32, i32
  }
}

</mosaic_0001>

<llo_original>
// kernel: weight_binding_net_forward.9
$region0: #{weight_binding_net_forward.9}
  #allocation0 [shape = 'u32[]', space=smem, size = 0x4, offset = 0x4, fixed_abs, tag = 'smem constant byte address 0x4 - core index']
  #allocation1 [shape = 'u32[72,128]{1,0:T(1,128)}', space=vmem, size = 0x9000, scoped, tag = 'internal scratch']
  %s0 = inlined_call_operand.vmem [shape: bf16[2,8,64,64], index: 0, kind: input, shape index: {}]
  %s1 = inlined_call_operand.vmem [shape: bf16[2,64,64], index: 1, kind: input, shape index: {}]
  %s2 = inlined_call_operand.vmem [shape: f32[1,64], index: 2, kind: input, shape index: {}]
  %s3 = inlined_call_operand.vmem [shape: f32[2,64,64], index: 3, kind: output, shape index: {}]
  %s4 = sld [smem:[#allocation0]]
  $region45: #{weight_binding_net_forward.9} parent=0
    _
  %s6 = ssub.s32 1, %s4
  %s7 = scalar_select 0, %s6, %s4
  loop: start=0, step=1, limit=4
  $region2: #{weight_binding_net_forward.9} parent=0 // loop_pre_header
    _
  $region3: #{weight_binding_net_forward.9} parent=0 // loop_header
    %s9 = sphi 0, %s13
    %p10 = scmp.ge.s32.totalorder %s9, 4
    %s16 = sphi 0, %s28
    %s17 = sphi 0, %s24
    %s18 = sphi 0, %s16
    %s19 = sphi 0, %s17
    %s20 = sphi 0, %s18
    %s21 = sphi 0, %s19
    %s33 = sphi 0, %s35
    %s36 = sphi 0, %s33
    %s37 = sphi 0, %s36
    %s53 = sphi 0, %s37
    %s61 = sphi 0, %s63
    %s64 = sphi 0, %s61
    %s65 = sphi 0, %s64
    %s81 = sphi 0, %s65
    %s85 = sphi 0, %s85
    %s87 = sphi 0, %s85
    %s88 = sphi 0, %s87
    %s102 = sphi 0, %s88
    %s110 = sphi 0, %s112
    %s113 = sphi 0, %s110
    %s114 = sphi 0, %s113
    %s130 = sphi 0, %s114
  $region4: #{weight_binding_net_forward.9} parent=0 // loop_header_branch
    %12 = sbr.rel (%p10) target = $region8
  $region5: #{weight_binding_net_forward.9} parent=0 // loop_body
    %s14 = ssub.s32 %s9, 1
    %s15 = ssub.s32 %s9, 2
    %s22 = sadd.s32 1, %s17
    %p23 = scmp.ge.s32.totalorder %s22, 1
    %s24 = scalar_select %p23, 0, %s22
    %s25 = sadd.s32 1, %s16
    %s26 = scalar_select %p23, %s25, %s16
    %p27 = scmp.ge.s32.totalorder %s26, 2
    %s28 = scalar_select %p27, 0, %s26
    %s29 = ssub.s32 %s16, %s28
    %s30 = ssub.s32 %s17, %s24
    %s31 = sor.u32 %s29, %s30
    %p32 = scmp.eq.s32.totalorder %s31, 0
    %s34 = sadd.s32 %s33, 1
    %s35 = scalar_select %p32, %s33, %s34
    %p38 = pneg %p32
    %p39 = scmp.eq.s32.totalorder %s9, 1
    %p40 = por %p38, %p39
    %p41 = scmp.ne.s32.totalorder %s33, %s36
    %p42 = scmp.eq.s32.totalorder %s9, 0
    %p43 = por %p41, %p42
    %p44 = scmp.ne.s32.totalorder %s33, %s36
    %p45 = scmp.eq.s32.totalorder %s14, 1
    %p46 = por %p44, %p45
    %p47 = scmp.ne.s32.totalorder %s36, %s37
    %p48 = scmp.eq.s32.totalorder %s14, 0
    %p49 = por %p47, %p48
    %p50 = scmp.ne.s32.totalorder %s36, %s37
    %p51 = scmp.eq.s32.totalorder %s15, 1
    %p52 = por %p50, %p51
    %p54 = scmp.ne.s32.totalorder %s37, %s53
    %p55 = scmp.eq.s32.totalorder %s15, 0
    %p56 = por %p54, %p55
    %s57 = ssub.s32 %s16, %s28
    %s58 = ssub.s32 %s17, %s24
    %s59 = sor.u32 %s57, %s58
    %p60 = scmp.eq.s32.totalorder %s59, 0
    %s62 = sadd.s32 %s61, 1
    %s63 = scalar_select %p60, %s61, %s62
    %p66 = pneg %p60
    %p67 = scmp.eq.s32.totalorder %s9, 1
    %p68 = por %p66, %p67
    %p69 = scmp.ne.s32.totalorder %s61, %s64
    %p70 = scmp.eq.s32.totalorder %s9, 0
    %p71 = por %p69, %p70
    %p72 = scmp.ne.s32.totalorder %s61, %s64
    %p73 = scmp.eq.s32.totalorder %s14, 1
    %p74 = por %p72, %p73
    %p75 = scmp.ne.s32.totalorder %s64, %s65
    %p76 = scmp.eq.s32.totalorder %s14, 0
    %p77 = por %p75, %p76
    %p78 = scmp.ne.s32.totalorder %s64, %s65
    %p79 = scmp.eq.s32.totalorder %s15, 1
    %p80 = por %p78, %p79
    %p82 = scmp.ne.s32.totalorder %s65, %s81
    %p83 = scmp.eq.s32.totalorder %s15, 0
    %p84 = por %p82, %p83
    %s86 = sadd.s32 %s85, 1
    %p89 = scmp.eq.s32.totalorder %s9, 1
    %p90 = scmp.ne.s32.totalorder %s85, %s87
    %p91 = scmp.eq.s32.totalorder %s9, 0
    %p92 = por %p90, %p91
    %p93 = scmp.ne.s32.totalorder %s85, %s87
    %p94 = scmp.eq.s32.totalorder %s14, 1
    %p95 = por %p93, %p94
    %p96 = scmp.ne.s32.totalorder %s87, %s88
    %p97 = scmp.eq.s32.totalorder %s14, 0
    %p98 = por %p96, %p97
    %p99 = scmp.ne.s32.totalorder %s87, %s88
    %p100 = scmp.eq.s32.totalorder %s15, 1
    %p101 = por %p99, %p100
    %p103 = scmp.ne.s32.totalorder %s88, %s102
    %p104 = scmp.eq.s32.totalorder %s15, 0
    %p105 = por %p103, %p104
    %s106 = ssub.s32 %s16, %s28
    %s107 = ssub.s32 %s17, %s24
    %s108 = sor.u32 %s106, %s107
    %p109 = scmp.eq.s32.totalorder %s108, 0
    %s111 = sadd.s32 %s110, 1
    %s112 = scalar_select %p109, %s110, %s111
    %p115 = pneg %p109
    %p116 = scmp.eq.s32.totalorder %s9, 1
    %p117 = por %p115, %p116
    %p118 = scmp.ne.s32.totalorder %s110, %s113
    %p119 = scmp.eq.s32.totalorder %s9, 0
    %p120 = por %p118, %p119
    %p121 = scmp.ne.s32.totalorder %s110, %s113
    %p122 = scmp.eq.s32.totalorder %s14, 1
    %p123 = por %p121, %p122
    %p124 = scmp.ne.s32.totalorder %s113, %s114
    %p125 = scmp.eq.s32.totalorder %s14, 0
    %p126 = por %p124, %p125
    %p127 = scmp.ne.s32.totalorder %s113, %s114
    %p128 = scmp.eq.s32.totalorder %s15, 1
    %p129 = por %p127, %p128
    %p131 = scmp.ne.s32.totalorder %s114, %s130
    %p132 = scmp.eq.s32.totalorder %s15, 0
    %p133 = por %p131, %p132
    %p134 = scmp.le.s32.totalorder 1, %s9
    %p135 = scmp.lt.s32.totalorder %s9, 3
    %p136 = pnand %p134, %p135
    %p137 = pneg %p136
    // Predicated region
    $region9: #{weight_binding_net_forward.9} parent=5 // pred_check
      _
    $region10: #{weight_binding_net_forward.9} parent=5 // pred_check_branch
      %139 = sbr.rel (%p136) target = $region12
    $region11: #{weight_binding_net_forward.9} parent=5 // pred_region
      %s140 = ssub.s32 %s9, 1
      // Predicated region
      $region13: #{weight_binding_net_forward.9} parent=11 // pred_check
        %p141 = pneg %p98
      $region14: #{weight_binding_net_forward.9} parent=11 // pred_check_branch
        %143 = sbr.rel (%p141) target = $region16
      $region15: #{weight_binding_net_forward.9} parent=11 // pred_region
        _
      $region16: #{weight_binding_net_forward.9} parent=11 // pred_fallthru
        _
    $region12: #{weight_binding_net_forward.9} parent=5 // pred_fallthru
      _
    %p144 = scmp.lt.s32.totalorder %s9, 2
    // Predicated region
    $region17: #{weight_binding_net_forward.9} parent=5 // pred_check
      %p145 = pneg %p144
    $region18: #{weight_binding_net_forward.9} parent=5 // pred_check_branch
      %147 = sbr.rel (%p145) target = $region20
    $region19: #{weight_binding_net_forward.9} parent=5 // pred_region
      // Predicated region
      $region21: #{weight_binding_net_forward.9} parent=19 // pred_check
        %p148 = pneg %p43
      $region22: #{weight_binding_net_forward.9} parent=19 // pred_check_branch
        %150 = sbr.rel (%p148) target = $region24
      $region23: #{weight_binding_net_forward.9} parent=19 // pred_region
        %s151 = smul.u32 8, %s17
        %p152 = scmp.lt.s32.totalorder %s16, 1
        %s153 = scalar_select %p152, %s16, 1
        %p154 = scmp.lt.s32.totalorder %s151, 7
        %s155 = scalar_select %p154, %s151, 7
        %s156 = smul.addr %s153, 64
        %s157 = sadd.s32 %s155, %s156
        %s158 = smul.addr %s157, 4
        %s159 = scalar_lea.vmem %s0, %s158
        %s160 = smul.u32 8, %s17
      $region24: #{weight_binding_net_forward.9} parent=19 // pred_fallthru
        _
      // Predicated region
      $region25: #{weight_binding_net_forward.9} parent=19 // pred_check
        %p161 = pneg %p71
      $region26: #{weight_binding_net_forward.9} parent=19 // pred_check_branch
        %163 = sbr.rel (%p161) target = $region28
      $region27: #{weight_binding_net_forward.9} parent=19 // pred_region
        %s164 = smul.u32 8, %s17
        %p165 = scmp.lt.s32.totalorder %s16, 1
        %s166 = scalar_select %p165, %s16, 1
        %p167 = scmp.lt.s32.totalorder %s164, 7
        %s168 = scalar_select %p167, %s164, 7
        %s169 = smul.addr %s166, 8
        %s170 = sadd.s32 %s168, %s169
        %s171 = smul.addr %s170, 4
        %s172 = scalar_lea.vmem %s1, %s171
        %s173 = smul.u32 8, %s17
      $region28: #{weight_binding_net_forward.9} parent=19 // pred_fallthru
        _
    $region20: #{weight_binding_net_forward.9} parent=5 // pred_fallthru
      _
    %p174 = scmp.le.s32.totalorder 1, %s9
    %p175 = scmp.lt.s32.totalorder %s9, 3
    %p176 = pnand %p174, %p175
    %p177 = pneg %p176
    // Predicated region
    $region29: #{weight_binding_net_forward.9} parent=5 // pred_check
      _
    $region30: #{weight_binding_net_forward.9} parent=5 // pred_check_branch
      %179 = sbr.rel (%p176) target = $region32
    $region31: #{weight_binding_net_forward.9} parent=5 // pred_region
      %s180 = ssub.s32 %s9, 1
      %s181 = smul.u32 8, %s19
      %p182 = scmp.lt.s32.totalorder %s18, 1
      %s183 = scalar_select %p182, %s18, 1
      %p184 = scmp.lt.s32.totalorder %s181, 7
      %s185 = scalar_select %p184, %s181, 7
      %s186 = smul.addr %s183, 64
      %s187 = sadd.s32 %s185, %s186
      %s188 = smul.addr %s187, 4
      %s189 = scalar_lea.vmem %s0, %s188
      %p190 = pneg %p49
      %p191 = pneg %p46
      %s192 = smul.u32 8, %s19
      %p193 = scmp.lt.s32.totalorder %s18, 1
      %s194 = scalar_select %p193, %s18, 1
      %p195 = scmp.lt.s32.totalorder %s192, 7
      %s196 = scalar_select %p195, %s192, 7
      %s197 = smul.addr %s194, 8
      %s198 = sadd.s32 %s196, %s197
      %s199 = smul.addr %s198, 4
      %s200 = scalar_lea.vmem %s1, %s199
      %p201 = pneg %p77
      %p202 = pneg %p74
      %p203 = pneg %p98
      %p204 = pneg %p95
      %p205 = pneg %p126
      %p206 = pneg %p123
      %s207 = smul.u32 8, %s19
      %p208 = scmp.lt.s32.totalorder %s18, 1
      %s209 = scalar_select %p208, %s18, 1
      %p210 = scmp.lt.s32.totalorder %s207, 7
      %s211 = scalar_select %p210, %s207, 7
      %s212 = smul.addr %s209, 8
      %s213 = sadd.s32 %s211, %s212
      %s214 = smul.addr %s213, 8
      %s215 = scalar_lea.vmem %s3, %s214
      %s216 = smul.u32 8, %s19
      %p217 = scmp.lt.s32.totalorder %s18, 1
      %s218 = scalar_select %p217, %s18, 1
      %p219 = scmp.lt.s32.totalorder %s216, 7
      %s220 = scalar_select %p219, %s216, 7
      %s221 = smul.addr %s218, 64
      %s222 = sadd.s32 %s220, %s221
      %s223 = smul.addr %s222, 4
      %s224 = scalar_lea.vmem %s0, %s223
      %s225 = smul.u32 8, %s19
      %s226 = smul.u32 8, %s19
      %p227 = scmp.lt.s32.totalorder %s18, 1
      %s228 = scalar_select %p227, %s18, 1
      %p229 = scmp.lt.s32.totalorder %s226, 7
      %s230 = scalar_select %p229, %s226, 7
      %s231 = smul.addr %s228, 8
      %s232 = sadd.s32 %s230, %s231
      %s233 = smul.addr %s232, 4
      %s234 = scalar_lea.vmem %s1, %s233
      %s235 = smul.u32 8, %s19
      %s236 = smul.u32 8, %s19
      %p237 = scmp.lt.s32.totalorder %s18, 1
      %s238 = scalar_select %p237, %s18, 1
      %p239 = scmp.lt.s32.totalorder %s236, 7
      %s240 = scalar_select %p239, %s236, 7
      %s241 = smul.addr %s238, 8
      %s242 = sadd.s32 %s240, %s241
      %s243 = smul.addr %s242, 8
      %s244 = scalar_lea.vmem %s3, %s243
      %s245 = smul.u32 8, %s19
      %v246 = vld [vmem:[%s224] sm:$0xf]
      %v247 = vld [vmem:[%s224 + $0x4] sm:$0xf]
      %v248 = vld [vmem:[%s224 + $0x8] sm:$0xf]
      %v249 = vld [vmem:[%s224 + $0xc] sm:$0xf]
      %v250 = vld [vmem:[%s224 + $0x10] sm:$0xf]
      %v251 = vld [vmem:[%s224 + $0x14] sm:$0xf]
      %v252 = vld [vmem:[%s224 + $0x18] sm:$0xf]
      %v253 = vld [vmem:[%s224 + $0x1c] sm:$0xf]
      %s254 = scalar_lea.vmem %s224, 32
      %v255 = vld [vmem:[%s254] sm:$0xf]
      %v256 = vld [vmem:[%s254 + $0x4] sm:$0xf]
      %v257 = vld [vmem:[%s254 + $0x8] sm:$0xf]
      %v258 = vld [vmem:[%s254 + $0xc] sm:$0xf]
      %v259 = vld [vmem:[%s254 + $0x10] sm:$0xf]
      %v260 = vld [vmem:[%s254 + $0x14] sm:$0xf]
      %v261 = vld [vmem:[%s254 + $0x18] sm:$0xf]
      %v262 = vld [vmem:[%s254 + $0x1c] sm:$0xf]
      %v263 = vunpack.c.l.bf16 %v246
      %v264 = vunpack.c.l.bf16 %v247
      %v265 = vunpack.c.l.bf16 %v248
      %v266 = vunpack.c.l.bf16 %v249
      %v267 = vunpack.c.l.bf16 %v250
      %v268 = vunpack.c.l.bf16 %v251
      %v269 = vunpack.c.l.bf16 %v252
      %v270 = vunpack.c.l.bf16 %v253
      %v271 = vunpack.c.l.bf16 %v255
      %v272 = vunpack.c.l.bf16 %v256
      %v273 = vunpack.c.l.bf16 %v257
      %v274 = vunpack.c.l.bf16 %v258
      %v275 = vunpack.c.l.bf16 %v259
      %v276 = vunpack.c.l.bf16 %v260
      %v277 = vunpack.c.l.bf16 %v261
      %v278 = vunpack.c.l.bf16 %v262
      %v279 = vmax.f32 %v263, %v271
      %v280 = vmax.f32 %v264, %v272
      %v281 = vmax.f32 %v265, %v273
      %v282 = vmax.f32 %v266, %v274
      %v283 = vmax.f32 %v267, %v275
      %v284 = vmax.f32 %v268, %v276
      %v285 = vmax.f32 %v269, %v277
      %v286 = vmax.f32 %v270, %v278
      %v287 = vpack.c.bf16 %v279, %v279
      %v288 = vpack.c.bf16 %v280, %v280
      %v289 = vpack.c.bf16 %v281, %v281
      %v290 = vpack.c.bf16 %v282, %v282
      %v291 = vpack.c.bf16 %v283, %v283
      %v292 = vpack.c.bf16 %v284, %v284
      %v293 = vpack.c.bf16 %v285, %v285
      %v294 = vpack.c.bf16 %v286, %v286
      %s295 = scalar_lea.vmem %s224, 64
      %v296 = vld [vmem:[%s295] sm:$0xf]
      %v297 = vld [vmem:[%s295 + $0x4] sm:$0xf]
      %v298 = vld [vmem:[%s295 + $0x8] sm:$0xf]
      %v299 = vld [vmem:[%s295 + $0xc] sm:$0xf]
      %v300 = vld [vmem:[%s295 + $0x10] sm:$0xf]
      %v301 = vld [vmem:[%s295 + $0x14] sm:$0xf]
      %v302 = vld [vmem:[%s295 + $0x18] sm:$0xf]
      %v303 = vld [vmem:[%s295 + $0x1c] sm:$0xf]
      %v304 = vunpack.c.l.bf16 %v287
      %v305 = vunpack.c.l.bf16 %v288
      %v306 = vunpack.c.l.bf16 %v289
      %v307 = vunpack.c.l.bf16 %v290
      %v308 = vunpack.c.l.bf16 %v291
      %v309 = vunpack.c.l.bf16 %v292
      %v310 = vunpack.c.l.bf16 %v293
      %v311 = vunpack.c.l.bf16 %v294
      %v312 = vunpack.c.l.bf16 %v296
      %v313 = vunpack.c.l.bf16 %v297
      %v314 = vunpack.c.l.bf16 %v298
      %v315 = vunpack.c.l.bf16 %v299
      %v316 = vunpack.c.l.bf16 %v300
      %v317 = vunpack.c.l.bf16 %v301
      %v318 = vunpack.c.l.bf16 %v302
      %v319 = vunpack.c.l.bf16 %v303
      %v320 = vmax.f32 %v304, %v312
      %v321 = vmax.f32 %v305, %v313
      %v322 = vmax.f32 %v306, %v314
      %v323 = vmax.f32 %v307, %v315
      %v324 = vmax.f32 %v308, %v316
      %v325 = vmax.f32 %v309, %v317
      %v326 = vmax.f32 %v310, %v318
      %v327 = vmax.f32 %v311, %v319
      %v328 = vpack.c.bf16 %v320, %v320
      %v329 = vpack.c.bf16 %v321, %v321
      %v330 = vpack.c.bf16 %v322, %v322
      %v331 = vpack.c.bf16 %v323, %v323
      %v332 = vpack.c.bf16 %v324, %v324
      %v333 = vpack.c.bf16 %v325, %v325
      %v334 = vpack.c.bf16 %v326, %v326
      %v335 = vpack.c.bf16 %v327, %v327
      %s336 = scalar_lea.vmem %s224, 96
      %v337 = vld [vmem:[%s336] sm:$0xf]
      %v338 = vld [vmem:[%s336 + $0x4] sm:$0xf]
      %v339 = vld [vmem:[%s336 + $0x8] sm:$0xf]
      %v340 = vld [vmem:[%s336 + $0xc] sm:$0xf]
      %v341 = vld [vmem:[%s336 + $0x10] sm:$0xf]
      %v342 = vld [vmem:[%s336 + $0x14] sm:$0xf]
      %v343 = vld [vmem:[%s336 + $0x18] sm:$0xf]
      %v344 = vld [vmem:[%s336 + $0x1c] sm:$0xf]
      %v345 = vunpack.c.l.bf16 %v328
      %v346 = vunpack.c.l.bf16 %v329
      %v347 = vunpack.c.l.bf16 %v330
      %v348 = vunpack.c.l.bf16 %v331
      %v349 = vunpack.c.l.bf16 %v332
      %v350 = vunpack.c.l.bf16 %v333
      %v351 = vunpack.c.l.bf16 %v334
      %v352 = vunpack.c.l.bf16 %v335
      %v353 = vunpack.c.l.bf16 %v337
      %v354 = vunpack.c.l.bf16 %v338
      %v355 = vunpack.c.l.bf16 %v339
      %v356 = vunpack.c.l.bf16 %v340
      %v357 = vunpack.c.l.bf16 %v341
      %v358 = vunpack.c.l.bf16 %v342
      %v359 = vunpack.c.l.bf16 %v343
      %v360 = vunpack.c.l.bf16 %v344
      %v361 = vmax.f32 %v345, %v353
      %v362 = vmax.f32 %v346, %v354
      %v363 = vmax.f32 %v347, %v355
      %v364 = vmax.f32 %v348, %v356
      %v365 = vmax.f32 %v349, %v357
      %v366 = vmax.f32 %v350, %v358
      %v367 = vmax.f32 %v351, %v359
      %v368 = vmax.f32 %v352, %v360
      %v369 = vpack.c.bf16 %v361, %v361
      %v370 = vpack.c.bf16 %v362, %v362
      %v371 = vpack.c.bf16 %v363, %v363
      %v372 = vpack.c.bf16 %v364, %v364
      %v373 = vpack.c.bf16 %v365, %v365
      %v374 = vpack.c.bf16 %v366, %v366
      %v375 = vpack.c.bf16 %v367, %v367
      %v376 = vpack.c.bf16 %v368, %v368
      %s377 = scalar_lea.vmem %s224, 128
      %v378 = vld [vmem:[%s377] sm:$0xf]
      %v379 = vld [vmem:[%s377 + $0x4] sm:$0xf]
      %v380 = vld [vmem:[%s377 + $0x8] sm:$0xf]
      %v381 = vld [vmem:[%s377 + $0xc] sm:$0xf]
      %v382 = vld [vmem:[%s377 + $0x10] sm:$0xf]
      %v383 = vld [vmem:[%s377 + $0x14] sm:$0xf]
      %v384 = vld [vmem:[%s377 + $0x18] sm:$0xf]
      %v385 = vld [vmem:[%s377 + $0x1c] sm:$0xf]
      %v386 = vunpack.c.l.bf16 %v369
      %v387 = vunpack.c.l.bf16 %v370
      %v388 = vunpack.c.l.bf16 %v371
      %v389 = vunpack.c.l.bf16 %v372
      %v390 = vunpack.c.l.bf16 %v373
      %v391 = vunpack.c.l.bf16 %v374
      %v392 = vunpack.c.l.bf16 %v375
      %v393 = vunpack.c.l.bf16 %v376
      %v394 = vunpack.c.l.bf16 %v378
      %v395 = vunpack.c.l.bf16 %v379
      %v396 = vunpack.c.l.bf16 %v380
      %v397 = vunpack.c.l.bf16 %v381
      %v398 = vunpack.c.l.bf16 %v382
      %v399 = vunpack.c.l.bf16 %v383
      %v400 = vunpack.c.l.bf16 %v384
      %v401 = vunpack.c.l.bf16 %v385
      %v402 = vmax.f32 %v386, %v394
      %v403 = vmax.f32 %v387, %v395
      %v404 = vmax.f32 %v388, %v396
      %v405 = vmax.f32 %v389, %v397
      %v406 = vmax.f32 %v390, %v398
      %v407 = vmax.f32 %v391, %v399
      %v408 = vmax.f32 %v392, %v400
      %v409 = vmax.f32 %v393, %v401
      %v410 = vpack.c.bf16 %v402, %v402
      %v411 = vpack.c.bf16 %v403, %v403
      %v412 = vpack.c.bf16 %v404, %v404
      %v413 = vpack.c.bf16 %v405, %v405
      %v414 = vpack.c.bf16 %v406, %v406
      %v415 = vpack.c.bf16 %v407, %v407
      %v416 = vpack.c.bf16 %v408, %v408
      %v417 = vpack.c.bf16 %v409, %v409
      %s418 = scalar_lea.vmem %s224, 160
      %v419 = vld [vmem:[%s418] sm:$0xf]
      %v420 = vld [vmem:[%s418 + $0x4] sm:$0xf]
      %v421 = vld [vmem:[%s418 + $0x8] sm:$0xf]
      %v422 = vld [vmem:[%s418 + $0xc] sm:$0xf]
      %v423 = vld [vmem:[%s418 + $0x10] sm:$0xf]
      %v424 = vld [vmem:[%s418 + $0x14] sm:$0xf]
      %v425 = vld [vmem:[%s418 + $0x18] sm:$0xf]
      %v426 = vld [vmem:[%s418 + $0x1c] sm:$0xf]
      %v427 = vunpack.c.l.bf16 %v410
      %v428 = vunpack.c.l.bf16 %v411
      %v429 = vunpack.c.l.bf16 %v412
      %v430 = vunpack.c.l.bf16 %v413
      %v431 = vunpack.c.l.bf16 %v414
      %v432 = vunpack.c.l.bf16 %v415
      %v433 = vunpack.c.l.bf16 %v416
      %v434 = vunpack.c.l.bf16 %v417
      %v435 = vunpack.c.l.bf16 %v419
      %v436 = vunpack.c.l.bf16 %v420
      %v437 = vunpack.c.l.bf16 %v421
      %v438 = vunpack.c.l.bf16 %v422
      %v439 = vunpack.c.l.bf16 %v423
      %v440 = vunpack.c.l.bf16 %v424
      %v441 = vunpack.c.l.bf16 %v425
      %v442 = vunpack.c.l.bf16 %v426
      %v443 = vmax.f32 %v427, %v435
      %v444 = vmax.f32 %v428, %v436
      %v445 = vmax.f32 %v429, %v437
      %v446 = vmax.f32 %v430, %v438
      %v447 = vmax.f32 %v431, %v439
      %v448 = vmax.f32 %v432, %v440
      %v449 = vmax.f32 %v433, %v441
      %v450 = vmax.f32 %v434, %v442
      %v451 = vpack.c.bf16 %v443, %v443
      %v452 = vpack.c.bf16 %v444, %v444
      %v453 = vpack.c.bf16 %v445, %v445
      %v454 = vpack.c.bf16 %v446, %v446
      %v455 = vpack.c.bf16 %v447, %v447
      %v456 = vpack.c.bf16 %v448, %v448
      %v457 = vpack.c.bf16 %v449, %v449
      %v458 = vpack.c.bf16 %v450, %v450
      %s459 = scalar_lea.vmem %s224, 192
      %v460 = vld [vmem:[%s459] sm:$0xf]
      %v461 = vld [vmem:[%s459 + $0x4] sm:$0xf]
      %v462 = vld [vmem:[%s459 + $0x8] sm:$0xf]
      %v463 = vld [vmem:[%s459 + $0xc] sm:$0xf]
      %v464 = vld [vmem:[%s459 + $0x10] sm:$0xf]
      %v465 = vld [vmem:[%s459 + $0x14] sm:$0xf]
      %v466 = vld [vmem:[%s459 + $0x18] sm:$0xf]
      %v467 = vld [vmem:[%s459 + $0x1c] sm:$0xf]
      %v468 = vunpack.c.l.bf16 %v451
      %v469 = vunpack.c.l.bf16 %v452
      %v470 = vunpack.c.l.bf16 %v453
      %v471 = vunpack.c.l.bf16 %v454
      %v472 = vunpack.c.l.bf16 %v455
      %v473 = vunpack.c.l.bf16 %v456
      %v474 = vunpack.c.l.bf16 %v457
      %v475 = vunpack.c.l.bf16 %v458
      %v476 = vunpack.c.l.bf16 %v460
      %v477 = vunpack.c.l.bf16 %v461
      %v478 = vunpack.c.l.bf16 %v462
      %v479 = vunpack.c.l.bf16 %v463
      %v480 = vunpack.c.l.bf16 %v464
      %v481 = vunpack.c.l.bf16 %v465
      %v482 = vunpack.c.l.bf16 %v466
      %v483 = vunpack.c.l.bf16 %v467
      %v484 = vmax.f32 %v468, %v476
      %v485 = vmax.f32 %v469, %v477
      %v486 = vmax.f32 %v470, %v478
      %v487 = vmax.f32 %v471, %v479
      %v488 = vmax.f32 %v472, %v480
      %v489 = vmax.f32 %v473, %v481
      %v490 = vmax.f32 %v474, %v482
      %v491 = vmax.f32 %v475, %v483
      %v492 = vpack.c.bf16 %v484, %v484
      %v493 = vpack.c.bf16 %v485, %v485
      %v494 = vpack.c.bf16 %v486, %v486
      %v495 = vpack.c.bf16 %v487, %v487
      %v496 = vpack.c.bf16 %v488, %v488
      %v497 = vpack.c.bf16 %v489, %v489
      %v498 = vpack.c.bf16 %v490, %v490
      %v499 = vpack.c.bf16 %v491, %v491
      %s500 = scalar_lea.vmem %s224, 224
      %v501 = vld [vmem:[%s500] sm:$0xf]
      %v502 = vld [vmem:[%s500 + $0x4] sm:$0xf]
      %v503 = vld [vmem:[%s500 + $0x8] sm:$0xf]
      %v504 = vld [vmem:[%s500 + $0xc] sm:$0xf]
      %v505 = vld [vmem:[%s500 + $0x10] sm:$0xf]
      %v506 = vld [vmem:[%s500 + $0x14] sm:$0xf]
      %v507 = vld [vmem:[%s500 + $0x18] sm:$0xf]
      %v508 = vld [vmem:[%s500 + $0x1c] sm:$0xf]
      %v509 = vunpack.c.l.bf16 %v492
      %v510 = vunpack.c.l.bf16 %v493
      %v511 = vunpack.c.l.bf16 %v494
      %v512 = vunpack.c.l.bf16 %v495
      %v513 = vunpack.c.l.bf16 %v496
      %v514 = vunpack.c.l.bf16 %v497
      %v515 = vunpack.c.l.bf16 %v498
      %v516 = vunpack.c.l.bf16 %v499
      %v517 = vunpack.c.l.bf16 %v501
      %v518 = vunpack.c.l.bf16 %v502
      %v519 = vunpack.c.l.bf16 %v503
      %v520 = vunpack.c.l.bf16 %v504
      %v521 = vunpack.c.l.bf16 %v505
      %v522 = vunpack.c.l.bf16 %v506
      %v523 = vunpack.c.l.bf16 %v507
      %v524 = vunpack.c.l.bf16 %v508
      %v525 = vmax.f32 %v509, %v517
      %v526 = vmax.f32 %v510, %v518
      %v527 = vmax.f32 %v511, %v519
      %v528 = vmax.f32 %v512, %v520
      %v529 = vmax.f32 %v513, %v521
      %v530 = vmax.f32 %v514, %v522
      %v531 = vmax.f32 %v515, %v523
      %v532 = vmax.f32 %v516, %v524
      %v533 = vpack.c.bf16 %v525, %v525
      %v534 = vpack.c.bf16 %v526, %v526
      %v535 = vpack.c.bf16 %v527, %v527
      %v536 = vpack.c.bf16 %v528, %v528
      %v537 = vpack.c.bf16 %v529, %v529
      %v538 = vpack.c.bf16 %v530, %v530
      %v539 = vpack.c.bf16 %v531, %v531
      %v540 = vpack.c.bf16 %v532, %v532
      %v541 = vunpack.c.l.bf16 %v533
      %v542 = vunpack.c.l.bf16 %v534
      %v543 = vunpack.c.l.bf16 %v535
      %v544 = vunpack.c.l.bf16 %v536
      %v545 = vunpack.c.l.bf16 %v537
      %v546 = vunpack.c.l.bf16 %v538
      %v547 = vunpack.c.l.bf16 %v539
      %v548 = vunpack.c.l.bf16 %v540
      %v549 = vld [vmem:[%s234] sm:$0xf]
      %v550 = vld [vmem:[%s234 + $0x4] sm:$0xf]
      %v551 = vld [vmem:[%s234 + $0x8] sm:$0xf]
      %v552 = vld [vmem:[%s234 + $0xc] sm:$0xf]
      %v553 = vld [vmem:[%s234 + $0x10] sm:$0xf]
      %v554 = vld [vmem:[%s234 + $0x14] sm:$0xf]
      %v555 = vld [vmem:[%s234 + $0x18] sm:$0xf]
      %v556 = vld [vmem:[%s234 + $0x1c] sm:$0xf]
      %v557 = vunpack.c.l.bf16 %v549
      %v558 = vunpack.c.l.bf16 %v550
      %v559 = vunpack.c.l.bf16 %v551
      %v560 = vunpack.c.l.bf16 %v552
      %v561 = vunpack.c.l.bf16 %v553
      %v562 = vunpack.c.l.bf16 %v554
      %v563 = vunpack.c.l.bf16 %v555
      %v564 = vunpack.c.l.bf16 %v556
      %v565 = vadd.f32 %v541, %v557
      %v566 = vadd.f32 %v542, %v558
      %v567 = vadd.f32 %v543, %v559
      %v568 = vadd.f32 %v544, %v560
      %v569 = vadd.f32 %v545, %v561
      %v570 = vadd.f32 %v546, %v562
      %v571 = vadd.f32 %v547, %v563
      %v572 = vadd.f32 %v548, %v564
      %v573 = vld [vmem:[%s2] sm:$0x1]
      %v575 = vperm.slane %v573, 0
      %v577 = vadd.f32 %v565, %v575
      %v578 = vadd.f32 %v566, %v575
      %v579 = vadd.f32 %v567, %v575
      %v580 = vadd.f32 %v568, %v575
      %v581 = vadd.f32 %v569, %v575
      %v582 = vadd.f32 %v570, %v575
      %v583 = vadd.f32 %v571, %v575
      %v584 = vadd.f32 %v572, %v575
      %v585 = vmul.f32 %v577, 0.2
      %v586 = vmul.f32 %v578, 0.2
      %v587 = vmul.f32 %v579, 0.2
      %v588 = vmul.f32 %v580, 0.2
      %v589 = vmul.f32 %v581, 0.2
      %v590 = vmul.f32 %v582, 0.2
      %v591 = vmul.f32 %v583, 0.2
      %v592 = vmul.f32 %v584, 0.2
      %v593 = vmax.f32 %v577, %v585
      %v594 = vmax.f32 %v578, %v586
      %v595 = vmax.f32 %v579, %v587
      %v596 = vmax.f32 %v580, %v588
      %v597 = vmax.f32 %v581, %v589
      %v598 = vmax.f32 %v582, %v590
      %v599 = vmax.f32 %v583, %v591
      %v600 = vmax.f32 %v584, %v592
      %vm601 = vcmask 523264
      %602 = vst.msk [vmem:[%s244] sm:$0xff] %vm601, %v593
      %603 = vst.msk [vmem:[%s244 + $0x8] sm:$0xff] %vm601, %v594
      %604 = vst.msk [vmem:[%s244 + $0x10] sm:$0xff] %vm601, %v595
      %605 = vst.msk [vmem:[%s244 + $0x18] sm:$0xff] %vm601, %v596
      %606 = vst.msk [vmem:[%s244 + $0x20] sm:$0xff] %vm601, %v597
      %607 = vst.msk [vmem:[%s244 + $0x28] sm:$0xff] %vm601, %v598
      %608 = vst.msk [vmem:[%s244 + $0x30] sm:$0xff] %vm601, %v599
      %609 = vst.msk [vmem:[%s244 + $0x38] sm:$0xff] %vm601, %v600
      %s610 = smul.u32 8, %s19
      %p611 = scmp.lt.s32.totalorder %s18, 1
      %s612 = scalar_select %p611, %s18, 1
      %p613 = scmp.lt.s32.totalorder %s610, 7
      %s614 = scalar_select %p613, %s610, 7
      %s615 = smul.addr %s612, 8
      %s616 = sadd.s32 %s614, %s615
      %s617 = smul.addr %s616, 8
      %s618 = scalar_lea.vmem %s3, %s617
      // Predicated region
      $region33: #{weight_binding_net_forward.9} parent=31 // pred_check
        %p619 = pneg %p123
      $region34: #{weight_binding_net_forward.9} parent=31 // pred_check_branch
        %621 = sbr.rel (%p619) target = $region36
      $region35: #{weight_binding_net_forward.9} parent=31 // pred_region
        %s622 = smul.u32 8, %s19
      $region36: #{weight_binding_net_forward.9} parent=31 // pred_fallthru
        _
    $region32: #{weight_binding_net_forward.9} parent=5 // pred_fallthru
      _
    %p623 = scmp.le.s32.totalorder 2, %s9
    // Predicated region
    $region37: #{weight_binding_net_forward.9} parent=5 // pred_check
      %p624 = pneg %p623
    $region38: #{weight_binding_net_forward.9} parent=5 // pred_check_branch
      %626 = sbr.rel (%p624) target = $region40
    $region39: #{weight_binding_net_forward.9} parent=5 // pred_region
      %s627 = ssub.s32 %s9, 2
      // Predicated region
      $region41: #{weight_binding_net_forward.9} parent=39 // pred_check
        %p628 = pneg %p129
      $region42: #{weight_binding_net_forward.9} parent=39 // pred_check_branch
        %630 = sbr.rel (%p628) target = $region44
      $region43: #{weight_binding_net_forward.9} parent=39 // pred_region
        %s631 = smul.u32 8, %s21
        %p632 = scmp.lt.s32.totalorder %s20, 1
        %s633 = scalar_select %p632, %s20, 1
        %p634 = scmp.lt.s32.totalorder %s631, 7
        %s635 = scalar_select %p634, %s631, 7
        %s636 = smul.addr %s633, 8
        %s637 = sadd.s32 %s635, %s636
        %s638 = smul.addr %s637, 8
        %s639 = scalar_lea.vmem %s3, %s638
      $region44: #{weight_binding_net_forward.9} parent=39 // pred_fallthru
        _
    $region40: #{weight_binding_net_forward.9} parent=5 // pred_fallthru
      _
  $region6: #{weight_binding_net_forward.9} parent=0 // loop_footer
    %s13 = sadd.s32 1, %s9
  $region7: #{weight_binding_net_forward.9} parent=0 // loop_footer_branch
    %8 = sbr.rel target = $region3
  $region8: #{weight_binding_net_forward.9} parent=0 // loop_exit
    _

// kernel: weight_binding_net_forward.8
$region0: #{weight_binding_net_forward.8}
  #allocation0 [shape = 'u32[]', space=smem, size = 0x4, offset = 0x4, fixed_abs, tag = 'smem constant byte address 0x4 - core index']
  #allocation1 [shape = 'u32[72,128]{1,0:T(1,128)}', space=vmem, size = 0x9000, scoped, tag = 'internal scratch']
  %s0 = inlined_call_operand.vmem [shape: bf16[128,3], index: 0, kind: input, shape index: {}]
  %s1 = inlined_call_operand.hbm [shape: bf16[3,128], index: 1, kind: input, shape index: {}]
  %s2 = inlined_call_operand.vmem [shape: bf16[128,128], index: 2, kind: output, shape index: {}]
  %s3 = sld [smem:[#allocation0]]
  $region22: #{weight_binding_net_forward.8} parent=0
    _
  %s5 = ssub.s32 1, %s3
  %s6 = scalar_select 0, %s5, %s3
  $region1: #{weight_binding_net_forward.8} parent=0
    #allocation2 [shape = 'u8[1024]{0}', space=vmem, size = 0x400, scoped, tag = 'input window, operand 1, single buffered']
    #allocation3 [shape = 's32[1]{0}', space=sflag, size = 0x4, scoped, tag = 'scoped memory for weight_binding_net_forward.8']
    %7 = vsyncpa [#allocation3], 0
    // Predicated region
    $region2: #{weight_binding_net_forward.8} parent=1 // pred_check
      _
    $region3: #{weight_binding_net_forward.8} parent=1 // pred_check_branch
      %9 = sbr.rel (0) target = $region5
    $region4: #{weight_binding_net_forward.8} parent=1 // pred_region
      _
    $region5: #{weight_binding_net_forward.8} parent=1 // pred_fallthru
      _
    // Predicated region
    $region6: #{weight_binding_net_forward.8} parent=1 // pred_check
      _
    $region7: #{weight_binding_net_forward.8} parent=1 // pred_check_branch
      %11 = sbr.rel (0) target = $region9
    $region8: #{weight_binding_net_forward.8} parent=1 // pred_region
      %13 = vsyncadd [#allocation3], 0
      %s15 = sshll.u32 %s1, 4
      %s16 = int_to_ptr.hbm [resolvable:$true] %s15
      %s17 = sshll.u32 [#allocation2], 4
      %s18 = int_to_ptr.vmem [resolvable:$true] %s17
      %20 = dma.hbm_to_vmem [thread:$0]  %s16, 32, %s18, [#allocation3]
    $region9: #{weight_binding_net_forward.8} parent=1 // pred_fallthru
      _
    // Predicated region
    $region10: #{weight_binding_net_forward.8} parent=1 // pred_check
      _
    $region11: #{weight_binding_net_forward.8} parent=1 // pred_check_branch
      %22 = sbr.rel (0) target = $region13
    $region12: #{weight_binding_net_forward.8} parent=1 // pred_region
      %24 = dma.done [#allocation3], 32
    $region13: #{weight_binding_net_forward.8} parent=1 // pred_fallthru
      _
    %v26 = vld [vmem:[%s0] sm:$0xf]
    %v27 = vld [vmem:[%s0 + $0x4] sm:$0xf]
    %v28 = vld [vmem:[%s0 + $0x8] sm:$0xf]
    %v29 = vld [vmem:[%s0 + $0xc] sm:$0xf]
    %v30 = vld [vmem:[%s0 + $0x10] sm:$0xf]
    %v31 = vld [vmem:[%s0 + $0x14] sm:$0xf]
    %v32 = vld [vmem:[%s0 + $0x18] sm:$0xf]
    %v33 = vld [vmem:[%s0 + $0x1c] sm:$0xf]
    %v34 = vld [vmem:[%s0 + $0x20] sm:$0xf]
    %v35 = vld [vmem:[%s0 + $0x24] sm:$0xf]
    %v36 = vld [vmem:[%s0 + $0x28] sm:$0xf]
    %v37 = vld [vmem:[%s0 + $0x2c] sm:$0xf]
    %v38 = vld [vmem:[%s0 + $0x30] sm:$0xf]
    %v39 = vld [vmem:[%s0 + $0x34] sm:$0xf]
    %v40 = vld [vmem:[%s0 + $0x38] sm:$0xf]
    %v41 = vld [vmem:[%s0 + $0x3c] sm:$0xf]
    %v42 = vld [vmem:[#allocation2] sm:$0x3]
    %v59 = vunpack.c.l.b16 %v26
    %v60 = vunpack.c.l.b16 %v27
    %v61 = vunpack.c.l.b16 %v28
    %v62 = vunpack.c.l.b16 %v29
    %v63 = vunpack.c.l.b16 %v30
    %v64 = vunpack.c.l.b16 %v31
    %v65 = vunpack.c.l.b16 %v32
    %v66 = vunpack.c.l.b16 %v33
    %v67 = vunpack.c.l.b16 %v34
    %v68 = vunpack.c.l.b16 %v35
    %v69 = vunpack.c.l.b16 %v36
    %v70 = vunpack.c.l.b16 %v37
    %v71 = vunpack.c.l.b16 %v38
    %v72 = vunpack.c.l.b16 %v39
    %v73 = vunpack.c.l.b16 %v40
    %v74 = vunpack.c.l.b16 %v41
    %v75 = vpack.c.b16 %v60, %v59
    %v76 = vpack.c.b16 %v62, %v61
    %v77 = vpack.c.b16 %v64, %v63
    %v78 = vpack.c.b16 %v66, %v65
    %v79 = vpack.c.b16 %v68, %v67
    %v80 = vpack.c.b16 %v70, %v69
    %v81 = vpack.c.b16 %v72, %v71
    %v82 = vpack.c.b16 %v74, %v73
    %vm83 = vcmask 23552
    %v85 = vsel %vm83, %v75, 0
    %v88 = vsel %vm83, %v76, 0
    %v91 = vsel %vm83, %v77, 0
    %v94 = vsel %vm83, %v78, 0
    %v97 = vsel %vm83, %v79, 0
    %v100 = vsel %vm83, %v80, 0
    %v103 = vsel %vm83, %v81, 0
    %v106 = vsel %vm83, %v82, 0
    %vm108 = vcmask 1040384
    %vm109 = vcmask 1041408
    %v110 = vsel %vm108, 4294967295, 65535
    %v111 = vsel %vm109, %v110, 0
    %v113 = vand.u32 %v42, %v111
    %115 = vmatpush.bf16.msra.mxu0 0
    %116 = vmatpush.bf16.msra.mxu0 0
    %117 = vmatpush.bf16.msra.mxu0 0
    %118 = vmatpush.bf16.msra.mxu0 0
    %119 = vmatpush.bf16.msra.mxu0 0
    %120 = vmatpush.bf16.msra.mxu0 0
    %121 = vmatpush.bf16.msra.mxu0 0
    %122 = vmatpush.bf16.msra.mxu0 %v113
    %123 = vmatmul.bf16.gmra.mxu0 %v85
    %v124 = vpop.f32.mrf.mxu0
    %v125 = vadd.f32 0.0, %v124
    %v126 = vpop.f32.mrf.mxu0
    %v127 = vadd.f32 0.0, %v126
    %128 = vmatmul.bf16.gmra.mxu0 %v88
    %v129 = vpop.f32.mrf.mxu0
    %v130 = vadd.f32 0.0, %v129
    %v131 = vpop.f32.mrf.mxu0
    %v132 = vadd.f32 0.0, %v131
    %133 = vmatmul.bf16.gmra.mxu0 %v91
    %v134 = vpop.f32.mrf.mxu0
    %v135 = vadd.f32 0.0, %v134
    %v136 = vpop.f32.mrf.mxu0
    %v137 = vadd.f32 0.0, %v136
    %138 = vmatmul.bf16.gmra.mxu0 %v94
    %v139 = vpop.f32.mrf.mxu0
    %v140 = vadd.f32 0.0, %v139
    %v141 = vpop.f32.mrf.mxu0
    %v142 = vadd.f32 0.0, %v141
    %143 = vmatmul.bf16.gmra.mxu0 %v97
    %v144 = vpop.f32.mrf.mxu0
    %v145 = vadd.f32 0.0, %v144
    %v146 = vpop.f32.mrf.mxu0
    %v147 = vadd.f32 0.0, %v146
    %148 = vmatmul.bf16.gmra.mxu0 %v100
    %v149 = vpop.f32.mrf.mxu0
    %v150 = vadd.f32 0.0, %v149
    %v151 = vpop.f32.mrf.mxu0
    %v152 = vadd.f32 0.0, %v151
    %153 = vmatmul.bf16.gmra.mxu0 %v103
    %v154 = vpop.f32.mrf.mxu0
    %v155 = vadd.f32 0.0, %v154
    %v156 = vpop.f32.mrf.mxu0
    %v157 = vadd.f32 0.0, %v156
    %158 = vmatmul.bf16.gmra.mxu0 %v106
    %v159 = vpop.f32.mrf.mxu0
    %v160 = vadd.f32 0.0, %v159
    %v161 = vpop.f32.mrf.mxu0
    %v162 = vadd.f32 0.0, %v161
    %163 = vdwg.mxu0
    %v164 = vpack.c.bf16 %v125, %v125
    %v165 = vpack.c.bf16 %v127, %v127
    %v166 = vpack.c.bf16 %v130, %v130
    %v167 = vpack.c.bf16 %v132, %v132
    %v168 = vpack.c.bf16 %v135, %v135
    %v169 = vpack.c.bf16 %v137, %v137
    %v170 = vpack.c.bf16 %v140, %v140
    %v171 = vpack.c.bf16 %v142, %v142
    %v172 = vpack.c.bf16 %v145, %v145
    %v173 = vpack.c.bf16 %v147, %v147
    %v174 = vpack.c.bf16 %v150, %v150
    %v175 = vpack.c.bf16 %v152, %v152
    %v176 = vpack.c.bf16 %v155, %v155
    %v177 = vpack.c.bf16 %v157, %v157
    %v178 = vpack.c.bf16 %v160, %v160
    %v179 = vpack.c.bf16 %v162, %v162
    %180 = vst [vmem:[%s2] sm:$0xf] %v164
    %181 = vst [vmem:[%s2 + $0x4] sm:$0xf] %v165
    %182 = vst [vmem:[%s2 + $0x8] sm:$0xf] %v166
    %183 = vst [vmem:[%s2 + $0xc] sm:$0xf] %v167
    %184 = vst [vmem:[%s2 + $0x10] sm:$0xf] %v168
    %185 = vst [vmem:[%s2 + $0x14] sm:$0xf] %v169
    %186 = vst [vmem:[%s2 + $0x18] sm:$0xf] %v170
    %187 = vst [vmem:[%s2 + $0x1c] sm:$0xf] %v171
    %188 = vst [vmem:[%s2 + $0x20] sm:$0xf] %v172
    %189 = vst [vmem:[%s2 + $0x24] sm:$0xf] %v173
    %190 = vst [vmem:[%s2 + $0x28] sm:$0xf] %v174
    %191 = vst [vmem:[%s2 + $0x2c] sm:$0xf] %v175
    %192 = vst [vmem:[%s2 + $0x30] sm:$0xf] %v176
    %193 = vst [vmem:[%s2 + $0x34] sm:$0xf] %v177
    %194 = vst [vmem:[%s2 + $0x38] sm:$0xf] %v178
    %195 = vst [vmem:[%s2 + $0x3c] sm:$0xf] %v179
    // Predicated region
    $region14: #{weight_binding_net_forward.8} parent=1 // pred_check
      _
    $region15: #{weight_binding_net_forward.8} parent=1 // pred_check_branch
      %197 = sbr.rel (0) target = $region17
    $region16: #{weight_binding_net_forward.8} parent=1 // pred_region
      _
    $region17: #{weight_binding_net_forward.8} parent=1 // pred_fallthru
      _
    // Predicated region
    $region18: #{weight_binding_net_forward.8} parent=1 // pred_check
      _
    $region19: #{weight_binding_net_forward.8} parent=1 // pred_check_branch
      %199 = sbr.rel (0) target = $region21
    $region20: #{weight_binding_net_forward.8} parent=1 // pred_region
      _
    $region21: #{weight_binding_net_forward.8} parent=1 // pred_fallthru
      _
    %200 = vsyncpa [#allocation3], 1

// kernel: weight_binding_net_forward.10
$region0: #{weight_binding_net_forward.10}
  #allocation0 [shape = 'u32[]', space=smem, size = 0x4, offset = 0x4, fixed_abs, tag = 'smem constant byte address 0x4 - core index']
  #allocation1 [shape = 'u32[72,128]{1,0:T(1,128)}', space=vmem, size = 0x9000, scoped, tag = 'internal scratch']
  %s0 = inlined_call_operand.vmem [shape: bf16[128,64], index: 0, kind: input, shape index: {}]
  %s1 = inlined_call_operand.vmem [shape: bf16[64,256], index: 1, kind: input, shape index: {}]
  %s2 = inlined_call_operand.vmem [shape: bf16[128,256], index: 2, kind: output, shape index: {}]
  %s3 = sld [smem:[#allocation0]]
  $region18: #{weight_binding_net_forward.10} parent=0
    _
  %s5 = ssub.s32 1, %s3
  %s6 = scalar_select 0, %s5, %s3
  // Predicated region
  $region2: #{weight_binding_net_forward.10} parent=0 // pred_check
    _
  $region3: #{weight_binding_net_forward.10} parent=0 // pred_check_branch
    %8 = sbr.rel (0) target = $region5
  $region4: #{weight_binding_net_forward.10} parent=0 // pred_region
    _
  $region5: #{weight_binding_net_forward.10} parent=0 // pred_fallthru
    _
  // Predicated region
  $region6: #{weight_binding_net_forward.10} parent=0 // pred_check
    _
  $region7: #{weight_binding_net_forward.10} parent=0 // pred_check_branch
    %10 = sbr.rel (0) target = $region9
  $region8: #{weight_binding_net_forward.10} parent=0 // pred_region
    _
  $region9: #{weight_binding_net_forward.10} parent=0 // pred_fallthru
    _
  %v12 = vld [vmem:[%s0] sm:$0xf]
  %v13 = vld [vmem:[%s0 + $0x4] sm:$0xf]
  %v14 = vld [vmem:[%s0 + $0x8] sm:$0xf]
  %v15 = vld [vmem:[%s0 + $0xc] sm:$0xf]
  %v16 = vld [vmem:[%s0 + $0x10] sm:$0xf]
  %v17 = vld [vmem:[%s0 + $0x14] sm:$0xf]
  %v18 = vld [vmem:[%s0 + $0x18] sm:$0xf]
  %v19 = vld [vmem:[%s0 + $0x1c] sm:$0xf]
  %v20 = vld [vmem:[%s0 + $0x20] sm:$0xf]
  %v21 = vld [vmem:[%s0 + $0x24] sm:$0xf]
  %v22 = vld [vmem:[%s0 + $0x28] sm:$0xf]
  %v23 = vld [vmem:[%s0 + $0x2c] sm:$0xf]
  %v24 = vld [vmem:[%s0 + $0x30] sm:$0xf]
  %v25 = vld [vmem:[%s0 + $0x34] sm:$0xf]
  %v26 = vld [vmem:[%s0 + $0x38] sm:$0xf]
  %v27 = vld [vmem:[%s0 + $0x3c] sm:$0xf]
  %v28 = vld [vmem:[%s1] sm:$0xff]
  %v29 = vld [vmem:[%s1 + $0x8] sm:$0xff]
  %v30 = vld [vmem:[%s1 + $0x10] sm:$0xff]
  %v31 = vld [vmem:[%s1 + $0x18] sm:$0xff]
  %v32 = vld [vmem:[%s1 + $0x20] sm:$0xff]
  %v33 = vld [vmem:[%s1 + $0x28] sm:$0xff]
  %v34 = vld [vmem:[%s1 + $0x30] sm:$0xff]
  %v35 = vld [vmem:[%s1 + $0x38] sm:$0xff]
  %v52 = vunpack.c.l.b16 %v12
  %v53 = vunpack.c.l.b16 %v13
  %v54 = vunpack.c.l.b16 %v14
  %v55 = vunpack.c.l.b16 %v15
  %v56 = vunpack.c.l.b16 %v16
  %v57 = vunpack.c.l.b16 %v17
  %v58 = vunpack.c.l.b16 %v18
  %v59 = vunpack.c.l.b16 %v19
  %v60 = vunpack.c.l.b16 %v20
  %v61 = vunpack.c.l.b16 %v21
  %v62 = vunpack.c.l.b16 %v22
  %v63 = vunpack.c.l.b16 %v23
  %v64 = vunpack.c.l.b16 %v24
  %v65 = vunpack.c.l.b16 %v25
  %v66 = vunpack.c.l.b16 %v26
  %v67 = vunpack.c.l.b16 %v27
  %v68 = vpack.c.b16 %v53, %v52
  %v69 = vpack.c.b16 %v55, %v54
  %v70 = vpack.c.b16 %v57, %v56
  %v71 = vpack.c.b16 %v59, %v58
  %v72 = vpack.c.b16 %v61, %v60
  %v73 = vpack.c.b16 %v63, %v62
  %v74 = vpack.c.b16 %v65, %v64
  %v75 = vpack.c.b16 %v67, %v66
  %v84 = vunpack.c.l.b16 %v28
  %v85 = vunpack.c.h.b16 %v28
  %v86 = vunpack.c.l.b16 %v29
  %v87 = vunpack.c.h.b16 %v29
  %v88 = vunpack.c.l.b16 %v30
  %v89 = vunpack.c.h.b16 %v30
  %v90 = vunpack.c.l.b16 %v31
  %v91 = vunpack.c.h.b16 %v31
  %v92 = vunpack.c.l.b16 %v32
  %v93 = vunpack.c.h.b16 %v32
  %v94 = vunpack.c.l.b16 %v33
  %v95 = vunpack.c.h.b16 %v33
  %v96 = vunpack.c.l.b16 %v34
  %v97 = vunpack.c.h.b16 %v34
  %v98 = vunpack.c.l.b16 %v35
  %v99 = vunpack.c.h.b16 %v35
  %v100 = vpack.c.b16 %v86, %v84
  %v101 = vpack.c.b16 %v87, %v85
  %v102 = vpack.c.b16 %v90, %v88
  %v103 = vpack.c.b16 %v91, %v89
  %v104 = vpack.c.b16 %v94, %v92
  %v105 = vpack.c.b16 %v95, %v93
  %v106 = vpack.c.b16 %v98, %v96
  %v107 = vpack.c.b16 %v99, %v97
  %vm116 = vcmask 523264
  %v118 = vsel %vm116, %v68, 0
  %v121 = vsel %vm116, %v69, 0
  %v124 = vsel %vm116, %v70, 0
  %v127 = vsel %vm116, %v71, 0
  %v130 = vsel %vm116, %v72, 0
  %v133 = vsel %vm116, %v73, 0
  %v136 = vsel %vm116, %v74, 0
  %v139 = vsel %vm116, %v75, 0
  %141 = vmatpush.bf16.msra.mxu0 0
  %142 = vmatpush.bf16.msra.mxu0 0
  %143 = vmatpush.bf16.msra.mxu0 0
  %144 = vmatpush.bf16.msra.mxu0 0
  %145 = vmatpush.bf16.msra.mxu0 %v106
  %146 = vmatpush.bf16.msra.mxu0 %v104
  %147 = vmatpush.bf16.msra.mxu0 %v102
  %148 = vmatpush.bf16.msra.mxu0 %v100
  %149 = vmatmul.bf16.gmra.mxu0 %v118
  %v150 = vpop.f32.mrf.mxu0
  %v151 = vadd.f32 0.0, %v150
  %v152 = vpop.f32.mrf.mxu0
  %v153 = vadd.f32 0.0, %v152
  %154 = vmatmul.bf16.gmra.mxu0 %v121
  %v155 = vpop.f32.mrf.mxu0
  %v156 = vadd.f32 0.0, %v155
  %v157 = vpop.f32.mrf.mxu0
  %v158 = vadd.f32 0.0, %v157
  %159 = vmatmul.bf16.gmra.mxu0 %v124
  %v160 = vpop.f32.mrf.mxu0
  %v161 = vadd.f32 0.0, %v160
  %v162 = vpop.f32.mrf.mxu0
  %v163 = vadd.f32 0.0, %v162
  %164 = vmatmul.bf16.gmra.mxu0 %v127
  %v165 = vpop.f32.mrf.mxu0
  %v166 = vadd.f32 0.0, %v165
  %v167 = vpop.f32.mrf.mxu0
  %v168 = vadd.f32 0.0, %v167
  %169 = vmatmul.bf16.gmra.mxu0 %v130
  %v170 = vpop.f32.mrf.mxu0
  %v171 = vadd.f32 0.0, %v170
  %v172 = vpop.f32.mrf.mxu0
  %v173 = vadd.f32 0.0, %v172
  %174 = vmatmul.bf16.gmra.mxu0 %v133
  %v175 = vpop.f32.mrf.mxu0
  %v176 = vadd.f32 0.0, %v175
  %v177 = vpop.f32.mrf.mxu0
  %v178 = vadd.f32 0.0, %v177
  %179 = vmatmul.bf16.gmra.mxu0 %v136
  %v180 = vpop.f32.mrf.mxu0
  %v181 = vadd.f32 0.0, %v180
  %v182 = vpop.f32.mrf.mxu0
  %v183 = vadd.f32 0.0, %v182
  %184 = vmatmul.bf16.gmra.mxu0 %v139
  %v185 = vpop.f32.mrf.mxu0
  %v186 = vadd.f32 0.0, %v185
  %v187 = vpop.f32.mrf.mxu0
  %v188 = vadd.f32 0.0, %v187
  %189 = vdwg.mxu0
  %190 = vmatpush.bf16.msra.mxu0 0
  %191 = vmatpush.bf16.msra.mxu0 0
  %192 = vmatpush.bf16.msra.mxu0 0
  %193 = vmatpush.bf16.msra.mxu0 0
  %194 = vmatpush.bf16.msra.mxu0 %v107
  %195 = vmatpush.bf16.msra.mxu0 %v105
  %196 = vmatpush.bf16.msra.mxu0 %v103
  %197 = vmatpush.bf16.msra.mxu0 %v101
  %198 = vmatmul.bf16.gmra.mxu0 %v118
  %v199 = vpop.f32.mrf.mxu0
  %v200 = vadd.f32 0.0, %v199
  %v201 = vpop.f32.mrf.mxu0
  %v202 = vadd.f32 0.0, %v201
  %203 = vmatmul.bf16.gmra.mxu0 %v121
  %v204 = vpop.f32.mrf.mxu0
  %v205 = vadd.f32 0.0, %v204
  %v206 = vpop.f32.mrf.mxu0
  %v207 = vadd.f32 0.0, %v206
  %208 = vmatmul.bf16.gmra.mxu0 %v124
  %v209 = vpop.f32.mrf.mxu0
  %v210 = vadd.f32 0.0, %v209
  %v211 = vpop.f32.mrf.mxu0
  %v212 = vadd.f32 0.0, %v211
  %213 = vmatmul.bf16.gmra.mxu0 %v127
  %v214 = vpop.f32.mrf.mxu0
  %v215 = vadd.f32 0.0, %v214
  %v216 = vpop.f32.mrf.mxu0
  %v217 = vadd.f32 0.0, %v216
  %218 = vmatmul.bf16.gmra.mxu0 %v130
  %v219 = vpop.f32.mrf.mxu0
  %v220 = vadd.f32 0.0, %v219
  %v221 = vpop.f32.mrf.mxu0
  %v222 = vadd.f32 0.0, %v221
  %223 = vmatmul.bf16.gmra.mxu0 %v133
  %v224 = vpop.f32.mrf.mxu0
  %v225 = vadd.f32 0.0, %v224
  %v226 = vpop.f32.mrf.mxu0
  %v227 = vadd.f32 0.0, %v226
  %228 = vmatmul.bf16.gmra.mxu0 %v136
  %v229 = vpop.f32.mrf.mxu0
  %v230 = vadd.f32 0.0, %v229
  %v231 = vpop.f32.mrf.mxu0
  %v232 = vadd.f32 0.0, %v231
  %233 = vmatmul.bf16.gmra.mxu0 %v139
  %v234 = vpop.f32.mrf.mxu0
  %v235 = vadd.f32 0.0, %v234
  %v236 = vpop.f32.mrf.mxu0
  %v237 = vadd.f32 0.0, %v236
  %238 = vdwg.mxu0
  %v239 = vpack.c.bf16 %v200, %v151
  %v240 = vpack.c.bf16 %v202, %v153
  %v241 = vpack.c.bf16 %v205, %v156
  %v242 = vpack.c.bf16 %v207, %v158
  %v243 = vpack.c.bf16 %v210, %v161
  %v244 = vpack.c.bf16 %v212, %v163
  %v245 = vpack.c.bf16 %v215, %v166
  %v246 = vpack.c.bf16 %v217, %v168
  %v247 = vpack.c.bf16 %v220, %v171
  %v248 = vpack.c.bf16 %v222, %v173
  %v249 = vpack.c.bf16 %v225, %v176
  %v250 = vpack.c.bf16 %v227, %v178
  %v251 = vpack.c.bf16 %v230, %v181
  %v252 = vpack.c.bf16 %v232, %v183
  %v253 = vpack.c.bf16 %v235, %v186
  %v254 = vpack.c.bf16 %v237, %v188
  %255 = vst [vmem:[%s2] sm:$0xff] %v239
  %256 = vst [vmem:[%s2 + $0x8] sm:$0xff] %v240
  %257 = vst [vmem:[%s2 + $0x10] sm:$0xff] %v241
  %258 = vst [vmem:[%s2 + $0x18] sm:$0xff] %v242
  %259 = vst [vmem:[%s2 + $0x20] sm:$0xff] %v243
  %260 = vst [vmem:[%s2 + $0x28] sm:$0xff] %v244
  %261 = vst [vmem:[%s2 + $0x30] sm:$0xff] %v245
  %262 = vst [vmem:[%s2 + $0x38] sm:$0xff] %v246
  %263 = vst [vmem:[%s2 + $0x40] sm:$0xff] %v247
  %264 = vst [vmem:[%s2 + $0x48] sm:$0xff] %v248
  %265 = vst [vmem:[%s2 + $0x50] sm:$0xff] %v249
  %266 = vst [vmem:[%s2 + $0x58] sm:$0xff] %v250
  %267 = vst [vmem:[%s2 + $0x60] sm:$0xff] %v251
  %268 = vst [vmem:[%s2 + $0x68] sm:$0xff] %v252
  %269 = vst [vmem:[%s2 + $0x70] sm:$0xff] %v253
  %270 = vst [vmem:[%s2 + $0x78] sm:$0xff] %v254
  // Predicated region
  $region10: #{weight_binding_net_forward.10} parent=0 // pred_check
    _
  $region11: #{weight_binding_net_forward.10} parent=0 // pred_check_branch
    %272 = sbr.rel (0) target = $region13
  $region12: #{weight_binding_net_forward.10} parent=0 // pred_region
    _
  $region13: #{weight_binding_net_forward.10} parent=0 // pred_fallthru
    _
  // Predicated region
  $region14: #{weight_binding_net_forward.10} parent=0 // pred_check
    _
  $region15: #{weight_binding_net_forward.10} parent=0 // pred_check_branch
    %274 = sbr.rel (0) target = $region17
  $region16: #{weight_binding_net_forward.10} parent=0 // pred_region
    _
  $region17: #{weight_binding_net_forward.10} parent=0 // pred_fallthru
    _

// kernel: weight_binding_net_forward.11
$region0: #{weight_binding_net_forward.11}
  #allocation0 [shape = 'u32[]', space=smem, size = 0x4, offset = 0x4, fixed_abs, tag = 'smem constant byte address 0x4 - core index']
  #allocation1 [shape = 'u32[72,128]{1,0:T(1,128)}', space=vmem, size = 0x9000, scoped, tag = 'internal scratch']
  %s0 = inlined_call_operand.vmem [shape: bf16[2,8,64,128], index: 0, kind: input, shape index: {}]
  %s1 = inlined_call_operand.vmem [shape: bf16[2,64,128], index: 1, kind: input, shape index: {}]
  %s2 = inlined_call_operand.vmem [shape: f32[1,128], index: 2, kind: input, shape index: {}]
  %s3 = inlined_call_operand.vmem [shape: f32[2,64,128], index: 3, kind: output, shape index: {}]
  %s4 = sld [smem:[#allocation0]]
  $region45: #{weight_binding_net_forward.11} parent=0
    _
  %s6 = ssub.s32 1, %s4
  %s7 = scalar_select 0, %s6, %s4
  loop: start=0, step=1, limit=4
  $region2: #{weight_binding_net_forward.11} parent=0 // loop_pre_header
    _
  $region3: #{weight_binding_net_forward.11} parent=0 // loop_header
    %s9 = sphi 0, %s13
    %p10 = scmp.ge.s32.totalorder %s9, 4
    %s16 = sphi 0, %s28
    %s17 = sphi 0, %s24
    %s18 = sphi 0, %s16
    %s19 = sphi 0, %s17
    %s20 = sphi 0, %s18
    %s21 = sphi 0, %s19
    %s33 = sphi 0, %s35
    %s36 = sphi 0, %s33
    %s37 = sphi 0, %s36
    %s53 = sphi 0, %s37
    %s61 = sphi 0, %s63
    %s64 = sphi 0, %s61
    %s65 = sphi 0, %s64
    %s81 = sphi 0, %s65
    %s85 = sphi 0, %s85
    %s87 = sphi 0, %s85
    %s88 = sphi 0, %s87
    %s102 = sphi 0, %s88
    %s110 = sphi 0, %s112
    %s113 = sphi 0, %s110
    %s114 = sphi 0, %s113
    %s130 = sphi 0, %s114
  $region4: #{weight_binding_net_forward.11} parent=0 // loop_header_branch
    %12 = sbr.rel (%p10) target = $region8
  $region5: #{weight_binding_net_forward.11} parent=0 // loop_body
    %s14 = ssub.s32 %s9, 1
    %s15 = ssub.s32 %s9, 2
    %s22 = sadd.s32 1, %s17
    %p23 = scmp.ge.s32.totalorder %s22, 1
    %s24 = scalar_select %p23, 0, %s22
    %s25 = sadd.s32 1, %s16
    %s26 = scalar_select %p23, %s25, %s16
    %p27 = scmp.ge.s32.totalorder %s26, 2
    %s28 = scalar_select %p27, 0, %s26
    %s29 = ssub.s32 %s16, %s28
    %s30 = ssub.s32 %s17, %s24
    %s31 = sor.u32 %s29, %s30
    %p32 = scmp.eq.s32.totalorder %s31, 0
    %s34 = sadd.s32 %s33, 1
    %s35 = scalar_select %p32, %s33, %s34
    %p38 = pneg %p32
    %p39 = scmp.eq.s32.totalorder %s9, 1
    %p40 = por %p38, %p39
    %p41 = scmp.ne.s32.totalorder %s33, %s36
    %p42 = scmp.eq.s32.totalorder %s9, 0
    %p43 = por %p41, %p42
    %p44 = scmp.ne.s32.totalorder %s33, %s36
    %p45 = scmp.eq.s32.totalorder %s14, 1
    %p46 = por %p44, %p45
    %p47 = scmp.ne.s32.totalorder %s36, %s37
    %p48 = scmp.eq.s32.totalorder %s14, 0
    %p49 = por %p47, %p48
    %p50 = scmp.ne.s32.totalorder %s36, %s37
    %p51 = scmp.eq.s32.totalorder %s15, 1
    %p52 = por %p50, %p51
    %p54 = scmp.ne.s32.totalorder %s37, %s53
    %p55 = scmp.eq.s32.totalorder %s15, 0
    %p56 = por %p54, %p55
    %s57 = ssub.s32 %s16, %s28
    %s58 = ssub.s32 %s17, %s24
    %s59 = sor.u32 %s57, %s58
    %p60 = scmp.eq.s32.totalorder %s59, 0
    %s62 = sadd.s32 %s61, 1
    %s63 = scalar_select %p60, %s61, %s62
    %p66 = pneg %p60
    %p67 = scmp.eq.s32.totalorder %s9, 1
    %p68 = por %p66, %p67
    %p69 = scmp.ne.s32.totalorder %s61, %s64
    %p70 = scmp.eq.s32.totalorder %s9, 0
    %p71 = por %p69, %p70
    %p72 = scmp.ne.s32.totalorder %s61, %s64
    %p73 = scmp.eq.s32.totalorder %s14, 1
    %p74 = por %p72, %p73
    %p75 = scmp.ne.s32.totalorder %s64, %s65
    %p76 = scmp.eq.s32.totalorder %s14, 0
    %p77 = por %p75, %p76
    %p78 = scmp.ne.s32.totalorder %s64, %s65
    %p79 = scmp.eq.s32.totalorder %s15, 1
    %p80 = por %p78, %p79
    %p82 = scmp.ne.s32.totalorder %s65, %s81
    %p83 = scmp.eq.s32.totalorder %s15, 0
    %p84 = por %p82, %p83
    %s86 = sadd.s32 %s85, 1
    %p89 = scmp.eq.s32.totalorder %s9, 1
    %p90 = scmp.ne.s32.totalorder %s85, %s87
    %p91 = scmp.eq.s32.totalorder %s9, 0
    %p92 = por %p90, %p91
    %p93 = scmp.ne.s32.totalorder %s85, %s87
    %p94 = scmp.eq.s32.totalorder %s14, 1
    %p95 = por %p93, %p94
    %p96 = scmp.ne.s32.totalorder %s87, %s88
    %p97 = scmp.eq.s32.totalorder %s14, 0
    %p98 = por %p96, %p97
    %p99 = scmp.ne.s32.totalorder %s87, %s88
    %p100 = scmp.eq.s32.totalorder %s15, 1
    %p101 = por %p99, %p100
    %p103 = scmp.ne.s32.totalorder %s88, %s102
    %p104 = scmp.eq.s32.totalorder %s15, 0
    %p105 = por %p103, %p104
    %s106 = ssub.s32 %s16, %s28
    %s107 = ssub.s32 %s17, %s24
    %s108 = sor.u32 %s106, %s107
    %p109 = scmp.eq.s32.totalorder %s108, 0
    %s111 = sadd.s32 %s110, 1
    %s112 = scalar_select %p109, %s110, %s111
    %p115 = pneg %p109
    %p116 = scmp.eq.s32.totalorder %s9, 1
    %p117 = por %p115, %p116
    %p118 = scmp.ne.s32.totalorder %s110, %s113
    %p119 = scmp.eq.s32.totalorder %s9, 0
    %p120 = por %p118, %p119
    %p121 = scmp.ne.s32.totalorder %s110, %s113
    %p122 = scmp.eq.s32.totalorder %s14, 1
    %p123 = por %p121, %p122
    %p124 = scmp.ne.s32.totalorder %s113, %s114
    %p125 = scmp.eq.s32.totalorder %s14, 0
    %p126 = por %p124, %p125
    %p127 = scmp.ne.s32.totalorder %s113, %s114
    %p128 = scmp.eq.s32.totalorder %s15, 1
    %p129 = por %p127, %p128
    %p131 = scmp.ne.s32.totalorder %s114, %s130
    %p132 = scmp.eq.s32.totalorder %s15, 0
    %p133 = por %p131, %p132
    %p134 = scmp.le.s32.totalorder 1, %s9
    %p135 = scmp.lt.s32.totalorder %s9, 3
    %p136 = pnand %p134, %p135
    %p137 = pneg %p136
    // Predicated region
    $region9: #{weight_binding_net_forward.11} parent=5 // pred_check
      _
    $region10: #{weight_binding_net_forward.11} parent=5 // pred_check_branch
      %139 = sbr.rel (%p136) target = $region12
    $region11: #{weight_binding_net_forward.11} parent=5 // pred_region
      %s140 = ssub.s32 %s9, 1
      // Predicated region
      $region13: #{weight_binding_net_forward.11} parent=11 // pred_check
        %p141 = pneg %p98
      $region14: #{weight_binding_net_forward.11} parent=11 // pred_check_branch
        %143 = sbr.rel (%p141) target = $region16
      $region15: #{weight_binding_net_forward.11} parent=11 // pred_region
        _
      $region16: #{weight_binding_net_forward.11} parent=11 // pred_fallthru
        _
    $region12: #{weight_binding_net_forward.11} parent=5 // pred_fallthru
      _
    %p144 = scmp.lt.s32.totalorder %s9, 2
    // Predicated region
    $region17: #{weight_binding_net_forward.11} parent=5 // pred_check
      %p145 = pneg %p144
    $region18: #{weight_binding_net_forward.11} parent=5 // pred_check_branch
      %147 = sbr.rel (%p145) target = $region20
    $region19: #{weight_binding_net_forward.11} parent=5 // pred_region
      // Predicated region
      $region21: #{weight_binding_net_forward.11} parent=19 // pred_check
        %p148 = pneg %p43
      $region22: #{weight_binding_net_forward.11} parent=19 // pred_check_branch
        %150 = sbr.rel (%p148) target = $region24
      $region23: #{weight_binding_net_forward.11} parent=19 // pred_region
        %s151 = smul.u32 8, %s17
        %p152 = scmp.lt.s32.totalorder %s16, 1
        %s153 = scalar_select %p152, %s16, 1
        %p154 = scmp.lt.s32.totalorder %s151, 7
        %s155 = scalar_select %p154, %s151, 7
        %s156 = smul.addr %s153, 64
        %s157 = sadd.s32 %s155, %s156
        %s158 = smul.addr %s157, 4
        %s159 = scalar_lea.vmem %s0, %s158
        %s160 = smul.u32 8, %s17
      $region24: #{weight_binding_net_forward.11} parent=19 // pred_fallthru
        _
      // Predicated region
      $region25: #{weight_binding_net_forward.11} parent=19 // pred_check
        %p161 = pneg %p71
      $region26: #{weight_binding_net_forward.11} parent=19 // pred_check_branch
        %163 = sbr.rel (%p161) target = $region28
      $region27: #{weight_binding_net_forward.11} parent=19 // pred_region
        %s164 = smul.u32 8, %s17
        %p165 = scmp.lt.s32.totalorder %s16, 1
        %s166 = scalar_select %p165, %s16, 1
        %p167 = scmp.lt.s32.totalorder %s164, 7
        %s168 = scalar_select %p167, %s164, 7
        %s169 = smul.addr %s166, 8
        %s170 = sadd.s32 %s168, %s169
        %s171 = smul.addr %s170, 4
        %s172 = scalar_lea.vmem %s1, %s171
        %s173 = smul.u32 8, %s17
      $region28: #{weight_binding_net_forward.11} parent=19 // pred_fallthru
        _
    $region20: #{weight_binding_net_forward.11} parent=5 // pred_fallthru
      _
    %p174 = scmp.le.s32.totalorder 1, %s9
    %p175 = scmp.lt.s32.totalorder %s9, 3
    %p176 = pnand %p174, %p175
    %p177 = pneg %p176
    // Predicated region
    $region29: #{weight_binding_net_forward.11} parent=5 // pred_check
      _
    $region30: #{weight_binding_net_forward.11} parent=5 // pred_check_branch
      %179 = sbr.rel (%p176) target = $region32
    $region31: #{weight_binding_net_forward.11} parent=5 // pred_region
      %s180 = ssub.s32 %s9, 1
      %s181 = smul.u32 8, %s19
      %p182 = scmp.lt.s32.totalorder %s18, 1
      %s183 = scalar_select %p182, %s18, 1
      %p184 = scmp.lt.s32.totalorder %s181, 7
      %s185 = scalar_select %p184, %s181, 7
      %s186 = smul.addr %s183, 64
      %s187 = sadd.s32 %s185, %s186
      %s188 = smul.addr %s187, 4
      %s189 = scalar_lea.vmem %s0, %s188
      %p190 = pneg %p49
      %p191 = pneg %p46
      %s192 = smul.u32 8, %s19
      %p193 = scmp.lt.s32.totalorder %s18, 1
      %s194 = scalar_select %p193, %s18, 1
      %p195 = scmp.lt.s32.totalorder %s192, 7
      %s196 = scalar_select %p195, %s192, 7
      %s197 = smul.addr %s194, 8
      %s198 = sadd.s32 %s196, %s197
      %s199 = smul.addr %s198, 4
      %s200 = scalar_lea.vmem %s1, %s199
      %p201 = pneg %p77
      %p202 = pneg %p74
      %p203 = pneg %p98
      %p204 = pneg %p95
      %p205 = pneg %p126
      %p206 = pneg %p123
      %s207 = smul.u32 8, %s19
      %p208 = scmp.lt.s32.totalorder %s18, 1
      %s209 = scalar_select %p208, %s18, 1
      %p210 = scmp.lt.s32.totalorder %s207, 7
      %s211 = scalar_select %p210, %s207, 7
      %s212 = smul.addr %s209, 8
      %s213 = sadd.s32 %s211, %s212
      %s214 = smul.addr %s213, 8
      %s215 = scalar_lea.vmem %s3, %s214
      %s216 = smul.u32 8, %s19
      %p217 = scmp.lt.s32.totalorder %s18, 1
      %s218 = scalar_select %p217, %s18, 1
      %p219 = scmp.lt.s32.totalorder %s216, 7
      %s220 = scalar_select %p219, %s216, 7
      %s221 = smul.addr %s218, 64
      %s222 = sadd.s32 %s220, %s221
      %s223 = smul.addr %s222, 4
      %s224 = scalar_lea.vmem %s0, %s223
      %s225 = smul.u32 8, %s19
      %s226 = smul.u32 8, %s19
      %p227 = scmp.lt.s32.totalorder %s18, 1
      %s228 = scalar_select %p227, %s18, 1
      %p229 = scmp.lt.s32.totalorder %s226, 7
      %s230 = scalar_select %p229, %s226, 7
      %s231 = smul.addr %s228, 8
      %s232 = sadd.s32 %s230, %s231
      %s233 = smul.addr %s232, 4
      %s234 = scalar_lea.vmem %s1, %s233
      %s235 = smul.u32 8, %s19
      %s236 = smul.u32 8, %s19
      %p237 = scmp.lt.s32.totalorder %s18, 1
      %s238 = scalar_select %p237, %s18, 1
      %p239 = scmp.lt.s32.totalorder %s236, 7
      %s240 = scalar_select %p239, %s236, 7
      %s241 = smul.addr %s238, 8
      %s242 = sadd.s32 %s240, %s241
      %s243 = smul.addr %s242, 8
      %s244 = scalar_lea.vmem %s3, %s243
      %s245 = smul.u32 8, %s19
      %v246 = vld [vmem:[%s224] sm:$0xf]
      %v247 = vld [vmem:[%s224 + $0x4] sm:$0xf]
      %v248 = vld [vmem:[%s224 + $0x8] sm:$0xf]
      %v249 = vld [vmem:[%s224 + $0xc] sm:$0xf]
      %v250 = vld [vmem:[%s224 + $0x10] sm:$0xf]
      %v251 = vld [vmem:[%s224 + $0x14] sm:$0xf]
      %v252 = vld [vmem:[%s224 + $0x18] sm:$0xf]
      %v253 = vld [vmem:[%s224 + $0x1c] sm:$0xf]
      %s254 = scalar_lea.vmem %s224, 32
      %v255 = vld [vmem:[%s254] sm:$0xf]
      %v256 = vld [vmem:[%s254 + $0x4] sm:$0xf]
      %v257 = vld [vmem:[%s254 + $0x8] sm:$0xf]
      %v258 = vld [vmem:[%s254 + $0xc] sm:$0xf]
      %v259 = vld [vmem:[%s254 + $0x10] sm:$0xf]
      %v260 = vld [vmem:[%s254 + $0x14] sm:$0xf]
      %v261 = vld [vmem:[%s254 + $0x18] sm:$0xf]
      %v262 = vld [vmem:[%s254 + $0x1c] sm:$0xf]
      %v263 = vunpack.c.l.bf16 %v246
      %v264 = vunpack.c.l.bf16 %v247
      %v265 = vunpack.c.l.bf16 %v248
      %v266 = vunpack.c.l.bf16 %v249
      %v267 = vunpack.c.l.bf16 %v250
      %v268 = vunpack.c.l.bf16 %v251
      %v269 = vunpack.c.l.bf16 %v252
      %v270 = vunpack.c.l.bf16 %v253
      %v271 = vunpack.c.l.bf16 %v255
      %v272 = vunpack.c.l.bf16 %v256
      %v273 = vunpack.c.l.bf16 %v257
      %v274 = vunpack.c.l.bf16 %v258
      %v275 = vunpack.c.l.bf16 %v259
      %v276 = vunpack.c.l.bf16 %v260
      %v277 = vunpack.c.l.bf16 %v261
      %v278 = vunpack.c.l.bf16 %v262
      %v279 = vmax.f32 %v263, %v271
      %v280 = vmax.f32 %v264, %v272
      %v281 = vmax.f32 %v265, %v273
      %v282 = vmax.f32 %v266, %v274
      %v283 = vmax.f32 %v267, %v275
      %v284 = vmax.f32 %v268, %v276
      %v285 = vmax.f32 %v269, %v277
      %v286 = vmax.f32 %v270, %v278
      %v287 = vpack.c.bf16 %v279, %v279
      %v288 = vpack.c.bf16 %v280, %v280
      %v289 = vpack.c.bf16 %v281, %v281
      %v290 = vpack.c.bf16 %v282, %v282
      %v291 = vpack.c.bf16 %v283, %v283
      %v292 = vpack.c.bf16 %v284, %v284
      %v293 = vpack.c.bf16 %v285, %v285
      %v294 = vpack.c.bf16 %v286, %v286
      %s295 = scalar_lea.vmem %s224, 64
      %v296 = vld [vmem:[%s295] sm:$0xf]
      %v297 = vld [vmem:[%s295 + $0x4] sm:$0xf]
      %v298 = vld [vmem:[%s295 + $0x8] sm:$0xf]
      %v299 = vld [vmem:[%s295 + $0xc] sm:$0xf]
      %v300 = vld [vmem:[%s295 + $0x10] sm:$0xf]
      %v301 = vld [vmem:[%s295 + $0x14] sm:$0xf]
      %v302 = vld [vmem:[%s295 + $0x18] sm:$0xf]
      %v303 = vld [vmem:[%s295 + $0x1c] sm:$0xf]
      %v304 = vunpack.c.l.bf16 %v287
      %v305 = vunpack.c.l.bf16 %v288
      %v306 = vunpack.c.l.bf16 %v289
      %v307 = vunpack.c.l.bf16 %v290
      %v308 = vunpack.c.l.bf16 %v291
      %v309 = vunpack.c.l.bf16 %v292
      %v310 = vunpack.c.l.bf16 %v293
      %v311 = vunpack.c.l.bf16 %v294
      %v312 = vunpack.c.l.bf16 %v296
      %v313 = vunpack.c.l.bf16 %v297
      %v314 = vunpack.c.l.bf16 %v298
      %v315 = vunpack.c.l.bf16 %v299
      %v316 = vunpack.c.l.bf16 %v300
      %v317 = vunpack.c.l.bf16 %v301
      %v318 = vunpack.c.l.bf16 %v302
      %v319 = vunpack.c.l.bf16 %v303
      %v320 = vmax.f32 %v304, %v312
      %v321 = vmax.f32 %v305, %v313
      %v322 = vmax.f32 %v306, %v314
      %v323 = vmax.f32 %v307, %v315
      %v324 = vmax.f32 %v308, %v316
      %v325 = vmax.f32 %v309, %v317
      %v326 = vmax.f32 %v310, %v318
      %v327 = vmax.f32 %v311, %v319
      %v328 = vpack.c.bf16 %v320, %v320
      %v329 = vpack.c.bf16 %v321, %v321
      %v330 = vpack.c.bf16 %v322, %v322
      %v331 = vpack.c.bf16 %v323, %v323
      %v332 = vpack.c.bf16 %v324, %v324
      %v333 = vpack.c.bf16 %v325, %v325
      %v334 = vpack.c.bf16 %v326, %v326
      %v335 = vpack.c.bf16 %v327, %v327
      %s336 = scalar_lea.vmem %s224, 96
      %v337 = vld [vmem:[%s336] sm:$0xf]
      %v338 = vld [vmem:[%s336 + $0x4] sm:$0xf]
      %v339 = vld [vmem:[%s336 + $0x8] sm:$0xf]
      %v340 = vld [vmem:[%s336 + $0xc] sm:$0xf]
      %v341 = vld [vmem:[%s336 + $0x10] sm:$0xf]
      %v342 = vld [vmem:[%s336 + $0x14] sm:$0xf]
      %v343 = vld [vmem:[%s336 + $0x18] sm:$0xf]
      %v344 = vld [vmem:[%s336 + $0x1c] sm:$0xf]
      %v345 = vunpack.c.l.bf16 %v328
      %v346 = vunpack.c.l.bf16 %v329
      %v347 = vunpack.c.l.bf16 %v330
      %v348 = vunpack.c.l.bf16 %v331
      %v349 = vunpack.c.l.bf16 %v332
      %v350 = vunpack.c.l.bf16 %v333
      %v351 = vunpack.c.l.bf16 %v334
      %v352 = vunpack.c.l.bf16 %v335
      %v353 = vunpack.c.l.bf16 %v337
      %v354 = vunpack.c.l.bf16 %v338
      %v355 = vunpack.c.l.bf16 %v339
      %v356 = vunpack.c.l.bf16 %v340
      %v357 = vunpack.c.l.bf16 %v341
      %v358 = vunpack.c.l.bf16 %v342
      %v359 = vunpack.c.l.bf16 %v343
      %v360 = vunpack.c.l.bf16 %v344
      %v361 = vmax.f32 %v345, %v353
      %v362 = vmax.f32 %v346, %v354
      %v363 = vmax.f32 %v347, %v355
      %v364 = vmax.f32 %v348, %v356
      %v365 = vmax.f32 %v349, %v357
      %v366 = vmax.f32 %v350, %v358
      %v367 = vmax.f32 %v351, %v359
      %v368 = vmax.f32 %v352, %v360
      %v369 = vpack.c.bf16 %v361, %v361
      %v370 = vpack.c.bf16 %v362, %v362
      %v371 = vpack.c.bf16 %v363, %v363
      %v372 = vpack.c.bf16 %v364, %v364
      %v373 = vpack.c.bf16 %v365, %v365
      %v374 = vpack.c.bf16 %v366, %v366
      %v375 = vpack.c.bf16 %v367, %v367
      %v376 = vpack.c.bf16 %v368, %v368
      %s377 = scalar_lea.vmem %s224, 128
      %v378 = vld [vmem:[%s377] sm:$0xf]
      %v379 = vld [vmem:[%s377 + $0x4] sm:$0xf]
      %v380 = vld [vmem:[%s377 + $0x8] sm:$0xf]
      %v381 = vld [vmem:[%s377 + $0xc] sm:$0xf]
      %v382 = vld [vmem:[%s377 + $0x10] sm:$0xf]
      %v383 = vld [vmem:[%s377 + $0x14] sm:$0xf]
      %v384 = vld [vmem:[%s377 + $0x18] sm:$0xf]
      %v385 = vld [vmem:[%s377 + $0x1c] sm:$0xf]
      %v386 = vunpack.c.l.bf16 %v369
      %v387 = vunpack.c.l.bf16 %v370
      %v388 = vunpack.c.l.bf16 %v371
      %v389 = vunpack.c.l.bf16 %v372
      %v390 = vunpack.c.l.bf16 %v373
      %v391 = vunpack.c.l.bf16 %v374
      %v392 = vunpack.c.l.bf16 %v375
      %v393 = vunpack.c.l.bf16 %v376
      %v394 = vunpack.c.l.bf16 %v378
      %v395 = vunpack.c.l.bf16 %v379
      %v396 = vunpack.c.l.bf16 %v380
      %v397 = vunpack.c.l.bf16 %v381
      %v398 = vunpack.c.l.bf16 %v382
      %v399 = vunpack.c.l.bf16 %v383
      %v400 = vunpack.c.l.bf16 %v384
      %v401 = vunpack.c.l.bf16 %v385
      %v402 = vmax.f32 %v386, %v394
      %v403 = vmax.f32 %v387, %v395
      %v404 = vmax.f32 %v388, %v396
      %v405 = vmax.f32 %v389, %v397
      %v406 = vmax.f32 %v390, %v398
      %v407 = vmax.f32 %v391, %v399
      %v408 = vmax.f32 %v392, %v400
      %v409 = vmax.f32 %v393, %v401
      %v410 = vpack.c.bf16 %v402, %v402
      %v411 = vpack.c.bf16 %v403, %v403
      %v412 = vpack.c.bf16 %v404, %v404
      %v413 = vpack.c.bf16 %v405, %v405
      %v414 = vpack.c.bf16 %v406, %v406
      %v415 = vpack.c.bf16 %v407, %v407
      %v416 = vpack.c.bf16 %v408, %v408
      %v417 = vpack.c.bf16 %v409, %v409
      %s418 = scalar_lea.vmem %s224, 160
      %v419 = vld [vmem:[%s418] sm:$0xf]
      %v420 = vld [vmem:[%s418 + $0x4] sm:$0xf]
      %v421 = vld [vmem:[%s418 + $0x8] sm:$0xf]
      %v422 = vld [vmem:[%s418 + $0xc] sm:$0xf]
      %v423 = vld [vmem:[%s418 + $0x10] sm:$0xf]
      %v424 = vld [vmem:[%s418 + $0x14] sm:$0xf]
      %v425 = vld [vmem:[%s418 + $0x18] sm:$0xf]
      %v426 = vld [vmem:[%s418 + $0x1c] sm:$0xf]
      %v427 = vunpack.c.l.bf16 %v410
      %v428 = vunpack.c.l.bf16 %v411
      %v429 = vunpack.c.l.bf16 %v412
      %v430 = vunpack.c.l.bf16 %v413
      %v431 = vunpack.c.l.bf16 %v414
      %v432 = vunpack.c.l.bf16 %v415
      %v433 = vunpack.c.l.bf16 %v416
      %v434 = vunpack.c.l.bf16 %v417
      %v435 = vunpack.c.l.bf16 %v419
      %v436 = vunpack.c.l.bf16 %v420
      %v437 = vunpack.c.l.bf16 %v421
      %v438 = vunpack.c.l.bf16 %v422
      %v439 = vunpack.c.l.bf16 %v423
      %v440 = vunpack.c.l.bf16 %v424
      %v441 = vunpack.c.l.bf16 %v425
      %v442 = vunpack.c.l.bf16 %v426
      %v443 = vmax.f32 %v427, %v435
      %v444 = vmax.f32 %v428, %v436
      %v445 = vmax.f32 %v429, %v437
      %v446 = vmax.f32 %v430, %v438
      %v447 = vmax.f32 %v431, %v439
      %v448 = vmax.f32 %v432, %v440
      %v449 = vmax.f32 %v433, %v441
      %v450 = vmax.f32 %v434, %v442
      %v451 = vpack.c.bf16 %v443, %v443
      %v452 = vpack.c.bf16 %v444, %v444
      %v453 = vpack.c.bf16 %v445, %v445
      %v454 = vpack.c.bf16 %v446, %v446
      %v455 = vpack.c.bf16 %v447, %v447
      %v456 = vpack.c.bf16 %v448, %v448
      %v457 = vpack.c.bf16 %v449, %v449
      %v458 = vpack.c.bf16 %v450, %v450
      %s459 = scalar_lea.vmem %s224, 192
      %v460 = vld [vmem:[%s459] sm:$0xf]
      %v461 = vld [vmem:[%s459 + $0x4] sm:$0xf]
      %v462 = vld [vmem:[%s459 + $0x8] sm:$0xf]
      %v463 = vld [vmem:[%s459 + $0xc] sm:$0xf]
      %v464 = vld [vmem:[%s459 + $0x10] sm:$0xf]
      %v465 = vld [vmem:[%s459 + $0x14] sm:$0xf]
      %v466 = vld [vmem:[%s459 + $0x18] sm:$0xf]
      %v467 = vld [vmem:[%s459 + $0x1c] sm:$0xf]
      %v468 = vunpack.c.l.bf16 %v451
      %v469 = vunpack.c.l.bf16 %v452
      %v470 = vunpack.c.l.bf16 %v453
      %v471 = vunpack.c.l.bf16 %v454
      %v472 = vunpack.c.l.bf16 %v455
      %v473 = vunpack.c.l.bf16 %v456
      %v474 = vunpack.c.l.bf16 %v457
      %v475 = vunpack.c.l.bf16 %v458
      %v476 = vunpack.c.l.bf16 %v460
      %v477 = vunpack.c.l.bf16 %v461
      %v478 = vunpack.c.l.bf16 %v462
      %v479 = vunpack.c.l.bf16 %v463
      %v480 = vunpack.c.l.bf16 %v464
      %v481 = vunpack.c.l.bf16 %v465
      %v482 = vunpack.c.l.bf16 %v466
      %v483 = vunpack.c.l.bf16 %v467
      %v484 = vmax.f32 %v468, %v476
      %v485 = vmax.f32 %v469, %v477
      %v486 = vmax.f32 %v470, %v478
      %v487 = vmax.f32 %v471, %v479
      %v488 = vmax.f32 %v472, %v480
      %v489 = vmax.f32 %v473, %v481
      %v490 = vmax.f32 %v474, %v482
      %v491 = vmax.f32 %v475, %v483
      %v492 = vpack.c.bf16 %v484, %v484
      %v493 = vpack.c.bf16 %v485, %v485
      %v494 = vpack.c.bf16 %v486, %v486
      %v495 = vpack.c.bf16 %v487, %v487
      %v496 = vpack.c.bf16 %v488, %v488
      %v497 = vpack.c.bf16 %v489, %v489
      %v498 = vpack.c.bf16 %v490, %v490
      %v499 = vpack.c.bf16 %v491, %v491
      %s500 = scalar_lea.vmem %s224, 224
      %v501 = vld [vmem:[%s500] sm:$0xf]
      %v502 = vld [vmem:[%s500 + $0x4] sm:$0xf]
      %v503 = vld [vmem:[%s500 + $0x8] sm:$0xf]
      %v504 = vld [vmem:[%s500 + $0xc] sm:$0xf]
      %v505 = vld [vmem:[%s500 + $0x10] sm:$0xf]
      %v506 = vld [vmem:[%s500 + $0x14] sm:$0xf]
      %v507 = vld [vmem:[%s500 + $0x18] sm:$0xf]
      %v508 = vld [vmem:[%s500 + $0x1c] sm:$0xf]
      %v509 = vunpack.c.l.bf16 %v492
      %v510 = vunpack.c.l.bf16 %v493
      %v511 = vunpack.c.l.bf16 %v494
      %v512 = vunpack.c.l.bf16 %v495
      %v513 = vunpack.c.l.bf16 %v496
      %v514 = vunpack.c.l.bf16 %v497
      %v515 = vunpack.c.l.bf16 %v498
      %v516 = vunpack.c.l.bf16 %v499
      %v517 = vunpack.c.l.bf16 %v501
      %v518 = vunpack.c.l.bf16 %v502
      %v519 = vunpack.c.l.bf16 %v503
      %v520 = vunpack.c.l.bf16 %v504
      %v521 = vunpack.c.l.bf16 %v505
      %v522 = vunpack.c.l.bf16 %v506
      %v523 = vunpack.c.l.bf16 %v507
      %v524 = vunpack.c.l.bf16 %v508
      %v525 = vmax.f32 %v509, %v517
      %v526 = vmax.f32 %v510, %v518
      %v527 = vmax.f32 %v511, %v519
      %v528 = vmax.f32 %v512, %v520
      %v529 = vmax.f32 %v513, %v521
      %v530 = vmax.f32 %v514, %v522
      %v531 = vmax.f32 %v515, %v523
      %v532 = vmax.f32 %v516, %v524
      %v533 = vpack.c.bf16 %v525, %v525
      %v534 = vpack.c.bf16 %v526, %v526
      %v535 = vpack.c.bf16 %v527, %v527
      %v536 = vpack.c.bf16 %v528, %v528
      %v537 = vpack.c.bf16 %v529, %v529
      %v538 = vpack.c.bf16 %v530, %v530
      %v539 = vpack.c.bf16 %v531, %v531
      %v540 = vpack.c.bf16 %v532, %v532
      %v541 = vunpack.c.l.bf16 %v533
      %v542 = vunpack.c.l.bf16 %v534
      %v543 = vunpack.c.l.bf16 %v535
      %v544 = vunpack.c.l.bf16 %v536
      %v545 = vunpack.c.l.bf16 %v537
      %v546 = vunpack.c.l.bf16 %v538
      %v547 = vunpack.c.l.bf16 %v539
      %v548 = vunpack.c.l.bf16 %v540
      %v549 = vld [vmem:[%s234] sm:$0xf]
      %v550 = vld [vmem:[%s234 + $0x4] sm:$0xf]
      %v551 = vld [vmem:[%s234 + $0x8] sm:$0xf]
      %v552 = vld [vmem:[%s234 + $0xc] sm:$0xf]
      %v553 = vld [vmem:[%s234 + $0x10] sm:$0xf]
      %v554 = vld [vmem:[%s234 + $0x14] sm:$0xf]
      %v555 = vld [vmem:[%s234 + $0x18] sm:$0xf]
      %v556 = vld [vmem:[%s234 + $0x1c] sm:$0xf]
      %v557 = vunpack.c.l.bf16 %v549
      %v558 = vunpack.c.l.bf16 %v550
      %v559 = vunpack.c.l.bf16 %v551
      %v560 = vunpack.c.l.bf16 %v552
      %v561 = vunpack.c.l.bf16 %v553
      %v562 = vunpack.c.l.bf16 %v554
      %v563 = vunpack.c.l.bf16 %v555
      %v564 = vunpack.c.l.bf16 %v556
      %v565 = vadd.f32 %v541, %v557
      %v566 = vadd.f32 %v542, %v558
      %v567 = vadd.f32 %v543, %v559
      %v568 = vadd.f32 %v544, %v560
      %v569 = vadd.f32 %v545, %v561
      %v570 = vadd.f32 %v546, %v562
      %v571 = vadd.f32 %v547, %v563
      %v572 = vadd.f32 %v548, %v564
      %v573 = vld [vmem:[%s2] sm:$0x1]
      %v575 = vperm.slane %v573, 0
      %v577 = vadd.f32 %v565, %v575
      %v578 = vadd.f32 %v566, %v575
      %v579 = vadd.f32 %v567, %v575
      %v580 = vadd.f32 %v568, %v575
      %v581 = vadd.f32 %v569, %v575
      %v582 = vadd.f32 %v570, %v575
      %v583 = vadd.f32 %v571, %v575
      %v584 = vadd.f32 %v572, %v575
      %v585 = vmul.f32 %v577, 0.2
      %v586 = vmul.f32 %v578, 0.2
      %v587 = vmul.f32 %v579, 0.2
      %v588 = vmul.f32 %v580, 0.2
      %v589 = vmul.f32 %v581, 0.2
      %v590 = vmul.f32 %v582, 0.2
      %v591 = vmul.f32 %v583, 0.2
      %v592 = vmul.f32 %v584, 0.2
      %v593 = vmax.f32 %v577, %v585
      %v594 = vmax.f32 %v578, %v586
      %v595 = vmax.f32 %v579, %v587
      %v596 = vmax.f32 %v580, %v588
      %v597 = vmax.f32 %v581, %v589
      %v598 = vmax.f32 %v582, %v590
      %v599 = vmax.f32 %v583, %v591
      %v600 = vmax.f32 %v584, %v592
      %601 = vst [vmem:[%s244] sm:$0xff] %v593
      %602 = vst [vmem:[%s244 + $0x8] sm:$0xff] %v594
      %603 = vst [vmem:[%s244 + $0x10] sm:$0xff] %v595
      %604 = vst [vmem:[%s244 + $0x18] sm:$0xff] %v596
      %605 = vst [vmem:[%s244 + $0x20] sm:$0xff] %v597
      %606 = vst [vmem:[%s244 + $0x28] sm:$0xff] %v598
      %607 = vst [vmem:[%s244 + $0x30] sm:$0xff] %v599
      %608 = vst [vmem:[%s244 + $0x38] sm:$0xff] %v600
      %s609 = smul.u32 8, %s19
      %p610 = scmp.lt.s32.totalorder %s18, 1
      %s611 = scalar_select %p610, %s18, 1
      %p612 = scmp.lt.s32.totalorder %s609, 7
      %s613 = scalar_select %p612, %s609, 7
      %s614 = smul.addr %s611, 8
      %s615 = sadd.s32 %s613, %s614
      %s616 = smul.addr %s615, 8
      %s617 = scalar_lea.vmem %s3, %s616
      // Predicated region
      $region33: #{weight_binding_net_forward.11} parent=31 // pred_check
        %p618 = pneg %p123
      $region34: #{weight_binding_net_forward.11} parent=31 // pred_check_branch
        %620 = sbr.rel (%p618) target = $region36
      $region35: #{weight_binding_net_forward.11} parent=31 // pred_region
        %s621 = smul.u32 8, %s19
      $region36: #{weight_binding_net_forward.11} parent=31 // pred_fallthru
        _
    $region32: #{weight_binding_net_forward.11} parent=5 // pred_fallthru
      _
    %p622 = scmp.le.s32.totalorder 2, %s9
    // Predicated region
    $region37: #{weight_binding_net_forward.11} parent=5 // pred_check
      %p623 = pneg %p622
    $region38: #{weight_binding_net_forward.11} parent=5 // pred_check_branch
      %625 = sbr.rel (%p623) target = $region40
    $region39: #{weight_binding_net_forward.11} parent=5 // pred_region
      %s626 = ssub.s32 %s9, 2
      // Predicated region
      $region41: #{weight_binding_net_forward.11} parent=39 // pred_check
        %p627 = pneg %p129
      $region42: #{weight_binding_net_forward.11} parent=39 // pred_check_branch
        %629 = sbr.rel (%p627) target = $region44
      $region43: #{weight_binding_net_forward.11} parent=39 // pred_region
        %s630 = smul.u32 8, %s21
        %p631 = scmp.lt.s32.totalorder %s20, 1
        %s632 = scalar_select %p631, %s20, 1
        %p633 = scmp.lt.s32.totalorder %s630, 7
        %s634 = scalar_select %p633, %s630, 7
        %s635 = smul.addr %s632, 8
        %s636 = sadd.s32 %s634, %s635
        %s637 = smul.addr %s636, 8
        %s638 = scalar_lea.vmem %s3, %s637
      $region44: #{weight_binding_net_forward.11} parent=39 // pred_fallthru
        _
    $region40: #{weight_binding_net_forward.11} parent=5 // pred_fallthru
      _
  $region6: #{weight_binding_net_forward.11} parent=0 // loop_footer
    %s13 = sadd.s32 1, %s9
  $region7: #{weight_binding_net_forward.11} parent=0 // loop_footer_branch
    %8 = sbr.rel target = $region3
  $region8: #{weight_binding_net_forward.11} parent=0 // loop_exit
    _

// kernel: weight_binding_net_forward.12
$region0: #{weight_binding_net_forward.12}
  #allocation0 [shape = 'u32[]', space=smem, size = 0x4, offset = 0x4, fixed_abs, tag = 'smem constant byte address 0x4 - core index']
  #allocation1 [shape = 'u32[72,128]{1,0:T(1,128)}', space=vmem, size = 0x9000, scoped, tag = 'internal scratch']
  %s0 = inlined_call_operand.vmem [shape: bf16[128,128], index: 0, kind: input, shape index: {}]
  %s1 = inlined_call_operand.vmem [shape: bf16[128,512], index: 1, kind: input, shape index: {}]
  %s2 = inlined_call_operand.vmem [shape: bf16[128,512], index: 2, kind: output, shape index: {}]
  %s3 = sld [smem:[#allocation0]]
  $region18: #{weight_binding_net_forward.12} parent=0
    _
  %s5 = ssub.s32 1, %s3
  %s6 = scalar_select 0, %s5, %s3
  // Predicated region
  $region2: #{weight_binding_net_forward.12} parent=0 // pred_check
    _
  $region3: #{weight_binding_net_forward.12} parent=0 // pred_check_branch
    %8 = sbr.rel (0) target = $region5
  $region4: #{weight_binding_net_forward.12} parent=0 // pred_region
    _
  $region5: #{weight_binding_net_forward.12} parent=0 // pred_fallthru
    _
  // Predicated region
  $region6: #{weight_binding_net_forward.12} parent=0 // pred_check
    _
  $region7: #{weight_binding_net_forward.12} parent=0 // pred_check_branch
    %10 = sbr.rel (0) target = $region9
  $region8: #{weight_binding_net_forward.12} parent=0 // pred_region
    _
  $region9: #{weight_binding_net_forward.12} parent=0 // pred_fallthru
    _
  %v11 = vld [vmem:[%s0] sm:$0xf]
  %v12 = vld [vmem:[%s0 + $0x4] sm:$0xf]
  %v13 = vld [vmem:[%s0 + $0x8] sm:$0xf]
  %v14 = vld [vmem:[%s0 + $0xc] sm:$0xf]
  %v15 = vld [vmem:[%s0 + $0x10] sm:$0xf]
  %v16 = vld [vmem:[%s0 + $0x14] sm:$0xf]
  %v17 = vld [vmem:[%s0 + $0x18] sm:$0xf]
  %v18 = vld [vmem:[%s0 + $0x1c] sm:$0xf]
  %v19 = vld [vmem:[%s0 + $0x20] sm:$0xf]
  %v20 = vld [vmem:[%s0 + $0x24] sm:$0xf]
  %v21 = vld [vmem:[%s0 + $0x28] sm:$0xf]
  %v22 = vld [vmem:[%s0 + $0x2c] sm:$0xf]
  %v23 = vld [vmem:[%s0 + $0x30] sm:$0xf]
  %v24 = vld [vmem:[%s0 + $0x34] sm:$0xf]
  %v25 = vld [vmem:[%s0 + $0x38] sm:$0xf]
  %v26 = vld [vmem:[%s0 + $0x3c] sm:$0xf]
  %v27 = vld [vmem:[%s1] sm:$0xff]
  %v28 = vld [vmem:[%s1 + $0x8] sm:$0xff]
  %v29 = vld [vmem:[%s1 + $0x10] sm:$0xff]
  %v30 = vld [vmem:[%s1 + $0x18] sm:$0xff]
  %v31 = vld [vmem:[%s1 + $0x20] sm:$0xff]
  %v32 = vld [vmem:[%s1 + $0x28] sm:$0xff]
  %v33 = vld [vmem:[%s1 + $0x30] sm:$0xff]
  %v34 = vld [vmem:[%s1 + $0x38] sm:$0xff]
  %v35 = vld [vmem:[%s1 + $0x40] sm:$0xff]
  %v36 = vld [vmem:[%s1 + $0x48] sm:$0xff]
  %v37 = vld [vmem:[%s1 + $0x50] sm:$0xff]
  %v38 = vld [vmem:[%s1 + $0x58] sm:$0xff]
  %v39 = vld [vmem:[%s1 + $0x60] sm:$0xff]
  %v40 = vld [vmem:[%s1 + $0x68] sm:$0xff]
  %v41 = vld [vmem:[%s1 + $0x70] sm:$0xff]
  %v42 = vld [vmem:[%s1 + $0x78] sm:$0xff]
  %v43 = vld [vmem:[%s1 + $0x80] sm:$0xff]
  %v44 = vld [vmem:[%s1 + $0x88] sm:$0xff]
  %v45 = vld [vmem:[%s1 + $0x90] sm:$0xff]
  %v46 = vld [vmem:[%s1 + $0x98] sm:$0xff]
  %v47 = vld [vmem:[%s1 + $0xa0] sm:$0xff]
  %v48 = vld [vmem:[%s1 + $0xa8] sm:$0xff]
  %v49 = vld [vmem:[%s1 + $0xb0] sm:$0xff]
  %v50 = vld [vmem:[%s1 + $0xb8] sm:$0xff]
  %v51 = vld [vmem:[%s1 + $0xc0] sm:$0xff]
  %v52 = vld [vmem:[%s1 + $0xc8] sm:$0xff]
  %v53 = vld [vmem:[%s1 + $0xd0] sm:$0xff]
  %v54 = vld [vmem:[%s1 + $0xd8] sm:$0xff]
  %v55 = vld [vmem:[%s1 + $0xe0] sm:$0xff]
  %v56 = vld [vmem:[%s1 + $0xe8] sm:$0xff]
  %v57 = vld [vmem:[%s1 + $0xf0] sm:$0xff]
  %v58 = vld [vmem:[%s1 + $0xf8] sm:$0xff]
  %v75 = vunpack.c.l.b16 %v11
  %v76 = vunpack.c.l.b16 %v12
  %v77 = vunpack.c.l.b16 %v13
  %v78 = vunpack.c.l.b16 %v14
  %v79 = vunpack.c.l.b16 %v15
  %v80 = vunpack.c.l.b16 %v16
  %v81 = vunpack.c.l.b16 %v17
  %v82 = vunpack.c.l.b16 %v18
  %v83 = vunpack.c.l.b16 %v19
  %v84 = vunpack.c.l.b16 %v20
  %v85 = vunpack.c.l.b16 %v21
  %v86 = vunpack.c.l.b16 %v22
  %v87 = vunpack.c.l.b16 %v23
  %v88 = vunpack.c.l.b16 %v24
  %v89 = vunpack.c.l.b16 %v25
  %v90 = vunpack.c.l.b16 %v26
  %v91 = vpack.c.b16 %v76, %v75
  %v92 = vpack.c.b16 %v78, %v77
  %v93 = vpack.c.b16 %v80, %v79
  %v94 = vpack.c.b16 %v82, %v81
  %v95 = vpack.c.b16 %v84, %v83
  %v96 = vpack.c.b16 %v86, %v85
  %v97 = vpack.c.b16 %v88, %v87
  %v98 = vpack.c.b16 %v90, %v89
  %v139 = vunpack.c.l.b16 %v27
  %v140 = vunpack.c.h.b16 %v27
  %v141 = vunpack.c.l.b16 %v28
  %v142 = vunpack.c.h.b16 %v28
  %v143 = vunpack.c.l.b16 %v29
  %v144 = vunpack.c.h.b16 %v29
  %v145 = vunpack.c.l.b16 %v30
  %v146 = vunpack.c.h.b16 %v30
  %v147 = vunpack.c.l.b16 %v31
  %v148 = vunpack.c.h.b16 %v31
  %v149 = vunpack.c.l.b16 %v32
  %v150 = vunpack.c.h.b16 %v32
  %v151 = vunpack.c.l.b16 %v33
  %v152 = vunpack.c.h.b16 %v33
  %v153 = vunpack.c.l.b16 %v34
  %v154 = vunpack.c.h.b16 %v34
  %v155 = vunpack.c.l.b16 %v35
  %v156 = vunpack.c.h.b16 %v35
  %v157 = vunpack.c.l.b16 %v36
  %v158 = vunpack.c.h.b16 %v36
  %v159 = vunpack.c.l.b16 %v37
  %v160 = vunpack.c.h.b16 %v37
  %v161 = vunpack.c.l.b16 %v38
  %v162 = vunpack.c.h.b16 %v38
  %v163 = vunpack.c.l.b16 %v39
  %v164 = vunpack.c.h.b16 %v39
  %v165 = vunpack.c.l.b16 %v40
  %v166 = vunpack.c.h.b16 %v40
  %v167 = vunpack.c.l.b16 %v41
  %v168 = vunpack.c.h.b16 %v41
  %v169 = vunpack.c.l.b16 %v42
  %v170 = vunpack.c.h.b16 %v42
  %v171 = vunpack.c.l.b16 %v43
  %v172 = vunpack.c.h.b16 %v43
  %v173 = vunpack.c.l.b16 %v44
  %v174 = vunpack.c.h.b16 %v44
  %v175 = vunpack.c.l.b16 %v45
  %v176 = vunpack.c.h.b16 %v45
  %v177 = vunpack.c.l.b16 %v46
  %v178 = vunpack.c.h.b16 %v46
  %v179 = vunpack.c.l.b16 %v47
  %v180 = vunpack.c.h.b16 %v47
  %v181 = vunpack.c.l.b16 %v48
  %v182 = vunpack.c.h.b16 %v48
  %v183 = vunpack.c.l.b16 %v49
  %v184 = vunpack.c.h.b16 %v49
  %v185 = vunpack.c.l.b16 %v50
  %v186 = vunpack.c.h.b16 %v50
  %v187 = vunpack.c.l.b16 %v51
  %v188 = vunpack.c.h.b16 %v51
  %v189 = vunpack.c.l.b16 %v52
  %v190 = vunpack.c.h.b16 %v52
  %v191 = vunpack.c.l.b16 %v53
  %v192 = vunpack.c.h.b16 %v53
  %v193 = vunpack.c.l.b16 %v54
  %v194 = vunpack.c.h.b16 %v54
  %v195 = vunpack.c.l.b16 %v55
  %v196 = vunpack.c.h.b16 %v55
  %v197 = vunpack.c.l.b16 %v56
  %v198 = vunpack.c.h.b16 %v56
  %v199 = vunpack.c.l.b16 %v57
  %v200 = vunpack.c.h.b16 %v57
  %v201 = vunpack.c.l.b16 %v58
  %v202 = vunpack.c.h.b16 %v58
  %v203 = vpack.c.b16 %v143, %v139
  %v204 = vpack.c.b16 %v144, %v140
  %v205 = vpack.c.b16 %v145, %v141
  %v206 = vpack.c.b16 %v146, %v142
  %v207 = vpack.c.b16 %v151, %v147
  %v208 = vpack.c.b16 %v152, %v148
  %v209 = vpack.c.b16 %v153, %v149
  %v210 = vpack.c.b16 %v154, %v150
  %v211 = vpack.c.b16 %v159, %v155
  %v212 = vpack.c.b16 %v160, %v156
  %v213 = vpack.c.b16 %v161, %v157
  %v214 = vpack.c.b16 %v162, %v158
  %v215 = vpack.c.b16 %v167, %v163
  %v216 = vpack.c.b16 %v168, %v164
  %v217 = vpack.c.b16 %v169, %v165
  %v218 = vpack.c.b16 %v170, %v166
  %v219 = vpack.c.b16 %v175, %v171
  %v220 = vpack.c.b16 %v176, %v172
  %v221 = vpack.c.b16 %v177, %v173
  %v222 = vpack.c.b16 %v178, %v174
  %v223 = vpack.c.b16 %v183, %v179
  %v224 = vpack.c.b16 %v184, %v180
  %v225 = vpack.c.b16 %v185, %v181
  %v226 = vpack.c.b16 %v186, %v182
  %v227 = vpack.c.b16 %v191, %v187
  %v228 = vpack.c.b16 %v192, %v188
  %v229 = vpack.c.b16 %v193, %v189
  %v230 = vpack.c.b16 %v194, %v190
  %v231 = vpack.c.b16 %v199, %v195
  %v232 = vpack.c.b16 %v200, %v196
  %v233 = vpack.c.b16 %v201, %v197
  %v234 = vpack.c.b16 %v202, %v198
  %267 = vmatpush.bf16.msra.mxu0 %v231
  %268 = vmatpush.bf16.msra.mxu0 %v227
  %269 = vmatpush.bf16.msra.mxu0 %v223
  %270 = vmatpush.bf16.msra.mxu0 %v219
  %271 = vmatpush.bf16.msra.mxu0 %v215
  %272 = vmatpush.bf16.msra.mxu0 %v211
  %273 = vmatpush.bf16.msra.mxu0 %v207
  %274 = vmatpush.bf16.msra.mxu0 %v203
  %275 = vmatmul.bf16.gmra.mxu0 %v91
  %v276 = vpop.f32.mrf.mxu0
  %v277 = vadd.f32 0.0, %v276
  %v278 = vpop.f32.mrf.mxu0
  %v279 = vadd.f32 0.0, %v278
  %280 = vmatmul.bf16.gmra.mxu0 %v92
  %v281 = vpop.f32.mrf.mxu0
  %v282 = vadd.f32 0.0, %v281
  %v283 = vpop.f32.mrf.mxu0
  %v284 = vadd.f32 0.0, %v283
  %285 = vmatmul.bf16.gmra.mxu0 %v93
  %v286 = vpop.f32.mrf.mxu0
  %v287 = vadd.f32 0.0, %v286
  %v288 = vpop.f32.mrf.mxu0
  %v289 = vadd.f32 0.0, %v288
  %290 = vmatmul.bf16.gmra.mxu0 %v94
  %v291 = vpop.f32.mrf.mxu0
  %v292 = vadd.f32 0.0, %v291
  %v293 = vpop.f32.mrf.mxu0
  %v294 = vadd.f32 0.0, %v293
  %295 = vmatmul.bf16.gmra.mxu0 %v95
  %v296 = vpop.f32.mrf.mxu0
  %v297 = vadd.f32 0.0, %v296
  %v298 = vpop.f32.mrf.mxu0
  %v299 = vadd.f32 0.0, %v298
  %300 = vmatmul.bf16.gmra.mxu0 %v96
  %v301 = vpop.f32.mrf.mxu0
  %v302 = vadd.f32 0.0, %v301
  %v303 = vpop.f32.mrf.mxu0
  %v304 = vadd.f32 0.0, %v303
  %305 = vmatmul.bf16.gmra.mxu0 %v97
  %v306 = vpop.f32.mrf.mxu0
  %v307 = vadd.f32 0.0, %v306
  %v308 = vpop.f32.mrf.mxu0
  %v309 = vadd.f32 0.0, %v308
  %310 = vmatmul.bf16.gmra.mxu0 %v98
  %v311 = vpop.f32.mrf.mxu0
  %v312 = vadd.f32 0.0, %v311
  %v313 = vpop.f32.mrf.mxu0
  %v314 = vadd.f32 0.0, %v313
  %315 = vdwg.mxu0
  %316 = vmatpush.bf16.msra.mxu0 %v232
  %317 = vmatpush.bf16.msra.mxu0 %v228
  %318 = vmatpush.bf16.msra.mxu0 %v224
  %319 = vmatpush.bf16.msra.mxu0 %v220
  %320 = vmatpush.bf16.msra.mxu0 %v216
  %321 = vmatpush.bf16.msra.mxu0 %v212
  %322 = vmatpush.bf16.msra.mxu0 %v208
  %323 = vmatpush.bf16.msra.mxu0 %v204
  %324 = vmatmul.bf16.gmra.mxu0 %v91
  %v325 = vpop.f32.mrf.mxu0
  %v326 = vadd.f32 0.0, %v325
  %v327 = vpop.f32.mrf.mxu0
  %v328 = vadd.f32 0.0, %v327
  %329 = vmatmul.bf16.gmra.mxu0 %v92
  %v330 = vpop.f32.mrf.mxu0
  %v331 = vadd.f32 0.0, %v330
  %v332 = vpop.f32.mrf.mxu0
  %v333 = vadd.f32 0.0, %v332
  %334 = vmatmul.bf16.gmra.mxu0 %v93
  %v335 = vpop.f32.mrf.mxu0
  %v336 = vadd.f32 0.0, %v335
  %v337 = vpop.f32.mrf.mxu0
  %v338 = vadd.f32 0.0, %v337
  %339 = vmatmul.bf16.gmra.mxu0 %v94
  %v340 = vpop.f32.mrf.mxu0
  %v341 = vadd.f32 0.0, %v340
  %v342 = vpop.f32.mrf.mxu0
  %v343 = vadd.f32 0.0, %v342
  %344 = vmatmul.bf16.gmra.mxu0 %v95
  %v345 = vpop.f32.mrf.mxu0
  %v346 = vadd.f32 0.0, %v345
  %v347 = vpop.f32.mrf.mxu0
  %v348 = vadd.f32 0.0, %v347
  %349 = vmatmul.bf16.gmra.mxu0 %v96
  %v350 = vpop.f32.mrf.mxu0
  %v351 = vadd.f32 0.0, %v350
  %v352 = vpop.f32.mrf.mxu0
  %v353 = vadd.f32 0.0, %v352
  %354 = vmatmul.bf16.gmra.mxu0 %v97
  %v355 = vpop.f32.mrf.mxu0
  %v356 = vadd.f32 0.0, %v355
  %v357 = vpop.f32.mrf.mxu0
  %v358 = vadd.f32 0.0, %v357
  %359 = vmatmul.bf16.gmra.mxu0 %v98
  %v360 = vpop.f32.mrf.mxu0
  %v361 = vadd.f32 0.0, %v360
  %v362 = vpop.f32.mrf.mxu0
  %v363 = vadd.f32 0.0, %v362
  %364 = vdwg.mxu0
  %365 = vmatpush.bf16.msra.mxu0 %v233
  %366 = vmatpush.bf16.msra.mxu0 %v229
  %367 = vmatpush.bf16.msra.mxu0 %v225
  %368 = vmatpush.bf16.msra.mxu0 %v221
  %369 = vmatpush.bf16.msra.mxu0 %v217
  %370 = vmatpush.bf16.msra.mxu0 %v213
  %371 = vmatpush.bf16.msra.mxu0 %v209
  %372 = vmatpush.bf16.msra.mxu0 %v205
  %373 = vmatmul.bf16.gmra.mxu0 %v91
  %v374 = vpop.f32.mrf.mxu0
  %v375 = vadd.f32 0.0, %v374
  %v376 = vpop.f32.mrf.mxu0
  %v377 = vadd.f32 0.0, %v376
  %378 = vmatmul.bf16.gmra.mxu0 %v92
  %v379 = vpop.f32.mrf.mxu0
  %v380 = vadd.f32 0.0, %v379
  %v381 = vpop.f32.mrf.mxu0
  %v382 = vadd.f32 0.0, %v381
  %383 = vmatmul.bf16.gmra.mxu0 %v93
  %v384 = vpop.f32.mrf.mxu0
  %v385 = vadd.f32 0.0, %v384
  %v386 = vpop.f32.mrf.mxu0
  %v387 = vadd.f32 0.0, %v386
  %388 = vmatmul.bf16.gmra.mxu0 %v94
  %v389 = vpop.f32.mrf.mxu0
  %v390 = vadd.f32 0.0, %v389
  %v391 = vpop.f32.mrf.mxu0
  %v392 = vadd.f32 0.0, %v391
  %393 = vmatmul.bf16.gmra.mxu0 %v95
  %v394 = vpop.f32.mrf.mxu0
  %v395 = vadd.f32 0.0, %v394
  %v396 = vpop.f32.mrf.mxu0
  %v397 = vadd.f32 0.0, %v396
  %398 = vmatmul.bf16.gmra.mxu0 %v96
  %v399 = vpop.f32.mrf.mxu0
  %v400 = vadd.f32 0.0, %v399
  %v401 = vpop.f32.mrf.mxu0
  %v402 = vadd.f32 0.0, %v401
  %403 = vmatmul.bf16.gmra.mxu0 %v97
  %v404 = vpop.f32.mrf.mxu0
  %v405 = vadd.f32 0.0, %v404
  %v406 = vpop.f32.mrf.mxu0
  %v407 = vadd.f32 0.0, %v406
  %408 = vmatmul.bf16.gmra.mxu0 %v98
  %v409 = vpop.f32.mrf.mxu0
  %v410 = vadd.f32 0.0, %v409
  %v411 = vpop.f32.mrf.mxu0
  %v412 = vadd.f32 0.0, %v411
  %413 = vdwg.mxu0
  %414 = vmatpush.bf16.msra.mxu0 %v234
  %415 = vmatpush.bf16.msra.mxu0 %v230
  %416 = vmatpush.bf16.msra.mxu0 %v226
  %417 = vmatpush.bf16.msra.mxu0 %v222
  %418 = vmatpush.bf16.msra.mxu0 %v218
  %419 = vmatpush.bf16.msra.mxu0 %v214
  %420 = vmatpush.bf16.msra.mxu0 %v210
  %421 = vmatpush.bf16.msra.mxu0 %v206
  %422 = vmatmul.bf16.gmra.mxu0 %v91
  %v423 = vpop.f32.mrf.mxu0
  %v424 = vadd.f32 0.0, %v423
  %v425 = vpop.f32.mrf.mxu0
  %v426 = vadd.f32 0.0, %v425
  %427 = vmatmul.bf16.gmra.mxu0 %v92
  %v428 = vpop.f32.mrf.mxu0
  %v429 = vadd.f32 0.0, %v428
  %v430 = vpop.f32.mrf.mxu0
  %v431 = vadd.f32 0.0, %v430
  %432 = vmatmul.bf16.gmra.mxu0 %v93
  %v433 = vpop.f32.mrf.mxu0
  %v434 = vadd.f32 0.0, %v433
  %v435 = vpop.f32.mrf.mxu0
  %v436 = vadd.f32 0.0, %v435
  %437 = vmatmul.bf16.gmra.mxu0 %v94
  %v438 = vpop.f32.mrf.mxu0
  %v439 = vadd.f32 0.0, %v438
  %v440 = vpop.f32.mrf.mxu0
  %v441 = vadd.f32 0.0, %v440
  %442 = vmatmul.bf16.gmra.mxu0 %v95
  %v443 = vpop.f32.mrf.mxu0
  %v444 = vadd.f32 0.0, %v443
  %v445 = vpop.f32.mrf.mxu0
  %v446 = vadd.f32 0.0, %v445
  %447 = vmatmul.bf16.gmra.mxu0 %v96
  %v448 = vpop.f32.mrf.mxu0
  %v449 = vadd.f32 0.0, %v448
  %v450 = vpop.f32.mrf.mxu0
  %v451 = vadd.f32 0.0, %v450
  %452 = vmatmul.bf16.gmra.mxu0 %v97
  %v453 = vpop.f32.mrf.mxu0
  %v454 = vadd.f32 0.0, %v453
  %v455 = vpop.f32.mrf.mxu0
  %v456 = vadd.f32 0.0, %v455
  %457 = vmatmul.bf16.gmra.mxu0 %v98
  %v458 = vpop.f32.mrf.mxu0
  %v459 = vadd.f32 0.0, %v458
  %v460 = vpop.f32.mrf.mxu0
  %v461 = vadd.f32 0.0, %v460
  %462 = vdwg.mxu0
  %v463 = vpack.c.bf16 %v326, %v277
  %v464 = vpack.c.bf16 %v424, %v375
  %v465 = vpack.c.bf16 %v328, %v279
  %v466 = vpack.c.bf16 %v426, %v377
  %v467 = vpack.c.bf16 %v331, %v282
  %v468 = vpack.c.bf16 %v429, %v380
  %v469 = vpack.c.bf16 %v333, %v284
  %v470 = vpack.c.bf16 %v431, %v382
  %v471 = vpack.c.bf16 %v336, %v287
  %v472 = vpack.c.bf16 %v434, %v385
  %v473 = vpack.c.bf16 %v338, %v289
  %v474 = vpack.c.bf16 %v436, %v387
  %v475 = vpack.c.bf16 %v341, %v292
  %v476 = vpack.c.bf16 %v439, %v390
  %v477 = vpack.c.bf16 %v343, %v294
  %v478 = vpack.c.bf16 %v441, %v392
  %v479 = vpack.c.bf16 %v346, %v297
  %v480 = vpack.c.bf16 %v444, %v395
  %v481 = vpack.c.bf16 %v348, %v299
  %v482 = vpack.c.bf16 %v446, %v397
  %v483 = vpack.c.bf16 %v351, %v302
  %v484 = vpack.c.bf16 %v449, %v400
  %v485 = vpack.c.bf16 %v353, %v304
  %v486 = vpack.c.bf16 %v451, %v402
  %v487 = vpack.c.bf16 %v356, %v307
  %v488 = vpack.c.bf16 %v454, %v405
  %v489 = vpack.c.bf16 %v358, %v309
  %v490 = vpack.c.bf16 %v456, %v407
  %v491 = vpack.c.bf16 %v361, %v312
  %v492 = vpack.c.bf16 %v459, %v410
  %v493 = vpack.c.bf16 %v363, %v314
  %v494 = vpack.c.bf16 %v461, %v412
  %495 = vst [vmem:[%s2] sm:$0xff] %v463
  %496 = vst [vmem:[%s2 + $0x8] sm:$0xff] %v464
  %497 = vst [vmem:[%s2 + $0x10] sm:$0xff] %v465
  %498 = vst [vmem:[%s2 + $0x18] sm:$0xff] %v466
  %499 = vst [vmem:[%s2 + $0x20] sm:$0xff] %v467
  %500 = vst [vmem:[%s2 + $0x28] sm:$0xff] %v468
  %501 = vst [vmem:[%s2 + $0x30] sm:$0xff] %v469
  %502 = vst [vmem:[%s2 + $0x38] sm:$0xff] %v470
  %503 = vst [vmem:[%s2 + $0x40] sm:$0xff] %v471
  %504 = vst [vmem:[%s2 + $0x48] sm:$0xff] %v472
  %505 = vst [vmem:[%s2 + $0x50] sm:$0xff] %v473
  %506 = vst [vmem:[%s2 + $0x58] sm:$0xff] %v474
  %507 = vst [vmem:[%s2 + $0x60] sm:$0xff] %v475
  %508 = vst [vmem:[%s2 + $0x68] sm:$0xff] %v476
  %509 = vst [vmem:[%s2 + $0x70] sm:$0xff] %v477
  %510 = vst [vmem:[%s2 + $0x78] sm:$0xff] %v478
  %511 = vst [vmem:[%s2 + $0x80] sm:$0xff] %v479
  %512 = vst [vmem:[%s2 + $0x88] sm:$0xff] %v480
  %513 = vst [vmem:[%s2 + $0x90] sm:$0xff] %v481
  %514 = vst [vmem:[%s2 + $0x98] sm:$0xff] %v482
  %515 = vst [vmem:[%s2 + $0xa0] sm:$0xff] %v483
  %516 = vst [vmem:[%s2 + $0xa8] sm:$0xff] %v484
  %517 = vst [vmem:[%s2 + $0xb0] sm:$0xff] %v485
  %518 = vst [vmem:[%s2 + $0xb8] sm:$0xff] %v486
  %519 = vst [vmem:[%s2 + $0xc0] sm:$0xff] %v487
  %520 = vst [vmem:[%s2 + $0xc8] sm:$0xff] %v488
  %521 = vst [vmem:[%s2 + $0xd0] sm:$0xff] %v489
  %522 = vst [vmem:[%s2 + $0xd8] sm:$0xff] %v490
  %523 = vst [vmem:[%s2 + $0xe0] sm:$0xff] %v491
  %524 = vst [vmem:[%s2 + $0xe8] sm:$0xff] %v492
  %525 = vst [vmem:[%s2 + $0xf0] sm:$0xff] %v493
  %526 = vst [vmem:[%s2 + $0xf8] sm:$0xff] %v494
  // Predicated region
  $region10: #{weight_binding_net_forward.12} parent=0 // pred_check
    _
  $region11: #{weight_binding_net_forward.12} parent=0 // pred_check_branch
    %528 = sbr.rel (0) target = $region13
  $region12: #{weight_binding_net_forward.12} parent=0 // pred_region
    _
  $region13: #{weight_binding_net_forward.12} parent=0 // pred_fallthru
    _
  // Predicated region
  $region14: #{weight_binding_net_forward.12} parent=0 // pred_check
    _
  $region15: #{weight_binding_net_forward.12} parent=0 // pred_check_branch
    %530 = sbr.rel (0) target = $region17
  $region16: #{weight_binding_net_forward.12} parent=0 // pred_region
    _
  $region17: #{weight_binding_net_forward.12} parent=0 // pred_fallthru
    _

// kernel: weight_binding_net_forward.13
$region0: #{weight_binding_net_forward.13}
  #allocation0 [shape = 'u32[]', space=smem, size = 0x4, offset = 0x4, fixed_abs, tag = 'smem constant byte address 0x4 - core index']
  #allocation1 [shape = 'u32[72,128]{1,0:T(1,128)}', space=vmem, size = 0x9000, scoped, tag = 'internal scratch']
  %s0 = inlined_call_operand.vmem [shape: bf16[2,8,64,256], index: 0, kind: input, shape index: {}]
  %s1 = inlined_call_operand.vmem [shape: bf16[2,64,256], index: 1, kind: input, shape index: {}]
  %s2 = inlined_call_operand.vmem [shape: f32[1,256], index: 2, kind: input, shape index: {}]
  %s3 = inlined_call_operand.vmem [shape: f32[2,64,256], index: 3, kind: output, shape index: {}]
  %s4 = sld [smem:[#allocation0]]
  $region45: #{weight_binding_net_forward.13} parent=0
    _
  %s6 = ssub.s32 1, %s4
  %s7 = scalar_select 0, %s6, %s4
  loop: start=0, step=1, limit=4
  $region2: #{weight_binding_net_forward.13} parent=0 // loop_pre_header
    _
  $region3: #{weight_binding_net_forward.13} parent=0 // loop_header
    %s9 = sphi 0, %s13
    %p10 = scmp.ge.s32.totalorder %s9, 4
    %s16 = sphi 0, %s28
    %s17 = sphi 0, %s24
    %s18 = sphi 0, %s16
    %s19 = sphi 0, %s17
    %s20 = sphi 0, %s18
    %s21 = sphi 0, %s19
    %s33 = sphi 0, %s35
    %s36 = sphi 0, %s33
    %s37 = sphi 0, %s36
    %s53 = sphi 0, %s37
    %s61 = sphi 0, %s63
    %s64 = sphi 0, %s61
    %s65 = sphi 0, %s64
    %s81 = sphi 0, %s65
    %s85 = sphi 0, %s85
    %s87 = sphi 0, %s85
    %s88 = sphi 0, %s87
    %s102 = sphi 0, %s88
    %s110 = sphi 0, %s112
    %s113 = sphi 0, %s110
    %s114 = sphi 0, %s113
    %s130 = sphi 0, %s114
  $region4: #{weight_binding_net_forward.13} parent=0 // loop_header_branch
    %12 = sbr.rel (%p10) target = $region8
  $region5: #{weight_binding_net_forward.13} parent=0 // loop_body
    %s14 = ssub.s32 %s9, 1
    %s15 = ssub.s32 %s9, 2
    %s22 = sadd.s32 1, %s17
    %p23 = scmp.ge.s32.totalorder %s22, 1
    %s24 = scalar_select %p23, 0, %s22
    %s25 = sadd.s32 1, %s16
    %s26 = scalar_select %p23, %s25, %s16
    %p27 = scmp.ge.s32.totalorder %s26, 2
    %s28 = scalar_select %p27, 0, %s26
    %s29 = ssub.s32 %s16, %s28
    %s30 = ssub.s32 %s17, %s24
    %s31 = sor.u32 %s29, %s30
    %p32 = scmp.eq.s32.totalorder %s31, 0
    %s34 = sadd.s32 %s33, 1
    %s35 = scalar_select %p32, %s33, %s34
    %p38 = pneg %p32
    %p39 = scmp.eq.s32.totalorder %s9, 1
    %p40 = por %p38, %p39
    %p41 = scmp.ne.s32.totalorder %s33, %s36
    %p42 = scmp.eq.s32.totalorder %s9, 0
    %p43 = por %p41, %p42
    %p44 = scmp.ne.s32.totalorder %s33, %s36
    %p45 = scmp.eq.s32.totalorder %s14, 1
    %p46 = por %p44, %p45
    %p47 = scmp.ne.s32.totalorder %s36, %s37
    %p48 = scmp.eq.s32.totalorder %s14, 0
    %p49 = por %p47, %p48
    %p50 = scmp.ne.s32.totalorder %s36, %s37
    %p51 = scmp.eq.s32.totalorder %s15, 1
    %p52 = por %p50, %p51
    %p54 = scmp.ne.s32.totalorder %s37, %s53
    %p55 = scmp.eq.s32.totalorder %s15, 0
    %p56 = por %p54, %p55
    %s57 = ssub.s32 %s16, %s28
    %s58 = ssub.s32 %s17, %s24
    %s59 = sor.u32 %s57, %s58
    %p60 = scmp.eq.s32.totalorder %s59, 0
    %s62 = sadd.s32 %s61, 1
    %s63 = scalar_select %p60, %s61, %s62
    %p66 = pneg %p60
    %p67 = scmp.eq.s32.totalorder %s9, 1
    %p68 = por %p66, %p67
    %p69 = scmp.ne.s32.totalorder %s61, %s64
    %p70 = scmp.eq.s32.totalorder %s9, 0
    %p71 = por %p69, %p70
    %p72 = scmp.ne.s32.totalorder %s61, %s64
    %p73 = scmp.eq.s32.totalorder %s14, 1
    %p74 = por %p72, %p73
    %p75 = scmp.ne.s32.totalorder %s64, %s65
    %p76 = scmp.eq.s32.totalorder %s14, 0
    %p77 = por %p75, %p76
    %p78 = scmp.ne.s32.totalorder %s64, %s65
    %p79 = scmp.eq.s32.totalorder %s15, 1
    %p80 = por %p78, %p79
    %p82 = scmp.ne.s32.totalorder %s65, %s81
    %p83 = scmp.eq.s32.totalorder %s15, 0
    %p84 = por %p82, %p83
    %s86 = sadd.s32 %s85, 1
    %p89 = scmp.eq.s32.totalorder %s9, 1
    %p90 = scmp.ne.s32.totalorder %s85, %s87
    %p91 = scmp.eq.s32.totalorder %s9, 0
    %p92 = por %p90, %p91
    %p93 = scmp.ne.s32.totalorder %s85, %s87
    %p94 = scmp.eq.s32.totalorder %s14, 1
    %p95 = por %p93, %p94
    %p96 = scmp.ne.s32.totalorder %s87, %s88
    %p97 = scmp.eq.s32.totalorder %s14, 0
    %p98 = por %p96, %p97
    %p99 = scmp.ne.s32.totalorder %s87, %s88
    %p100 = scmp.eq.s32.totalorder %s15, 1
    %p101 = por %p99, %p100
    %p103 = scmp.ne.s32.totalorder %s88, %s102
    %p104 = scmp.eq.s32.totalorder %s15, 0
    %p105 = por %p103, %p104
    %s106 = ssub.s32 %s16, %s28
    %s107 = ssub.s32 %s17, %s24
    %s108 = sor.u32 %s106, %s107
    %p109 = scmp.eq.s32.totalorder %s108, 0
    %s111 = sadd.s32 %s110, 1
    %s112 = scalar_select %p109, %s110, %s111
    %p115 = pneg %p109
    %p116 = scmp.eq.s32.totalorder %s9, 1
    %p117 = por %p115, %p116
    %p118 = scmp.ne.s32.totalorder %s110, %s113
    %p119 = scmp.eq.s32.totalorder %s9, 0
    %p120 = por %p118, %p119
    %p121 = scmp.ne.s32.totalorder %s110, %s113
    %p122 = scmp.eq.s32.totalorder %s14, 1
    %p123 = por %p121, %p122
    %p124 = scmp.ne.s32.totalorder %s113, %s114
    %p125 = scmp.eq.s32.totalorder %s14, 0
    %p126 = por %p124, %p125
    %p127 = scmp.ne.s32.totalorder %s113, %s114
    %p128 = scmp.eq.s32.totalorder %s15, 1
    %p129 = por %p127, %p128
    %p131 = scmp.ne.s32.totalorder %s114, %s130
    %p132 = scmp.eq.s32.totalorder %s15, 0
    %p133 = por %p131, %p132
    %p134 = scmp.le.s32.totalorder 1, %s9
    %p135 = scmp.lt.s32.totalorder %s9, 3
    %p136 = pnand %p134, %p135
    %p137 = pneg %p136
    // Predicated region
    $region9: #{weight_binding_net_forward.13} parent=5 // pred_check
      _
    $region10: #{weight_binding_net_forward.13} parent=5 // pred_check_branch
      %139 = sbr.rel (%p136) target = $region12
    $region11: #{weight_binding_net_forward.13} parent=5 // pred_region
      %s140 = ssub.s32 %s9, 1
      // Predicated region
      $region13: #{weight_binding_net_forward.13} parent=11 // pred_check
        %p141 = pneg %p98
      $region14: #{weight_binding_net_forward.13} parent=11 // pred_check_branch
        %143 = sbr.rel (%p141) target = $region16
      $region15: #{weight_binding_net_forward.13} parent=11 // pred_region
        _
      $region16: #{weight_binding_net_forward.13} parent=11 // pred_fallthru
        _
    $region12: #{weight_binding_net_forward.13} parent=5 // pred_fallthru
      _
    %p144 = scmp.lt.s32.totalorder %s9, 2
    // Predicated region
    $region17: #{weight_binding_net_forward.13} parent=5 // pred_check
      %p145 = pneg %p144
    $region18: #{weight_binding_net_forward.13} parent=5 // pred_check_branch
      %147 = sbr.rel (%p145) target = $region20
    $region19: #{weight_binding_net_forward.13} parent=5 // pred_region
      // Predicated region
      $region21: #{weight_binding_net_forward.13} parent=19 // pred_check
        %p148 = pneg %p43
      $region22: #{weight_binding_net_forward.13} parent=19 // pred_check_branch
        %150 = sbr.rel (%p148) target = $region24
      $region23: #{weight_binding_net_forward.13} parent=19 // pred_region
        %s151 = smul.u32 8, %s17
        %p152 = scmp.lt.s32.totalorder %s16, 1
        %s153 = scalar_select %p152, %s16, 1
        %p154 = scmp.lt.s32.totalorder %s151, 7
        %s155 = scalar_select %p154, %s151, 7
        %s156 = smul.addr %s155, 2
        %s157 = smul.addr %s153, 128
        %s158 = sadd.s32 %s156, %s157
        %s159 = smul.addr %s158, 4
        %s160 = scalar_lea.vmem %s0, %s159
        %s161 = smul.u32 8, %s17
      $region24: #{weight_binding_net_forward.13} parent=19 // pred_fallthru
        _
      // Predicated region
      $region25: #{weight_binding_net_forward.13} parent=19 // pred_check
        %p162 = pneg %p71
      $region26: #{weight_binding_net_forward.13} parent=19 // pred_check_branch
        %164 = sbr.rel (%p162) target = $region28
      $region27: #{weight_binding_net_forward.13} parent=19 // pred_region
        %s165 = smul.u32 8, %s17
        %p166 = scmp.lt.s32.totalorder %s16, 1
        %s167 = scalar_select %p166, %s16, 1
        %p168 = scmp.lt.s32.totalorder %s165, 7
        %s169 = scalar_select %p168, %s165, 7
        %s170 = smul.addr %s169, 2
        %s171 = smul.addr %s167, 16
        %s172 = sadd.s32 %s170, %s171
        %s173 = smul.addr %s172, 4
        %s174 = scalar_lea.vmem %s1, %s173
        %s175 = smul.u32 8, %s17
      $region28: #{weight_binding_net_forward.13} parent=19 // pred_fallthru
        _
    $region20: #{weight_binding_net_forward.13} parent=5 // pred_fallthru
      _
    %p176 = scmp.le.s32.totalorder 1, %s9
    %p177 = scmp.lt.s32.totalorder %s9, 3
    %p178 = pnand %p176, %p177
    %p179 = pneg %p178
    // Predicated region
    $region29: #{weight_binding_net_forward.13} parent=5 // pred_check
      _
    $region30: #{weight_binding_net_forward.13} parent=5 // pred_check_branch
      %181 = sbr.rel (%p178) target = $region32
    $region31: #{weight_binding_net_forward.13} parent=5 // pred_region
      %s182 = ssub.s32 %s9, 1
      %s183 = smul.u32 8, %s19
      %p184 = scmp.lt.s32.totalorder %s18, 1
      %s185 = scalar_select %p184, %s18, 1
      %p186 = scmp.lt.s32.totalorder %s183, 7
      %s187 = scalar_select %p186, %s183, 7
      %s188 = smul.addr %s187, 2
      %s189 = smul.addr %s185, 128
      %s190 = sadd.s32 %s188, %s189
      %s191 = smul.addr %s190, 4
      %s192 = scalar_lea.vmem %s0, %s191
      %p193 = pneg %p49
      %p194 = pneg %p46
      %s195 = smul.u32 8, %s19
      %p196 = scmp.lt.s32.totalorder %s18, 1
      %s197 = scalar_select %p196, %s18, 1
      %p198 = scmp.lt.s32.totalorder %s195, 7
      %s199 = scalar_select %p198, %s195, 7
      %s200 = smul.addr %s199, 2
      %s201 = smul.addr %s197, 16
      %s202 = sadd.s32 %s200, %s201
      %s203 = smul.addr %s202, 4
      %s204 = scalar_lea.vmem %s1, %s203
      %p205 = pneg %p77
      %p206 = pneg %p74
      %p207 = pneg %p98
      %p208 = pneg %p95
      %p209 = pneg %p126
      %p210 = pneg %p123
      %s211 = smul.u32 8, %s19
      %p212 = scmp.lt.s32.totalorder %s18, 1
      %s213 = scalar_select %p212, %s18, 1
      %p214 = scmp.lt.s32.totalorder %s211, 7
      %s215 = scalar_select %p214, %s211, 7
      %s216 = smul.addr %s215, 2
      %s217 = smul.addr %s213, 16
      %s218 = sadd.s32 %s216, %s217
      %s219 = smul.addr %s218, 8
      %s220 = scalar_lea.vmem %s3, %s219
      %s221 = smul.u32 8, %s19
      %p222 = scmp.lt.s32.totalorder %s18, 1
      %s223 = scalar_select %p222, %s18, 1
      %p224 = scmp.lt.s32.totalorder %s221, 7
      %s225 = scalar_select %p224, %s221, 7
      %s226 = smul.addr %s225, 2
      %s227 = smul.addr %s223, 128
      %s228 = sadd.s32 %s226, %s227
      %s229 = smul.addr %s228, 4
      %s230 = scalar_lea.vmem %s0, %s229
      %s231 = smul.u32 8, %s19
      %s232 = smul.u32 8, %s19
      %p233 = scmp.lt.s32.totalorder %s18, 1
      %s234 = scalar_select %p233, %s18, 1
      %p235 = scmp.lt.s32.totalorder %s232, 7
      %s236 = scalar_select %p235, %s232, 7
      %s237 = smul.addr %s236, 2
      %s238 = smul.addr %s234, 16
      %s239 = sadd.s32 %s237, %s238
      %s240 = smul.addr %s239, 4
      %s241 = scalar_lea.vmem %s1, %s240
      %s242 = smul.u32 8, %s19
      %s243 = smul.u32 8, %s19
      %p244 = scmp.lt.s32.totalorder %s18, 1
      %s245 = scalar_select %p244, %s18, 1
      %p246 = scmp.lt.s32.totalorder %s243, 7
      %s247 = scalar_select %p246, %s243, 7
      %s248 = smul.addr %s247, 2
      %s249 = smul.addr %s245, 16
      %s250 = sadd.s32 %s248, %s249
      %s251 = smul.addr %s250, 8
      %s252 = scalar_lea.vmem %s3, %s251
      %s253 = smul.u32 8, %s19
      %v254 = vld [vmem:[%s230] sm:$0xff]
      %v255 = vld [vmem:[%s230 + $0x8] sm:$0xff]
      %v256 = vld [vmem:[%s230 + $0x10] sm:$0xff]
      %v257 = vld [vmem:[%s230 + $0x18] sm:$0xff]
      %v258 = vld [vmem:[%s230 + $0x20] sm:$0xff]
      %v259 = vld [vmem:[%s230 + $0x28] sm:$0xff]
      %v260 = vld [vmem:[%s230 + $0x30] sm:$0xff]
      %v261 = vld [vmem:[%s230 + $0x38] sm:$0xff]
      %s262 = scalar_lea.vmem %s230, 64
      %v263 = vld [vmem:[%s262] sm:$0xff]
      %v264 = vld [vmem:[%s262 + $0x8] sm:$0xff]
      %v265 = vld [vmem:[%s262 + $0x10] sm:$0xff]
      %v266 = vld [vmem:[%s262 + $0x18] sm:$0xff]
      %v267 = vld [vmem:[%s262 + $0x20] sm:$0xff]
      %v268 = vld [vmem:[%s262 + $0x28] sm:$0xff]
      %v269 = vld [vmem:[%s262 + $0x30] sm:$0xff]
      %v270 = vld [vmem:[%s262 + $0x38] sm:$0xff]
      %v271 = vunpack.c.l.bf16 %v254
      %v272 = vunpack.c.h.bf16 %v254
      %v273 = vunpack.c.l.bf16 %v255
      %v274 = vunpack.c.h.bf16 %v255
      %v275 = vunpack.c.l.bf16 %v256
      %v276 = vunpack.c.h.bf16 %v256
      %v277 = vunpack.c.l.bf16 %v257
      %v278 = vunpack.c.h.bf16 %v257
      %v279 = vunpack.c.l.bf16 %v258
      %v280 = vunpack.c.h.bf16 %v258
      %v281 = vunpack.c.l.bf16 %v259
      %v282 = vunpack.c.h.bf16 %v259
      %v283 = vunpack.c.l.bf16 %v260
      %v284 = vunpack.c.h.bf16 %v260
      %v285 = vunpack.c.l.bf16 %v261
      %v286 = vunpack.c.h.bf16 %v261
      %v287 = vunpack.c.l.bf16 %v263
      %v288 = vunpack.c.h.bf16 %v263
      %v289 = vunpack.c.l.bf16 %v264
      %v290 = vunpack.c.h.bf16 %v264
      %v291 = vunpack.c.l.bf16 %v265
      %v292 = vunpack.c.h.bf16 %v265
      %v293 = vunpack.c.l.bf16 %v266
      %v294 = vunpack.c.h.bf16 %v266
      %v295 = vunpack.c.l.bf16 %v267
      %v296 = vunpack.c.h.bf16 %v267
      %v297 = vunpack.c.l.bf16 %v268
      %v298 = vunpack.c.h.bf16 %v268
      %v299 = vunpack.c.l.bf16 %v269
      %v300 = vunpack.c.h.bf16 %v269
      %v301 = vunpack.c.l.bf16 %v270
      %v302 = vunpack.c.h.bf16 %v270
      %v303 = vmax.f32 %v271, %v287
      %v304 = vmax.f32 %v272, %v288
      %v305 = vmax.f32 %v273, %v289
      %v306 = vmax.f32 %v274, %v290
      %v307 = vmax.f32 %v275, %v291
      %v308 = vmax.f32 %v276, %v292
      %v309 = vmax.f32 %v277, %v293
      %v310 = vmax.f32 %v278, %v294
      %v311 = vmax.f32 %v279, %v295
      %v312 = vmax.f32 %v280, %v296
      %v313 = vmax.f32 %v281, %v297
      %v314 = vmax.f32 %v282, %v298
      %v315 = vmax.f32 %v283, %v299
      %v316 = vmax.f32 %v284, %v300
      %v317 = vmax.f32 %v285, %v301
      %v318 = vmax.f32 %v286, %v302
      %v319 = vpack.c.bf16 %v304, %v303
      %v320 = vpack.c.bf16 %v306, %v305
      %v321 = vpack.c.bf16 %v308, %v307
      %v322 = vpack.c.bf16 %v310, %v309
      %v323 = vpack.c.bf16 %v312, %v311
      %v324 = vpack.c.bf16 %v314, %v313
      %v325 = vpack.c.bf16 %v316, %v315
      %v326 = vpack.c.bf16 %v318, %v317
      %s327 = scalar_lea.vmem %s230, 128
      %v328 = vld [vmem:[%s327] sm:$0xff]
      %v329 = vld [vmem:[%s327 + $0x8] sm:$0xff]
      %v330 = vld [vmem:[%s327 + $0x10] sm:$0xff]
      %v331 = vld [vmem:[%s327 + $0x18] sm:$0xff]
      %v332 = vld [vmem:[%s327 + $0x20] sm:$0xff]
      %v333 = vld [vmem:[%s327 + $0x28] sm:$0xff]
      %v334 = vld [vmem:[%s327 + $0x30] sm:$0xff]
      %v335 = vld [vmem:[%s327 + $0x38] sm:$0xff]
      %v336 = vunpack.c.l.bf16 %v319
      %v337 = vunpack.c.h.bf16 %v319
      %v338 = vunpack.c.l.bf16 %v320
      %v339 = vunpack.c.h.bf16 %v320
      %v340 = vunpack.c.l.bf16 %v321
      %v341 = vunpack.c.h.bf16 %v321
      %v342 = vunpack.c.l.bf16 %v322
      %v343 = vunpack.c.h.bf16 %v322
      %v344 = vunpack.c.l.bf16 %v323
      %v345 = vunpack.c.h.bf16 %v323
      %v346 = vunpack.c.l.bf16 %v324
      %v347 = vunpack.c.h.bf16 %v324
      %v348 = vunpack.c.l.bf16 %v325
      %v349 = vunpack.c.h.bf16 %v325
      %v350 = vunpack.c.l.bf16 %v326
      %v351 = vunpack.c.h.bf16 %v326
      %v352 = vunpack.c.l.bf16 %v328
      %v353 = vunpack.c.h.bf16 %v328
      %v354 = vunpack.c.l.bf16 %v329
      %v355 = vunpack.c.h.bf16 %v329
      %v356 = vunpack.c.l.bf16 %v330
      %v357 = vunpack.c.h.bf16 %v330
      %v358 = vunpack.c.l.bf16 %v331
      %v359 = vunpack.c.h.bf16 %v331
      %v360 = vunpack.c.l.bf16 %v332
      %v361 = vunpack.c.h.bf16 %v332
      %v362 = vunpack.c.l.bf16 %v333
      %v363 = vunpack.c.h.bf16 %v333
      %v364 = vunpack.c.l.bf16 %v334
      %v365 = vunpack.c.h.bf16 %v334
      %v366 = vunpack.c.l.bf16 %v335
      %v367 = vunpack.c.h.bf16 %v335
      %v368 = vmax.f32 %v336, %v352
      %v369 = vmax.f32 %v337, %v353
      %v370 = vmax.f32 %v338, %v354
      %v371 = vmax.f32 %v339, %v355
      %v372 = vmax.f32 %v340, %v356
      %v373 = vmax.f32 %v341, %v357
      %v374 = vmax.f32 %v342, %v358
      %v375 = vmax.f32 %v343, %v359
      %v376 = vmax.f32 %v344, %v360
      %v377 = vmax.f32 %v345, %v361
      %v378 = vmax.f32 %v346, %v362
      %v379 = vmax.f32 %v347, %v363
      %v380 = vmax.f32 %v348, %v364
      %v381 = vmax.f32 %v349, %v365
      %v382 = vmax.f32 %v350, %v366
      %v383 = vmax.f32 %v351, %v367
      %v384 = vpack.c.bf16 %v369, %v368
      %v385 = vpack.c.bf16 %v371, %v370
      %v386 = vpack.c.bf16 %v373, %v372
      %v387 = vpack.c.bf16 %v375, %v374
      %v388 = vpack.c.bf16 %v377, %v376
      %v389 = vpack.c.bf16 %v379, %v378
      %v390 = vpack.c.bf16 %v381, %v380
      %v391 = vpack.c.bf16 %v383, %v382
      %s392 = scalar_lea.vmem %s230, 192
      %v393 = vld [vmem:[%s392] sm:$0xff]
      %v394 = vld [vmem:[%s392 + $0x8] sm:$0xff]
      %v395 = vld [vmem:[%s392 + $0x10] sm:$0xff]
      %v396 = vld [vmem:[%s392 + $0x18] sm:$0xff]
      %v397 = vld [vmem:[%s392 + $0x20] sm:$0xff]
      %v398 = vld [vmem:[%s392 + $0x28] sm:$0xff]
      %v399 = vld [vmem:[%s392 + $0x30] sm:$0xff]
      %v400 = vld [vmem:[%s392 + $0x38] sm:$0xff]
      %v401 = vunpack.c.l.bf16 %v384
      %v402 = vunpack.c.h.bf16 %v384
      %v403 = vunpack.c.l.bf16 %v385
      %v404 = vunpack.c.h.bf16 %v385
      %v405 = vunpack.c.l.bf16 %v386
      %v406 = vunpack.c.h.bf16 %v386
      %v407 = vunpack.c.l.bf16 %v387
      %v408 = vunpack.c.h.bf16 %v387
      %v409 = vunpack.c.l.bf16 %v388
      %v410 = vunpack.c.h.bf16 %v388
      %v411 = vunpack.c.l.bf16 %v389
      %v412 = vunpack.c.h.bf16 %v389
      %v413 = vunpack.c.l.bf16 %v390
      %v414 = vunpack.c.h.bf16 %v390
      %v415 = vunpack.c.l.bf16 %v391
      %v416 = vunpack.c.h.bf16 %v391
      %v417 = vunpack.c.l.bf16 %v393
      %v418 = vunpack.c.h.bf16 %v393
      %v419 = vunpack.c.l.bf16 %v394
      %v420 = vunpack.c.h.bf16 %v394
      %v421 = vunpack.c.l.bf16 %v395
      %v422 = vunpack.c.h.bf16 %v395
      %v423 = vunpack.c.l.bf16 %v396
      %v424 = vunpack.c.h.bf16 %v396
      %v425 = vunpack.c.l.bf16 %v397
      %v426 = vunpack.c.h.bf16 %v397
      %v427 = vunpack.c.l.bf16 %v398
      %v428 = vunpack.c.h.bf16 %v398
      %v429 = vunpack.c.l.bf16 %v399
      %v430 = vunpack.c.h.bf16 %v399
      %v431 = vunpack.c.l.bf16 %v400
      %v432 = vunpack.c.h.bf16 %v400
      %v433 = vmax.f32 %v401, %v417
      %v434 = vmax.f32 %v402, %v418
      %v435 = vmax.f32 %v403, %v419
      %v436 = vmax.f32 %v404, %v420
      %v437 = vmax.f32 %v405, %v421
      %v438 = vmax.f32 %v406, %v422
      %v439 = vmax.f32 %v407, %v423
      %v440 = vmax.f32 %v408, %v424
      %v441 = vmax.f32 %v409, %v425
      %v442 = vmax.f32 %v410, %v426
      %v443 = vmax.f32 %v411, %v427
      %v444 = vmax.f32 %v412, %v428
      %v445 = vmax.f32 %v413, %v429
      %v446 = vmax.f32 %v414, %v430
      %v447 = vmax.f32 %v415, %v431
      %v448 = vmax.f32 %v416, %v432
      %v449 = vpack.c.bf16 %v434, %v433
      %v450 = vpack.c.bf16 %v436, %v435
      %v451 = vpack.c.bf16 %v438, %v437
      %v452 = vpack.c.bf16 %v440, %v439
      %v453 = vpack.c.bf16 %v442, %v441
      %v454 = vpack.c.bf16 %v444, %v443
      %v455 = vpack.c.bf16 %v446, %v445
      %v456 = vpack.c.bf16 %v448, %v447
      %s457 = scalar_lea.vmem %s230, 256
      %v458 = vld [vmem:[%s457] sm:$0xff]
      %v459 = vld [vmem:[%s457 + $0x8] sm:$0xff]
      %v460 = vld [vmem:[%s457 + $0x10] sm:$0xff]
      %v461 = vld [vmem:[%s457 + $0x18] sm:$0xff]
      %v462 = vld [vmem:[%s457 + $0x20] sm:$0xff]
      %v463 = vld [vmem:[%s457 + $0x28] sm:$0xff]
      %v464 = vld [vmem:[%s457 + $0x30] sm:$0xff]
      %v465 = vld [vmem:[%s457 + $0x38] sm:$0xff]
      %v466 = vunpack.c.l.bf16 %v449
      %v467 = vunpack.c.h.bf16 %v449
      %v468 = vunpack.c.l.bf16 %v450
      %v469 = vunpack.c.h.bf16 %v450
      %v470 = vunpack.c.l.bf16 %v451
      %v471 = vunpack.c.h.bf16 %v451
      %v472 = vunpack.c.l.bf16 %v452
      %v473 = vunpack.c.h.bf16 %v452
      %v474 = vunpack.c.l.bf16 %v453
      %v475 = vunpack.c.h.bf16 %v453
      %v476 = vunpack.c.l.bf16 %v454
      %v477 = vunpack.c.h.bf16 %v454
      %v478 = vunpack.c.l.bf16 %v455
      %v479 = vunpack.c.h.bf16 %v455
      %v480 = vunpack.c.l.bf16 %v456
      %v481 = vunpack.c.h.bf16 %v456
      %v482 = vunpack.c.l.bf16 %v458
      %v483 = vunpack.c.h.bf16 %v458
      %v484 = vunpack.c.l.bf16 %v459
      %v485 = vunpack.c.h.bf16 %v459
      %v486 = vunpack.c.l.bf16 %v460
      %v487 = vunpack.c.h.bf16 %v460
      %v488 = vunpack.c.l.bf16 %v461
      %v489 = vunpack.c.h.bf16 %v461
      %v490 = vunpack.c.l.bf16 %v462
      %v491 = vunpack.c.h.bf16 %v462
      %v492 = vunpack.c.l.bf16 %v463
      %v493 = vunpack.c.h.bf16 %v463
      %v494 = vunpack.c.l.bf16 %v464
      %v495 = vunpack.c.h.bf16 %v464
      %v496 = vunpack.c.l.bf16 %v465
      %v497 = vunpack.c.h.bf16 %v465
      %v498 = vmax.f32 %v466, %v482
      %v499 = vmax.f32 %v467, %v483
      %v500 = vmax.f32 %v468, %v484
      %v501 = vmax.f32 %v469, %v485
      %v502 = vmax.f32 %v470, %v486
      %v503 = vmax.f32 %v471, %v487
      %v504 = vmax.f32 %v472, %v488
      %v505 = vmax.f32 %v473, %v489
      %v506 = vmax.f32 %v474, %v490
      %v507 = vmax.f32 %v475, %v491
      %v508 = vmax.f32 %v476, %v492
      %v509 = vmax.f32 %v477, %v493
      %v510 = vmax.f32 %v478, %v494
      %v511 = vmax.f32 %v479, %v495
      %v512 = vmax.f32 %v480, %v496
      %v513 = vmax.f32 %v481, %v497
      %v514 = vpack.c.bf16 %v499, %v498
      %v515 = vpack.c.bf16 %v501, %v500
      %v516 = vpack.c.bf16 %v503, %v502
      %v517 = vpack.c.bf16 %v505, %v504
      %v518 = vpack.c.bf16 %v507, %v506
      %v519 = vpack.c.bf16 %v509, %v508
      %v520 = vpack.c.bf16 %v511, %v510
      %v521 = vpack.c.bf16 %v513, %v512
      %s522 = scalar_lea.vmem %s230, 320
      %v523 = vld [vmem:[%s522] sm:$0xff]
      %v524 = vld [vmem:[%s522 + $0x8] sm:$0xff]
      %v525 = vld [vmem:[%s522 + $0x10] sm:$0xff]
      %v526 = vld [vmem:[%s522 + $0x18] sm:$0xff]
      %v527 = vld [vmem:[%s522 + $0x20] sm:$0xff]
      %v528 = vld [vmem:[%s522 + $0x28] sm:$0xff]
      %v529 = vld [vmem:[%s522 + $0x30] sm:$0xff]
      %v530 = vld [vmem:[%s522 + $0x38] sm:$0xff]
      %v531 = vunpack.c.l.bf16 %v514
      %v532 = vunpack.c.h.bf16 %v514
      %v533 = vunpack.c.l.bf16 %v515
      %v534 = vunpack.c.h.bf16 %v515
      %v535 = vunpack.c.l.bf16 %v516
      %v536 = vunpack.c.h.bf16 %v516
      %v537 = vunpack.c.l.bf16 %v517
      %v538 = vunpack.c.h.bf16 %v517
      %v539 = vunpack.c.l.bf16 %v518
      %v540 = vunpack.c.h.bf16 %v518
      %v541 = vunpack.c.l.bf16 %v519
      %v542 = vunpack.c.h.bf16 %v519
      %v543 = vunpack.c.l.bf16 %v520
      %v544 = vunpack.c.h.bf16 %v520
      %v545 = vunpack.c.l.bf16 %v521
      %v546 = vunpack.c.h.bf16 %v521
      %v547 = vunpack.c.l.bf16 %v523
      %v548 = vunpack.c.h.bf16 %v523
      %v549 = vunpack.c.l.bf16 %v524
      %v550 = vunpack.c.h.bf16 %v524
      %v551 = vunpack.c.l.bf16 %v525
      %v552 = vunpack.c.h.bf16 %v525
      %v553 = vunpack.c.l.bf16 %v526
      %v554 = vunpack.c.h.bf16 %v526
      %v555 = vunpack.c.l.bf16 %v527
      %v556 = vunpack.c.h.bf16 %v527
      %v557 = vunpack.c.l.bf16 %v528
      %v558 = vunpack.c.h.bf16 %v528
      %v559 = vunpack.c.l.bf16 %v529
      %v560 = vunpack.c.h.bf16 %v529
      %v561 = vunpack.c.l.bf16 %v530
      %v562 = vunpack.c.h.bf16 %v530
      %v563 = vmax.f32 %v531, %v547
      %v564 = vmax.f32 %v532, %v548
      %v565 = vmax.f32 %v533, %v549
      %v566 = vmax.f32 %v534, %v550
      %v567 = vmax.f32 %v535, %v551
      %v568 = vmax.f32 %v536, %v552
      %v569 = vmax.f32 %v537, %v553
      %v570 = vmax.f32 %v538, %v554
      %v571 = vmax.f32 %v539, %v555
      %v572 = vmax.f32 %v540, %v556
      %v573 = vmax.f32 %v541, %v557
      %v574 = vmax.f32 %v542, %v558
      %v575 = vmax.f32 %v543, %v559
      %v576 = vmax.f32 %v544, %v560
      %v577 = vmax.f32 %v545, %v561
      %v578 = vmax.f32 %v546, %v562
      %v579 = vpack.c.bf16 %v564, %v563
      %v580 = vpack.c.bf16 %v566, %v565
      %v581 = vpack.c.bf16 %v568, %v567
      %v582 = vpack.c.bf16 %v570, %v569
      %v583 = vpack.c.bf16 %v572, %v571
      %v584 = vpack.c.bf16 %v574, %v573
      %v585 = vpack.c.bf16 %v576, %v575
      %v586 = vpack.c.bf16 %v578, %v577
      %s587 = scalar_lea.vmem %s230, 384
      %v588 = vld [vmem:[%s587] sm:$0xff]
      %v589 = vld [vmem:[%s587 + $0x8] sm:$0xff]
      %v590 = vld [vmem:[%s587 + $0x10] sm:$0xff]
      %v591 = vld [vmem:[%s587 + $0x18] sm:$0xff]
      %v592 = vld [vmem:[%s587 + $0x20] sm:$0xff]
      %v593 = vld [vmem:[%s587 + $0x28] sm:$0xff]
      %v594 = vld [vmem:[%s587 + $0x30] sm:$0xff]
      %v595 = vld [vmem:[%s587 + $0x38] sm:$0xff]
      %v596 = vunpack.c.l.bf16 %v579
      %v597 = vunpack.c.h.bf16 %v579
      %v598 = vunpack.c.l.bf16 %v580
      %v599 = vunpack.c.h.bf16 %v580
      %v600 = vunpack.c.l.bf16 %v581
      %v601 = vunpack.c.h.bf16 %v581
      %v602 = vunpack.c.l.bf16 %v582
      %v603 = vunpack.c.h.bf16 %v582
      %v604 = vunpack.c.l.bf16 %v583
      %v605 = vunpack.c.h.bf16 %v583
      %v606 = vunpack.c.l.bf16 %v584
      %v607 = vunpack.c.h.bf16 %v584
      %v608 = vunpack.c.l.bf16 %v585
      %v609 = vunpack.c.h.bf16 %v585
      %v610 = vunpack.c.l.bf16 %v586
      %v611 = vunpack.c.h.bf16 %v586
      %v612 = vunpack.c.l.bf16 %v588
      %v613 = vunpack.c.h.bf16 %v588
      %v614 = vunpack.c.l.bf16 %v589
      %v615 = vunpack.c.h.bf16 %v589
      %v616 = vunpack.c.l.bf16 %v590
      %v617 = vunpack.c.h.bf16 %v590
      %v618 = vunpack.c.l.bf16 %v591
      %v619 = vunpack.c.h.bf16 %v591
      %v620 = vunpack.c.l.bf16 %v592
      %v621 = vunpack.c.h.bf16 %v592
      %v622 = vunpack.c.l.bf16 %v593
      %v623 = vunpack.c.h.bf16 %v593
      %v624 = vunpack.c.l.bf16 %v594
      %v625 = vunpack.c.h.bf16 %v594
      %v626 = vunpack.c.l.bf16 %v595
      %v627 = vunpack.c.h.bf16 %v595
      %v628 = vmax.f32 %v596, %v612
      %v629 = vmax.f32 %v597, %v613
      %v630 = vmax.f32 %v598, %v614
      %v631 = vmax.f32 %v599, %v615
      %v632 = vmax.f32 %v600, %v616
      %v633 = vmax.f32 %v601, %v617
      %v634 = vmax.f32 %v602, %v618
      %v635 = vmax.f32 %v603, %v619
      %v636 = vmax.f32 %v604, %v620
      %v637 = vmax.f32 %v605, %v621
      %v638 = vmax.f32 %v606, %v622
      %v639 = vmax.f32 %v607, %v623
      %v640 = vmax.f32 %v608, %v624
      %v641 = vmax.f32 %v609, %v625
      %v642 = vmax.f32 %v610, %v626
      %v643 = vmax.f32 %v611, %v627
      %v644 = vpack.c.bf16 %v629, %v628
      %v645 = vpack.c.bf16 %v631, %v630
      %v646 = vpack.c.bf16 %v633, %v632
      %v647 = vpack.c.bf16 %v635, %v634
      %v648 = vpack.c.bf16 %v637, %v636
      %v649 = vpack.c.bf16 %v639, %v638
      %v650 = vpack.c.bf16 %v641, %v640
      %v651 = vpack.c.bf16 %v643, %v642
      %s652 = scalar_lea.vmem %s230, 448
      %v653 = vld [vmem:[%s652] sm:$0xff]
      %v654 = vld [vmem:[%s652 + $0x8] sm:$0xff]
      %v655 = vld [vmem:[%s652 + $0x10] sm:$0xff]
      %v656 = vld [vmem:[%s652 + $0x18] sm:$0xff]
      %v657 = vld [vmem:[%s652 + $0x20] sm:$0xff]
      %v658 = vld [vmem:[%s652 + $0x28] sm:$0xff]
      %v659 = vld [vmem:[%s652 + $0x30] sm:$0xff]
      %v660 = vld [vmem:[%s652 + $0x38] sm:$0xff]
      %v661 = vunpack.c.l.bf16 %v644
      %v662 = vunpack.c.h.bf16 %v644
      %v663 = vunpack.c.l.bf16 %v645
      %v664 = vunpack.c.h.bf16 %v645
      %v665 = vunpack.c.l.bf16 %v646
      %v666 = vunpack.c.h.bf16 %v646
      %v667 = vunpack.c.l.bf16 %v647
      %v668 = vunpack.c.h.bf16 %v647
      %v669 = vunpack.c.l.bf16 %v648
      %v670 = vunpack.c.h.bf16 %v648
      %v671 = vunpack.c.l.bf16 %v649
      %v672 = vunpack.c.h.bf16 %v649
      %v673 = vunpack.c.l.bf16 %v650
      %v674 = vunpack.c.h.bf16 %v650
      %v675 = vunpack.c.l.bf16 %v651
      %v676 = vunpack.c.h.bf16 %v651
      %v677 = vunpack.c.l.bf16 %v653
      %v678 = vunpack.c.h.bf16 %v653
      %v679 = vunpack.c.l.bf16 %v654
      %v680 = vunpack.c.h.bf16 %v654
      %v681 = vunpack.c.l.bf16 %v655
      %v682 = vunpack.c.h.bf16 %v655
      %v683 = vunpack.c.l.bf16 %v656
      %v684 = vunpack.c.h.bf16 %v656
      %v685 = vunpack.c.l.bf16 %v657
      %v686 = vunpack.c.h.bf16 %v657
      %v687 = vunpack.c.l.bf16 %v658
      %v688 = vunpack.c.h.bf16 %v658
      %v689 = vunpack.c.l.bf16 %v659
      %v690 = vunpack.c.h.bf16 %v659
      %v691 = vunpack.c.l.bf16 %v660
      %v692 = vunpack.c.h.bf16 %v660
      %v693 = vmax.f32 %v661, %v677
      %v694 = vmax.f32 %v662, %v678
      %v695 = vmax.f32 %v663, %v679
      %v696 = vmax.f32 %v664, %v680
      %v697 = vmax.f32 %v665, %v681
      %v698 = vmax.f32 %v666, %v682
      %v699 = vmax.f32 %v667, %v683
      %v700 = vmax.f32 %v668, %v684
      %v701 = vmax.f32 %v669, %v685
      %v702 = vmax.f32 %v670, %v686
      %v703 = vmax.f32 %v671, %v687
      %v704 = vmax.f32 %v672, %v688
      %v705 = vmax.f32 %v673, %v689
      %v706 = vmax.f32 %v674, %v690
      %v707 = vmax.f32 %v675, %v691
      %v708 = vmax.f32 %v676, %v692
      %v709 = vpack.c.bf16 %v694, %v693
      %v710 = vpack.c.bf16 %v696, %v695
      %v711 = vpack.c.bf16 %v698, %v697
      %v712 = vpack.c.bf16 %v700, %v699
      %v713 = vpack.c.bf16 %v702, %v701
      %v714 = vpack.c.bf16 %v704, %v703
      %v715 = vpack.c.bf16 %v706, %v705
      %v716 = vpack.c.bf16 %v708, %v707
      %v717 = vunpack.c.l.bf16 %v709
      %v718 = vunpack.c.h.bf16 %v709
      %v719 = vunpack.c.l.bf16 %v710
      %v720 = vunpack.c.h.bf16 %v710
      %v721 = vunpack.c.l.bf16 %v711
      %v722 = vunpack.c.h.bf16 %v711
      %v723 = vunpack.c.l.bf16 %v712
      %v724 = vunpack.c.h.bf16 %v712
      %v725 = vunpack.c.l.bf16 %v713
      %v726 = vunpack.c.h.bf16 %v713
      %v727 = vunpack.c.l.bf16 %v714
      %v728 = vunpack.c.h.bf16 %v714
      %v729 = vunpack.c.l.bf16 %v715
      %v730 = vunpack.c.h.bf16 %v715
      %v731 = vunpack.c.l.bf16 %v716
      %v732 = vunpack.c.h.bf16 %v716
      %v733 = vld [vmem:[%s241] sm:$0xff]
      %v734 = vld [vmem:[%s241 + $0x8] sm:$0xff]
      %v735 = vld [vmem:[%s241 + $0x10] sm:$0xff]
      %v736 = vld [vmem:[%s241 + $0x18] sm:$0xff]
      %v737 = vld [vmem:[%s241 + $0x20] sm:$0xff]
      %v738 = vld [vmem:[%s241 + $0x28] sm:$0xff]
      %v739 = vld [vmem:[%s241 + $0x30] sm:$0xff]
      %v740 = vld [vmem:[%s241 + $0x38] sm:$0xff]
      %v741 = vunpack.c.l.bf16 %v733
      %v742 = vunpack.c.h.bf16 %v733
      %v743 = vunpack.c.l.bf16 %v734
      %v744 = vunpack.c.h.bf16 %v734
      %v745 = vunpack.c.l.bf16 %v735
      %v746 = vunpack.c.h.bf16 %v735
      %v747 = vunpack.c.l.bf16 %v736
      %v748 = vunpack.c.h.bf16 %v736
      %v749 = vunpack.c.l.bf16 %v737
      %v750 = vunpack.c.h.bf16 %v737
      %v751 = vunpack.c.l.bf16 %v738
      %v752 = vunpack.c.h.bf16 %v738
      %v753 = vunpack.c.l.bf16 %v739
      %v754 = vunpack.c.h.bf16 %v739
      %v755 = vunpack.c.l.bf16 %v740
      %v756 = vunpack.c.h.bf16 %v740
      %v757 = vadd.f32 %v717, %v741
      %v758 = vadd.f32 %v718, %v742
      %v759 = vadd.f32 %v719, %v743
      %v760 = vadd.f32 %v720, %v744
      %v761 = vadd.f32 %v721, %v745
      %v762 = vadd.f32 %v722, %v746
      %v763 = vadd.f32 %v723, %v747
      %v764 = vadd.f32 %v724, %v748
      %v765 = vadd.f32 %v725, %v749
      %v766 = vadd.f32 %v726, %v750
      %v767 = vadd.f32 %v727, %v751
      %v768 = vadd.f32 %v728, %v752
      %v769 = vadd.f32 %v729, %v753
      %v770 = vadd.f32 %v730, %v754
      %v771 = vadd.f32 %v731, %v755
      %v772 = vadd.f32 %v732, %v756
      %v773 = vld [vmem:[%s2] sm:$0x3]
      %v775 = vperm.slane %v773, 0
      %v776 = vperm.slane %v773, 1
      %v779 = vadd.f32 %v757, %v775
      %v780 = vadd.f32 %v758, %v776
      %v781 = vadd.f32 %v759, %v775
      %v782 = vadd.f32 %v760, %v776
      %v783 = vadd.f32 %v761, %v775
      %v784 = vadd.f32 %v762, %v776
      %v785 = vadd.f32 %v763, %v775
      %v786 = vadd.f32 %v764, %v776
      %v787 = vadd.f32 %v765, %v775
      %v788 = vadd.f32 %v766, %v776
      %v789 = vadd.f32 %v767, %v775
      %v790 = vadd.f32 %v768, %v776
      %v791 = vadd.f32 %v769, %v775
      %v792 = vadd.f32 %v770, %v776
      %v793 = vadd.f32 %v771, %v775
      %v794 = vadd.f32 %v772, %v776
      %v795 = vmul.f32 %v779, 0.2
      %v796 = vmul.f32 %v780, 0.2
      %v797 = vmul.f32 %v781, 0.2
      %v798 = vmul.f32 %v782, 0.2
      %v799 = vmul.f32 %v783, 0.2
      %v800 = vmul.f32 %v784, 0.2
      %v801 = vmul.f32 %v785, 0.2
      %v802 = vmul.f32 %v786, 0.2
      %v803 = vmul.f32 %v787, 0.2
      %v804 = vmul.f32 %v788, 0.2
      %v805 = vmul.f32 %v789, 0.2
      %v806 = vmul.f32 %v790, 0.2
      %v807 = vmul.f32 %v791, 0.2
      %v808 = vmul.f32 %v792, 0.2
      %v809 = vmul.f32 %v793, 0.2
      %v810 = vmul.f32 %v794, 0.2
      %v811 = vmax.f32 %v779, %v795
      %v812 = vmax.f32 %v780, %v796
      %v813 = vmax.f32 %v781, %v797
      %v814 = vmax.f32 %v782, %v798
      %v815 = vmax.f32 %v783, %v799
      %v816 = vmax.f32 %v784, %v800
      %v817 = vmax.f32 %v785, %v801
      %v818 = vmax.f32 %v786, %v802
      %v819 = vmax.f32 %v787, %v803
      %v820 = vmax.f32 %v788, %v804
      %v821 = vmax.f32 %v789, %v805
      %v822 = vmax.f32 %v790, %v806
      %v823 = vmax.f32 %v791, %v807
      %v824 = vmax.f32 %v792, %v808
      %v825 = vmax.f32 %v793, %v809
      %v826 = vmax.f32 %v794, %v810
      %827 = vst [vmem:[%s252] sm:$0xff] %v811
      %828 = vst [vmem:[%s252 + $0x8] sm:$0xff] %v812
      %829 = vst [vmem:[%s252 + $0x10] sm:$0xff] %v813
      %830 = vst [vmem:[%s252 + $0x18] sm:$0xff] %v814
      %831 = vst [vmem:[%s252 + $0x20] sm:$0xff] %v815
      %832 = vst [vmem:[%s252 + $0x28] sm:$0xff] %v816
      %833 = vst [vmem:[%s252 + $0x30] sm:$0xff] %v817
      %834 = vst [vmem:[%s252 + $0x38] sm:$0xff] %v818
      %835 = vst [vmem:[%s252 + $0x40] sm:$0xff] %v819
      %836 = vst [vmem:[%s252 + $0x48] sm:$0xff] %v820
      %837 = vst [vmem:[%s252 + $0x50] sm:$0xff] %v821
      %838 = vst [vmem:[%s252 + $0x58] sm:$0xff] %v822
      %839 = vst [vmem:[%s252 + $0x60] sm:$0xff] %v823
      %840 = vst [vmem:[%s252 + $0x68] sm:$0xff] %v824
      %841 = vst [vmem:[%s252 + $0x70] sm:$0xff] %v825
      %842 = vst [vmem:[%s252 + $0x78] sm:$0xff] %v826
      %s843 = smul.u32 8, %s19
      %p844 = scmp.lt.s32.totalorder %s18, 1
      %s845 = scalar_select %p844, %s18, 1
      %p846 = scmp.lt.s32.totalorder %s843, 7
      %s847 = scalar_select %p846, %s843, 7
      %s848 = smul.addr %s847, 2
      %s849 = smul.addr %s845, 16
      %s850 = sadd.s32 %s848, %s849
      %s851 = smul.addr %s850, 8
      %s852 = scalar_lea.vmem %s3, %s851
      // Predicated region
      $region33: #{weight_binding_net_forward.13} parent=31 // pred_check
        %p853 = pneg %p123
      $region34: #{weight_binding_net_forward.13} parent=31 // pred_check_branch
        %855 = sbr.rel (%p853) target = $region36
      $region35: #{weight_binding_net_forward.13} parent=31 // pred_region
        %s856 = smul.u32 8, %s19
      $region36: #{weight_binding_net_forward.13} parent=31 // pred_fallthru
        _
    $region32: #{weight_binding_net_forward.13} parent=5 // pred_fallthru
      _
    %p857 = scmp.le.s32.totalorder 2, %s9
    // Predicated region
    $region37: #{weight_binding_net_forward.13} parent=5 // pred_check
      %p858 = pneg %p857
    $region38: #{weight_binding_net_forward.13} parent=5 // pred_check_branch
      %860 = sbr.rel (%p858) target = $region40
    $region39: #{weight_binding_net_forward.13} parent=5 // pred_region
      %s861 = ssub.s32 %s9, 2
      // Predicated region
      $region41: #{weight_binding_net_forward.13} parent=39 // pred_check
        %p862 = pneg %p129
      $region42: #{weight_binding_net_forward.13} parent=39 // pred_check_branch
        %864 = sbr.rel (%p862) target = $region44
      $region43: #{weight_binding_net_forward.13} parent=39 // pred_region
        %s865 = smul.u32 8, %s21
        %p866 = scmp.lt.s32.totalorder %s20, 1
        %s867 = scalar_select %p866, %s20, 1
        %p868 = scmp.lt.s32.totalorder %s865, 7
        %s869 = scalar_select %p868, %s865, 7
        %s870 = smul.addr %s869, 2
        %s871 = smul.addr %s867, 16
        %s872 = sadd.s32 %s870, %s871
        %s873 = smul.addr %s872, 8
        %s874 = scalar_lea.vmem %s3, %s873
      $region44: #{weight_binding_net_forward.13} parent=39 // pred_fallthru
        _
    $region40: #{weight_binding_net_forward.13} parent=5 // pred_fallthru
      _
  $region6: #{weight_binding_net_forward.13} parent=0 // loop_footer
    %s13 = sadd.s32 1, %s9
  $region7: #{weight_binding_net_forward.13} parent=0 // loop_footer_branch
    %8 = sbr.rel target = $region3
  $region8: #{weight_binding_net_forward.13} parent=0 // loop_exit
    _

// kernel: weight_binding_net_forward.14
$region0: #{weight_binding_net_forward.14}
  #allocation0 [shape = 'u32[]', space=smem, size = 0x4, offset = 0x4, fixed_abs, tag = 'smem constant byte address 0x4 - core index']
  #allocation1 [shape = 'u32[72,128]{1,0:T(1,128)}', space=vmem, size = 0x9000, scoped, tag = 'internal scratch']
  %s0 = inlined_call_operand.vmem [shape: bf16[2,64,512], index: 0, kind: input, shape index: {}]
  %s1 = inlined_call_operand.vmem [shape: bf16[512,512], index: 1, kind: input, shape index: {}]
  %s2 = inlined_call_operand.vmem [shape: f32[1,512], index: 2, kind: input, shape index: {}]
  %s3 = inlined_call_operand.vmem [shape: f32[2,1,512], index: 3, kind: output, shape index: {0}]
  %s4 = inlined_call_operand.vmem [shape: f32[2,1,512], index: 4, kind: output, shape index: {1}]
  %5 = xla_tuple %s3, %s4
  %s6 = sld [smem:[#allocation0]]
  $region61: #{weight_binding_net_forward.14} parent=0
    _
  %s8 = ssub.s32 1, %s6
  %s9 = scalar_select 0, %s8, %s6
  loop: start=0, step=1, limit=4
  $region2: #{weight_binding_net_forward.14} parent=0 // loop_pre_header
    _
  $region3: #{weight_binding_net_forward.14} parent=0 // loop_header
    %s11 = sphi 0, %s15
    %p12 = scmp.ge.s32.totalorder %s11, 4
    %s18 = sphi 0, %s30
    %s19 = sphi 0, %s26
    %s20 = sphi 0, %s18
    %s21 = sphi 0, %s19
    %s22 = sphi 0, %s20
    %s23 = sphi 0, %s21
    %s35 = sphi 0, %s37
    %s38 = sphi 0, %s35
    %s39 = sphi 0, %s38
    %s55 = sphi 0, %s39
    %s59 = sphi 0, %s59
    %s61 = sphi 0, %s59
    %s62 = sphi 0, %s61
    %s76 = sphi 0, %s62
    %s80 = sphi 0, %s80
    %s82 = sphi 0, %s80
    %s83 = sphi 0, %s82
    %s97 = sphi 0, %s83
    %s103 = sphi 0, %s105
    %s106 = sphi 0, %s103
    %s107 = sphi 0, %s106
    %s123 = sphi 0, %s107
    %s129 = sphi 0, %s131
    %s132 = sphi 0, %s129
    %s133 = sphi 0, %s132
    %s149 = sphi 0, %s133
  $region4: #{weight_binding_net_forward.14} parent=0 // loop_header_branch
    %14 = sbr.rel (%p12) target = $region8
  $region5: #{weight_binding_net_forward.14} parent=0 // loop_body
    %s16 = ssub.s32 %s11, 1
    %s17 = ssub.s32 %s11, 2
    %s24 = sadd.s32 1, %s19
    %p25 = scmp.ge.s32.totalorder %s24, 1
    %s26 = scalar_select %p25, 0, %s24
    %s27 = sadd.s32 1, %s18
    %s28 = scalar_select %p25, %s27, %s18
    %p29 = scmp.ge.s32.totalorder %s28, 2
    %s30 = scalar_select %p29, 0, %s28
    %s31 = ssub.s32 %s18, %s30
    %s32 = ssub.s32 %s19, %s26
    %s33 = sor.u32 %s31, %s32
    %p34 = scmp.eq.s32.totalorder %s33, 0
    %s36 = sadd.s32 %s35, 1
    %s37 = scalar_select %p34, %s35, %s36
    %p40 = pneg %p34
    %p41 = scmp.eq.s32.totalorder %s11, 1
    %p42 = por %p40, %p41
    %p43 = scmp.ne.s32.totalorder %s35, %s38
    %p44 = scmp.eq.s32.totalorder %s11, 0
    %p45 = por %p43, %p44
    %p46 = scmp.ne.s32.totalorder %s35, %s38
    %p47 = scmp.eq.s32.totalorder %s16, 1
    %p48 = por %p46, %p47
    %p49 = scmp.ne.s32.totalorder %s38, %s39
    %p50 = scmp.eq.s32.totalorder %s16, 0
    %p51 = por %p49, %p50
    %p52 = scmp.ne.s32.totalorder %s38, %s39
    %p53 = scmp.eq.s32.totalorder %s17, 1
    %p54 = por %p52, %p53
    %p56 = scmp.ne.s32.totalorder %s39, %s55
    %p57 = scmp.eq.s32.totalorder %s17, 0
    %p58 = por %p56, %p57
    %s60 = sadd.s32 %s59, 1
    %p63 = scmp.eq.s32.totalorder %s11, 1
    %p64 = scmp.ne.s32.totalorder %s59, %s61
    %p65 = scmp.eq.s32.totalorder %s11, 0
    %p66 = por %p64, %p65
    %p67 = scmp.ne.s32.totalorder %s59, %s61
    %p68 = scmp.eq.s32.totalorder %s16, 1
    %p69 = por %p67, %p68
    %p70 = scmp.ne.s32.totalorder %s61, %s62
    %p71 = scmp.eq.s32.totalorder %s16, 0
    %p72 = por %p70, %p71
    %p73 = scmp.ne.s32.totalorder %s61, %s62
    %p74 = scmp.eq.s32.totalorder %s17, 1
    %p75 = por %p73, %p74
    %p77 = scmp.ne.s32.totalorder %s62, %s76
    %p78 = scmp.eq.s32.totalorder %s17, 0
    %p79 = por %p77, %p78
    %s81 = sadd.s32 %s80, 1
    %p84 = scmp.eq.s32.totalorder %s11, 1
    %p85 = scmp.ne.s32.totalorder %s80, %s82
    %p86 = scmp.eq.s32.totalorder %s11, 0
    %p87 = por %p85, %p86
    %p88 = scmp.ne.s32.totalorder %s80, %s82
    %p89 = scmp.eq.s32.totalorder %s16, 1
    %p90 = por %p88, %p89
    %p91 = scmp.ne.s32.totalorder %s82, %s83
    %p92 = scmp.eq.s32.totalorder %s16, 0
    %p93 = por %p91, %p92
    %p94 = scmp.ne.s32.totalorder %s82, %s83
    %p95 = scmp.eq.s32.totalorder %s17, 1
    %p96 = por %p94, %p95
    %p98 = scmp.ne.s32.totalorder %s83, %s97
    %p99 = scmp.eq.s32.totalorder %s17, 0
    %p100 = por %p98, %p99
    %s101 = ssub.s32 %s18, %s30
    %p102 = scmp.eq.s32.totalorder %s101, 0
    %s104 = sadd.s32 %s103, 1
    %s105 = scalar_select %p102, %s103, %s104
    %p108 = pneg %p102
    %p109 = scmp.eq.s32.totalorder %s11, 1
    %p110 = por %p108, %p109
    %p111 = scmp.ne.s32.totalorder %s103, %s106
    %p112 = scmp.eq.s32.totalorder %s11, 0
    %p113 = por %p111, %p112
    %p114 = scmp.ne.s32.totalorder %s103, %s106
    %p115 = scmp.eq.s32.totalorder %s16, 1
    %p116 = por %p114, %p115
    %p117 = scmp.ne.s32.totalorder %s106, %s107
    %p118 = scmp.eq.s32.totalorder %s16, 0
    %p119 = por %p117, %p118
    %p120 = scmp.ne.s32.totalorder %s106, %s107
    %p121 = scmp.eq.s32.totalorder %s17, 1
    %p122 = por %p120, %p121
    %p124 = scmp.ne.s32.totalorder %s107, %s123
    %p125 = scmp.eq.s32.totalorder %s17, 0
    %p126 = por %p124, %p125
    %s127 = ssub.s32 %s18, %s30
    %p128 = scmp.eq.s32.totalorder %s127, 0
    %s130 = sadd.s32 %s129, 1
    %s131 = scalar_select %p128, %s129, %s130
    %p134 = pneg %p128
    %p135 = scmp.eq.s32.totalorder %s11, 1
    %p136 = por %p134, %p135
    %p137 = scmp.ne.s32.totalorder %s129, %s132
    %p138 = scmp.eq.s32.totalorder %s11, 0
    %p139 = por %p137, %p138
    %p140 = scmp.ne.s32.totalorder %s129, %s132
    %p141 = scmp.eq.s32.totalorder %s16, 1
    %p142 = por %p140, %p141
    %p143 = scmp.ne.s32.totalorder %s132, %s133
    %p144 = scmp.eq.s32.totalorder %s16, 0
    %p145 = por %p143, %p144
    %p146 = scmp.ne.s32.totalorder %s132, %s133
    %p147 = scmp.eq.s32.totalorder %s17, 1
    %p148 = por %p146, %p147
    %p150 = scmp.ne.s32.totalorder %s133, %s149
    %p151 = scmp.eq.s32.totalorder %s17, 0
    %p152 = por %p150, %p151
    %p153 = scmp.le.s32.totalorder 1, %s11
    %p154 = scmp.lt.s32.totalorder %s11, 3
    %p155 = pnand %p153, %p154
    %p156 = pneg %p155
    // Predicated region
    $region9: #{weight_binding_net_forward.14} parent=5 // pred_check
      _
    $region10: #{weight_binding_net_forward.14} parent=5 // pred_check_branch
      %158 = sbr.rel (%p155) target = $region12
    $region11: #{weight_binding_net_forward.14} parent=5 // pred_region
      %s159 = ssub.s32 %s11, 1
      // Predicated region
      $region13: #{weight_binding_net_forward.14} parent=11 // pred_check
        %p160 = pneg %p72
      $region14: #{weight_binding_net_forward.14} parent=11 // pred_check_branch
        %162 = sbr.rel (%p160) target = $region16
      $region15: #{weight_binding_net_forward.14} parent=11 // pred_region
        _
      $region16: #{weight_binding_net_forward.14} parent=11 // pred_fallthru
        _
      // Predicated region
      $region17: #{weight_binding_net_forward.14} parent=11 // pred_check
        %p163 = pneg %p93
      $region18: #{weight_binding_net_forward.14} parent=11 // pred_check_branch
        %165 = sbr.rel (%p163) target = $region20
      $region19: #{weight_binding_net_forward.14} parent=11 // pred_region
        _
      $region20: #{weight_binding_net_forward.14} parent=11 // pred_fallthru
        _
    $region12: #{weight_binding_net_forward.14} parent=5 // pred_fallthru
      _
    %p166 = scmp.lt.s32.totalorder %s11, 2
    // Predicated region
    $region21: #{weight_binding_net_forward.14} parent=5 // pred_check
      %p167 = pneg %p166
    $region22: #{weight_binding_net_forward.14} parent=5 // pred_check_branch
      %169 = sbr.rel (%p167) target = $region24
    $region23: #{weight_binding_net_forward.14} parent=5 // pred_region
      // Predicated region
      $region25: #{weight_binding_net_forward.14} parent=23 // pred_check
        %p170 = pneg %p45
      $region26: #{weight_binding_net_forward.14} parent=23 // pred_check_branch
        %172 = sbr.rel (%p170) target = $region28
      $region27: #{weight_binding_net_forward.14} parent=23 // pred_region
        %s173 = smul.u32 8, %s19
        %p174 = scmp.lt.s32.totalorder %s18, 1
        %s175 = scalar_select %p174, %s18, 1
        %p176 = scmp.lt.s32.totalorder %s173, 7
        %s177 = scalar_select %p176, %s173, 7
        %s178 = smul.addr %s177, 4
        %s179 = smul.addr %s175, 32
        %s180 = sadd.s32 %s178, %s179
        %s181 = smul.addr %s180, 4
        %s182 = scalar_lea.vmem %s0, %s181
        %s183 = smul.u32 8, %s19
      $region28: #{weight_binding_net_forward.14} parent=23 // pred_fallthru
        _
    $region24: #{weight_binding_net_forward.14} parent=5 // pred_fallthru
      _
    %p184 = scmp.le.s32.totalorder 1, %s11
    %p185 = scmp.lt.s32.totalorder %s11, 3
    %p186 = pnand %p184, %p185
    %p187 = pneg %p186
    // Predicated region
    $region29: #{weight_binding_net_forward.14} parent=5 // pred_check
      _
    $region30: #{weight_binding_net_forward.14} parent=5 // pred_check_branch
      %189 = sbr.rel (%p186) target = $region32
    $region31: #{weight_binding_net_forward.14} parent=5 // pred_region
      %s190 = ssub.s32 %s11, 1
      %s191 = smul.u32 8, %s21
      %p192 = scmp.lt.s32.totalorder %s20, 1
      %s193 = scalar_select %p192, %s20, 1
      %p194 = scmp.lt.s32.totalorder %s191, 7
      %s195 = scalar_select %p194, %s191, 7
      %s196 = smul.addr %s195, 4
      %s197 = smul.addr %s193, 32
      %s198 = sadd.s32 %s196, %s197
      %s199 = smul.addr %s198, 4
      %s200 = scalar_lea.vmem %s0, %s199
      %p201 = pneg %p51
      %p202 = pneg %p48
      %p203 = pneg %p72
      %p204 = pneg %p69
      %p205 = pneg %p93
      %p206 = pneg %p90
      %p207 = pneg %p119
      %p208 = pneg %p116
      %p209 = scmp.lt.s32.totalorder %s20, 1
      %s210 = scalar_select %p209, %s20, 1
      %s211 = smul.addr %s210, 4
      %s212 = scalar_lea.vmem %s3, %s211
      %p213 = pneg %p145
      %p214 = pneg %p142
      %p215 = scmp.lt.s32.totalorder %s20, 1
      %s216 = scalar_select %p215, %s20, 1
      %s217 = smul.addr %s216, 4
      %s218 = scalar_lea.vmem %s4, %s217
      %s219 = smul.u32 8, %s21
      %p220 = scmp.lt.s32.totalorder %s20, 1
      %s221 = scalar_select %p220, %s20, 1
      %p222 = scmp.lt.s32.totalorder %s219, 7
      %s223 = scalar_select %p222, %s219, 7
      %s224 = smul.addr %s223, 4
      %s225 = smul.addr %s221, 32
      %s226 = sadd.s32 %s224, %s225
      %s227 = smul.addr %s226, 4
      %s228 = scalar_lea.vmem %s0, %s227
      %s229 = smul.u32 8, %s21
      %p230 = scmp.lt.s32.totalorder %s20, 1
      %s231 = scalar_select %p230, %s20, 1
      %s232 = smul.addr %s231, 4
      %s233 = scalar_lea.vmem %s3, %s232
      %p234 = scmp.lt.s32.totalorder %s20, 1
      %s235 = scalar_select %p234, %s20, 1
      %s236 = smul.addr %s235, 4
      %s237 = scalar_lea.vmem %s4, %s236
      %v238 = vld [vmem:[%s228] sm:$0xff]
      %v239 = vld [vmem:[%s228 + $0x8] sm:$0xff]
      %v240 = vld [vmem:[%s228 + $0x10] sm:$0xff]
      %v241 = vld [vmem:[%s228 + $0x18] sm:$0xff]
      %v242 = vld [vmem:[%s228 + $0x20] sm:$0xff]
      %v243 = vld [vmem:[%s228 + $0x28] sm:$0xff]
      %v244 = vld [vmem:[%s228 + $0x30] sm:$0xff]
      %v245 = vld [vmem:[%s228 + $0x38] sm:$0xff]
      %v246 = vld [vmem:[%s228 + $0x40] sm:$0xff]
      %v247 = vld [vmem:[%s228 + $0x48] sm:$0xff]
      %v248 = vld [vmem:[%s228 + $0x50] sm:$0xff]
      %v249 = vld [vmem:[%s228 + $0x58] sm:$0xff]
      %v250 = vld [vmem:[%s228 + $0x60] sm:$0xff]
      %v251 = vld [vmem:[%s228 + $0x68] sm:$0xff]
      %v252 = vld [vmem:[%s228 + $0x70] sm:$0xff]
      %v253 = vld [vmem:[%s228 + $0x78] sm:$0xff]
      %v254 = vld [vmem:[%s1] sm:$0xff]
      %v255 = vld [vmem:[%s1 + $0x8] sm:$0xff]
      %v256 = vld [vmem:[%s1 + $0x10] sm:$0xff]
      %v257 = vld [vmem:[%s1 + $0x18] sm:$0xff]
      %v258 = vld [vmem:[%s1 + $0x20] sm:$0xff]
      %v259 = vld [vmem:[%s1 + $0x28] sm:$0xff]
      %v260 = vld [vmem:[%s1 + $0x30] sm:$0xff]
      %v261 = vld [vmem:[%s1 + $0x38] sm:$0xff]
      %v262 = vld [vmem:[%s1 + $0x40] sm:$0xff]
      %v263 = vld [vmem:[%s1 + $0x48] sm:$0xff]
      %v264 = vld [vmem:[%s1 + $0x50] sm:$0xff]
      %v265 = vld [vmem:[%s1 + $0x58] sm:$0xff]
      %v266 = vld [vmem:[%s1 + $0x60] sm:$0xff]
      %v267 = vld [vmem:[%s1 + $0x68] sm:$0xff]
      %v268 = vld [vmem:[%s1 + $0x70] sm:$0xff]
      %v269 = vld [vmem:[%s1 + $0x78] sm:$0xff]
      %v270 = vld [vmem:[%s1 + $0x80] sm:$0xff]
      %v271 = vld [vmem:[%s1 + $0x88] sm:$0xff]
      %v272 = vld [vmem:[%s1 + $0x90] sm:$0xff]
      %v273 = vld [vmem:[%s1 + $0x98] sm:$0xff]
      %v274 = vld [vmem:[%s1 + $0xa0] sm:$0xff]
      %v275 = vld [vmem:[%s1 + $0xa8] sm:$0xff]
      %v276 = vld [vmem:[%s1 + $0xb0] sm:$0xff]
      %v277 = vld [vmem:[%s1 + $0xb8] sm:$0xff]
      %v278 = vld [vmem:[%s1 + $0xc0] sm:$0xff]
      %v279 = vld [vmem:[%s1 + $0xc8] sm:$0xff]
      %v280 = vld [vmem:[%s1 + $0xd0] sm:$0xff]
      %v281 = vld [vmem:[%s1 + $0xd8] sm:$0xff]
      %v282 = vld [vmem:[%s1 + $0xe0] sm:$0xff]
      %v283 = vld [vmem:[%s1 + $0xe8] sm:$0xff]
      %v284 = vld [vmem:[%s1 + $0xf0] sm:$0xff]
      %v285 = vld [vmem:[%s1 + $0xf8] sm:$0xff]
      %v286 = vld [vmem:[%s1 + $0x100] sm:$0xff]
      %v287 = vld [vmem:[%s1 + $0x108] sm:$0xff]
      %v288 = vld [vmem:[%s1 + $0x110] sm:$0xff]
      %v289 = vld [vmem:[%s1 + $0x118] sm:$0xff]
      %v290 = vld [vmem:[%s1 + $0x120] sm:$0xff]
      %v291 = vld [vmem:[%s1 + $0x128] sm:$0xff]
      %v292 = vld [vmem:[%s1 + $0x130] sm:$0xff]
      %v293 = vld [vmem:[%s1 + $0x138] sm:$0xff]
      %v294 = vld [vmem:[%s1 + $0x140] sm:$0xff]
      %v295 = vld [vmem:[%s1 + $0x148] sm:$0xff]
      %v296 = vld [vmem:[%s1 + $0x150] sm:$0xff]
      %v297 = vld [vmem:[%s1 + $0x158] sm:$0xff]
      %v298 = vld [vmem:[%s1 + $0x160] sm:$0xff]
      %v299 = vld [vmem:[%s1 + $0x168] sm:$0xff]
      %v300 = vld [vmem:[%s1 + $0x170] sm:$0xff]
      %v301 = vld [vmem:[%s1 + $0x178] sm:$0xff]
      %v302 = vld [vmem:[%s1 + $0x180] sm:$0xff]
      %v303 = vld [vmem:[%s1 + $0x188] sm:$0xff]
      %v304 = vld [vmem:[%s1 + $0x190] sm:$0xff]
      %v305 = vld [vmem:[%s1 + $0x198] sm:$0xff]
      %v306 = vld [vmem:[%s1 + $0x1a0] sm:$0xff]
      %v307 = vld [vmem:[%s1 + $0x1a8] sm:$0xff]
      %v308 = vld [vmem:[%s1 + $0x1b0] sm:$0xff]
      %v309 = vld [vmem:[%s1 + $0x1b8] sm:$0xff]
      %v310 = vld [vmem:[%s1 + $0x1c0] sm:$0xff]
      %v311 = vld [vmem:[%s1 + $0x1c8] sm:$0xff]
      %v312 = vld [vmem:[%s1 + $0x1d0] sm:$0xff]
      %v313 = vld [vmem:[%s1 + $0x1d8] sm:$0xff]
      %v314 = vld [vmem:[%s1 + $0x1e0] sm:$0xff]
      %v315 = vld [vmem:[%s1 + $0x1e8] sm:$0xff]
      %v316 = vld [vmem:[%s1 + $0x1f0] sm:$0xff]
      %v317 = vld [vmem:[%s1 + $0x1f8] sm:$0xff]
      %v318 = vld [vmem:[%s1 + $0x200] sm:$0xff]
      %v319 = vld [vmem:[%s1 + $0x208] sm:$0xff]
      %v320 = vld [vmem:[%s1 + $0x210] sm:$0xff]
      %v321 = vld [vmem:[%s1 + $0x218] sm:$0xff]
      %v322 = vld [vmem:[%s1 + $0x220] sm:$0xff]
      %v323 = vld [vmem:[%s1 + $0x228] sm:$0xff]
      %v324 = vld [vmem:[%s1 + $0x230] sm:$0xff]
      %v325 = vld [vmem:[%s1 + $0x238] sm:$0xff]
      %v326 = vld [vmem:[%s1 + $0x240] sm:$0xff]
      %v327 = vld [vmem:[%s1 + $0x248] sm:$0xff]
      %v328 = vld [vmem:[%s1 + $0x250] sm:$0xff]
      %v329 = vld [vmem:[%s1 + $0x258] sm:$0xff]
      %v330 = vld [vmem:[%s1 + $0x260] sm:$0xff]
      %v331 = vld [vmem:[%s1 + $0x268] sm:$0xff]
      %v332 = vld [vmem:[%s1 + $0x270] sm:$0xff]
      %v333 = vld [vmem:[%s1 + $0x278] sm:$0xff]
      %v334 = vld [vmem:[%s1 + $0x280] sm:$0xff]
      %v335 = vld [vmem:[%s1 + $0x288] sm:$0xff]
      %v336 = vld [vmem:[%s1 + $0x290] sm:$0xff]
      %v337 = vld [vmem:[%s1 + $0x298] sm:$0xff]
      %v338 = vld [vmem:[%s1 + $0x2a0] sm:$0xff]
      %v339 = vld [vmem:[%s1 + $0x2a8] sm:$0xff]
      %v340 = vld [vmem:[%s1 + $0x2b0] sm:$0xff]
      %v341 = vld [vmem:[%s1 + $0x2b8] sm:$0xff]
      %v342 = vld [vmem:[%s1 + $0x2c0] sm:$0xff]
      %v343 = vld [vmem:[%s1 + $0x2c8] sm:$0xff]
      %v344 = vld [vmem:[%s1 + $0x2d0] sm:$0xff]
      %v345 = vld [vmem:[%s1 + $0x2d8] sm:$0xff]
      %v346 = vld [vmem:[%s1 + $0x2e0] sm:$0xff]
      %v347 = vld [vmem:[%s1 + $0x2e8] sm:$0xff]
      %v348 = vld [vmem:[%s1 + $0x2f0] sm:$0xff]
      %v349 = vld [vmem:[%s1 + $0x2f8] sm:$0xff]
      %v350 = vld [vmem:[%s1 + $0x300] sm:$0xff]
      %v351 = vld [vmem:[%s1 + $0x308] sm:$0xff]
      %v352 = vld [vmem:[%s1 + $0x310] sm:$0xff]
      %v353 = vld [vmem:[%s1 + $0x318] sm:$0xff]
      %v354 = vld [vmem:[%s1 + $0x320] sm:$0xff]
      %v355 = vld [vmem:[%s1 + $0x328] sm:$0xff]
      %v356 = vld [vmem:[%s1 + $0x330] sm:$0xff]
      %v357 = vld [vmem:[%s1 + $0x338] sm:$0xff]
      %v358 = vld [vmem:[%s1 + $0x340] sm:$0xff]
      %v359 = vld [vmem:[%s1 + $0x348] sm:$0xff]
      %v360 = vld [vmem:[%s1 + $0x350] sm:$0xff]
      %v361 = vld [vmem:[%s1 + $0x358] sm:$0xff]
      %v362 = vld [vmem:[%s1 + $0x360] sm:$0xff]
      %v363 = vld [vmem:[%s1 + $0x368] sm:$0xff]
      %v364 = vld [vmem:[%s1 + $0x370] sm:$0xff]
      %v365 = vld [vmem:[%s1 + $0x378] sm:$0xff]
      %v366 = vld [vmem:[%s1 + $0x380] sm:$0xff]
      %v367 = vld [vmem:[%s1 + $0x388] sm:$0xff]
      %v368 = vld [vmem:[%s1 + $0x390] sm:$0xff]
      %v369 = vld [vmem:[%s1 + $0x398] sm:$0xff]
      %v370 = vld [vmem:[%s1 + $0x3a0] sm:$0xff]
      %v371 = vld [vmem:[%s1 + $0x3a8] sm:$0xff]
      %v372 = vld [vmem:[%s1 + $0x3b0] sm:$0xff]
      %v373 = vld [vmem:[%s1 + $0x3b8] sm:$0xff]
      %v374 = vld [vmem:[%s1 + $0x3c0] sm:$0xff]
      %v375 = vld [vmem:[%s1 + $0x3c8] sm:$0xff]
      %v376 = vld [vmem:[%s1 + $0x3d0] sm:$0xff]
      %v377 = vld [vmem:[%s1 + $0x3d8] sm:$0xff]
      %v378 = vld [vmem:[%s1 + $0x3e0] sm:$0xff]
      %v379 = vld [vmem:[%s1 + $0x3e8] sm:$0xff]
      %v380 = vld [vmem:[%s1 + $0x3f0] sm:$0xff]
      %v381 = vld [vmem:[%s1 + $0x3f8] sm:$0xff]
      %v382 = vld [vmem:[%s2] sm:$0xf]
      %v384 = vperm.slane %v382, 0
      %v385 = vperm.slane %v382, 1
      %v386 = vperm.slane %v382, 2
      %v387 = vperm.slane %v382, 3
      %v408 = vunpack.c.l.b16 %v238
      %v409 = vunpack.c.h.b16 %v238
      %v410 = vunpack.c.l.b16 %v239
      %v411 = vunpack.c.h.b16 %v239
      %v412 = vunpack.c.l.b16 %v240
      %v413 = vunpack.c.h.b16 %v240
      %v414 = vunpack.c.l.b16 %v241
      %v415 = vunpack.c.h.b16 %v241
      %v416 = vunpack.c.l.b16 %v242
      %v417 = vunpack.c.h.b16 %v242
      %v418 = vunpack.c.l.b16 %v243
      %v419 = vunpack.c.h.b16 %v243
      %v420 = vunpack.c.l.b16 %v244
      %v421 = vunpack.c.h.b16 %v244
      %v422 = vunpack.c.l.b16 %v245
      %v423 = vunpack.c.h.b16 %v245
      %v424 = vunpack.c.l.b16 %v246
      %v425 = vunpack.c.h.b16 %v246
      %v426 = vunpack.c.l.b16 %v247
      %v427 = vunpack.c.h.b16 %v247
      %v428 = vunpack.c.l.b16 %v248
      %v429 = vunpack.c.h.b16 %v248
      %v430 = vunpack.c.l.b16 %v249
      %v431 = vunpack.c.h.b16 %v249
      %v432 = vunpack.c.l.b16 %v250
      %v433 = vunpack.c.h.b16 %v250
      %v434 = vunpack.c.l.b16 %v251
      %v435 = vunpack.c.h.b16 %v251
      %v436 = vunpack.c.l.b16 %v252
      %v437 = vunpack.c.h.b16 %v252
      %v438 = vunpack.c.l.b16 %v253
      %v439 = vunpack.c.h.b16 %v253
      %v440 = vpack.c.b16 %v412, %v408
      %v441 = vpack.c.b16 %v413, %v409
      %v442 = vpack.c.b16 %v414, %v410
      %v443 = vpack.c.b16 %v415, %v411
      %v444 = vpack.c.b16 %v420, %v416
      %v445 = vpack.c.b16 %v421, %v417
      %v446 = vpack.c.b16 %v422, %v418
      %v447 = vpack.c.b16 %v423, %v419
      %v448 = vpack.c.b16 %v428, %v424
      %v449 = vpack.c.b16 %v429, %v425
      %v450 = vpack.c.b16 %v430, %v426
      %v451 = vpack.c.b16 %v431, %v427
      %v452 = vpack.c.b16 %v436, %v432
      %v453 = vpack.c.b16 %v437, %v433
      %v454 = vpack.c.b16 %v438, %v434
      %v455 = vpack.c.b16 %v439, %v435
      %v600 = vunpack.c.l.b16 %v254
      %v601 = vunpack.c.h.b16 %v254
      %v602 = vunpack.c.l.b16 %v255
      %v603 = vunpack.c.h.b16 %v255
      %v604 = vunpack.c.l.b16 %v256
      %v605 = vunpack.c.h.b16 %v256
      %v606 = vunpack.c.l.b16 %v257
      %v607 = vunpack.c.h.b16 %v257
      %v608 = vunpack.c.l.b16 %v258
      %v609 = vunpack.c.h.b16 %v258
      %v610 = vunpack.c.l.b16 %v259
      %v611 = vunpack.c.h.b16 %v259
      %v612 = vunpack.c.l.b16 %v260
      %v613 = vunpack.c.h.b16 %v260
      %v614 = vunpack.c.l.b16 %v261
      %v615 = vunpack.c.h.b16 %v261
      %v616 = vunpack.c.l.b16 %v262
      %v617 = vunpack.c.h.b16 %v262
      %v618 = vunpack.c.l.b16 %v263
      %v619 = vunpack.c.h.b16 %v263
      %v620 = vunpack.c.l.b16 %v264
      %v621 = vunpack.c.h.b16 %v264
      %v622 = vunpack.c.l.b16 %v265
      %v623 = vunpack.c.h.b16 %v265
      %v624 = vunpack.c.l.b16 %v266
      %v625 = vunpack.c.h.b16 %v266
      %v626 = vunpack.c.l.b16 %v267
      %v627 = vunpack.c.h.b16 %v267
      %v628 = vunpack.c.l.b16 %v268
      %v629 = vunpack.c.h.b16 %v268
      %v630 = vunpack.c.l.b16 %v269
      %v631 = vunpack.c.h.b16 %v269
      %v632 = vunpack.c.l.b16 %v270
      %v633 = vunpack.c.h.b16 %v270
      %v634 = vunpack.c.l.b16 %v271
      %v635 = vunpack.c.h.b16 %v271
      %v636 = vunpack.c.l.b16 %v272
      %v637 = vunpack.c.h.b16 %v272
      %v638 = vunpack.c.l.b16 %v273
      %v639 = vunpack.c.h.b16 %v273
      %v640 = vunpack.c.l.b16 %v274
      %v641 = vunpack.c.h.b16 %v274
      %v642 = vunpack.c.l.b16 %v275
      %v643 = vunpack.c.h.b16 %v275
      %v644 = vunpack.c.l.b16 %v276
      %v645 = vunpack.c.h.b16 %v276
      %v646 = vunpack.c.l.b16 %v277
      %v647 = vunpack.c.h.b16 %v277
      %v648 = vunpack.c.l.b16 %v278
      %v649 = vunpack.c.h.b16 %v278
      %v650 = vunpack.c.l.b16 %v279
      %v651 = vunpack.c.h.b16 %v279
      %v652 = vunpack.c.l.b16 %v280
      %v653 = vunpack.c.h.b16 %v280
      %v654 = vunpack.c.l.b16 %v281
      %v655 = vunpack.c.h.b16 %v281
      %v656 = vunpack.c.l.b16 %v282
      %v657 = vunpack.c.h.b16 %v282
      %v658 = vunpack.c.l.b16 %v283
      %v659 = vunpack.c.h.b16 %v283
      %v660 = vunpack.c.l.b16 %v284
      %v661 = vunpack.c.h.b16 %v284
      %v662 = vunpack.c.l.b16 %v285
      %v663 = vunpack.c.h.b16 %v285
      %v664 = vunpack.c.l.b16 %v286
      %v665 = vunpack.c.h.b16 %v286
      %v666 = vunpack.c.l.b16 %v287
      %v667 = vunpack.c.h.b16 %v287
      %v668 = vunpack.c.l.b16 %v288
      %v669 = vunpack.c.h.b16 %v288
      %v670 = vunpack.c.l.b16 %v289
      %v671 = vunpack.c.h.b16 %v289
      %v672 = vunpack.c.l.b16 %v290
      %v673 = vunpack.c.h.b16 %v290
      %v674 = vunpack.c.l.b16 %v291
      %v675 = vunpack.c.h.b16 %v291
      %v676 = vunpack.c.l.b16 %v292
      %v677 = vunpack.c.h.b16 %v292
      %v678 = vunpack.c.l.b16 %v293
      %v679 = vunpack.c.h.b16 %v293
      %v680 = vunpack.c.l.b16 %v294
      %v681 = vunpack.c.h.b16 %v294
      %v682 = vunpack.c.l.b16 %v295
      %v683 = vunpack.c.h.b16 %v295
      %v684 = vunpack.c.l.b16 %v296
      %v685 = vunpack.c.h.b16 %v296
      %v686 = vunpack.c.l.b16 %v297
      %v687 = vunpack.c.h.b16 %v297
      %v688 = vunpack.c.l.b16 %v298
      %v689 = vunpack.c.h.b16 %v298
      %v690 = vunpack.c.l.b16 %v299
      %v691 = vunpack.c.h.b16 %v299
      %v692 = vunpack.c.l.b16 %v300
      %v693 = vunpack.c.h.b16 %v300
      %v694 = vunpack.c.l.b16 %v301
      %v695 = vunpack.c.h.b16 %v301
      %v696 = vunpack.c.l.b16 %v302
      %v697 = vunpack.c.h.b16 %v302
      %v698 = vunpack.c.l.b16 %v303
      %v699 = vunpack.c.h.b16 %v303
      %v700 = vunpack.c.l.b16 %v304
      %v701 = vunpack.c.h.b16 %v304
      %v702 = vunpack.c.l.b16 %v305
      %v703 = vunpack.c.h.b16 %v305
      %v704 = vunpack.c.l.b16 %v306
      %v705 = vunpack.c.h.b16 %v306
      %v706 = vunpack.c.l.b16 %v307
      %v707 = vunpack.c.h.b16 %v307
      %v708 = vunpack.c.l.b16 %v308
      %v709 = vunpack.c.h.b16 %v308
      %v710 = vunpack.c.l.b16 %v309
      %v711 = vunpack.c.h.b16 %v309
      %v712 = vunpack.c.l.b16 %v310
      %v713 = vunpack.c.h.b16 %v310
      %v714 = vunpack.c.l.b16 %v311
      %v715 = vunpack.c.h.b16 %v311
      %v716 = vunpack.c.l.b16 %v312
      %v717 = vunpack.c.h.b16 %v312
      %v718 = vunpack.c.l.b16 %v313
      %v719 = vunpack.c.h.b16 %v313
      %v720 = vunpack.c.l.b16 %v314
      %v721 = vunpack.c.h.b16 %v314
      %v722 = vunpack.c.l.b16 %v315
      %v723 = vunpack.c.h.b16 %v315
      %v724 = vunpack.c.l.b16 %v316
      %v725 = vunpack.c.h.b16 %v316
      %v726 = vunpack.c.l.b16 %v317
      %v727 = vunpack.c.h.b16 %v317
      %v728 = vunpack.c.l.b16 %v318
      %v729 = vunpack.c.h.b16 %v318
      %v730 = vunpack.c.l.b16 %v319
      %v731 = vunpack.c.h.b16 %v319
      %v732 = vunpack.c.l.b16 %v320
      %v733 = vunpack.c.h.b16 %v320
      %v734 = vunpack.c.l.b16 %v321
      %v735 = vunpack.c.h.b16 %v321
      %v736 = vunpack.c.l.b16 %v322
      %v737 = vunpack.c.h.b16 %v322
      %v738 = vunpack.c.l.b16 %v323
      %v739 = vunpack.c.h.b16 %v323
      %v740 = vunpack.c.l.b16 %v324
      %v741 = vunpack.c.h.b16 %v324
      %v742 = vunpack.c.l.b16 %v325
      %v743 = vunpack.c.h.b16 %v325
      %v744 = vunpack.c.l.b16 %v326
      %v745 = vunpack.c.h.b16 %v326
      %v746 = vunpack.c.l.b16 %v327
      %v747 = vunpack.c.h.b16 %v327
      %v748 = vunpack.c.l.b16 %v328
      %v749 = vunpack.c.h.b16 %v328
      %v750 = vunpack.c.l.b16 %v329
      %v751 = vunpack.c.h.b16 %v329
      %v752 = vunpack.c.l.b16 %v330
      %v753 = vunpack.c.h.b16 %v330
      %v754 = vunpack.c.l.b16 %v331
      %v755 = vunpack.c.h.b16 %v331
      %v756 = vunpack.c.l.b16 %v332
      %v757 = vunpack.c.h.b16 %v332
      %v758 = vunpack.c.l.b16 %v333
      %v759 = vunpack.c.h.b16 %v333
      %v760 = vunpack.c.l.b16 %v334
      %v761 = vunpack.c.h.b16 %v334
      %v762 = vunpack.c.l.b16 %v335
      %v763 = vunpack.c.h.b16 %v335
      %v764 = vunpack.c.l.b16 %v336
      %v765 = vunpack.c.h.b16 %v336
      %v766 = vunpack.c.l.b16 %v337
      %v767 = vunpack.c.h.b16 %v337
      %v768 = vunpack.c.l.b16 %v338
      %v769 = vunpack.c.h.b16 %v338
      %v770 = vunpack.c.l.b16 %v339
      %v771 = vunpack.c.h.b16 %v339
      %v772 = vunpack.c.l.b16 %v340
      %v773 = vunpack.c.h.b16 %v340
      %v774 = vunpack.c.l.b16 %v341
      %v775 = vunpack.c.h.b16 %v341
      %v776 = vunpack.c.l.b16 %v342
      %v777 = vunpack.c.h.b16 %v342
      %v778 = vunpack.c.l.b16 %v343
      %v779 = vunpack.c.h.b16 %v343
      %v780 = vunpack.c.l.b16 %v344
      %v781 = vunpack.c.h.b16 %v344
      %v782 = vunpack.c.l.b16 %v345
      %v783 = vunpack.c.h.b16 %v345
      %v784 = vunpack.c.l.b16 %v346
      %v785 = vunpack.c.h.b16 %v346
      %v786 = vunpack.c.l.b16 %v347
      %v787 = vunpack.c.h.b16 %v347
      %v788 = vunpack.c.l.b16 %v348
      %v789 = vunpack.c.h.b16 %v348
      %v790 = vunpack.c.l.b16 %v349
      %v791 = vunpack.c.h.b16 %v349
      %v792 = vunpack.c.l.b16 %v350
      %v793 = vunpack.c.h.b16 %v350
      %v794 = vunpack.c.l.b16 %v351
      %v795 = vunpack.c.h.b16 %v351
      %v796 = vunpack.c.l.b16 %v352
      %v797 = vunpack.c.h.b16 %v352
      %v798 = vunpack.c.l.b16 %v353
      %v799 = vunpack.c.h.b16 %v353
      %v800 = vunpack.c.l.b16 %v354
      %v801 = vunpack.c.h.b16 %v354
      %v802 = vunpack.c.l.b16 %v355
      %v803 = vunpack.c.h.b16 %v355
      %v804 = vunpack.c.l.b16 %v356
      %v805 = vunpack.c.h.b16 %v356
      %v806 = vunpack.c.l.b16 %v357
      %v807 = vunpack.c.h.b16 %v357
      %v808 = vunpack.c.l.b16 %v358
      %v809 = vunpack.c.h.b16 %v358
      %v810 = vunpack.c.l.b16 %v359
      %v811 = vunpack.c.h.b16 %v359
      %v812 = vunpack.c.l.b16 %v360
      %v813 = vunpack.c.h.b16 %v360
      %v814 = vunpack.c.l.b16 %v361
      %v815 = vunpack.c.h.b16 %v361
      %v816 = vunpack.c.l.b16 %v362
      %v817 = vunpack.c.h.b16 %v362
      %v818 = vunpack.c.l.b16 %v363
      %v819 = vunpack.c.h.b16 %v363
      %v820 = vunpack.c.l.b16 %v364
      %v821 = vunpack.c.h.b16 %v364
      %v822 = vunpack.c.l.b16 %v365
      %v823 = vunpack.c.h.b16 %v365
      %v824 = vunpack.c.l.b16 %v366
      %v825 = vunpack.c.h.b16 %v366
      %v826 = vunpack.c.l.b16 %v367
      %v827 = vunpack.c.h.b16 %v367
      %v828 = vunpack.c.l.b16 %v368
      %v829 = vunpack.c.h.b16 %v368
      %v830 = vunpack.c.l.b16 %v369
      %v831 = vunpack.c.h.b16 %v369
      %v832 = vunpack.c.l.b16 %v370
      %v833 = vunpack.c.h.b16 %v370
      %v834 = vunpack.c.l.b16 %v371
      %v835 = vunpack.c.h.b16 %v371
      %v836 = vunpack.c.l.b16 %v372
      %v837 = vunpack.c.h.b16 %v372
      %v838 = vunpack.c.l.b16 %v373
      %v839 = vunpack.c.h.b16 %v373
      %v840 = vunpack.c.l.b16 %v374
      %v841 = vunpack.c.h.b16 %v374
      %v842 = vunpack.c.l.b16 %v375
      %v843 = vunpack.c.h.b16 %v375
      %v844 = vunpack.c.l.b16 %v376
      %v845 = vunpack.c.h.b16 %v376
      %v846 = vunpack.c.l.b16 %v377
      %v847 = vunpack.c.h.b16 %v377
      %v848 = vunpack.c.l.b16 %v378
      %v849 = vunpack.c.h.b16 %v378
      %v850 = vunpack.c.l.b16 %v379
      %v851 = vunpack.c.h.b16 %v379
      %v852 = vunpack.c.l.b16 %v380
      %v853 = vunpack.c.h.b16 %v380
      %v854 = vunpack.c.l.b16 %v381
      %v855 = vunpack.c.h.b16 %v381
      %v856 = vpack.c.b16 %v604, %v600
      %v857 = vpack.c.b16 %v605, %v601
      %v858 = vpack.c.b16 %v606, %v602
      %v859 = vpack.c.b16 %v607, %v603
      %v860 = vpack.c.b16 %v612, %v608
      %v861 = vpack.c.b16 %v613, %v609
      %v862 = vpack.c.b16 %v614, %v610
      %v863 = vpack.c.b16 %v615, %v611
      %v864 = vpack.c.b16 %v620, %v616
      %v865 = vpack.c.b16 %v621, %v617
      %v866 = vpack.c.b16 %v622, %v618
      %v867 = vpack.c.b16 %v623, %v619
      %v868 = vpack.c.b16 %v628, %v624
      %v869 = vpack.c.b16 %v629, %v625
      %v870 = vpack.c.b16 %v630, %v626
      %v871 = vpack.c.b16 %v631, %v627
      %v872 = vpack.c.b16 %v636, %v632
      %v873 = vpack.c.b16 %v637, %v633
      %v874 = vpack.c.b16 %v638, %v634
      %v875 = vpack.c.b16 %v639, %v635
      %v876 = vpack.c.b16 %v644, %v640
      %v877 = vpack.c.b16 %v645, %v641
      %v878 = vpack.c.b16 %v646, %v642
      %v879 = vpack.c.b16 %v647, %v643
      %v880 = vpack.c.b16 %v652, %v648
      %v881 = vpack.c.b16 %v653, %v649
      %v882 = vpack.c.b16 %v654, %v650
      %v883 = vpack.c.b16 %v655, %v651
      %v884 = vpack.c.b16 %v660, %v656
      %v885 = vpack.c.b16 %v661, %v657
      %v886 = vpack.c.b16 %v662, %v658
      %v887 = vpack.c.b16 %v663, %v659
      %v888 = vpack.c.b16 %v668, %v664
      %v889 = vpack.c.b16 %v669, %v665
      %v890 = vpack.c.b16 %v670, %v666
      %v891 = vpack.c.b16 %v671, %v667
      %v892 = vpack.c.b16 %v676, %v672
      %v893 = vpack.c.b16 %v677, %v673
      %v894 = vpack.c.b16 %v678, %v674
      %v895 = vpack.c.b16 %v679, %v675
      %v896 = vpack.c.b16 %v684, %v680
      %v897 = vpack.c.b16 %v685, %v681
      %v898 = vpack.c.b16 %v686, %v682
      %v899 = vpack.c.b16 %v687, %v683
      %v900 = vpack.c.b16 %v692, %v688
      %v901 = vpack.c.b16 %v693, %v689
      %v902 = vpack.c.b16 %v694, %v690
      %v903 = vpack.c.b16 %v695, %v691
      %v904 = vpack.c.b16 %v700, %v696
      %v905 = vpack.c.b16 %v701, %v697
      %v906 = vpack.c.b16 %v702, %v698
      %v907 = vpack.c.b16 %v703, %v699
      %v908 = vpack.c.b16 %v708, %v704
      %v909 = vpack.c.b16 %v709, %v705
      %v910 = vpack.c.b16 %v710, %v706
      %v911 = vpack.c.b16 %v711, %v707
      %v912 = vpack.c.b16 %v716, %v712
      %v913 = vpack.c.b16 %v717, %v713
      %v914 = vpack.c.b16 %v718, %v714
      %v915 = vpack.c.b16 %v719, %v715
      %v916 = vpack.c.b16 %v724, %v720
      %v917 = vpack.c.b16 %v725, %v721
      %v918 = vpack.c.b16 %v726, %v722
      %v919 = vpack.c.b16 %v727, %v723
      %v920 = vpack.c.b16 %v732, %v728
      %v921 = vpack.c.b16 %v733, %v729
      %v922 = vpack.c.b16 %v734, %v730
      %v923 = vpack.c.b16 %v735, %v731
      %v924 = vpack.c.b16 %v740, %v736
      %v925 = vpack.c.b16 %v741, %v737
      %v926 = vpack.c.b16 %v742, %v738
      %v927 = vpack.c.b16 %v743, %v739
      %v928 = vpack.c.b16 %v748, %v744
      %v929 = vpack.c.b16 %v749, %v745
      %v930 = vpack.c.b16 %v750, %v746
      %v931 = vpack.c.b16 %v751, %v747
      %v932 = vpack.c.b16 %v756, %v752
      %v933 = vpack.c.b16 %v757, %v753
      %v934 = vpack.c.b16 %v758, %v754
      %v935 = vpack.c.b16 %v759, %v755
      %v936 = vpack.c.b16 %v764, %v760
      %v937 = vpack.c.b16 %v765, %v761
      %v938 = vpack.c.b16 %v766, %v762
      %v939 = vpack.c.b16 %v767, %v763
      %v940 = vpack.c.b16 %v772, %v768
      %v941 = vpack.c.b16 %v773, %v769
      %v942 = vpack.c.b16 %v774, %v770
      %v943 = vpack.c.b16 %v775, %v771
      %v944 = vpack.c.b16 %v780, %v776
      %v945 = vpack.c.b16 %v781, %v777
      %v946 = vpack.c.b16 %v782, %v778
      %v947 = vpack.c.b16 %v783, %v779
      %v948 = vpack.c.b16 %v788, %v784
      %v949 = vpack.c.b16 %v789, %v785
      %v950 = vpack.c.b16 %v790, %v786
      %v951 = vpack.c.b16 %v791, %v787
      %v952 = vpack.c.b16 %v796, %v792
      %v953 = vpack.c.b16 %v797, %v793
      %v954 = vpack.c.b16 %v798, %v794
      %v955 = vpack.c.b16 %v799, %v795
      %v956 = vpack.c.b16 %v804, %v800
      %v957 = vpack.c.b16 %v805, %v801
      %v958 = vpack.c.b16 %v806, %v802
      %v959 = vpack.c.b16 %v807, %v803
      %v960 = vpack.c.b16 %v812, %v808
      %v961 = vpack.c.b16 %v813, %v809
      %v962 = vpack.c.b16 %v814, %v810
      %v963 = vpack.c.b16 %v815, %v811
      %v964 = vpack.c.b16 %v820, %v816
      %v965 = vpack.c.b16 %v821, %v817
      %v966 = vpack.c.b16 %v822, %v818
      %v967 = vpack.c.b16 %v823, %v819
      %v968 = vpack.c.b16 %v828, %v824
      %v969 = vpack.c.b16 %v829, %v825
      %v970 = vpack.c.b16 %v830, %v826
      %v971 = vpack.c.b16 %v831, %v827
      %v972 = vpack.c.b16 %v836, %v832
      %v973 = vpack.c.b16 %v837, %v833
      %v974 = vpack.c.b16 %v838, %v834
      %v975 = vpack.c.b16 %v839, %v835
      %v976 = vpack.c.b16 %v844, %v840
      %v977 = vpack.c.b16 %v845, %v841
      %v978 = vpack.c.b16 %v846, %v842
      %v979 = vpack.c.b16 %v847, %v843
      %v980 = vpack.c.b16 %v852, %v848
      %v981 = vpack.c.b16 %v853, %v849
      %v982 = vpack.c.b16 %v854, %v850
      %v983 = vpack.c.b16 %v855, %v851
      %1112 = vmatpush.bf16.msra.mxu0 %v884
      %1113 = vmatpush.bf16.msra.mxu0 %v880
      %1114 = vmatpush.bf16.msra.mxu0 %v876
      %1115 = vmatpush.bf16.msra.mxu0 %v872
      %1116 = vmatpush.bf16.msra.mxu0 %v868
      %1117 = vmatpush.bf16.msra.mxu0 %v864
      %1118 = vmatpush.bf16.msra.mxu0 %v860
      %1119 = vmatpush.bf16.msra.mxu0 %v856
      %1120 = vmatmul.bf16.gmra.mxu0 %v440
      %v1121 = vpop.f32.mrf.mxu0
      %v1122 = vadd.f32 %v384, %v1121
      %v1123 = vpop.f32.mrf.mxu0
      %v1124 = vadd.f32 %v384, %v1123
      %1125 = vmatmul.bf16.gmra.mxu0 %v444
      %v1126 = vpop.f32.mrf.mxu0
      %v1127 = vadd.f32 %v384, %v1126
      %v1128 = vpop.f32.mrf.mxu0
      %v1129 = vadd.f32 %v384, %v1128
      %1130 = vmatmul.bf16.gmra.mxu0 %v448
      %v1131 = vpop.f32.mrf.mxu0
      %v1132 = vadd.f32 %v384, %v1131
      %v1133 = vpop.f32.mrf.mxu0
      %v1134 = vadd.f32 %v384, %v1133
      %1135 = vmatmul.bf16.gmra.mxu0 %v452
      %v1136 = vpop.f32.mrf.mxu0
      %v1137 = vadd.f32 %v384, %v1136
      %v1138 = vpop.f32.mrf.mxu0
      %v1139 = vadd.f32 %v384, %v1138
      %1140 = vdwg.mxu0
      %1141 = vmatpush.bf16.msra.mxu0 %v916
      %1142 = vmatpush.bf16.msra.mxu0 %v912
      %1143 = vmatpush.bf16.msra.mxu0 %v908
      %1144 = vmatpush.bf16.msra.mxu0 %v904
      %1145 = vmatpush.bf16.msra.mxu0 %v900
      %1146 = vmatpush.bf16.msra.mxu0 %v896
      %1147 = vmatpush.bf16.msra.mxu0 %v892
      %1148 = vmatpush.bf16.msra.mxu0 %v888
      %1149 = vmatmul.bf16.gmra.mxu0 %v441
      %v1150 = vpop.f32.mrf.mxu0
      %v1151 = vadd.f32 %v1122, %v1150
      %v1152 = vpop.f32.mrf.mxu0
      %v1153 = vadd.f32 %v1124, %v1152
      %1154 = vmatmul.bf16.gmra.mxu0 %v445
      %v1155 = vpop.f32.mrf.mxu0
      %v1156 = vadd.f32 %v1127, %v1155
      %v1157 = vpop.f32.mrf.mxu0
      %v1158 = vadd.f32 %v1129, %v1157
      %1159 = vmatmul.bf16.gmra.mxu0 %v449
      %v1160 = vpop.f32.mrf.mxu0
      %v1161 = vadd.f32 %v1132, %v1160
      %v1162 = vpop.f32.mrf.mxu0
      %v1163 = vadd.f32 %v1134, %v1162
      %1164 = vmatmul.bf16.gmra.mxu0 %v453
      %v1165 = vpop.f32.mrf.mxu0
      %v1166 = vadd.f32 %v1137, %v1165
      %v1167 = vpop.f32.mrf.mxu0
      %v1168 = vadd.f32 %v1139, %v1167
      %1169 = vdwg.mxu0
      %1170 = vmatpush.bf16.msra.mxu0 %v948
      %1171 = vmatpush.bf16.msra.mxu0 %v944
      %1172 = vmatpush.bf16.msra.mxu0 %v940
      %1173 = vmatpush.bf16.msra.mxu0 %v936
      %1174 = vmatpush.bf16.msra.mxu0 %v932
      %1175 = vmatpush.bf16.msra.mxu0 %v928
      %1176 = vmatpush.bf16.msra.mxu0 %v924
      %1177 = vmatpush.bf16.msra.mxu0 %v920
      %1178 = vmatmul.bf16.gmra.mxu0 %v442
      %v1179 = vpop.f32.mrf.mxu0
      %v1180 = vadd.f32 %v1151, %v1179
      %v1181 = vpop.f32.mrf.mxu0
      %v1182 = vadd.f32 %v1153, %v1181
      %1183 = vmatmul.bf16.gmra.mxu0 %v446
      %v1184 = vpop.f32.mrf.mxu0
      %v1185 = vadd.f32 %v1156, %v1184
      %v1186 = vpop.f32.mrf.mxu0
      %v1187 = vadd.f32 %v1158, %v1186
      %1188 = vmatmul.bf16.gmra.mxu0 %v450
      %v1189 = vpop.f32.mrf.mxu0
      %v1190 = vadd.f32 %v1161, %v1189
      %v1191 = vpop.f32.mrf.mxu0
      %v1192 = vadd.f32 %v1163, %v1191
      %1193 = vmatmul.bf16.gmra.mxu0 %v454
      %v1194 = vpop.f32.mrf.mxu0
      %v1195 = vadd.f32 %v1166, %v1194
      %v1196 = vpop.f32.mrf.mxu0
      %v1197 = vadd.f32 %v1168, %v1196
      %1198 = vdwg.mxu0
      %1199 = vmatpush.bf16.msra.mxu0 %v980
      %1200 = vmatpush.bf16.msra.mxu0 %v976
      %1201 = vmatpush.bf16.msra.mxu0 %v972
      %1202 = vmatpush.bf16.msra.mxu0 %v968
      %1203 = vmatpush.bf16.msra.mxu0 %v964
      %1204 = vmatpush.bf16.msra.mxu0 %v960
      %1205 = vmatpush.bf16.msra.mxu0 %v956
      %1206 = vmatpush.bf16.msra.mxu0 %v952
      %1207 = vmatmul.bf16.gmra.mxu0 %v443
      %v1208 = vpop.f32.mrf.mxu0
      %v1209 = vadd.f32 %v1180, %v1208
      %v1210 = vpop.f32.mrf.mxu0
      %v1211 = vadd.f32 %v1182, %v1210
      %1212 = vmatmul.bf16.gmra.mxu0 %v447
      %v1213 = vpop.f32.mrf.mxu0
      %v1214 = vadd.f32 %v1185, %v1213
      %v1215 = vpop.f32.mrf.mxu0
      %v1216 = vadd.f32 %v1187, %v1215
      %1217 = vmatmul.bf16.gmra.mxu0 %v451
      %v1218 = vpop.f32.mrf.mxu0
      %v1219 = vadd.f32 %v1190, %v1218
      %v1220 = vpop.f32.mrf.mxu0
      %v1221 = vadd.f32 %v1192, %v1220
      %1222 = vmatmul.bf16.gmra.mxu0 %v455
      %v1223 = vpop.f32.mrf.mxu0
      %v1224 = vadd.f32 %v1195, %v1223
      %v1225 = vpop.f32.mrf.mxu0
      %v1226 = vadd.f32 %v1197, %v1225
      %1227 = vdwg.mxu0
      %1228 = vmatpush.bf16.msra.mxu0 %v885
      %1229 = vmatpush.bf16.msra.mxu0 %v881
      %1230 = vmatpush.bf16.msra.mxu0 %v877
      %1231 = vmatpush.bf16.msra.mxu0 %v873
      %1232 = vmatpush.bf16.msra.mxu0 %v869
      %1233 = vmatpush.bf16.msra.mxu0 %v865
      %1234 = vmatpush.bf16.msra.mxu0 %v861
      %1235 = vmatpush.bf16.msra.mxu0 %v857
      %1236 = vmatmul.bf16.gmra.mxu0 %v440
      %v1237 = vpop.f32.mrf.mxu0
      %v1238 = vadd.f32 %v385, %v1237
      %v1239 = vpop.f32.mrf.mxu0
      %v1240 = vadd.f32 %v385, %v1239
      %1241 = vmatmul.bf16.gmra.mxu0 %v444
      %v1242 = vpop.f32.mrf.mxu0
      %v1243 = vadd.f32 %v385, %v1242
      %v1244 = vpop.f32.mrf.mxu0
      %v1245 = vadd.f32 %v385, %v1244
      %1246 = vmatmul.bf16.gmra.mxu0 %v448
      %v1247 = vpop.f32.mrf.mxu0
      %v1248 = vadd.f32 %v385, %v1247
      %v1249 = vpop.f32.mrf.mxu0
      %v1250 = vadd.f32 %v385, %v1249
      %1251 = vmatmul.bf16.gmra.mxu0 %v452
      %v1252 = vpop.f32.mrf.mxu0
      %v1253 = vadd.f32 %v385, %v1252
      %v1254 = vpop.f32.mrf.mxu0
      %v1255 = vadd.f32 %v385, %v1254
      %1256 = vdwg.mxu0
      %1257 = vmatpush.bf16.msra.mxu0 %v917
      %1258 = vmatpush.bf16.msra.mxu0 %v913
      %1259 = vmatpush.bf16.msra.mxu0 %v909
      %1260 = vmatpush.bf16.msra.mxu0 %v905
      %1261 = vmatpush.bf16.msra.mxu0 %v901
      %1262 = vmatpush.bf16.msra.mxu0 %v897
      %1263 = vmatpush.bf16.msra.mxu0 %v893
      %1264 = vmatpush.bf16.msra.mxu0 %v889
      %1265 = vmatmul.bf16.gmra.mxu0 %v441
      %v1266 = vpop.f32.mrf.mxu0
      %v1267 = vadd.f32 %v1238, %v1266
      %v1268 = vpop.f32.mrf.mxu0
      %v1269 = vadd.f32 %v1240, %v1268
      %1270 = vmatmul.bf16.gmra.mxu0 %v445
      %v1271 = vpop.f32.mrf.mxu0
      %v1272 = vadd.f32 %v1243, %v1271
      %v1273 = vpop.f32.mrf.mxu0
      %v1274 = vadd.f32 %v1245, %v1273
      %1275 = vmatmul.bf16.gmra.mxu0 %v449
      %v1276 = vpop.f32.mrf.mxu0
      %v1277 = vadd.f32 %v1248, %v1276
      %v1278 = vpop.f32.mrf.mxu0
      %v1279 = vadd.f32 %v1250, %v1278
      %1280 = vmatmul.bf16.gmra.mxu0 %v453
      %v1281 = vpop.f32.mrf.mxu0
      %v1282 = vadd.f32 %v1253, %v1281
      %v1283 = vpop.f32.mrf.mxu0
      %v1284 = vadd.f32 %v1255, %v1283
      %1285 = vdwg.mxu0
      %1286 = vmatpush.bf16.msra.mxu0 %v949
      %1287 = vmatpush.bf16.msra.mxu0 %v945
      %1288 = vmatpush.bf16.msra.mxu0 %v941
      %1289 = vmatpush.bf16.msra.mxu0 %v937
      %1290 = vmatpush.bf16.msra.mxu0 %v933
      %1291 = vmatpush.bf16.msra.mxu0 %v929
      %1292 = vmatpush.bf16.msra.mxu0 %v925
      %1293 = vmatpush.bf16.msra.mxu0 %v921
      %1294 = vmatmul.bf16.gmra.mxu0 %v442
      %v1295 = vpop.f32.mrf.mxu0
      %v1296 = vadd.f32 %v1267, %v1295
      %v1297 = vpop.f32.mrf.mxu0
      %v1298 = vadd.f32 %v1269, %v1297
      %1299 = vmatmul.bf16.gmra.mxu0 %v446
      %v1300 = vpop.f32.mrf.mxu0
      %v1301 = vadd.f32 %v1272, %v1300
      %v1302 = vpop.f32.mrf.mxu0
      %v1303 = vadd.f32 %v1274, %v1302
      %1304 = vmatmul.bf16.gmra.mxu0 %v450
      %v1305 = vpop.f32.mrf.mxu0
      %v1306 = vadd.f32 %v1277, %v1305
      %v1307 = vpop.f32.mrf.mxu0
      %v1308 = vadd.f32 %v1279, %v1307
      %1309 = vmatmul.bf16.gmra.mxu0 %v454
      %v1310 = vpop.f32.mrf.mxu0
      %v1311 = vadd.f32 %v1282, %v1310
      %v1312 = vpop.f32.mrf.mxu0
      %v1313 = vadd.f32 %v1284, %v1312
      %1314 = vdwg.mxu0
      %1315 = vmatpush.bf16.msra.mxu0 %v981
      %1316 = vmatpush.bf16.msra.mxu0 %v977
      %1317 = vmatpush.bf16.msra.mxu0 %v973
      %1318 = vmatpush.bf16.msra.mxu0 %v969
      %1319 = vmatpush.bf16.msra.mxu0 %v965
      %1320 = vmatpush.bf16.msra.mxu0 %v961
      %1321 = vmatpush.bf16.msra.mxu0 %v957
      %1322 = vmatpush.bf16.msra.mxu0 %v953
      %1323 = vmatmul.bf16.gmra.mxu0 %v443
      %v1324 = vpop.f32.mrf.mxu0
      %v1325 = vadd.f32 %v1296, %v1324
      %v1326 = vpop.f32.mrf.mxu0
      %v1327 = vadd.f32 %v1298, %v1326
      %1328 = vmatmul.bf16.gmra.mxu0 %v447
      %v1329 = vpop.f32.mrf.mxu0
      %v1330 = vadd.f32 %v1301, %v1329
      %v1331 = vpop.f32.mrf.mxu0
      %v1332 = vadd.f32 %v1303, %v1331
      %1333 = vmatmul.bf16.gmra.mxu0 %v451
      %v1334 = vpop.f32.mrf.mxu0
      %v1335 = vadd.f32 %v1306, %v1334
      %v1336 = vpop.f32.mrf.mxu0
      %v1337 = vadd.f32 %v1308, %v1336
      %1338 = vmatmul.bf16.gmra.mxu0 %v455
      %v1339 = vpop.f32.mrf.mxu0
      %v1340 = vadd.f32 %v1311, %v1339
      %v1341 = vpop.f32.mrf.mxu0
      %v1342 = vadd.f32 %v1313, %v1341
      %1343 = vdwg.mxu0
      %1344 = vmatpush.bf16.msra.mxu0 %v886
      %1345 = vmatpush.bf16.msra.mxu0 %v882
      %1346 = vmatpush.bf16.msra.mxu0 %v878
      %1347 = vmatpush.bf16.msra.mxu0 %v874
      %1348 = vmatpush.bf16.msra.mxu0 %v870
      %1349 = vmatpush.bf16.msra.mxu0 %v866
      %1350 = vmatpush.bf16.msra.mxu0 %v862
      %1351 = vmatpush.bf16.msra.mxu0 %v858
      %1352 = vmatmul.bf16.gmra.mxu0 %v440
      %v1353 = vpop.f32.mrf.mxu0
      %v1354 = vadd.f32 %v386, %v1353
      %v1355 = vpop.f32.mrf.mxu0
      %v1356 = vadd.f32 %v386, %v1355
      %1357 = vmatmul.bf16.gmra.mxu0 %v444
      %v1358 = vpop.f32.mrf.mxu0
      %v1359 = vadd.f32 %v386, %v1358
      %v1360 = vpop.f32.mrf.mxu0
      %v1361 = vadd.f32 %v386, %v1360
      %1362 = vmatmul.bf16.gmra.mxu0 %v448
      %v1363 = vpop.f32.mrf.mxu0
      %v1364 = vadd.f32 %v386, %v1363
      %v1365 = vpop.f32.mrf.mxu0
      %v1366 = vadd.f32 %v386, %v1365
      %1367 = vmatmul.bf16.gmra.mxu0 %v452
      %v1368 = vpop.f32.mrf.mxu0
      %v1369 = vadd.f32 %v386, %v1368
      %v1370 = vpop.f32.mrf.mxu0
      %v1371 = vadd.f32 %v386, %v1370
      %1372 = vdwg.mxu0
      %1373 = vmatpush.bf16.msra.mxu0 %v918
      %1374 = vmatpush.bf16.msra.mxu0 %v914
      %1375 = vmatpush.bf16.msra.mxu0 %v910
      %1376 = vmatpush.bf16.msra.mxu0 %v906
      %1377 = vmatpush.bf16.msra.mxu0 %v902
      %1378 = vmatpush.bf16.msra.mxu0 %v898
      %1379 = vmatpush.bf16.msra.mxu0 %v894
      %1380 = vmatpush.bf16.msra.mxu0 %v890
      %1381 = vmatmul.bf16.gmra.mxu0 %v441
      %v1382 = vpop.f32.mrf.mxu0
      %v1383 = vadd.f32 %v1354, %v1382
      %v1384 = vpop.f32.mrf.mxu0
      %v1385 = vadd.f32 %v1356, %v1384
      %1386 = vmatmul.bf16.gmra.mxu0 %v445
      %v1387 = vpop.f32.mrf.mxu0
      %v1388 = vadd.f32 %v1359, %v1387
      %v1389 = vpop.f32.mrf.mxu0
      %v1390 = vadd.f32 %v1361, %v1389
      %1391 = vmatmul.bf16.gmra.mxu0 %v449
      %v1392 = vpop.f32.mrf.mxu0
      %v1393 = vadd.f32 %v1364, %v1392
      %v1394 = vpop.f32.mrf.mxu0
      %v1395 = vadd.f32 %v1366, %v1394
      %1396 = vmatmul.bf16.gmra.mxu0 %v453
      %v1397 = vpop.f32.mrf.mxu0
      %v1398 = vadd.f32 %v1369, %v1397
      %v1399 = vpop.f32.mrf.mxu0
      %v1400 = vadd.f32 %v1371, %v1399
      %1401 = vdwg.mxu0
      %1402 = vmatpush.bf16.msra.mxu0 %v950
      %1403 = vmatpush.bf16.msra.mxu0 %v946
      %1404 = vmatpush.bf16.msra.mxu0 %v942
      %1405 = vmatpush.bf16.msra.mxu0 %v938
      %1406 = vmatpush.bf16.msra.mxu0 %v934
      %1407 = vmatpush.bf16.msra.mxu0 %v930
      %1408 = vmatpush.bf16.msra.mxu0 %v926
      %1409 = vmatpush.bf16.msra.mxu0 %v922
      %1410 = vmatmul.bf16.gmra.mxu0 %v442
      %v1411 = vpop.f32.mrf.mxu0
      %v1412 = vadd.f32 %v1383, %v1411
      %v1413 = vpop.f32.mrf.mxu0
      %v1414 = vadd.f32 %v1385, %v1413
      %1415 = vmatmul.bf16.gmra.mxu0 %v446
      %v1416 = vpop.f32.mrf.mxu0
      %v1417 = vadd.f32 %v1388, %v1416
      %v1418 = vpop.f32.mrf.mxu0
      %v1419 = vadd.f32 %v1390, %v1418
      %1420 = vmatmul.bf16.gmra.mxu0 %v450
      %v1421 = vpop.f32.mrf.mxu0
      %v1422 = vadd.f32 %v1393, %v1421
      %v1423 = vpop.f32.mrf.mxu0
      %v1424 = vadd.f32 %v1395, %v1423
      %1425 = vmatmul.bf16.gmra.mxu0 %v454
      %v1426 = vpop.f32.mrf.mxu0
      %v1427 = vadd.f32 %v1398, %v1426
      %v1428 = vpop.f32.mrf.mxu0
      %v1429 = vadd.f32 %v1400, %v1428
      %1430 = vdwg.mxu0
      %1431 = vmatpush.bf16.msra.mxu0 %v982
      %1432 = vmatpush.bf16.msra.mxu0 %v978
      %1433 = vmatpush.bf16.msra.mxu0 %v974
      %1434 = vmatpush.bf16.msra.mxu0 %v970
      %1435 = vmatpush.bf16.msra.mxu0 %v966
      %1436 = vmatpush.bf16.msra.mxu0 %v962
      %1437 = vmatpush.bf16.msra.mxu0 %v958
      %1438 = vmatpush.bf16.msra.mxu0 %v954
      %1439 = vmatmul.bf16.gmra.mxu0 %v443
      %v1440 = vpop.f32.mrf.mxu0
      %v1441 = vadd.f32 %v1412, %v1440
      %v1442 = vpop.f32.mrf.mxu0
      %v1443 = vadd.f32 %v1414, %v1442
      %1444 = vmatmul.bf16.gmra.mxu0 %v447
      %v1445 = vpop.f32.mrf.mxu0
      %v1446 = vadd.f32 %v1417, %v1445
      %v1447 = vpop.f32.mrf.mxu0
      %v1448 = vadd.f32 %v1419, %v1447
      %1449 = vmatmul.bf16.gmra.mxu0 %v451
      %v1450 = vpop.f32.mrf.mxu0
      %v1451 = vadd.f32 %v1422, %v1450
      %v1452 = vpop.f32.mrf.mxu0
      %v1453 = vadd.f32 %v1424, %v1452
      %1454 = vmatmul.bf16.gmra.mxu0 %v455
      %v1455 = vpop.f32.mrf.mxu0
      %v1456 = vadd.f32 %v1427, %v1455
      %v1457 = vpop.f32.mrf.mxu0
      %v1458 = vadd.f32 %v1429, %v1457
      %1459 = vdwg.mxu0
      %1460 = vmatpush.bf16.msra.mxu0 %v887
      %1461 = vmatpush.bf16.msra.mxu0 %v883
      %1462 = vmatpush.bf16.msra.mxu0 %v879
      %1463 = vmatpush.bf16.msra.mxu0 %v875
      %1464 = vmatpush.bf16.msra.mxu0 %v871
      %1465 = vmatpush.bf16.msra.mxu0 %v867
      %1466 = vmatpush.bf16.msra.mxu0 %v863
      %1467 = vmatpush.bf16.msra.mxu0 %v859
      %1468 = vmatmul.bf16.gmra.mxu0 %v440
      %v1469 = vpop.f32.mrf.mxu0
      %v1470 = vadd.f32 %v387, %v1469
      %v1471 = vpop.f32.mrf.mxu0
      %v1472 = vadd.f32 %v387, %v1471
      %1473 = vmatmul.bf16.gmra.mxu0 %v444
      %v1474 = vpop.f32.mrf.mxu0
      %v1475 = vadd.f32 %v387, %v1474
      %v1476 = vpop.f32.mrf.mxu0
      %v1477 = vadd.f32 %v387, %v1476
      %1478 = vmatmul.bf16.gmra.mxu0 %v448
      %v1479 = vpop.f32.mrf.mxu0
      %v1480 = vadd.f32 %v387, %v1479
      %v1481 = vpop.f32.mrf.mxu0
      %v1482 = vadd.f32 %v387, %v1481
      %1483 = vmatmul.bf16.gmra.mxu0 %v452
      %v1484 = vpop.f32.mrf.mxu0
      %v1485 = vadd.f32 %v387, %v1484
      %v1486 = vpop.f32.mrf.mxu0
      %v1487 = vadd.f32 %v387, %v1486
      %1488 = vdwg.mxu0
      %1489 = vmatpush.bf16.msra.mxu0 %v919
      %1490 = vmatpush.bf16.msra.mxu0 %v915
      %1491 = vmatpush.bf16.msra.mxu0 %v911
      %1492 = vmatpush.bf16.msra.mxu0 %v907
      %1493 = vmatpush.bf16.msra.mxu0 %v903
      %1494 = vmatpush.bf16.msra.mxu0 %v899
      %1495 = vmatpush.bf16.msra.mxu0 %v895
      %1496 = vmatpush.bf16.msra.mxu0 %v891
      %1497 = vmatmul.bf16.gmra.mxu0 %v441
      %v1498 = vpop.f32.mrf.mxu0
      %v1499 = vadd.f32 %v1470, %v1498
      %v1500 = vpop.f32.mrf.mxu0
      %v1501 = vadd.f32 %v1472, %v1500
      %1502 = vmatmul.bf16.gmra.mxu0 %v445
      %v1503 = vpop.f32.mrf.mxu0
      %v1504 = vadd.f32 %v1475, %v1503
      %v1505 = vpop.f32.mrf.mxu0
      %v1506 = vadd.f32 %v1477, %v1505
      %1507 = vmatmul.bf16.gmra.mxu0 %v449
      %v1508 = vpop.f32.mrf.mxu0
      %v1509 = vadd.f32 %v1480, %v1508
      %v1510 = vpop.f32.mrf.mxu0
      %v1511 = vadd.f32 %v1482, %v1510
      %1512 = vmatmul.bf16.gmra.mxu0 %v453
      %v1513 = vpop.f32.mrf.mxu0
      %v1514 = vadd.f32 %v1485, %v1513
      %v1515 = vpop.f32.mrf.mxu0
      %v1516 = vadd.f32 %v1487, %v1515
      %1517 = vdwg.mxu0
      %1518 = vmatpush.bf16.msra.mxu0 %v951
      %1519 = vmatpush.bf16.msra.mxu0 %v947
      %1520 = vmatpush.bf16.msra.mxu0 %v943
      %1521 = vmatpush.bf16.msra.mxu0 %v939
      %1522 = vmatpush.bf16.msra.mxu0 %v935
      %1523 = vmatpush.bf16.msra.mxu0 %v931
      %1524 = vmatpush.bf16.msra.mxu0 %v927
      %1525 = vmatpush.bf16.msra.mxu0 %v923
      %1526 = vmatmul.bf16.gmra.mxu0 %v442
      %v1527 = vpop.f32.mrf.mxu0
      %v1528 = vadd.f32 %v1499, %v1527
      %v1529 = vpop.f32.mrf.mxu0
      %v1530 = vadd.f32 %v1501, %v1529
      %1531 = vmatmul.bf16.gmra.mxu0 %v446
      %v1532 = vpop.f32.mrf.mxu0
      %v1533 = vadd.f32 %v1504, %v1532
      %v1534 = vpop.f32.mrf.mxu0
      %v1535 = vadd.f32 %v1506, %v1534
      %1536 = vmatmul.bf16.gmra.mxu0 %v450
      %v1537 = vpop.f32.mrf.mxu0
      %v1538 = vadd.f32 %v1509, %v1537
      %v1539 = vpop.f32.mrf.mxu0
      %v1540 = vadd.f32 %v1511, %v1539
      %1541 = vmatmul.bf16.gmra.mxu0 %v454
      %v1542 = vpop.f32.mrf.mxu0
      %v1543 = vadd.f32 %v1514, %v1542
      %v1544 = vpop.f32.mrf.mxu0
      %v1545 = vadd.f32 %v1516, %v1544
      %1546 = vdwg.mxu0
      %1547 = vmatpush.bf16.msra.mxu0 %v983
      %1548 = vmatpush.bf16.msra.mxu0 %v979
      %1549 = vmatpush.bf16.msra.mxu0 %v975
      %1550 = vmatpush.bf16.msra.mxu0 %v971
      %1551 = vmatpush.bf16.msra.mxu0 %v967
      %1552 = vmatpush.bf16.msra.mxu0 %v963
      %1553 = vmatpush.bf16.msra.mxu0 %v959
      %1554 = vmatpush.bf16.msra.mxu0 %v955
      %1555 = vmatmul.bf16.gmra.mxu0 %v443
      %v1556 = vpop.f32.mrf.mxu0
      %v1557 = vadd.f32 %v1528, %v1556
      %v1558 = vpop.f32.mrf.mxu0
      %v1559 = vadd.f32 %v1530, %v1558
      %1560 = vmatmul.bf16.gmra.mxu0 %v447
      %v1561 = vpop.f32.mrf.mxu0
      %v1562 = vadd.f32 %v1533, %v1561
      %v1563 = vpop.f32.mrf.mxu0
      %v1564 = vadd.f32 %v1535, %v1563
      %1565 = vmatmul.bf16.gmra.mxu0 %v451
      %v1566 = vpop.f32.mrf.mxu0
      %v1567 = vadd.f32 %v1538, %v1566
      %v1568 = vpop.f32.mrf.mxu0
      %v1569 = vadd.f32 %v1540, %v1568
      %1570 = vmatmul.bf16.gmra.mxu0 %v455
      %v1571 = vpop.f32.mrf.mxu0
      %v1572 = vadd.f32 %v1543, %v1571
      %v1573 = vpop.f32.mrf.mxu0
      %v1574 = vadd.f32 %v1545, %v1573
      %1575 = vdwg.mxu0
      %v1576 = vmul.f32 %v1209, 0.2
      %v1577 = vmul.f32 %v1325, 0.2
      %v1578 = vmul.f32 %v1441, 0.2
      %v1579 = vmul.f32 %v1557, 0.2
      %v1580 = vmul.f32 %v1211, 0.2
      %v1581 = vmul.f32 %v1327, 0.2
      %v1582 = vmul.f32 %v1443, 0.2
      %v1583 = vmul.f32 %v1559, 0.2
      %v1584 = vmul.f32 %v1214, 0.2
      %v1585 = vmul.f32 %v1330, 0.2
      %v1586 = vmul.f32 %v1446, 0.2
      %v1587 = vmul.f32 %v1562, 0.2
      %v1588 = vmul.f32 %v1216, 0.2
      %v1589 = vmul.f32 %v1332, 0.2
      %v1590 = vmul.f32 %v1448, 0.2
      %v1591 = vmul.f32 %v1564, 0.2
      %v1592 = vmul.f32 %v1219, 0.2
      %v1593 = vmul.f32 %v1335, 0.2
      %v1594 = vmul.f32 %v1451, 0.2
      %v1595 = vmul.f32 %v1567, 0.2
      %v1596 = vmul.f32 %v1221, 0.2
      %v1597 = vmul.f32 %v1337, 0.2
      %v1598 = vmul.f32 %v1453, 0.2
      %v1599 = vmul.f32 %v1569, 0.2
      %v1600 = vmul.f32 %v1224, 0.2
      %v1601 = vmul.f32 %v1340, 0.2
      %v1602 = vmul.f32 %v1456, 0.2
      %v1603 = vmul.f32 %v1572, 0.2
      %v1604 = vmul.f32 %v1226, 0.2
      %v1605 = vmul.f32 %v1342, 0.2
      %v1606 = vmul.f32 %v1458, 0.2
      %v1607 = vmul.f32 %v1574, 0.2
      %v1608 = vmax.f32 %v1209, %v1576
      %v1609 = vmax.f32 %v1325, %v1577
      %v1610 = vmax.f32 %v1441, %v1578
      %v1611 = vmax.f32 %v1557, %v1579
      %v1612 = vmax.f32 %v1211, %v1580
      %v1613 = vmax.f32 %v1327, %v1581
      %v1614 = vmax.f32 %v1443, %v1582
      %v1615 = vmax.f32 %v1559, %v1583
      %v1616 = vmax.f32 %v1214, %v1584
      %v1617 = vmax.f32 %v1330, %v1585
      %v1618 = vmax.f32 %v1446, %v1586
      %v1619 = vmax.f32 %v1562, %v1587
      %v1620 = vmax.f32 %v1216, %v1588
      %v1621 = vmax.f32 %v1332, %v1589
      %v1622 = vmax.f32 %v1448, %v1590
      %v1623 = vmax.f32 %v1564, %v1591
      %v1624 = vmax.f32 %v1219, %v1592
      %v1625 = vmax.f32 %v1335, %v1593
      %v1626 = vmax.f32 %v1451, %v1594
      %v1627 = vmax.f32 %v1567, %v1595
      %v1628 = vmax.f32 %v1221, %v1596
      %v1629 = vmax.f32 %v1337, %v1597
      %v1630 = vmax.f32 %v1453, %v1598
      %v1631 = vmax.f32 %v1569, %v1599
      %v1632 = vmax.f32 %v1224, %v1600
      %v1633 = vmax.f32 %v1340, %v1601
      %v1634 = vmax.f32 %v1456, %v1602
      %v1635 = vmax.f32 %v1572, %v1603
      %v1636 = vmax.f32 %v1226, %v1604
      %v1637 = vmax.f32 %v1342, %v1605
      %v1638 = vmax.f32 %v1458, %v1606
      %v1639 = vmax.f32 %v1574, %v1607
      %v1640 = vmax.f32 %v1608, %v1612
      %v1641 = vmax.f32 %v1640, %v1616
      %v1642 = vmax.f32 %v1641, %v1620
      %v1643 = vmax.f32 %v1642, %v1624
      %v1644 = vmax.f32 %v1643, %v1628
      %v1645 = vmax.f32 %v1644, %v1632
      %v1646 = vmax.f32 %v1645, %v1636
      %v1647 = vrot.slane %v1646, 4
      %v1648 = vmax.f32 %v1646, %v1647
      %v1649 = vrot.slane %v1648, 2
      %v1650 = vmax.f32 %v1648, %v1649
      %v1651 = vrot.slane %v1650, 1
      %v1652 = vmax.f32 %v1650, %v1651
      %v1653 = vmax.f32 %v1609, %v1613
      %v1654 = vmax.f32 %v1653, %v1617
      %v1655 = vmax.f32 %v1654, %v1621
      %v1656 = vmax.f32 %v1655, %v1625
      %v1657 = vmax.f32 %v1656, %v1629
      %v1658 = vmax.f32 %v1657, %v1633
      %v1659 = vmax.f32 %v1658, %v1637
      %v1660 = vrot.slane %v1659, 4
      %v1661 = vmax.f32 %v1659, %v1660
      %v1662 = vrot.slane %v1661, 2
      %v1663 = vmax.f32 %v1661, %v1662
      %v1664 = vrot.slane %v1663, 1
      %v1665 = vmax.f32 %v1663, %v1664
      %v1666 = vmax.f32 %v1610, %v1614
      %v1667 = vmax.f32 %v1666, %v1618
      %v1668 = vmax.f32 %v1667, %v1622
      %v1669 = vmax.f32 %v1668, %v1626
      %v1670 = vmax.f32 %v1669, %v1630
      %v1671 = vmax.f32 %v1670, %v1634
      %v1672 = vmax.f32 %v1671, %v1638
      %v1673 = vrot.slane %v1672, 4
      %v1674 = vmax.f32 %v1672, %v1673
      %v1675 = vrot.slane %v1674, 2
      %v1676 = vmax.f32 %v1674, %v1675
      %v1677 = vrot.slane %v1676, 1
      %v1678 = vmax.f32 %v1676, %v1677
      %v1679 = vmax.f32 %v1611, %v1615
      %v1680 = vmax.f32 %v1679, %v1619
      %v1681 = vmax.f32 %v1680, %v1623
      %v1682 = vmax.f32 %v1681, %v1627
      %v1683 = vmax.f32 %v1682, %v1631
      %v1684 = vmax.f32 %v1683, %v1635
      %v1685 = vmax.f32 %v1684, %v1639
      %v1686 = vrot.slane %v1685, 4
      %v1687 = vmax.f32 %v1685, %v1686
      %v1688 = vrot.slane %v1687, 2
      %v1689 = vmax.f32 %v1687, %v1688
      %v1690 = vrot.slane %v1689, 1
      %v1691 = vmax.f32 %v1689, %v1690
      %v1692 = vadd.f32 %v1608, %v1612
      %v1693 = vadd.f32 %v1692, %v1616
      %v1694 = vadd.f32 %v1693, %v1620
      %v1695 = vadd.f32 %v1694, %v1624
      %v1696 = vadd.f32 %v1695, %v1628
      %v1697 = vadd.f32 %v1696, %v1632
      %v1698 = vadd.f32 %v1697, %v1636
      %v1699 = vrot.slane %v1698, 4
      %v1700 = vadd.f32 %v1698, %v1699
      %v1701 = vrot.slane %v1700, 2
      %v1702 = vadd.f32 %v1700, %v1701
      %v1703 = vrot.slane %v1702, 1
      %v1704 = vadd.f32 %v1702, %v1703
      %v1705 = vadd.f32 %v1609, %v1613
      %v1706 = vadd.f32 %v1705, %v1617
      %v1707 = vadd.f32 %v1706, %v1621
      %v1708 = vadd.f32 %v1707, %v1625
      %v1709 = vadd.f32 %v1708, %v1629
      %v1710 = vadd.f32 %v1709, %v1633
      %v1711 = vadd.f32 %v1710, %v1637
      %v1712 = vrot.slane %v1711, 4
      %v1713 = vadd.f32 %v1711, %v1712
      %v1714 = vrot.slane %v1713, 2
      %v1715 = vadd.f32 %v1713, %v1714
      %v1716 = vrot.slane %v1715, 1
      %v1717 = vadd.f32 %v1715, %v1716
      %v1718 = vadd.f32 %v1610, %v1614
      %v1719 = vadd.f32 %v1718, %v1618
      %v1720 = vadd.f32 %v1719, %v1622
      %v1721 = vadd.f32 %v1720, %v1626
      %v1722 = vadd.f32 %v1721, %v1630
      %v1723 = vadd.f32 %v1722, %v1634
      %v1724 = vadd.f32 %v1723, %v1638
      %v1725 = vrot.slane %v1724, 4
      %v1726 = vadd.f32 %v1724, %v1725
      %v1727 = vrot.slane %v1726, 2
      %v1728 = vadd.f32 %v1726, %v1727
      %v1729 = vrot.slane %v1728, 1
      %v1730 = vadd.f32 %v1728, %v1729
      %v1731 = vadd.f32 %v1611, %v1615
      %v1732 = vadd.f32 %v1731, %v1619
      %v1733 = vadd.f32 %v1732, %v1623
      %v1734 = vadd.f32 %v1733, %v1627
      %v1735 = vadd.f32 %v1734, %v1631
      %v1736 = vadd.f32 %v1735, %v1635
      %v1737 = vadd.f32 %v1736, %v1639
      %v1738 = vrot.slane %v1737, 4
      %v1739 = vadd.f32 %v1737, %v1738
      %v1740 = vrot.slane %v1739, 2
      %v1741 = vadd.f32 %v1739, %v1740
      %v1742 = vrot.slane %v1741, 1
      %v1743 = vadd.f32 %v1741, %v1742
      %v1744 = vmul.f32 %v1704, 0.015625
      %v1745 = vmul.f32 %v1717, 0.015625
      %v1746 = vmul.f32 %v1730, 0.015625
      %v1747 = vmul.f32 %v1743, 0.015625
      %p1748 = scmp.eq.s32.totalorder %s21, 0
      // Predicated region
      $region33: #{weight_binding_net_forward.14} parent=31 // pred_check
        %p1749 = pneg %p1748
      $region34: #{weight_binding_net_forward.14} parent=31 // pred_check_branch
        %1751 = sbr.rel (%p1749) target = $region36
      $region35: #{weight_binding_net_forward.14} parent=31 // pred_region
        %v1756 = vrot.slane %v1665, 7
        %v1757 = vrot.slane %v1678, 6
        %v1758 = vrot.slane %v1691, 5
        %vm1759 = vcmask 1040384
        %v1760 = vsel %vm1759, %v1652, %v1756
        %vm1761 = vcmask 1042434
        %v1762 = vsel %vm1761, %v1757, %v1758
        %vm1763 = vcmask 1041408
        %v1764 = vsel %vm1763, %v1760, %v1762
        %v1766 = vlaneseq
        %vm1767 = vcmp.ge.s32.totalorder %v1766, 0
        %vm1768 = vcmp.lt.s32.totalorder %v1766, 512
        %vm1769 = vmand %vm1767, %vm1768
        %1770 = vst.msk [vmem:[%s233] sm:$0xf] %vm1769, %v1764
        %v1775 = vrot.slane %v1745, 7
        %v1776 = vrot.slane %v1746, 6
        %v1777 = vrot.slane %v1747, 5
        %v1778 = vsel %vm1759, %v1744, %v1775
        %v1779 = vsel %vm1761, %v1776, %v1777
        %v1780 = vsel %vm1763, %v1778, %v1779
        %1782 = vst.msk [vmem:[%s237] sm:$0xf] %vm1769, %v1780
      $region36: #{weight_binding_net_forward.14} parent=31 // pred_fallthru
        _
      %p1783 = scmp.gt.s32.totalorder %s21, 0
      // Predicated region
      $region37: #{weight_binding_net_forward.14} parent=31 // pred_check
        %p1784 = pneg %p1783
      $region38: #{weight_binding_net_forward.14} parent=31 // pred_check_branch
        %1786 = sbr.rel (%p1784) target = $region40
      $region39: #{weight_binding_net_forward.14} parent=31 // pred_region
        %v1787 = vld [vmem:[%s233] sm:$0xf]
        %v1792 = vrot.slane %v1665, 7
        %v1793 = vrot.slane %v1678, 6
        %v1794 = vrot.slane %v1691, 5
        %vm1795 = vcmask 1040384
        %v1796 = vsel %vm1795, %v1652, %v1792
        %vm1797 = vcmask 1042434
        %v1798 = vsel %vm1797, %v1793, %v1794
        %vm1799 = vcmask 1041408
        %v1800 = vsel %vm1799, %v1796, %v1798
        %v1802 = vmax.f32 %v1787, %v1800
        %v1803 = vlaneseq
        %vm1804 = vcmp.ge.s32.totalorder %v1803, 0
        %vm1805 = vcmp.lt.s32.totalorder %v1803, 512
        %vm1806 = vmand %vm1804, %vm1805
        %1807 = vst.msk [vmem:[%s233] sm:$0xf] %vm1806, %v1802
        %v1808 = vld [vmem:[%s237] sm:$0xf]
        %v1813 = vrot.slane %v1745, 7
        %v1814 = vrot.slane %v1746, 6
        %v1815 = vrot.slane %v1747, 5
        %v1816 = vsel %vm1795, %v1744, %v1813
        %v1817 = vsel %vm1797, %v1814, %v1815
        %v1818 = vsel %vm1799, %v1816, %v1817
        %v1820 = vadd.f32 %v1808, %v1818
        %1821 = vst.msk [vmem:[%s237] sm:$0xf] %vm1806, %v1820
      $region40: #{weight_binding_net_forward.14} parent=31 // pred_fallthru
        _
      %p1822 = scmp.lt.s32.totalorder %s20, 1
      %s1823 = scalar_select %p1822, %s20, 1
      %s1824 = smul.addr %s1823, 4
      %s1825 = scalar_lea.vmem %s3, %s1824
      %p1826 = scmp.lt.s32.totalorder %s20, 1
      %s1827 = scalar_select %p1826, %s20, 1
      %s1828 = smul.addr %s1827, 4
      %s1829 = scalar_lea.vmem %s4, %s1828
      // Predicated region
      $region41: #{weight_binding_net_forward.14} parent=31 // pred_check
        %p1830 = pneg %p116
      $region42: #{weight_binding_net_forward.14} parent=31 // pred_check_branch
        %1832 = sbr.rel (%p1830) target = $region44
      $region43: #{weight_binding_net_forward.14} parent=31 // pred_region
        _
      $region44: #{weight_binding_net_forward.14} parent=31 // pred_fallthru
        _
      // Predicated region
      $region45: #{weight_binding_net_forward.14} parent=31 // pred_check
        %p1833 = pneg %p142
      $region46: #{weight_binding_net_forward.14} parent=31 // pred_check_branch
        %1835 = sbr.rel (%p1833) target = $region48
      $region47: #{weight_binding_net_forward.14} parent=31 // pred_region
        _
      $region48: #{weight_binding_net_forward.14} parent=31 // pred_fallthru
        _
    $region32: #{weight_binding_net_forward.14} parent=5 // pred_fallthru
      _
    %p1836 = scmp.le.s32.totalorder 2, %s11
    // Predicated region
    $region49: #{weight_binding_net_forward.14} parent=5 // pred_check
      %p1837 = pneg %p1836
    $region50: #{weight_binding_net_forward.14} parent=5 // pred_check_branch
      %1839 = sbr.rel (%p1837) target = $region52
    $region51: #{weight_binding_net_forward.14} parent=5 // pred_region
      %s1840 = ssub.s32 %s11, 2
      // Predicated region
      $region53: #{weight_binding_net_forward.14} parent=51 // pred_check
        %p1841 = pneg %p122
      $region54: #{weight_binding_net_forward.14} parent=51 // pred_check_branch
        %1843 = sbr.rel (%p1841) target = $region56
      $region55: #{weight_binding_net_forward.14} parent=51 // pred_region
        %p1844 = scmp.lt.s32.totalorder %s22, 1
        %s1845 = scalar_select %p1844, %s22, 1
        %s1846 = smul.addr %s1845, 4
        %s1847 = scalar_lea.vmem %s3, %s1846
      $region56: #{weight_binding_net_forward.14} parent=51 // pred_fallthru
        _
      // Predicated region
      $region57: #{weight_binding_net_forward.14} parent=51 // pred_check
        %p1848 = pneg %p148
      $region58: #{weight_binding_net_forward.14} parent=51 // pred_check_branch
        %1850 = sbr.rel (%p1848) target = $region60
      $region59: #{weight_binding_net_forward.14} parent=51 // pred_region
        %p1851 = scmp.lt.s32.totalorder %s22, 1
        %s1852 = scalar_select %p1851, %s22, 1
        %s1853 = smul.addr %s1852, 4
        %s1854 = scalar_lea.vmem %s4, %s1853
      $region60: #{weight_binding_net_forward.14} parent=51 // pred_fallthru
        _
    $region52: #{weight_binding_net_forward.14} parent=5 // pred_fallthru
      _
  $region6: #{weight_binding_net_forward.14} parent=0 // loop_footer
    %s15 = sadd.s32 1, %s11
  $region7: #{weight_binding_net_forward.14} parent=0 // loop_footer_branch
    %10 = sbr.rel target = $region3
  $region8: #{weight_binding_net_forward.14} parent=0 // loop_exit
    _

// kernel: weight_binding_net_forward.15
$region0: #{weight_binding_net_forward.15}
  #allocation0 [shape = 'u32[]', space=smem, size = 0x4, offset = 0x4, fixed_abs, tag = 'smem constant byte address 0x4 - core index']
  #allocation1 [shape = 'u32[72,128]{1,0:T(1,128)}', space=vmem, size = 0x9000, scoped, tag = 'internal scratch']
  %s0 = inlined_call_operand.vmem [shape: bf16[2,128,512], index: 0, kind: input, shape index: {}]
  %s1 = inlined_call_operand.vmem [shape: f32[2,1,1024], index: 1, kind: input, shape index: {}]
  %s2 = inlined_call_operand.vmem [shape: bf16[512,1024], index: 2, kind: input, shape index: {}]
  %s3 = inlined_call_operand.vmem [shape: bf16[1024,256], index: 3, kind: input, shape index: {}]
  %s4 = inlined_call_operand.vmem [shape: f32[1,256], index: 4, kind: input, shape index: {}]
  %s5 = inlined_call_operand.vmem [shape: bf16[256,64], index: 5, kind: input, shape index: {}]
  %s6 = inlined_call_operand.vmem [shape: f32[1,64], index: 6, kind: input, shape index: {}]
  %s7 = inlined_call_operand.vmem [shape: bf16[16,64], index: 7, kind: input, shape index: {}]
  %s8 = inlined_call_operand.vmem [shape: f32[16,1], index: 8, kind: input, shape index: {}]
  %s9 = inlined_call_operand.hbm [shape: f32[2,16,128], index: 9, kind: output, shape index: {}]
  %s10 = sld [smem:[#allocation0]]
  $region69: #{weight_binding_net_forward.15} parent=0
    _
  %s12 = ssub.s32 1, %s10
  %s13 = scalar_select 0, %s12, %s10
  $region1: #{weight_binding_net_forward.15} parent=0
    #allocation2 [shape = 'u8[16384]{0}', space=vmem, size = 0x4000, scoped, tag = 'output window, operand 0']
    #allocation3 [shape = 's32[2]{0}', space=sflag, size = 0x8, scoped, tag = 'scoped memory for weight_binding_net_forward.15']
    %14 = vsyncpa [#allocation3], 0
    %s15 = scalar_lea.sflag [#allocation3], 1
    %16 = vsyncpa %s15, 0
    loop: start=0, step=1, limit=4
    $region2: #{weight_binding_net_forward.15} parent=1 // loop_pre_header
      _
    $region3: #{weight_binding_net_forward.15} parent=1 // loop_header
      %s18 = sphi 0, %s22
      %p19 = scmp.ge.s32.totalorder %s18, 4
      %s25 = sphi 0, %s37
      %s26 = sphi 0, %s33
      %s27 = sphi 0, %s25
      %s28 = sphi 0, %s26
      %s29 = sphi 0, %s27
      %s30 = sphi 0, %s28
      %s42 = sphi 0, %s44
      %s45 = sphi 0, %s42
      %s46 = sphi 0, %s45
      %s62 = sphi 0, %s46
      %s68 = sphi 0, %s70
      %s71 = sphi 0, %s68
      %s72 = sphi 0, %s71
      %s88 = sphi 0, %s72
      %s92 = sphi 0, %s92
      %s94 = sphi 0, %s92
      %s95 = sphi 0, %s94
      %s109 = sphi 0, %s95
      %s113 = sphi 0, %s113
      %s115 = sphi 0, %s113
      %s116 = sphi 0, %s115
      %s130 = sphi 0, %s116
      %s134 = sphi 0, %s134
      %s136 = sphi 0, %s134
      %s137 = sphi 0, %s136
      %s151 = sphi 0, %s137
      %s155 = sphi 0, %s155
      %s157 = sphi 0, %s155
      %s158 = sphi 0, %s157
      %s172 = sphi 0, %s158
      %s176 = sphi 0, %s176
      %s178 = sphi 0, %s176
      %s179 = sphi 0, %s178
      %s193 = sphi 0, %s179
      %s197 = sphi 0, %s197
      %s199 = sphi 0, %s197
      %s200 = sphi 0, %s199
      %s214 = sphi 0, %s200
      %s218 = sphi 0, %s218
      %s220 = sphi 0, %s218
      %s221 = sphi 0, %s220
      %s235 = sphi 0, %s221
      %s243 = sphi 0, %s245
      %s246 = sphi 0, %s243
      %s247 = sphi 0, %s246
      %s263 = sphi 0, %s247
    $region4: #{weight_binding_net_forward.15} parent=1 // loop_header_branch
      %21 = sbr.rel (%p19) target = $region8
    $region5: #{weight_binding_net_forward.15} parent=1 // loop_body
      %s23 = ssub.s32 %s18, 1
      %s24 = ssub.s32 %s18, 2
      %s31 = sadd.s32 1, %s26
      %p32 = scmp.ge.s32.totalorder %s31, 1
      %s33 = scalar_select %p32, 0, %s31
      %s34 = sadd.s32 1, %s25
      %s35 = scalar_select %p32, %s34, %s25
      %p36 = scmp.ge.s32.totalorder %s35, 2
      %s37 = scalar_select %p36, 0, %s35
      %s38 = ssub.s32 %s25, %s37
      %s39 = ssub.s32 %s26, %s33
      %s40 = sor.u32 %s38, %s39
      %p41 = scmp.eq.s32.totalorder %s40, 0
      %s43 = sadd.s32 %s42, 1
      %s44 = scalar_select %p41, %s42, %s43
      %p47 = pneg %p41
      %p48 = scmp.eq.s32.totalorder %s18, 1
      %p49 = por %p47, %p48
      %p50 = scmp.ne.s32.totalorder %s42, %s45
      %p51 = scmp.eq.s32.totalorder %s18, 0
      %p52 = por %p50, %p51
      %p53 = scmp.ne.s32.totalorder %s42, %s45
      %p54 = scmp.eq.s32.totalorder %s23, 1
      %p55 = por %p53, %p54
      %p56 = scmp.ne.s32.totalorder %s45, %s46
      %p57 = scmp.eq.s32.totalorder %s23, 0
      %p58 = por %p56, %p57
      %p59 = scmp.ne.s32.totalorder %s45, %s46
      %p60 = scmp.eq.s32.totalorder %s24, 1
      %p61 = por %p59, %p60
      %p63 = scmp.ne.s32.totalorder %s46, %s62
      %p64 = scmp.eq.s32.totalorder %s24, 0
      %p65 = por %p63, %p64
      %s66 = ssub.s32 %s25, %s37
      %p67 = scmp.eq.s32.totalorder %s66, 0
      %s69 = sadd.s32 %s68, 1
      %s70 = scalar_select %p67, %s68, %s69
      %p73 = pneg %p67
      %p74 = scmp.eq.s32.totalorder %s18, 1
      %p75 = por %p73, %p74
      %p76 = scmp.ne.s32.totalorder %s68, %s71
      %p77 = scmp.eq.s32.totalorder %s18, 0
      %p78 = por %p76, %p77
      %p79 = scmp.ne.s32.totalorder %s68, %s71
      %p80 = scmp.eq.s32.totalorder %s23, 1
      %p81 = por %p79, %p80
      %p82 = scmp.ne.s32.totalorder %s71, %s72
      %p83 = scmp.eq.s32.totalorder %s23, 0
      %p84 = por %p82, %p83
      %p85 = scmp.ne.s32.totalorder %s71, %s72
      %p86 = scmp.eq.s32.totalorder %s24, 1
      %p87 = por %p85, %p86
      %p89 = scmp.ne.s32.totalorder %s72, %s88
      %p90 = scmp.eq.s32.totalorder %s24, 0
      %p91 = por %p89, %p90
      %s93 = sadd.s32 %s92, 1
      %p96 = scmp.eq.s32.totalorder %s18, 1
      %p97 = scmp.ne.s32.totalorder %s92, %s94
      %p98 = scmp.eq.s32.totalorder %s18, 0
      %p99 = por %p97, %p98
      %p100 = scmp.ne.s32.totalorder %s92, %s94
      %p101 = scmp.eq.s32.totalorder %s23, 1
      %p102 = por %p100, %p101
      %p103 = scmp.ne.s32.totalorder %s94, %s95
      %p104 = scmp.eq.s32.totalorder %s23, 0
      %p105 = por %p103, %p104
      %p106 = scmp.ne.s32.totalorder %s94, %s95
      %p107 = scmp.eq.s32.totalorder %s24, 1
      %p108 = por %p106, %p107
      %p110 = scmp.ne.s32.totalorder %s95, %s109
      %p111 = scmp.eq.s32.totalorder %s24, 0
      %p112 = por %p110, %p111
      %s114 = sadd.s32 %s113, 1
      %p117 = scmp.eq.s32.totalorder %s18, 1
      %p118 = scmp.ne.s32.totalorder %s113, %s115
      %p119 = scmp.eq.s32.totalorder %s18, 0
      %p120 = por %p118, %p119
      %p121 = scmp.ne.s32.totalorder %s113, %s115
      %p122 = scmp.eq.s32.totalorder %s23, 1
      %p123 = por %p121, %p122
      %p124 = scmp.ne.s32.totalorder %s115, %s116
      %p125 = scmp.eq.s32.totalorder %s23, 0
      %p126 = por %p124, %p125
      %p127 = scmp.ne.s32.totalorder %s115, %s116
      %p128 = scmp.eq.s32.totalorder %s24, 1
      %p129 = por %p127, %p128
      %p131 = scmp.ne.s32.totalorder %s116, %s130
      %p132 = scmp.eq.s32.totalorder %s24, 0
      %p133 = por %p131, %p132
      %s135 = sadd.s32 %s134, 1
      %p138 = scmp.eq.s32.totalorder %s18, 1
      %p139 = scmp.ne.s32.totalorder %s134, %s136
      %p140 = scmp.eq.s32.totalorder %s18, 0
      %p141 = por %p139, %p140
      %p142 = scmp.ne.s32.totalorder %s134, %s136
      %p143 = scmp.eq.s32.totalorder %s23, 1
      %p144 = por %p142, %p143
      %p145 = scmp.ne.s32.totalorder %s136, %s137
      %p146 = scmp.eq.s32.totalorder %s23, 0
      %p147 = por %p145, %p146
      %p148 = scmp.ne.s32.totalorder %s136, %s137
      %p149 = scmp.eq.s32.totalorder %s24, 1
      %p150 = por %p148, %p149
      %p152 = scmp.ne.s32.totalorder %s137, %s151
      %p153 = scmp.eq.s32.totalorder %s24, 0
      %p154 = por %p152, %p153
      %s156 = sadd.s32 %s155, 1
      %p159 = scmp.eq.s32.totalorder %s18, 1
      %p160 = scmp.ne.s32.totalorder %s155, %s157
      %p161 = scmp.eq.s32.totalorder %s18, 0
      %p162 = por %p160, %p161
      %p163 = scmp.ne.s32.totalorder %s155, %s157
      %p164 = scmp.eq.s32.totalorder %s23, 1
      %p165 = por %p163, %p164
      %p166 = scmp.ne.s32.totalorder %s157, %s158
      %p167 = scmp.eq.s32.totalorder %s23, 0
      %p168 = por %p166, %p167
      %p169 = scmp.ne.s32.totalorder %s157, %s158
      %p170 = scmp.eq.s32.totalorder %s24, 1
      %p171 = por %p169, %p170
      %p173 = scmp.ne.s32.totalorder %s158, %s172
      %p174 = scmp.eq.s32.totalorder %s24, 0
      %p175 = por %p173, %p174
      %s177 = sadd.s32 %s176, 1
      %p180 = scmp.eq.s32.totalorder %s18, 1
      %p181 = scmp.ne.s32.totalorder %s176, %s178
      %p182 = scmp.eq.s32.totalorder %s18, 0
      %p183 = por %p181, %p182
      %p184 = scmp.ne.s32.totalorder %s176, %s178
      %p185 = scmp.eq.s32.totalorder %s23, 1
      %p186 = por %p184, %p185
      %p187 = scmp.ne.s32.totalorder %s178, %s179
      %p188 = scmp.eq.s32.totalorder %s23, 0
      %p189 = por %p187, %p188
      %p190 = scmp.ne.s32.totalorder %s178, %s179
      %p191 = scmp.eq.s32.totalorder %s24, 1
      %p192 = por %p190, %p191
      %p194 = scmp.ne.s32.totalorder %s179, %s193
      %p195 = scmp.eq.s32.totalorder %s24, 0
      %p196 = por %p194, %p195
      %s198 = sadd.s32 %s197, 1
      %p201 = scmp.eq.s32.totalorder %s18, 1
      %p202 = scmp.ne.s32.totalorder %s197, %s199
      %p203 = scmp.eq.s32.totalorder %s18, 0
      %p204 = por %p202, %p203
      %p205 = scmp.ne.s32.totalorder %s197, %s199
      %p206 = scmp.eq.s32.totalorder %s23, 1
      %p207 = por %p205, %p206
      %p208 = scmp.ne.s32.totalorder %s199, %s200
      %p209 = scmp.eq.s32.totalorder %s23, 0
      %p210 = por %p208, %p209
      %p211 = scmp.ne.s32.totalorder %s199, %s200
      %p212 = scmp.eq.s32.totalorder %s24, 1
      %p213 = por %p211, %p212
      %p215 = scmp.ne.s32.totalorder %s200, %s214
      %p216 = scmp.eq.s32.totalorder %s24, 0
      %p217 = por %p215, %p216
      %s219 = sadd.s32 %s218, 1
      %p222 = scmp.eq.s32.totalorder %s18, 1
      %p223 = scmp.ne.s32.totalorder %s218, %s220
      %p224 = scmp.eq.s32.totalorder %s18, 0
      %p225 = por %p223, %p224
      %p226 = scmp.ne.s32.totalorder %s218, %s220
      %p227 = scmp.eq.s32.totalorder %s23, 1
      %p228 = por %p226, %p227
      %p229 = scmp.ne.s32.totalorder %s220, %s221
      %p230 = scmp.eq.s32.totalorder %s23, 0
      %p231 = por %p229, %p230
      %p232 = scmp.ne.s32.totalorder %s220, %s221
      %p233 = scmp.eq.s32.totalorder %s24, 1
      %p234 = por %p232, %p233
      %p236 = scmp.ne.s32.totalorder %s221, %s235
      %p237 = scmp.eq.s32.totalorder %s24, 0
      %p238 = por %p236, %p237
      %s239 = ssub.s32 %s25, %s37
      %s240 = ssub.s32 %s26, %s33
      %s241 = sor.u32 %s239, %s240
      %p242 = scmp.eq.s32.totalorder %s241, 0
      %s244 = sadd.s32 %s243, 1
      %s245 = scalar_select %p242, %s243, %s244
      %p248 = pneg %p242
      %p249 = scmp.eq.s32.totalorder %s18, 1
      %p250 = por %p248, %p249
      %p251 = scmp.ne.s32.totalorder %s243, %s246
      %p252 = scmp.eq.s32.totalorder %s18, 0
      %p253 = por %p251, %p252
      %p254 = scmp.ne.s32.totalorder %s243, %s246
      %p255 = scmp.eq.s32.totalorder %s23, 1
      %p256 = por %p254, %p255
      %p257 = scmp.ne.s32.totalorder %s246, %s247
      %p258 = scmp.eq.s32.totalorder %s23, 0
      %p259 = por %p257, %p258
      %p260 = scmp.ne.s32.totalorder %s246, %s247
      %p261 = scmp.eq.s32.totalorder %s24, 1
      %p262 = por %p260, %p261
      %p264 = scmp.ne.s32.totalorder %s247, %s263
      %p265 = scmp.eq.s32.totalorder %s24, 0
      %p266 = por %p264, %p265
      %p267 = scmp.le.s32.totalorder 1, %s18
      %p268 = scmp.lt.s32.totalorder %s18, 3
      %p269 = pnand %p267, %p268
      %p270 = pneg %p269
      // Predicated region
      $region9: #{weight_binding_net_forward.15} parent=5 // pred_check
        _
      $region10: #{weight_binding_net_forward.15} parent=5 // pred_check_branch
        %272 = sbr.rel (%p269) target = $region12
      $region11: #{weight_binding_net_forward.15} parent=5 // pred_region
        %s273 = ssub.s32 %s18, 1
        // Predicated region
        $region13: #{weight_binding_net_forward.15} parent=11 // pred_check
          %p274 = pneg %p105
        $region14: #{weight_binding_net_forward.15} parent=11 // pred_check_branch
          %276 = sbr.rel (%p274) target = $region16
        $region15: #{weight_binding_net_forward.15} parent=11 // pred_region
          _
        $region16: #{weight_binding_net_forward.15} parent=11 // pred_fallthru
          _
        // Predicated region
        $region17: #{weight_binding_net_forward.15} parent=11 // pred_check
          %p277 = pneg %p126
        $region18: #{weight_binding_net_forward.15} parent=11 // pred_check_branch
          %279 = sbr.rel (%p277) target = $region20
        $region19: #{weight_binding_net_forward.15} parent=11 // pred_region
          _
        $region20: #{weight_binding_net_forward.15} parent=11 // pred_fallthru
          _
        // Predicated region
        $region21: #{weight_binding_net_forward.15} parent=11 // pred_check
          %p280 = pneg %p147
        $region22: #{weight_binding_net_forward.15} parent=11 // pred_check_branch
          %282 = sbr.rel (%p280) target = $region24
        $region23: #{weight_binding_net_forward.15} parent=11 // pred_region
          _
        $region24: #{weight_binding_net_forward.15} parent=11 // pred_fallthru
          _
        // Predicated region
        $region25: #{weight_binding_net_forward.15} parent=11 // pred_check
          %p283 = pneg %p168
        $region26: #{weight_binding_net_forward.15} parent=11 // pred_check_branch
          %285 = sbr.rel (%p283) target = $region28
        $region27: #{weight_binding_net_forward.15} parent=11 // pred_region
          _
        $region28: #{weight_binding_net_forward.15} parent=11 // pred_fallthru
          _
        // Predicated region
        $region29: #{weight_binding_net_forward.15} parent=11 // pred_check
          %p286 = pneg %p189
        $region30: #{weight_binding_net_forward.15} parent=11 // pred_check_branch
          %288 = sbr.rel (%p286) target = $region32
        $region31: #{weight_binding_net_forward.15} parent=11 // pred_region
          _
        $region32: #{weight_binding_net_forward.15} parent=11 // pred_fallthru
          _
        // Predicated region
        $region33: #{weight_binding_net_forward.15} parent=11 // pred_check
          %p289 = pneg %p210
        $region34: #{weight_binding_net_forward.15} parent=11 // pred_check_branch
          %291 = sbr.rel (%p289) target = $region36
        $region35: #{weight_binding_net_forward.15} parent=11 // pred_region
          _
        $region36: #{weight_binding_net_forward.15} parent=11 // pred_fallthru
          _
        // Predicated region
        $region37: #{weight_binding_net_forward.15} parent=11 // pred_check
          %p292 = pneg %p231
        $region38: #{weight_binding_net_forward.15} parent=11 // pred_check_branch
          %294 = sbr.rel (%p292) target = $region40
        $region39: #{weight_binding_net_forward.15} parent=11 // pred_region
          _
        $region40: #{weight_binding_net_forward.15} parent=11 // pred_fallthru
          _
      $region12: #{weight_binding_net_forward.15} parent=5 // pred_fallthru
        _
      %p295 = scmp.lt.s32.totalorder %s18, 2
      // Predicated region
      $region41: #{weight_binding_net_forward.15} parent=5 // pred_check
        %p296 = pneg %p295
      $region42: #{weight_binding_net_forward.15} parent=5 // pred_check_branch
        %298 = sbr.rel (%p296) target = $region44
      $region43: #{weight_binding_net_forward.15} parent=5 // pred_region
        // Predicated region
        $region45: #{weight_binding_net_forward.15} parent=43 // pred_check
          %p299 = pneg %p52
        $region46: #{weight_binding_net_forward.15} parent=43 // pred_check_branch
          %301 = sbr.rel (%p299) target = $region48
        $region47: #{weight_binding_net_forward.15} parent=43 // pred_region
          %s302 = smul.u32 16, %s26
          %p303 = scmp.lt.s32.totalorder %s25, 1
          %s304 = scalar_select %p303, %s25, 1
          %p305 = scmp.lt.s32.totalorder %s302, 15
          %s306 = scalar_select %p305, %s302, 15
          %s307 = smul.addr %s306, 4
          %s308 = smul.addr %s304, 64
          %s309 = sadd.s32 %s307, %s308
          %s310 = smul.addr %s309, 4
          %s311 = scalar_lea.vmem %s0, %s310
          %s312 = smul.u32 16, %s26
        $region48: #{weight_binding_net_forward.15} parent=43 // pred_fallthru
          _
        // Predicated region
        $region49: #{weight_binding_net_forward.15} parent=43 // pred_check
          %p313 = pneg %p78
        $region50: #{weight_binding_net_forward.15} parent=43 // pred_check_branch
          %315 = sbr.rel (%p313) target = $region52
        $region51: #{weight_binding_net_forward.15} parent=43 // pred_region
          %p316 = scmp.lt.s32.totalorder %s25, 1
          %s317 = scalar_select %p316, %s25, 1
          %s318 = smul.addr %s317, 8
          %s319 = scalar_lea.vmem %s1, %s318
        $region52: #{weight_binding_net_forward.15} parent=43 // pred_fallthru
          _
      $region44: #{weight_binding_net_forward.15} parent=5 // pred_fallthru
        _
      %p320 = scmp.le.s32.totalorder 1, %s18
      %p321 = scmp.lt.s32.totalorder %s18, 3
      %p322 = pnand %p320, %p321
      %p323 = pneg %p322
      // Predicated region
      $region53: #{weight_binding_net_forward.15} parent=5 // pred_check
        _
      $region54: #{weight_binding_net_forward.15} parent=5 // pred_check_branch
        %325 = sbr.rel (%p322) target = $region56
      $region55: #{weight_binding_net_forward.15} parent=5 // pred_region
        %s326 = ssub.s32 %s18, 1
        %s327 = smul.u32 16, %s28
        %p328 = scmp.lt.s32.totalorder %s27, 1
        %s329 = scalar_select %p328, %s27, 1
        %p330 = scmp.lt.s32.totalorder %s327, 15
        %s331 = scalar_select %p330, %s327, 15
        %s332 = smul.addr %s331, 4
        %s333 = smul.addr %s329, 64
        %s334 = sadd.s32 %s332, %s333
        %s335 = smul.addr %s334, 4
        %s336 = scalar_lea.vmem %s0, %s335
        %p337 = pneg %p58
        %p338 = pneg %p55
        %p339 = scmp.lt.s32.totalorder %s27, 1
        %s340 = scalar_select %p339, %s27, 1
        %s341 = smul.addr %s340, 8
        %s342 = scalar_lea.vmem %s1, %s341
        %p343 = pneg %p84
        %p344 = pneg %p81
        %p345 = pneg %p105
        %p346 = pneg %p102
        %p347 = pneg %p126
        %p348 = pneg %p123
        %p349 = pneg %p147
        %p350 = pneg %p144
        %p351 = pneg %p168
        %p352 = pneg %p165
        %p353 = pneg %p189
        %p354 = pneg %p186
        %p355 = pneg %p210
        %p356 = pneg %p207
        %p357 = pneg %p231
        %p358 = pneg %p228
        %p359 = pneg %p259
        %p360 = pneg %p256
        %s361 = sand.u32 %s246, 1
        %s362 = scalar_lea.sflag [#allocation3], %s361
        %s363 = sand.u32 %s246, 1
        %s364 = smul.addr %s363, 16
        %s365 = scalar_lea.vmem [#allocation2], %s364
        %s366 = smul.u32 16, %s28
        %p367 = scmp.lt.s32.totalorder %s27, 1
        %s368 = scalar_select %p367, %s27, 1
        %p369 = scmp.lt.s32.totalorder %s366, 15
        %s370 = scalar_select %p369, %s366, 15
        %s371 = smul.addr %s370, 4
        %s372 = smul.addr %s368, 64
        %s373 = sadd.s32 %s371, %s372
        %s374 = smul.addr %s373, 4
        %s375 = scalar_lea.vmem %s0, %s374
        %s376 = smul.u32 16, %s28
        %p377 = scmp.lt.s32.totalorder %s27, 1
        %s378 = scalar_select %p377, %s27, 1
        %s379 = smul.addr %s378, 8
        %s380 = scalar_lea.vmem %s1, %s379
        %v381 = vld [vmem:[%s375] sm:$0xff]
        %v382 = vld [vmem:[%s375 + $0x8] sm:$0xff]
        %v383 = vld [vmem:[%s375 + $0x10] sm:$0xff]
        %v384 = vld [vmem:[%s375 + $0x18] sm:$0xff]
        %v385 = vld [vmem:[%s375 + $0x20] sm:$0xff]
        %v386 = vld [vmem:[%s375 + $0x28] sm:$0xff]
        %v387 = vld [vmem:[%s375 + $0x30] sm:$0xff]
        %v388 = vld [vmem:[%s375 + $0x38] sm:$0xff]
        %v389 = vld [vmem:[%s375 + $0x40] sm:$0xff]
        %v390 = vld [vmem:[%s375 + $0x48] sm:$0xff]
        %v391 = vld [vmem:[%s375 + $0x50] sm:$0xff]
        %v392 = vld [vmem:[%s375 + $0x58] sm:$0xff]
        %v393 = vld [vmem:[%s375 + $0x60] sm:$0xff]
        %v394 = vld [vmem:[%s375 + $0x68] sm:$0xff]
        %v395 = vld [vmem:[%s375 + $0x70] sm:$0xff]
        %v396 = vld [vmem:[%s375 + $0x78] sm:$0xff]
        %v397 = vld [vmem:[%s375 + $0x80] sm:$0xff]
        %v398 = vld [vmem:[%s375 + $0x88] sm:$0xff]
        %v399 = vld [vmem:[%s375 + $0x90] sm:$0xff]
        %v400 = vld [vmem:[%s375 + $0x98] sm:$0xff]
        %v401 = vld [vmem:[%s375 + $0xa0] sm:$0xff]
        %v402 = vld [vmem:[%s375 + $0xa8] sm:$0xff]
        %v403 = vld [vmem:[%s375 + $0xb0] sm:$0xff]
        %v404 = vld [vmem:[%s375 + $0xb8] sm:$0xff]
        %v405 = vld [vmem:[%s375 + $0xc0] sm:$0xff]
        %v406 = vld [vmem:[%s375 + $0xc8] sm:$0xff]
        %v407 = vld [vmem:[%s375 + $0xd0] sm:$0xff]
        %v408 = vld [vmem:[%s375 + $0xd8] sm:$0xff]
        %v409 = vld [vmem:[%s375 + $0xe0] sm:$0xff]
        %v410 = vld [vmem:[%s375 + $0xe8] sm:$0xff]
        %v411 = vld [vmem:[%s375 + $0xf0] sm:$0xff]
        %v412 = vld [vmem:[%s375 + $0xf8] sm:$0xff]
        %v413 = vld [vmem:[%s2] sm:$0xff]
        %v414 = vld [vmem:[%s2 + $0x8] sm:$0xff]
        %v415 = vld [vmem:[%s2 + $0x10] sm:$0xff]
        %v416 = vld [vmem:[%s2 + $0x18] sm:$0xff]
        %v417 = vld [vmem:[%s2 + $0x20] sm:$0xff]
        %v418 = vld [vmem:[%s2 + $0x28] sm:$0xff]
        %v419 = vld [vmem:[%s2 + $0x30] sm:$0xff]
        %v420 = vld [vmem:[%s2 + $0x38] sm:$0xff]
        %v421 = vld [vmem:[%s2 + $0x40] sm:$0xff]
        %v422 = vld [vmem:[%s2 + $0x48] sm:$0xff]
        %v423 = vld [vmem:[%s2 + $0x50] sm:$0xff]
        %v424 = vld [vmem:[%s2 + $0x58] sm:$0xff]
        %v425 = vld [vmem:[%s2 + $0x60] sm:$0xff]
        %v426 = vld [vmem:[%s2 + $0x68] sm:$0xff]
        %v427 = vld [vmem:[%s2 + $0x70] sm:$0xff]
        %v428 = vld [vmem:[%s2 + $0x78] sm:$0xff]
        %v429 = vld [vmem:[%s2 + $0x80] sm:$0xff]
        %v430 = vld [vmem:[%s2 + $0x88] sm:$0xff]
        %v431 = vld [vmem:[%s2 + $0x90] sm:$0xff]
        %v432 = vld [vmem:[%s2 + $0x98] sm:$0xff]
        %v433 = vld [vmem:[%s2 + $0xa0] sm:$0xff]
        %v434 = vld [vmem:[%s2 + $0xa8] sm:$0xff]
        %v435 = vld [vmem:[%s2 + $0xb0] sm:$0xff]
        %v436 = vld [vmem:[%s2 + $0xb8] sm:$0xff]
        %v437 = vld [vmem:[%s2 + $0xc0] sm:$0xff]
        %v438 = vld [vmem:[%s2 + $0xc8] sm:$0xff]
        %v439 = vld [vmem:[%s2 + $0xd0] sm:$0xff]
        %v440 = vld [vmem:[%s2 + $0xd8] sm:$0xff]
        %v441 = vld [vmem:[%s2 + $0xe0] sm:$0xff]
        %v442 = vld [vmem:[%s2 + $0xe8] sm:$0xff]
        %v443 = vld [vmem:[%s2 + $0xf0] sm:$0xff]
        %v444 = vld [vmem:[%s2 + $0xf8] sm:$0xff]
        %v445 = vld [vmem:[%s2 + $0x100] sm:$0xff]
        %v446 = vld [vmem:[%s2 + $0x108] sm:$0xff]
        %v447 = vld [vmem:[%s2 + $0x110] sm:$0xff]
        %v448 = vld [vmem:[%s2 + $0x118] sm:$0xff]
        %v449 = vld [vmem:[%s2 + $0x120] sm:$0xff]
        %v450 = vld [vmem:[%s2 + $0x128] sm:$0xff]
        %v451 = vld [vmem:[%s2 + $0x130] sm:$0xff]
        %v452 = vld [vmem:[%s2 + $0x138] sm:$0xff]
        %v453 = vld [vmem:[%s2 + $0x140] sm:$0xff]
        %v454 = vld [vmem:[%s2 + $0x148] sm:$0xff]
        %v455 = vld [vmem:[%s2 + $0x150] sm:$0xff]
        %v456 = vld [vmem:[%s2 + $0x158] sm:$0xff]
        %v457 = vld [vmem:[%s2 + $0x160] sm:$0xff]
        %v458 = vld [vmem:[%s2 + $0x168] sm:$0xff]
        %v459 = vld [vmem:[%s2 + $0x170] sm:$0xff]
        %v460 = vld [vmem:[%s2 + $0x178] sm:$0xff]
        %v461 = vld [vmem:[%s2 + $0x180] sm:$0xff]
        %v462 = vld [vmem:[%s2 + $0x188] sm:$0xff]
        %v463 = vld [vmem:[%s2 + $0x190] sm:$0xff]
        %v464 = vld [vmem:[%s2 + $0x198] sm:$0xff]
        %v465 = vld [vmem:[%s2 + $0x1a0] sm:$0xff]
        %v466 = vld [vmem:[%s2 + $0x1a8] sm:$0xff]
        %v467 = vld [vmem:[%s2 + $0x1b0] sm:$0xff]
        %v468 = vld [vmem:[%s2 + $0x1b8] sm:$0xff]
        %v469 = vld [vmem:[%s2 + $0x1c0] sm:$0xff]
        %v470 = vld [vmem:[%s2 + $0x1c8] sm:$0xff]
        %v471 = vld [vmem:[%s2 + $0x1d0] sm:$0xff]
        %v472 = vld [vmem:[%s2 + $0x1d8] sm:$0xff]
        %v473 = vld [vmem:[%s2 + $0x1e0] sm:$0xff]
        %v474 = vld [vmem:[%s2 + $0x1e8] sm:$0xff]
        %v475 = vld [vmem:[%s2 + $0x1f0] sm:$0xff]
        %v476 = vld [vmem:[%s2 + $0x1f8] sm:$0xff]
        %v477 = vld [vmem:[%s2 + $0x200] sm:$0xff]
        %v478 = vld [vmem:[%s2 + $0x208] sm:$0xff]
        %v479 = vld [vmem:[%s2 + $0x210] sm:$0xff]
        %v480 = vld [vmem:[%s2 + $0x218] sm:$0xff]
        %v481 = vld [vmem:[%s2 + $0x220] sm:$0xff]
        %v482 = vld [vmem:[%s2 + $0x228] sm:$0xff]
        %v483 = vld [vmem:[%s2 + $0x230] sm:$0xff]
        %v484 = vld [vmem:[%s2 + $0x238] sm:$0xff]
        %v485 = vld [vmem:[%s2 + $0x240] sm:$0xff]
        %v486 = vld [vmem:[%s2 + $0x248] sm:$0xff]
        %v487 = vld [vmem:[%s2 + $0x250] sm:$0xff]
        %v488 = vld [vmem:[%s2 + $0x258] sm:$0xff]
        %v489 = vld [vmem:[%s2 + $0x260] sm:$0xff]
        %v490 = vld [vmem:[%s2 + $0x268] sm:$0xff]
        %v491 = vld [vmem:[%s2 + $0x270] sm:$0xff]
        %v492 = vld [vmem:[%s2 + $0x278] sm:$0xff]
        %v493 = vld [vmem:[%s2 + $0x280] sm:$0xff]
        %v494 = vld [vmem:[%s2 + $0x288] sm:$0xff]
        %v495 = vld [vmem:[%s2 + $0x290] sm:$0xff]
        %v496 = vld [vmem:[%s2 + $0x298] sm:$0xff]
        %v497 = vld [vmem:[%s2 + $0x2a0] sm:$0xff]
        %v498 = vld [vmem:[%s2 + $0x2a8] sm:$0xff]
        %v499 = vld [vmem:[%s2 + $0x2b0] sm:$0xff]
        %v500 = vld [vmem:[%s2 + $0x2b8] sm:$0xff]
        %v501 = vld [vmem:[%s2 + $0x2c0] sm:$0xff]
        %v502 = vld [vmem:[%s2 + $0x2c8] sm:$0xff]
        %v503 = vld [vmem:[%s2 + $0x2d0] sm:$0xff]
        %v504 = vld [vmem:[%s2 + $0x2d8] sm:$0xff]
        %v505 = vld [vmem:[%s2 + $0x2e0] sm:$0xff]
        %v506 = vld [vmem:[%s2 + $0x2e8] sm:$0xff]
        %v507 = vld [vmem:[%s2 + $0x2f0] sm:$0xff]
        %v508 = vld [vmem:[%s2 + $0x2f8] sm:$0xff]
        %v509 = vld [vmem:[%s2 + $0x300] sm:$0xff]
        %v510 = vld [vmem:[%s2 + $0x308] sm:$0xff]
        %v511 = vld [vmem:[%s2 + $0x310] sm:$0xff]
        %v512 = vld [vmem:[%s2 + $0x318] sm:$0xff]
        %v513 = vld [vmem:[%s2 + $0x320] sm:$0xff]
        %v514 = vld [vmem:[%s2 + $0x328] sm:$0xff]
        %v515 = vld [vmem:[%s2 + $0x330] sm:$0xff]
        %v516 = vld [vmem:[%s2 + $0x338] sm:$0xff]
        %v517 = vld [vmem:[%s2 + $0x340] sm:$0xff]
        %v518 = vld [vmem:[%s2 + $0x348] sm:$0xff]
        %v519 = vld [vmem:[%s2 + $0x350] sm:$0xff]
        %v520 = vld [vmem:[%s2 + $0x358] sm:$0xff]
        %v521 = vld [vmem:[%s2 + $0x360] sm:$0xff]
        %v522 = vld [vmem:[%s2 + $0x368] sm:$0xff]
        %v523 = vld [vmem:[%s2 + $0x370] sm:$0xff]
        %v524 = vld [vmem:[%s2 + $0x378] sm:$0xff]
        %v525 = vld [vmem:[%s2 + $0x380] sm:$0xff]
        %v526 = vld [vmem:[%s2 + $0x388] sm:$0xff]
        %v527 = vld [vmem:[%s2 + $0x390] sm:$0xff]
        %v528 = vld [vmem:[%s2 + $0x398] sm:$0xff]
        %v529 = vld [vmem:[%s2 + $0x3a0] sm:$0xff]
        %v530 = vld [vmem:[%s2 + $0x3a8] sm:$0xff]
        %v531 = vld [vmem:[%s2 + $0x3b0] sm:$0xff]
        %v532 = vld [vmem:[%s2 + $0x3b8] sm:$0xff]
        %v533 = vld [vmem:[%s2 + $0x3c0] sm:$0xff]
        %v534 = vld [vmem:[%s2 + $0x3c8] sm:$0xff]
        %v535 = vld [vmem:[%s2 + $0x3d0] sm:$0xff]
        %v536 = vld [vmem:[%s2 + $0x3d8] sm:$0xff]
        %v537 = vld [vmem:[%s2 + $0x3e0] sm:$0xff]
        %v538 = vld [vmem:[%s2 + $0x3e8] sm:$0xff]
        %v539 = vld [vmem:[%s2 + $0x3f0] sm:$0xff]
        %v540 = vld [vmem:[%s2 + $0x3f8] sm:$0xff]
        %v541 = vld [vmem:[%s2 + $0x400] sm:$0xff]
        %v542 = vld [vmem:[%s2 + $0x408] sm:$0xff]
        %v543 = vld [vmem:[%s2 + $0x410] sm:$0xff]
        %v544 = vld [vmem:[%s2 + $0x418] sm:$0xff]
        %v545 = vld [vmem:[%s2 + $0x420] sm:$0xff]
        %v546 = vld [vmem:[%s2 + $0x428] sm:$0xff]
        %v547 = vld [vmem:[%s2 + $0x430] sm:$0xff]
        %v548 = vld [vmem:[%s2 + $0x438] sm:$0xff]
        %v549 = vld [vmem:[%s2 + $0x440] sm:$0xff]
        %v550 = vld [vmem:[%s2 + $0x448] sm:$0xff]
        %v551 = vld [vmem:[%s2 + $0x450] sm:$0xff]
        %v552 = vld [vmem:[%s2 + $0x458] sm:$0xff]
        %v553 = vld [vmem:[%s2 + $0x460] sm:$0xff]
        %v554 = vld [vmem:[%s2 + $0x468] sm:$0xff]
        %v555 = vld [vmem:[%s2 + $0x470] sm:$0xff]
        %v556 = vld [vmem:[%s2 + $0x478] sm:$0xff]
        %v557 = vld [vmem:[%s2 + $0x480] sm:$0xff]
        %v558 = vld [vmem:[%s2 + $0x488] sm:$0xff]
        %v559 = vld [vmem:[%s2 + $0x490] sm:$0xff]
        %v560 = vld [vmem:[%s2 + $0x498] sm:$0xff]
        %v561 = vld [vmem:[%s2 + $0x4a0] sm:$0xff]
        %v562 = vld [vmem:[%s2 + $0x4a8] sm:$0xff]
        %v563 = vld [vmem:[%s2 + $0x4b0] sm:$0xff]
        %v564 = vld [vmem:[%s2 + $0x4b8] sm:$0xff]
        %v565 = vld [vmem:[%s2 + $0x4c0] sm:$0xff]
        %v566 = vld [vmem:[%s2 + $0x4c8] sm:$0xff]
        %v567 = vld [vmem:[%s2 + $0x4d0] sm:$0xff]
        %v568 = vld [vmem:[%s2 + $0x4d8] sm:$0xff]
        %v569 = vld [vmem:[%s2 + $0x4e0] sm:$0xff]
        %v570 = vld [vmem:[%s2 + $0x4e8] sm:$0xff]
        %v571 = vld [vmem:[%s2 + $0x4f0] sm:$0xff]
        %v572 = vld [vmem:[%s2 + $0x4f8] sm:$0xff]
        %v573 = vld [vmem:[%s2 + $0x500] sm:$0xff]
        %v574 = vld [vmem:[%s2 + $0x508] sm:$0xff]
        %v575 = vld [vmem:[%s2 + $0x510] sm:$0xff]
        %v576 = vld [vmem:[%s2 + $0x518] sm:$0xff]
        %v577 = vld [vmem:[%s2 + $0x520] sm:$0xff]
        %v578 = vld [vmem:[%s2 + $0x528] sm:$0xff]
        %v579 = vld [vmem:[%s2 + $0x530] sm:$0xff]
        %v580 = vld [vmem:[%s2 + $0x538] sm:$0xff]
        %v581 = vld [vmem:[%s2 + $0x540] sm:$0xff]
        %v582 = vld [vmem:[%s2 + $0x548] sm:$0xff]
        %v583 = vld [vmem:[%s2 + $0x550] sm:$0xff]
        %v584 = vld [vmem:[%s2 + $0x558] sm:$0xff]
        %v585 = vld [vmem:[%s2 + $0x560] sm:$0xff]
        %v586 = vld [vmem:[%s2 + $0x568] sm:$0xff]
        %v587 = vld [vmem:[%s2 + $0x570] sm:$0xff]
        %v588 = vld [vmem:[%s2 + $0x578] sm:$0xff]
        %v589 = vld [vmem:[%s2 + $0x580] sm:$0xff]
        %v590 = vld [vmem:[%s2 + $0x588] sm:$0xff]
        %v591 = vld [vmem:[%s2 + $0x590] sm:$0xff]
        %v592 = vld [vmem:[%s2 + $0x598] sm:$0xff]
        %v593 = vld [vmem:[%s2 + $0x5a0] sm:$0xff]
        %v594 = vld [vmem:[%s2 + $0x5a8] sm:$0xff]
        %v595 = vld [vmem:[%s2 + $0x5b0] sm:$0xff]
        %v596 = vld [vmem:[%s2 + $0x5b8] sm:$0xff]
        %v597 = vld [vmem:[%s2 + $0x5c0] sm:$0xff]
        %v598 = vld [vmem:[%s2 + $0x5c8] sm:$0xff]
        %v599 = vld [vmem:[%s2 + $0x5d0] sm:$0xff]
        %v600 = vld [vmem:[%s2 + $0x5d8] sm:$0xff]
        %v601 = vld [vmem:[%s2 + $0x5e0] sm:$0xff]
        %v602 = vld [vmem:[%s2 + $0x5e8] sm:$0xff]
        %v603 = vld [vmem:[%s2 + $0x5f0] sm:$0xff]
        %v604 = vld [vmem:[%s2 + $0x5f8] sm:$0xff]
        %v605 = vld [vmem:[%s2 + $0x600] sm:$0xff]
        %v606 = vld [vmem:[%s2 + $0x608] sm:$0xff]
        %v607 = vld [vmem:[%s2 + $0x610] sm:$0xff]
        %v608 = vld [vmem:[%s2 + $0x618] sm:$0xff]
        %v609 = vld [vmem:[%s2 + $0x620] sm:$0xff]
        %v610 = vld [vmem:[%s2 + $0x628] sm:$0xff]
        %v611 = vld [vmem:[%s2 + $0x630] sm:$0xff]
        %v612 = vld [vmem:[%s2 + $0x638] sm:$0xff]
        %v613 = vld [vmem:[%s2 + $0x640] sm:$0xff]
        %v614 = vld [vmem:[%s2 + $0x648] sm:$0xff]
        %v615 = vld [vmem:[%s2 + $0x650] sm:$0xff]
        %v616 = vld [vmem:[%s2 + $0x658] sm:$0xff]
        %v617 = vld [vmem:[%s2 + $0x660] sm:$0xff]
        %v618 = vld [vmem:[%s2 + $0x668] sm:$0xff]
        %v619 = vld [vmem:[%s2 + $0x670] sm:$0xff]
        %v620 = vld [vmem:[%s2 + $0x678] sm:$0xff]
        %v621 = vld [vmem:[%s2 + $0x680] sm:$0xff]
        %v622 = vld [vmem:[%s2 + $0x688] sm:$0xff]
        %v623 = vld [vmem:[%s2 + $0x690] sm:$0xff]
        %v624 = vld [vmem:[%s2 + $0x698] sm:$0xff]
        %v625 = vld [vmem:[%s2 + $0x6a0] sm:$0xff]
        %v626 = vld [vmem:[%s2 + $0x6a8] sm:$0xff]
        %v627 = vld [vmem:[%s2 + $0x6b0] sm:$0xff]
        %v628 = vld [vmem:[%s2 + $0x6b8] sm:$0xff]
        %v629 = vld [vmem:[%s2 + $0x6c0] sm:$0xff]
        %v630 = vld [vmem:[%s2 + $0x6c8] sm:$0xff]
        %v631 = vld [vmem:[%s2 + $0x6d0] sm:$0xff]
        %v632 = vld [vmem:[%s2 + $0x6d8] sm:$0xff]
        %v633 = vld [vmem:[%s2 + $0x6e0] sm:$0xff]
        %v634 = vld [vmem:[%s2 + $0x6e8] sm:$0xff]
        %v635 = vld [vmem:[%s2 + $0x6f0] sm:$0xff]
        %v636 = vld [vmem:[%s2 + $0x6f8] sm:$0xff]
        %v637 = vld [vmem:[%s2 + $0x700] sm:$0xff]
        %v638 = vld [vmem:[%s2 + $0x708] sm:$0xff]
        %v639 = vld [vmem:[%s2 + $0x710] sm:$0xff]
        %v640 = vld [vmem:[%s2 + $0x718] sm:$0xff]
        %v641 = vld [vmem:[%s2 + $0x720] sm:$0xff]
        %v642 = vld [vmem:[%s2 + $0x728] sm:$0xff]
        %v643 = vld [vmem:[%s2 + $0x730] sm:$0xff]
        %v644 = vld [vmem:[%s2 + $0x738] sm:$0xff]
        %v645 = vld [vmem:[%s2 + $0x740] sm:$0xff]
        %v646 = vld [vmem:[%s2 + $0x748] sm:$0xff]
        %v647 = vld [vmem:[%s2 + $0x750] sm:$0xff]
        %v648 = vld [vmem:[%s2 + $0x758] sm:$0xff]
        %v649 = vld [vmem:[%s2 + $0x760] sm:$0xff]
        %v650 = vld [vmem:[%s2 + $0x768] sm:$0xff]
        %v651 = vld [vmem:[%s2 + $0x770] sm:$0xff]
        %v652 = vld [vmem:[%s2 + $0x778] sm:$0xff]
        %v653 = vld [vmem:[%s2 + $0x780] sm:$0xff]
        %v654 = vld [vmem:[%s2 + $0x788] sm:$0xff]
        %v655 = vld [vmem:[%s2 + $0x790] sm:$0xff]
        %v656 = vld [vmem:[%s2 + $0x798] sm:$0xff]
        %v657 = vld [vmem:[%s2 + $0x7a0] sm:$0xff]
        %v658 = vld [vmem:[%s2 + $0x7a8] sm:$0xff]
        %v659 = vld [vmem:[%s2 + $0x7b0] sm:$0xff]
        %v660 = vld [vmem:[%s2 + $0x7b8] sm:$0xff]
        %v661 = vld [vmem:[%s2 + $0x7c0] sm:$0xff]
        %v662 = vld [vmem:[%s2 + $0x7c8] sm:$0xff]
        %v663 = vld [vmem:[%s2 + $0x7d0] sm:$0xff]
        %v664 = vld [vmem:[%s2 + $0x7d8] sm:$0xff]
        %v665 = vld [vmem:[%s2 + $0x7e0] sm:$0xff]
        %v666 = vld [vmem:[%s2 + $0x7e8] sm:$0xff]
        %v667 = vld [vmem:[%s2 + $0x7f0] sm:$0xff]
        %v668 = vld [vmem:[%s2 + $0x7f8] sm:$0xff]
        %v669 = vld [vmem:[%s380] sm:$0xff]
        %v671 = vperm.slane %v669, 0
        %v672 = vperm.slane %v669, 1
        %v673 = vperm.slane %v669, 2
        %v674 = vperm.slane %v669, 3
        %v675 = vperm.slane %v669, 4
        %v676 = vperm.slane %v669, 5
        %v677 = vperm.slane %v669, 6
        %v678 = vperm.slane %v669, 7
        %v719 = vunpack.c.l.b16 %v381
        %v720 = vunpack.c.h.b16 %v381
        %v721 = vunpack.c.l.b16 %v382
        %v722 = vunpack.c.h.b16 %v382
        %v723 = vunpack.c.l.b16 %v383
        %v724 = vunpack.c.h.b16 %v383
        %v725 = vunpack.c.l.b16 %v384
        %v726 = vunpack.c.h.b16 %v384
        %v727 = vunpack.c.l.b16 %v385
        %v728 = vunpack.c.h.b16 %v385
        %v729 = vunpack.c.l.b16 %v386
        %v730 = vunpack.c.h.b16 %v386
        %v731 = vunpack.c.l.b16 %v387
        %v732 = vunpack.c.h.b16 %v387
        %v733 = vunpack.c.l.b16 %v388
        %v734 = vunpack.c.h.b16 %v388
        %v735 = vunpack.c.l.b16 %v389
        %v736 = vunpack.c.h.b16 %v389
        %v737 = vunpack.c.l.b16 %v390
        %v738 = vunpack.c.h.b16 %v390
        %v739 = vunpack.c.l.b16 %v391
        %v740 = vunpack.c.h.b16 %v391
        %v741 = vunpack.c.l.b16 %v392
        %v742 = vunpack.c.h.b16 %v392
        %v743 = vunpack.c.l.b16 %v393
        %v744 = vunpack.c.h.b16 %v393
        %v745 = vunpack.c.l.b16 %v394
        %v746 = vunpack.c.h.b16 %v394
        %v747 = vunpack.c.l.b16 %v395
        %v748 = vunpack.c.h.b16 %v395
        %v749 = vunpack.c.l.b16 %v396
        %v750 = vunpack.c.h.b16 %v396
        %v751 = vunpack.c.l.b16 %v397
        %v752 = vunpack.c.h.b16 %v397
        %v753 = vunpack.c.l.b16 %v398
        %v754 = vunpack.c.h.b16 %v398
        %v755 = vunpack.c.l.b16 %v399
        %v756 = vunpack.c.h.b16 %v399
        %v757 = vunpack.c.l.b16 %v400
        %v758 = vunpack.c.h.b16 %v400
        %v759 = vunpack.c.l.b16 %v401
        %v760 = vunpack.c.h.b16 %v401
        %v761 = vunpack.c.l.b16 %v402
        %v762 = vunpack.c.h.b16 %v402
        %v763 = vunpack.c.l.b16 %v403
        %v764 = vunpack.c.h.b16 %v403
        %v765 = vunpack.c.l.b16 %v404
        %v766 = vunpack.c.h.b16 %v404
        %v767 = vunpack.c.l.b16 %v405
        %v768 = vunpack.c.h.b16 %v405
        %v769 = vunpack.c.l.b16 %v406
        %v770 = vunpack.c.h.b16 %v406
        %v771 = vunpack.c.l.b16 %v407
        %v772 = vunpack.c.h.b16 %v407
        %v773 = vunpack.c.l.b16 %v408
        %v774 = vunpack.c.h.b16 %v408
        %v775 = vunpack.c.l.b16 %v409
        %v776 = vunpack.c.h.b16 %v409
        %v777 = vunpack.c.l.b16 %v410
        %v778 = vunpack.c.h.b16 %v410
        %v779 = vunpack.c.l.b16 %v411
        %v780 = vunpack.c.h.b16 %v411
        %v781 = vunpack.c.l.b16 %v412
        %v782 = vunpack.c.h.b16 %v412
        %v783 = vpack.c.b16 %v723, %v719
        %v784 = vpack.c.b16 %v724, %v720
        %v785 = vpack.c.b16 %v725, %v721
        %v786 = vpack.c.b16 %v726, %v722
        %v787 = vpack.c.b16 %v731, %v727
        %v788 = vpack.c.b16 %v732, %v728
        %v789 = vpack.c.b16 %v733, %v729
        %v790 = vpack.c.b16 %v734, %v730
        %v791 = vpack.c.b16 %v739, %v735
        %v792 = vpack.c.b16 %v740, %v736
        %v793 = vpack.c.b16 %v741, %v737
        %v794 = vpack.c.b16 %v742, %v738
        %v795 = vpack.c.b16 %v747, %v743
        %v796 = vpack.c.b16 %v748, %v744
        %v797 = vpack.c.b16 %v749, %v745
        %v798 = vpack.c.b16 %v750, %v746
        %v799 = vpack.c.b16 %v755, %v751
        %v800 = vpack.c.b16 %v756, %v752
        %v801 = vpack.c.b16 %v757, %v753
        %v802 = vpack.c.b16 %v758, %v754
        %v803 = vpack.c.b16 %v763, %v759
        %v804 = vpack.c.b16 %v764, %v760
        %v805 = vpack.c.b16 %v765, %v761
        %v806 = vpack.c.b16 %v766, %v762
        %v807 = vpack.c.b16 %v771, %v767
        %v808 = vpack.c.b16 %v772, %v768
        %v809 = vpack.c.b16 %v773, %v769
        %v810 = vpack.c.b16 %v774, %v770
        %v811 = vpack.c.b16 %v779, %v775
        %v812 = vpack.c.b16 %v780, %v776
        %v813 = vpack.c.b16 %v781, %v777
        %v814 = vpack.c.b16 %v782, %v778
        %v1103 = vunpack.c.l.b16 %v413
        %v1104 = vunpack.c.h.b16 %v413
        %v1105 = vunpack.c.l.b16 %v414
        %v1106 = vunpack.c.h.b16 %v414
        %v1107 = vunpack.c.l.b16 %v415
        %v1108 = vunpack.c.h.b16 %v415
        %v1109 = vunpack.c.l.b16 %v416
        %v1110 = vunpack.c.h.b16 %v416
        %v1111 = vunpack.c.l.b16 %v417
        %v1112 = vunpack.c.h.b16 %v417
        %v1113 = vunpack.c.l.b16 %v418
        %v1114 = vunpack.c.h.b16 %v418
        %v1115 = vunpack.c.l.b16 %v419
        %v1116 = vunpack.c.h.b16 %v419
        %v1117 = vunpack.c.l.b16 %v420
        %v1118 = vunpack.c.h.b16 %v420
        %v1119 = vunpack.c.l.b16 %v421
        %v1120 = vunpack.c.h.b16 %v421
        %v1121 = vunpack.c.l.b16 %v422
        %v1122 = vunpack.c.h.b16 %v422
        %v1123 = vunpack.c.l.b16 %v423
        %v1124 = vunpack.c.h.b16 %v423
        %v1125 = vunpack.c.l.b16 %v424
        %v1126 = vunpack.c.h.b16 %v424
        %v1127 = vunpack.c.l.b16 %v425
        %v1128 = vunpack.c.h.b16 %v425
        %v1129 = vunpack.c.l.b16 %v426
        %v1130 = vunpack.c.h.b16 %v426
        %v1131 = vunpack.c.l.b16 %v427
        %v1132 = vunpack.c.h.b16 %v427
        %v1133 = vunpack.c.l.b16 %v428
        %v1134 = vunpack.c.h.b16 %v428
        %v1135 = vunpack.c.l.b16 %v429
        %v1136 = vunpack.c.h.b16 %v429
        %v1137 = vunpack.c.l.b16 %v430
        %v1138 = vunpack.c.h.b16 %v430
        %v1139 = vunpack.c.l.b16 %v431
        %v1140 = vunpack.c.h.b16 %v431
        %v1141 = vunpack.c.l.b16 %v432
        %v1142 = vunpack.c.h.b16 %v432
        %v1143 = vunpack.c.l.b16 %v433
        %v1144 = vunpack.c.h.b16 %v433
        %v1145 = vunpack.c.l.b16 %v434
        %v1146 = vunpack.c.h.b16 %v434
        %v1147 = vunpack.c.l.b16 %v435
        %v1148 = vunpack.c.h.b16 %v435
        %v1149 = vunpack.c.l.b16 %v436
        %v1150 = vunpack.c.h.b16 %v436
        %v1151 = vunpack.c.l.b16 %v437
        %v1152 = vunpack.c.h.b16 %v437
        %v1153 = vunpack.c.l.b16 %v438
        %v1154 = vunpack.c.h.b16 %v438
        %v1155 = vunpack.c.l.b16 %v439
        %v1156 = vunpack.c.h.b16 %v439
        %v1157 = vunpack.c.l.b16 %v440
        %v1158 = vunpack.c.h.b16 %v440
        %v1159 = vunpack.c.l.b16 %v441
        %v1160 = vunpack.c.h.b16 %v441
        %v1161 = vunpack.c.l.b16 %v442
        %v1162 = vunpack.c.h.b16 %v442
        %v1163 = vunpack.c.l.b16 %v443
        %v1164 = vunpack.c.h.b16 %v443
        %v1165 = vunpack.c.l.b16 %v444
        %v1166 = vunpack.c.h.b16 %v444
        %v1167 = vunpack.c.l.b16 %v445
        %v1168 = vunpack.c.h.b16 %v445
        %v1169 = vunpack.c.l.b16 %v446
        %v1170 = vunpack.c.h.b16 %v446
        %v1171 = vunpack.c.l.b16 %v447
        %v1172 = vunpack.c.h.b16 %v447
        %v1173 = vunpack.c.l.b16 %v448
        %v1174 = vunpack.c.h.b16 %v448
        %v1175 = vunpack.c.l.b16 %v449
        %v1176 = vunpack.c.h.b16 %v449
        %v1177 = vunpack.c.l.b16 %v450
        %v1178 = vunpack.c.h.b16 %v450
        %v1179 = vunpack.c.l.b16 %v451
        %v1180 = vunpack.c.h.b16 %v451
        %v1181 = vunpack.c.l.b16 %v452
        %v1182 = vunpack.c.h.b16 %v452
        %v1183 = vunpack.c.l.b16 %v453
        %v1184 = vunpack.c.h.b16 %v453
        %v1185 = vunpack.c.l.b16 %v454
        %v1186 = vunpack.c.h.b16 %v454
        %v1187 = vunpack.c.l.b16 %v455
        %v1188 = vunpack.c.h.b16 %v455
        %v1189 = vunpack.c.l.b16 %v456
        %v1190 = vunpack.c.h.b16 %v456
        %v1191 = vunpack.c.l.b16 %v457
        %v1192 = vunpack.c.h.b16 %v457
        %v1193 = vunpack.c.l.b16 %v458
        %v1194 = vunpack.c.h.b16 %v458
        %v1195 = vunpack.c.l.b16 %v459
        %v1196 = vunpack.c.h.b16 %v459
        %v1197 = vunpack.c.l.b16 %v460
        %v1198 = vunpack.c.h.b16 %v460
        %v1199 = vunpack.c.l.b16 %v461
        %v1200 = vunpack.c.h.b16 %v461
        %v1201 = vunpack.c.l.b16 %v462
        %v1202 = vunpack.c.h.b16 %v462
        %v1203 = vunpack.c.l.b16 %v463
        %v1204 = vunpack.c.h.b16 %v463
        %v1205 = vunpack.c.l.b16 %v464
        %v1206 = vunpack.c.h.b16 %v464
        %v1207 = vunpack.c.l.b16 %v465
        %v1208 = vunpack.c.h.b16 %v465
        %v1209 = vunpack.c.l.b16 %v466
        %v1210 = vunpack.c.h.b16 %v466
        %v1211 = vunpack.c.l.b16 %v467
        %v1212 = vunpack.c.h.b16 %v467
        %v1213 = vunpack.c.l.b16 %v468
        %v1214 = vunpack.c.h.b16 %v468
        %v1215 = vunpack.c.l.b16 %v469
        %v1216 = vunpack.c.h.b16 %v469
        %v1217 = vunpack.c.l.b16 %v470
        %v1218 = vunpack.c.h.b16 %v470
        %v1219 = vunpack.c.l.b16 %v471
        %v1220 = vunpack.c.h.b16 %v471
        %v1221 = vunpack.c.l.b16 %v472
        %v1222 = vunpack.c.h.b16 %v472
        %v1223 = vunpack.c.l.b16 %v473
        %v1224 = vunpack.c.h.b16 %v473
        %v1225 = vunpack.c.l.b16 %v474
        %v1226 = vunpack.c.h.b16 %v474
        %v1227 = vunpack.c.l.b16 %v475
        %v1228 = vunpack.c.h.b16 %v475
        %v1229 = vunpack.c.l.b16 %v476
        %v1230 = vunpack.c.h.b16 %v476
        %v1231 = vunpack.c.l.b16 %v477
        %v1232 = vunpack.c.h.b16 %v477
        %v1233 = vunpack.c.l.b16 %v478
        %v1234 = vunpack.c.h.b16 %v478
        %v1235 = vunpack.c.l.b16 %v479
        %v1236 = vunpack.c.h.b16 %v479
        %v1237 = vunpack.c.l.b16 %v480
        %v1238 = vunpack.c.h.b16 %v480
        %v1239 = vunpack.c.l.b16 %v481
        %v1240 = vunpack.c.h.b16 %v481
        %v1241 = vunpack.c.l.b16 %v482
        %v1242 = vunpack.c.h.b16 %v482
        %v1243 = vunpack.c.l.b16 %v483
        %v1244 = vunpack.c.h.b16 %v483
        %v1245 = vunpack.c.l.b16 %v484
        %v1246 = vunpack.c.h.b16 %v484
        %v1247 = vunpack.c.l.b16 %v485
        %v1248 = vunpack.c.h.b16 %v485
        %v1249 = vunpack.c.l.b16 %v486
        %v1250 = vunpack.c.h.b16 %v486
        %v1251 = vunpack.c.l.b16 %v487
        %v1252 = vunpack.c.h.b16 %v487
        %v1253 = vunpack.c.l.b16 %v488
        %v1254 = vunpack.c.h.b16 %v488
        %v1255 = vunpack.c.l.b16 %v489
        %v1256 = vunpack.c.h.b16 %v489
        %v1257 = vunpack.c.l.b16 %v490
        %v1258 = vunpack.c.h.b16 %v490
        %v1259 = vunpack.c.l.b16 %v491
        %v1260 = vunpack.c.h.b16 %v491
        %v1261 = vunpack.c.l.b16 %v492
        %v1262 = vunpack.c.h.b16 %v492
        %v1263 = vunpack.c.l.b16 %v493
        %v1264 = vunpack.c.h.b16 %v493
        %v1265 = vunpack.c.l.b16 %v494
        %v1266 = vunpack.c.h.b16 %v494
        %v1267 = vunpack.c.l.b16 %v495
        %v1268 = vunpack.c.h.b16 %v495
        %v1269 = vunpack.c.l.b16 %v496
        %v1270 = vunpack.c.h.b16 %v496
        %v1271 = vunpack.c.l.b16 %v497
        %v1272 = vunpack.c.h.b16 %v497
        %v1273 = vunpack.c.l.b16 %v498
        %v1274 = vunpack.c.h.b16 %v498
        %v1275 = vunpack.c.l.b16 %v499
        %v1276 = vunpack.c.h.b16 %v499
        %v1277 = vunpack.c.l.b16 %v500
        %v1278 = vunpack.c.h.b16 %v500
        %v1279 = vunpack.c.l.b16 %v501
        %v1280 = vunpack.c.h.b16 %v501
        %v1281 = vunpack.c.l.b16 %v502
        %v1282 = vunpack.c.h.b16 %v502
        %v1283 = vunpack.c.l.b16 %v503
        %v1284 = vunpack.c.h.b16 %v503
        %v1285 = vunpack.c.l.b16 %v504
        %v1286 = vunpack.c.h.b16 %v504
        %v1287 = vunpack.c.l.b16 %v505
        %v1288 = vunpack.c.h.b16 %v505
        %v1289 = vunpack.c.l.b16 %v506
        %v1290 = vunpack.c.h.b16 %v506
        %v1291 = vunpack.c.l.b16 %v507
        %v1292 = vunpack.c.h.b16 %v507
        %v1293 = vunpack.c.l.b16 %v508
        %v1294 = vunpack.c.h.b16 %v508
        %v1295 = vunpack.c.l.b16 %v509
        %v1296 = vunpack.c.h.b16 %v509
        %v1297 = vunpack.c.l.b16 %v510
        %v1298 = vunpack.c.h.b16 %v510
        %v1299 = vunpack.c.l.b16 %v511
        %v1300 = vunpack.c.h.b16 %v511
        %v1301 = vunpack.c.l.b16 %v512
        %v1302 = vunpack.c.h.b16 %v512
        %v1303 = vunpack.c.l.b16 %v513
        %v1304 = vunpack.c.h.b16 %v513
        %v1305 = vunpack.c.l.b16 %v514
        %v1306 = vunpack.c.h.b16 %v514
        %v1307 = vunpack.c.l.b16 %v515
        %v1308 = vunpack.c.h.b16 %v515
        %v1309 = vunpack.c.l.b16 %v516
        %v1310 = vunpack.c.h.b16 %v516
        %v1311 = vunpack.c.l.b16 %v517
        %v1312 = vunpack.c.h.b16 %v517
        %v1313 = vunpack.c.l.b16 %v518
        %v1314 = vunpack.c.h.b16 %v518
        %v1315 = vunpack.c.l.b16 %v519
        %v1316 = vunpack.c.h.b16 %v519
        %v1317 = vunpack.c.l.b16 %v520
        %v1318 = vunpack.c.h.b16 %v520
        %v1319 = vunpack.c.l.b16 %v521
        %v1320 = vunpack.c.h.b16 %v521
        %v1321 = vunpack.c.l.b16 %v522
        %v1322 = vunpack.c.h.b16 %v522
        %v1323 = vunpack.c.l.b16 %v523
        %v1324 = vunpack.c.h.b16 %v523
        %v1325 = vunpack.c.l.b16 %v524
        %v1326 = vunpack.c.h.b16 %v524
        %v1327 = vunpack.c.l.b16 %v525
        %v1328 = vunpack.c.h.b16 %v525
        %v1329 = vunpack.c.l.b16 %v526
        %v1330 = vunpack.c.h.b16 %v526
        %v1331 = vunpack.c.l.b16 %v527
        %v1332 = vunpack.c.h.b16 %v527
        %v1333 = vunpack.c.l.b16 %v528
        %v1334 = vunpack.c.h.b16 %v528
        %v1335 = vunpack.c.l.b16 %v529
        %v1336 = vunpack.c.h.b16 %v529
        %v1337 = vunpack.c.l.b16 %v530
        %v1338 = vunpack.c.h.b16 %v530
        %v1339 = vunpack.c.l.b16 %v531
        %v1340 = vunpack.c.h.b16 %v531
        %v1341 = vunpack.c.l.b16 %v532
        %v1342 = vunpack.c.h.b16 %v532
        %v1343 = vunpack.c.l.b16 %v533
        %v1344 = vunpack.c.h.b16 %v533
        %v1345 = vunpack.c.l.b16 %v534
        %v1346 = vunpack.c.h.b16 %v534
        %v1347 = vunpack.c.l.b16 %v535
        %v1348 = vunpack.c.h.b16 %v535
        %v1349 = vunpack.c.l.b16 %v536
        %v1350 = vunpack.c.h.b16 %v536
        %v1351 = vunpack.c.l.b16 %v537
        %v1352 = vunpack.c.h.b16 %v537
        %v1353 = vunpack.c.l.b16 %v538
        %v1354 = vunpack.c.h.b16 %v538
        %v1355 = vunpack.c.l.b16 %v539
        %v1356 = vunpack.c.h.b16 %v539
        %v1357 = vunpack.c.l.b16 %v540
        %v1358 = vunpack.c.h.b16 %v540
        %v1359 = vunpack.c.l.b16 %v541
        %v1360 = vunpack.c.h.b16 %v541
        %v1361 = vunpack.c.l.b16 %v542
        %v1362 = vunpack.c.h.b16 %v542
        %v1363 = vunpack.c.l.b16 %v543
        %v1364 = vunpack.c.h.b16 %v543
        %v1365 = vunpack.c.l.b16 %v544
        %v1366 = vunpack.c.h.b16 %v544
        %v1367 = vunpack.c.l.b16 %v545
        %v1368 = vunpack.c.h.b16 %v545
        %v1369 = vunpack.c.l.b16 %v546
        %v1370 = vunpack.c.h.b16 %v546
        %v1371 = vunpack.c.l.b16 %v547
        %v1372 = vunpack.c.h.b16 %v547
        %v1373 = vunpack.c.l.b16 %v548
        %v1374 = vunpack.c.h.b16 %v548
        %v1375 = vunpack.c.l.b16 %v549
        %v1376 = vunpack.c.h.b16 %v549
        %v1377 = vunpack.c.l.b16 %v550
        %v1378 = vunpack.c.h.b16 %v550
        %v1379 = vunpack.c.l.b16 %v551
        %v1380 = vunpack.c.h.b16 %v551
        %v1381 = vunpack.c.l.b16 %v552
        %v1382 = vunpack.c.h.b16 %v552
        %v1383 = vunpack.c.l.b16 %v553
        %v1384 = vunpack.c.h.b16 %v553
        %v1385 = vunpack.c.l.b16 %v554
        %v1386 = vunpack.c.h.b16 %v554
        %v1387 = vunpack.c.l.b16 %v555
        %v1388 = vunpack.c.h.b16 %v555
        %v1389 = vunpack.c.l.b16 %v556
        %v1390 = vunpack.c.h.b16 %v556
        %v1391 = vunpack.c.l.b16 %v557
        %v1392 = vunpack.c.h.b16 %v557
        %v1393 = vunpack.c.l.b16 %v558
        %v1394 = vunpack.c.h.b16 %v558
        %v1395 = vunpack.c.l.b16 %v559
        %v1396 = vunpack.c.h.b16 %v559
        %v1397 = vunpack.c.l.b16 %v560
        %v1398 = vunpack.c.h.b16 %v560
        %v1399 = vunpack.c.l.b16 %v561
        %v1400 = vunpack.c.h.b16 %v561
        %v1401 = vunpack.c.l.b16 %v562
        %v1402 = vunpack.c.h.b16 %v562
        %v1403 = vunpack.c.l.b16 %v563
        %v1404 = vunpack.c.h.b16 %v563
        %v1405 = vunpack.c.l.b16 %v564
        %v1406 = vunpack.c.h.b16 %v564
        %v1407 = vunpack.c.l.b16 %v565
        %v1408 = vunpack.c.h.b16 %v565
        %v1409 = vunpack.c.l.b16 %v566
        %v1410 = vunpack.c.h.b16 %v566
        %v1411 = vunpack.c.l.b16 %v567
        %v1412 = vunpack.c.h.b16 %v567
        %v1413 = vunpack.c.l.b16 %v568
        %v1414 = vunpack.c.h.b16 %v568
        %v1415 = vunpack.c.l.b16 %v569
        %v1416 = vunpack.c.h.b16 %v569
        %v1417 = vunpack.c.l.b16 %v570
        %v1418 = vunpack.c.h.b16 %v570
        %v1419 = vunpack.c.l.b16 %v571
        %v1420 = vunpack.c.h.b16 %v571
        %v1421 = vunpack.c.l.b16 %v572
        %v1422 = vunpack.c.h.b16 %v572
        %v1423 = vunpack.c.l.b16 %v573
        %v1424 = vunpack.c.h.b16 %v573
        %v1425 = vunpack.c.l.b16 %v574
        %v1426 = vunpack.c.h.b16 %v574
        %v1427 = vunpack.c.l.b16 %v575
        %v1428 = vunpack.c.h.b16 %v575
        %v1429 = vunpack.c.l.b16 %v576
        %v1430 = vunpack.c.h.b16 %v576
        %v1431 = vunpack.c.l.b16 %v577
        %v1432 = vunpack.c.h.b16 %v577
        %v1433 = vunpack.c.l.b16 %v578
        %v1434 = vunpack.c.h.b16 %v578
        %v1435 = vunpack.c.l.b16 %v579
        %v1436 = vunpack.c.h.b16 %v579
        %v1437 = vunpack.c.l.b16 %v580
        %v1438 = vunpack.c.h.b16 %v580
        %v1439 = vunpack.c.l.b16 %v581
        %v1440 = vunpack.c.h.b16 %v581
        %v1441 = vunpack.c.l.b16 %v582
        %v1442 = vunpack.c.h.b16 %v582
        %v1443 = vunpack.c.l.b16 %v583
        %v1444 = vunpack.c.h.b16 %v583
        %v1445 = vunpack.c.l.b16 %v584
        %v1446 = vunpack.c.h.b16 %v584
        %v1447 = vunpack.c.l.b16 %v585
        %v1448 = vunpack.c.h.b16 %v585
        %v1449 = vunpack.c.l.b16 %v586
        %v1450 = vunpack.c.h.b16 %v586
        %v1451 = vunpack.c.l.b16 %v587
        %v1452 = vunpack.c.h.b16 %v587
        %v1453 = vunpack.c.l.b16 %v588
        %v1454 = vunpack.c.h.b16 %v588
        %v1455 = vunpack.c.l.b16 %v589
        %v1456 = vunpack.c.h.b16 %v589
        %v1457 = vunpack.c.l.b16 %v590
        %v1458 = vunpack.c.h.b16 %v590
        %v1459 = vunpack.c.l.b16 %v591
        %v1460 = vunpack.c.h.b16 %v591
        %v1461 = vunpack.c.l.b16 %v592
        %v1462 = vunpack.c.h.b16 %v592
        %v1463 = vunpack.c.l.b16 %v593
        %v1464 = vunpack.c.h.b16 %v593
        %v1465 = vunpack.c.l.b16 %v594
        %v1466 = vunpack.c.h.b16 %v594
        %v1467 = vunpack.c.l.b16 %v595
        %v1468 = vunpack.c.h.b16 %v595
        %v1469 = vunpack.c.l.b16 %v596
        %v1470 = vunpack.c.h.b16 %v596
        %v1471 = vunpack.c.l.b16 %v597
        %v1472 = vunpack.c.h.b16 %v597
        %v1473 = vunpack.c.l.b16 %v598
        %v1474 = vunpack.c.h.b16 %v598
        %v1475 = vunpack.c.l.b16 %v599
        %v1476 = vunpack.c.h.b16 %v599
        %v1477 = vunpack.c.l.b16 %v600
        %v1478 = vunpack.c.h.b16 %v600
        %v1479 = vunpack.c.l.b16 %v601
        %v1480 = vunpack.c.h.b16 %v601
        %v1481 = vunpack.c.l.b16 %v602
        %v1482 = vunpack.c.h.b16 %v602
        %v1483 = vunpack.c.l.b16 %v603
        %v1484 = vunpack.c.h.b16 %v603
        %v1485 = vunpack.c.l.b16 %v604
        %v1486 = vunpack.c.h.b16 %v604
        %v1487 = vunpack.c.l.b16 %v605
        %v1488 = vunpack.c.h.b16 %v605
        %v1489 = vunpack.c.l.b16 %v606
        %v1490 = vunpack.c.h.b16 %v606
        %v1491 = vunpack.c.l.b16 %v607
        %v1492 = vunpack.c.h.b16 %v607
        %v1493 = vunpack.c.l.b16 %v608
        %v1494 = vunpack.c.h.b16 %v608
        %v1495 = vunpack.c.l.b16 %v609
        %v1496 = vunpack.c.h.b16 %v609
        %v1497 = vunpack.c.l.b16 %v610
        %v1498 = vunpack.c.h.b16 %v610
        %v1499 = vunpack.c.l.b16 %v611
        %v1500 = vunpack.c.h.b16 %v611
        %v1501 = vunpack.c.l.b16 %v612
        %v1502 = vunpack.c.h.b16 %v612
        %v1503 = vunpack.c.l.b16 %v613
        %v1504 = vunpack.c.h.b16 %v613
        %v1505 = vunpack.c.l.b16 %v614
        %v1506 = vunpack.c.h.b16 %v614
        %v1507 = vunpack.c.l.b16 %v615
        %v1508 = vunpack.c.h.b16 %v615
        %v1509 = vunpack.c.l.b16 %v616
        %v1510 = vunpack.c.h.b16 %v616
        %v1511 = vunpack.c.l.b16 %v617
        %v1512 = vunpack.c.h.b16 %v617
        %v1513 = vunpack.c.l.b16 %v618
        %v1514 = vunpack.c.h.b16 %v618
        %v1515 = vunpack.c.l.b16 %v619
        %v1516 = vunpack.c.h.b16 %v619
        %v1517 = vunpack.c.l.b16 %v620
        %v1518 = vunpack.c.h.b16 %v620
        %v1519 = vunpack.c.l.b16 %v621
        %v1520 = vunpack.c.h.b16 %v621
        %v1521 = vunpack.c.l.b16 %v622
        %v1522 = vunpack.c.h.b16 %v622
        %v1523 = vunpack.c.l.b16 %v623
        %v1524 = vunpack.c.h.b16 %v623
        %v1525 = vunpack.c.l.b16 %v624
        %v1526 = vunpack.c.h.b16 %v624
        %v1527 = vunpack.c.l.b16 %v625
        %v1528 = vunpack.c.h.b16 %v625
        %v1529 = vunpack.c.l.b16 %v626
        %v1530 = vunpack.c.h.b16 %v626
        %v1531 = vunpack.c.l.b16 %v627
        %v1532 = vunpack.c.h.b16 %v627
        %v1533 = vunpack.c.l.b16 %v628
        %v1534 = vunpack.c.h.b16 %v628
        %v1535 = vunpack.c.l.b16 %v629
        %v1536 = vunpack.c.h.b16 %v629
        %v1537 = vunpack.c.l.b16 %v630
        %v1538 = vunpack.c.h.b16 %v630
        %v1539 = vunpack.c.l.b16 %v631
        %v1540 = vunpack.c.h.b16 %v631
        %v1541 = vunpack.c.l.b16 %v632
        %v1542 = vunpack.c.h.b16 %v632
        %v1543 = vunpack.c.l.b16 %v633
        %v1544 = vunpack.c.h.b16 %v633
        %v1545 = vunpack.c.l.b16 %v634
        %v1546 = vunpack.c.h.b16 %v634
        %v1547 = vunpack.c.l.b16 %v635
        %v1548 = vunpack.c.h.b16 %v635
        %v1549 = vunpack.c.l.b16 %v636
        %v1550 = vunpack.c.h.b16 %v636
        %v1551 = vunpack.c.l.b16 %v637
        %v1552 = vunpack.c.h.b16 %v637
        %v1553 = vunpack.c.l.b16 %v638
        %v1554 = vunpack.c.h.b16 %v638
        %v1555 = vunpack.c.l.b16 %v639
        %v1556 = vunpack.c.h.b16 %v639
        %v1557 = vunpack.c.l.b16 %v640
        %v1558 = vunpack.c.h.b16 %v640
        %v1559 = vunpack.c.l.b16 %v641
        %v1560 = vunpack.c.h.b16 %v641
        %v1561 = vunpack.c.l.b16 %v642
        %v1562 = vunpack.c.h.b16 %v642
        %v1563 = vunpack.c.l.b16 %v643
        %v1564 = vunpack.c.h.b16 %v643
        %v1565 = vunpack.c.l.b16 %v644
        %v1566 = vunpack.c.h.b16 %v644
        %v1567 = vunpack.c.l.b16 %v645
        %v1568 = vunpack.c.h.b16 %v645
        %v1569 = vunpack.c.l.b16 %v646
        %v1570 = vunpack.c.h.b16 %v646
        %v1571 = vunpack.c.l.b16 %v647
        %v1572 = vunpack.c.h.b16 %v647
        %v1573 = vunpack.c.l.b16 %v648
        %v1574 = vunpack.c.h.b16 %v648
        %v1575 = vunpack.c.l.b16 %v649
        %v1576 = vunpack.c.h.b16 %v649
        %v1577 = vunpack.c.l.b16 %v650
        %v1578 = vunpack.c.h.b16 %v650
        %v1579 = vunpack.c.l.b16 %v651
        %v1580 = vunpack.c.h.b16 %v651
        %v1581 = vunpack.c.l.b16 %v652
        %v1582 = vunpack.c.h.b16 %v652
        %v1583 = vunpack.c.l.b16 %v653
        %v1584 = vunpack.c.h.b16 %v653
        %v1585 = vunpack.c.l.b16 %v654
        %v1586 = vunpack.c.h.b16 %v654
        %v1587 = vunpack.c.l.b16 %v655
        %v1588 = vunpack.c.h.b16 %v655
        %v1589 = vunpack.c.l.b16 %v656
        %v1590 = vunpack.c.h.b16 %v656
        %v1591 = vunpack.c.l.b16 %v657
        %v1592 = vunpack.c.h.b16 %v657
        %v1593 = vunpack.c.l.b16 %v658
        %v1594 = vunpack.c.h.b16 %v658
        %v1595 = vunpack.c.l.b16 %v659
        %v1596 = vunpack.c.h.b16 %v659
        %v1597 = vunpack.c.l.b16 %v660
        %v1598 = vunpack.c.h.b16 %v660
        %v1599 = vunpack.c.l.b16 %v661
        %v1600 = vunpack.c.h.b16 %v661
        %v1601 = vunpack.c.l.b16 %v662
        %v1602 = vunpack.c.h.b16 %v662
        %v1603 = vunpack.c.l.b16 %v663
        %v1604 = vunpack.c.h.b16 %v663
        %v1605 = vunpack.c.l.b16 %v664
        %v1606 = vunpack.c.h.b16 %v664
        %v1607 = vunpack.c.l.b16 %v665
        %v1608 = vunpack.c.h.b16 %v665
        %v1609 = vunpack.c.l.b16 %v666
        %v1610 = vunpack.c.h.b16 %v666
        %v1611 = vunpack.c.l.b16 %v667
        %v1612 = vunpack.c.h.b16 %v667
        %v1613 = vunpack.c.l.b16 %v668
        %v1614 = vunpack.c.h.b16 %v668
        %v1615 = vpack.c.b16 %v1111, %v1103
        %v1616 = vpack.c.b16 %v1112, %v1104
        %v1617 = vpack.c.b16 %v1113, %v1105
        %v1618 = vpack.c.b16 %v1114, %v1106
        %v1619 = vpack.c.b16 %v1115, %v1107
        %v1620 = vpack.c.b16 %v1116, %v1108
        %v1621 = vpack.c.b16 %v1117, %v1109
        %v1622 = vpack.c.b16 %v1118, %v1110
        %v1623 = vpack.c.b16 %v1127, %v1119
        %v1624 = vpack.c.b16 %v1128, %v1120
        %v1625 = vpack.c.b16 %v1129, %v1121
        %v1626 = vpack.c.b16 %v1130, %v1122
        %v1627 = vpack.c.b16 %v1131, %v1123
        %v1628 = vpack.c.b16 %v1132, %v1124
        %v1629 = vpack.c.b16 %v1133, %v1125
        %v1630 = vpack.c.b16 %v1134, %v1126
        %v1631 = vpack.c.b16 %v1143, %v1135
        %v1632 = vpack.c.b16 %v1144, %v1136
        %v1633 = vpack.c.b16 %v1145, %v1137
        %v1634 = vpack.c.b16 %v1146, %v1138
        %v1635 = vpack.c.b16 %v1147, %v1139
        %v1636 = vpack.c.b16 %v1148, %v1140
        %v1637 = vpack.c.b16 %v1149, %v1141
        %v1638 = vpack.c.b16 %v1150, %v1142
        %v1639 = vpack.c.b16 %v1159, %v1151
        %v1640 = vpack.c.b16 %v1160, %v1152
        %v1641 = vpack.c.b16 %v1161, %v1153
        %v1642 = vpack.c.b16 %v1162, %v1154
        %v1643 = vpack.c.b16 %v1163, %v1155
        %v1644 = vpack.c.b16 %v1164, %v1156
        %v1645 = vpack.c.b16 %v1165, %v1157
        %v1646 = vpack.c.b16 %v1166, %v1158
        %v1647 = vpack.c.b16 %v1175, %v1167
        %v1648 = vpack.c.b16 %v1176, %v1168
        %v1649 = vpack.c.b16 %v1177, %v1169
        %v1650 = vpack.c.b16 %v1178, %v1170
        %v1651 = vpack.c.b16 %v1179, %v1171
        %v1652 = vpack.c.b16 %v1180, %v1172
        %v1653 = vpack.c.b16 %v1181, %v1173
        %v1654 = vpack.c.b16 %v1182, %v1174
        %v1655 = vpack.c.b16 %v1191, %v1183
        %v1656 = vpack.c.b16 %v1192, %v1184
        %v1657 = vpack.c.b16 %v1193, %v1185
        %v1658 = vpack.c.b16 %v1194, %v1186
        %v1659 = vpack.c.b16 %v1195, %v1187
        %v1660 = vpack.c.b16 %v1196, %v1188
        %v1661 = vpack.c.b16 %v1197, %v1189
        %v1662 = vpack.c.b16 %v1198, %v1190
        %v1663 = vpack.c.b16 %v1207, %v1199
        %v1664 = vpack.c.b16 %v1208, %v1200
        %v1665 = vpack.c.b16 %v1209, %v1201
        %v1666 = vpack.c.b16 %v1210, %v1202
        %v1667 = vpack.c.b16 %v1211, %v1203
        %v1668 = vpack.c.b16 %v1212, %v1204
        %v1669 = vpack.c.b16 %v1213, %v1205
        %v1670 = vpack.c.b16 %v1214, %v1206
        %v1671 = vpack.c.b16 %v1223, %v1215
        %v1672 = vpack.c.b16 %v1224, %v1216
        %v1673 = vpack.c.b16 %v1225, %v1217
        %v1674 = vpack.c.b16 %v1226, %v1218
        %v1675 = vpack.c.b16 %v1227, %v1219
        %v1676 = vpack.c.b16 %v1228, %v1220
        %v1677 = vpack.c.b16 %v1229, %v1221
        %v1678 = vpack.c.b16 %v1230, %v1222
        %v1679 = vpack.c.b16 %v1239, %v1231
        %v1680 = vpack.c.b16 %v1240, %v1232
        %v1681 = vpack.c.b16 %v1241, %v1233
        %v1682 = vpack.c.b16 %v1242, %v1234
        %v1683 = vpack.c.b16 %v1243, %v1235
        %v1684 = vpack.c.b16 %v1244, %v1236
        %v1685 = vpack.c.b16 %v1245, %v1237
        %v1686 = vpack.c.b16 %v1246, %v1238
        %v1687 = vpack.c.b16 %v1255, %v1247
        %v1688 = vpack.c.b16 %v1256, %v1248
        %v1689 = vpack.c.b16 %v1257, %v1249
        %v1690 = vpack.c.b16 %v1258, %v1250
        %v1691 = vpack.c.b16 %v1259, %v1251
        %v1692 = vpack.c.b16 %v1260, %v1252
        %v1693 = vpack.c.b16 %v1261, %v1253
        %v1694 = vpack.c.b16 %v1262, %v1254
        %v1695 = vpack.c.b16 %v1271, %v1263
        %v1696 = vpack.c.b16 %v1272, %v1264
        %v1697 = vpack.c.b16 %v1273, %v1265
        %v1698 = vpack.c.b16 %v1274, %v1266
        %v1699 = vpack.c.b16 %v1275, %v1267
        %v1700 = vpack.c.b16 %v1276, %v1268
        %v1701 = vpack.c.b16 %v1277, %v1269
        %v1702 = vpack.c.b16 %v1278, %v1270
        %v1703 = vpack.c.b16 %v1287, %v1279
        %v1704 = vpack.c.b16 %v1288, %v1280
        %v1705 = vpack.c.b16 %v1289, %v1281
        %v1706 = vpack.c.b16 %v1290, %v1282
        %v1707 = vpack.c.b16 %v1291, %v1283
        %v1708 = vpack.c.b16 %v1292, %v1284
        %v1709 = vpack.c.b16 %v1293, %v1285
        %v1710 = vpack.c.b16 %v1294, %v1286
        %v1711 = vpack.c.b16 %v1303, %v1295
        %v1712 = vpack.c.b16 %v1304, %v1296
        %v1713 = vpack.c.b16 %v1305, %v1297
        %v1714 = vpack.c.b16 %v1306, %v1298
        %v1715 = vpack.c.b16 %v1307, %v1299
        %v1716 = vpack.c.b16 %v1308, %v1300
        %v1717 = vpack.c.b16 %v1309, %v1301
        %v1718 = vpack.c.b16 %v1310, %v1302
        %v1719 = vpack.c.b16 %v1319, %v1311
        %v1720 = vpack.c.b16 %v1320, %v1312
        %v1721 = vpack.c.b16 %v1321, %v1313
        %v1722 = vpack.c.b16 %v1322, %v1314
        %v1723 = vpack.c.b16 %v1323, %v1315
        %v1724 = vpack.c.b16 %v1324, %v1316
        %v1725 = vpack.c.b16 %v1325, %v1317
        %v1726 = vpack.c.b16 %v1326, %v1318
        %v1727 = vpack.c.b16 %v1335, %v1327
        %v1728 = vpack.c.b16 %v1336, %v1328
        %v1729 = vpack.c.b16 %v1337, %v1329
        %v1730 = vpack.c.b16 %v1338, %v1330
        %v1731 = vpack.c.b16 %v1339, %v1331
        %v1732 = vpack.c.b16 %v1340, %v1332
        %v1733 = vpack.c.b16 %v1341, %v1333
        %v1734 = vpack.c.b16 %v1342, %v1334
        %v1735 = vpack.c.b16 %v1351, %v1343
        %v1736 = vpack.c.b16 %v1352, %v1344
        %v1737 = vpack.c.b16 %v1353, %v1345
        %v1738 = vpack.c.b16 %v1354, %v1346
        %v1739 = vpack.c.b16 %v1355, %v1347
        %v1740 = vpack.c.b16 %v1356, %v1348
        %v1741 = vpack.c.b16 %v1357, %v1349
        %v1742 = vpack.c.b16 %v1358, %v1350
        %v1743 = vpack.c.b16 %v1367, %v1359
        %v1744 = vpack.c.b16 %v1368, %v1360
        %v1745 = vpack.c.b16 %v1369, %v1361
        %v1746 = vpack.c.b16 %v1370, %v1362
        %v1747 = vpack.c.b16 %v1371, %v1363
        %v1748 = vpack.c.b16 %v1372, %v1364
        %v1749 = vpack.c.b16 %v1373, %v1365
        %v1750 = vpack.c.b16 %v1374, %v1366
        %v1751 = vpack.c.b16 %v1383, %v1375
        %v1752 = vpack.c.b16 %v1384, %v1376
        %v1753 = vpack.c.b16 %v1385, %v1377
        %v1754 = vpack.c.b16 %v1386, %v1378
        %v1755 = vpack.c.b16 %v1387, %v1379
        %v1756 = vpack.c.b16 %v1388, %v1380
        %v1757 = vpack.c.b16 %v1389, %v1381
        %v1758 = vpack.c.b16 %v1390, %v1382
        %v1759 = vpack.c.b16 %v1399, %v1391
        %v1760 = vpack.c.b16 %v1400, %v1392
        %v1761 = vpack.c.b16 %v1401, %v1393
        %v1762 = vpack.c.b16 %v1402, %v1394
        %v1763 = vpack.c.b16 %v1403, %v1395
        %v1764 = vpack.c.b16 %v1404, %v1396
        %v1765 = vpack.c.b16 %v1405, %v1397
        %v1766 = vpack.c.b16 %v1406, %v1398
        %v1767 = vpack.c.b16 %v1415, %v1407
        %v1768 = vpack.c.b16 %v1416, %v1408
        %v1769 = vpack.c.b16 %v1417, %v1409
        %v1770 = vpack.c.b16 %v1418, %v1410
        %v1771 = vpack.c.b16 %v1419, %v1411
        %v1772 = vpack.c.b16 %v1420, %v1412
        %v1773 = vpack.c.b16 %v1421, %v1413
        %v1774 = vpack.c.b16 %v1422, %v1414
        %v1775 = vpack.c.b16 %v1431, %v1423
        %v1776 = vpack.c.b16 %v1432, %v1424
        %v1777 = vpack.c.b16 %v1433, %v1425
        %v1778 = vpack.c.b16 %v1434, %v1426
        %v1779 = vpack.c.b16 %v1435, %v1427
        %v1780 = vpack.c.b16 %v1436, %v1428
        %v1781 = vpack.c.b16 %v1437, %v1429
        %v1782 = vpack.c.b16 %v1438, %v1430
        %v1783 = vpack.c.b16 %v1447, %v1439
        %v1784 = vpack.c.b16 %v1448, %v1440
        %v1785 = vpack.c.b16 %v1449, %v1441
        %v1786 = vpack.c.b16 %v1450, %v1442
        %v1787 = vpack.c.b16 %v1451, %v1443
        %v1788 = vpack.c.b16 %v1452, %v1444
        %v1789 = vpack.c.b16 %v1453, %v1445
        %v1790 = vpack.c.b16 %v1454, %v1446
        %v1791 = vpack.c.b16 %v1463, %v1455
        %v1792 = vpack.c.b16 %v1464, %v1456
        %v1793 = vpack.c.b16 %v1465, %v1457
        %v1794 = vpack.c.b16 %v1466, %v1458
        %v1795 = vpack.c.b16 %v1467, %v1459
        %v1796 = vpack.c.b16 %v1468, %v1460
        %v1797 = vpack.c.b16 %v1469, %v1461
        %v1798 = vpack.c.b16 %v1470, %v1462
        %v1799 = vpack.c.b16 %v1479, %v1471
        %v1800 = vpack.c.b16 %v1480, %v1472
        %v1801 = vpack.c.b16 %v1481, %v1473
        %v1802 = vpack.c.b16 %v1482, %v1474
        %v1803 = vpack.c.b16 %v1483, %v1475
        %v1804 = vpack.c.b16 %v1484, %v1476
        %v1805 = vpack.c.b16 %v1485, %v1477
        %v1806 = vpack.c.b16 %v1486, %v1478
        %v1807 = vpack.c.b16 %v1495, %v1487
        %v1808 = vpack.c.b16 %v1496, %v1488
        %v1809 = vpack.c.b16 %v1497, %v1489
        %v1810 = vpack.c.b16 %v1498, %v1490
        %v1811 = vpack.c.b16 %v1499, %v1491
        %v1812 = vpack.c.b16 %v1500, %v1492
        %v1813 = vpack.c.b16 %v1501, %v1493
        %v1814 = vpack.c.b16 %v1502, %v1494
        %v1815 = vpack.c.b16 %v1511, %v1503
        %v1816 = vpack.c.b16 %v1512, %v1504
        %v1817 = vpack.c.b16 %v1513, %v1505
        %v1818 = vpack.c.b16 %v1514, %v1506
        %v1819 = vpack.c.b16 %v1515, %v1507
        %v1820 = vpack.c.b16 %v1516, %v1508
        %v1821 = vpack.c.b16 %v1517, %v1509
        %v1822 = vpack.c.b16 %v1518, %v1510
        %v1823 = vpack.c.b16 %v1527, %v1519
        %v1824 = vpack.c.b16 %v1528, %v1520
        %v1825 = vpack.c.b16 %v1529, %v1521
        %v1826 = vpack.c.b16 %v1530, %v1522
        %v1827 = vpack.c.b16 %v1531, %v1523
        %v1828 = vpack.c.b16 %v1532, %v1524
        %v1829 = vpack.c.b16 %v1533, %v1525
        %v1830 = vpack.c.b16 %v1534, %v1526
        %v1831 = vpack.c.b16 %v1543, %v1535
        %v1832 = vpack.c.b16 %v1544, %v1536
        %v1833 = vpack.c.b16 %v1545, %v1537
        %v1834 = vpack.c.b16 %v1546, %v1538
        %v1835 = vpack.c.b16 %v1547, %v1539
        %v1836 = vpack.c.b16 %v1548, %v1540
        %v1837 = vpack.c.b16 %v1549, %v1541
        %v1838 = vpack.c.b16 %v1550, %v1542
        %v1839 = vpack.c.b16 %v1559, %v1551
        %v1840 = vpack.c.b16 %v1560, %v1552
        %v1841 = vpack.c.b16 %v1561, %v1553
        %v1842 = vpack.c.b16 %v1562, %v1554
        %v1843 = vpack.c.b16 %v1563, %v1555
        %v1844 = vpack.c.b16 %v1564, %v1556
        %v1845 = vpack.c.b16 %v1565, %v1557
        %v1846 = vpack.c.b16 %v1566, %v1558
        %v1847 = vpack.c.b16 %v1575, %v1567
        %v1848 = vpack.c.b16 %v1576, %v1568
        %v1849 = vpack.c.b16 %v1577, %v1569
        %v1850 = vpack.c.b16 %v1578, %v1570
        %v1851 = vpack.c.b16 %v1579, %v1571
        %v1852 = vpack.c.b16 %v1580, %v1572
        %v1853 = vpack.c.b16 %v1581, %v1573
        %v1854 = vpack.c.b16 %v1582, %v1574
        %v1855 = vpack.c.b16 %v1591, %v1583
        %v1856 = vpack.c.b16 %v1592, %v1584
        %v1857 = vpack.c.b16 %v1593, %v1585
        %v1858 = vpack.c.b16 %v1594, %v1586
        %v1859 = vpack.c.b16 %v1595, %v1587
        %v1860 = vpack.c.b16 %v1596, %v1588
        %v1861 = vpack.c.b16 %v1597, %v1589
        %v1862 = vpack.c.b16 %v1598, %v1590
        %v1863 = vpack.c.b16 %v1607, %v1599
        %v1864 = vpack.c.b16 %v1608, %v1600
        %v1865 = vpack.c.b16 %v1609, %v1601
        %v1866 = vpack.c.b16 %v1610, %v1602
        %v1867 = vpack.c.b16 %v1611, %v1603
        %v1868 = vpack.c.b16 %v1612, %v1604
        %v1869 = vpack.c.b16 %v1613, %v1605
        %v1870 = vpack.c.b16 %v1614, %v1606
        %2127 = vmatpush.bf16.msra.mxu0 %v1671
        %2128 = vmatpush.bf16.msra.mxu0 %v1663
        %2129 = vmatpush.bf16.msra.mxu0 %v1655
        %2130 = vmatpush.bf16.msra.mxu0 %v1647
        %2131 = vmatpush.bf16.msra.mxu0 %v1639
        %2132 = vmatpush.bf16.msra.mxu0 %v1631
        %2133 = vmatpush.bf16.msra.mxu0 %v1623
        %2134 = vmatpush.bf16.msra.mxu0 %v1615
        %2135 = vmatmul.bf16.gmra.mxu0 %v783
        %v2136 = vpop.f32.mrf.mxu0
        %v2137 = vadd.f32 %v671, %v2136
        %v2138 = vpop.f32.mrf.mxu0
        %v2139 = vadd.f32 %v671, %v2138
        %2140 = vmatmul.bf16.gmra.mxu0 %v787
        %v2141 = vpop.f32.mrf.mxu0
        %v2142 = vadd.f32 %v671, %v2141
        %v2143 = vpop.f32.mrf.mxu0
        %v2144 = vadd.f32 %v671, %v2143
        %2145 = vmatmul.bf16.gmra.mxu0 %v791
        %v2146 = vpop.f32.mrf.mxu0
        %v2147 = vadd.f32 %v671, %v2146
        %v2148 = vpop.f32.mrf.mxu0
        %v2149 = vadd.f32 %v671, %v2148
        %2150 = vmatmul.bf16.gmra.mxu0 %v795
        %v2151 = vpop.f32.mrf.mxu0
        %v2152 = vadd.f32 %v671, %v2151
        %v2153 = vpop.f32.mrf.mxu0
        %v2154 = vadd.f32 %v671, %v2153
        %2155 = vmatmul.bf16.gmra.mxu0 %v799
        %v2156 = vpop.f32.mrf.mxu0
        %v2157 = vadd.f32 %v671, %v2156
        %v2158 = vpop.f32.mrf.mxu0
        %v2159 = vadd.f32 %v671, %v2158
        %2160 = vmatmul.bf16.gmra.mxu0 %v803
        %v2161 = vpop.f32.mrf.mxu0
        %v2162 = vadd.f32 %v671, %v2161
        %v2163 = vpop.f32.mrf.mxu0
        %v2164 = vadd.f32 %v671, %v2163
        %2165 = vmatmul.bf16.gmra.mxu0 %v807
        %v2166 = vpop.f32.mrf.mxu0
        %v2167 = vadd.f32 %v671, %v2166
        %v2168 = vpop.f32.mrf.mxu0
        %v2169 = vadd.f32 %v671, %v2168
        %2170 = vmatmul.bf16.gmra.mxu0 %v811
        %v2171 = vpop.f32.mrf.mxu0
        %v2172 = vadd.f32 %v671, %v2171
        %v2173 = vpop.f32.mrf.mxu0
        %v2174 = vadd.f32 %v671, %v2173
        %2175 = vdwg.mxu0
        %2176 = vmatpush.bf16.msra.mxu0 %v1735
        %2177 = vmatpush.bf16.msra.mxu0 %v1727
        %2178 = vmatpush.bf16.msra.mxu0 %v1719
        %2179 = vmatpush.bf16.msra.mxu0 %v1711
        %2180 = vmatpush.bf16.msra.mxu0 %v1703
        %2181 = vmatpush.bf16.msra.mxu0 %v1695
        %2182 = vmatpush.bf16.msra.mxu0 %v1687
        %2183 = vmatpush.bf16.msra.mxu0 %v1679
        %2184 = vmatmul.bf16.gmra.mxu0 %v784
        %v2185 = vpop.f32.mrf.mxu0
        %v2186 = vadd.f32 %v2137, %v2185
        %v2187 = vpop.f32.mrf.mxu0
        %v2188 = vadd.f32 %v2139, %v2187
        %2189 = vmatmul.bf16.gmra.mxu0 %v788
        %v2190 = vpop.f32.mrf.mxu0
        %v2191 = vadd.f32 %v2142, %v2190
        %v2192 = vpop.f32.mrf.mxu0
        %v2193 = vadd.f32 %v2144, %v2192
        %2194 = vmatmul.bf16.gmra.mxu0 %v792
        %v2195 = vpop.f32.mrf.mxu0
        %v2196 = vadd.f32 %v2147, %v2195
        %v2197 = vpop.f32.mrf.mxu0
        %v2198 = vadd.f32 %v2149, %v2197
        %2199 = vmatmul.bf16.gmra.mxu0 %v796
        %v2200 = vpop.f32.mrf.mxu0
        %v2201 = vadd.f32 %v2152, %v2200
        %v2202 = vpop.f32.mrf.mxu0
        %v2203 = vadd.f32 %v2154, %v2202
        %2204 = vmatmul.bf16.gmra.mxu0 %v800
        %v2205 = vpop.f32.mrf.mxu0
        %v2206 = vadd.f32 %v2157, %v2205
        %v2207 = vpop.f32.mrf.mxu0
        %v2208 = vadd.f32 %v2159, %v2207
        %2209 = vmatmul.bf16.gmra.mxu0 %v804
        %v2210 = vpop.f32.mrf.mxu0
        %v2211 = vadd.f32 %v2162, %v2210
        %v2212 = vpop.f32.mrf.mxu0
        %v2213 = vadd.f32 %v2164, %v2212
        %2214 = vmatmul.bf16.gmra.mxu0 %v808
        %v2215 = vpop.f32.mrf.mxu0
        %v2216 = vadd.f32 %v2167, %v2215
        %v2217 = vpop.f32.mrf.mxu0
        %v2218 = vadd.f32 %v2169, %v2217
        %2219 = vmatmul.bf16.gmra.mxu0 %v812
        %v2220 = vpop.f32.mrf.mxu0
        %v2221 = vadd.f32 %v2172, %v2220
        %v2222 = vpop.f32.mrf.mxu0
        %v2223 = vadd.f32 %v2174, %v2222
        %2224 = vdwg.mxu0
        %2225 = vmatpush.bf16.msra.mxu0 %v1799
        %2226 = vmatpush.bf16.msra.mxu0 %v1791
        %2227 = vmatpush.bf16.msra.mxu0 %v1783
        %2228 = vmatpush.bf16.msra.mxu0 %v1775
        %2229 = vmatpush.bf16.msra.mxu0 %v1767
        %2230 = vmatpush.bf16.msra.mxu0 %v1759
        %2231 = vmatpush.bf16.msra.mxu0 %v1751
        %2232 = vmatpush.bf16.msra.mxu0 %v1743
        %2233 = vmatmul.bf16.gmra.mxu0 %v785
        %v2234 = vpop.f32.mrf.mxu0
        %v2235 = vadd.f32 %v2186, %v2234
        %v2236 = vpop.f32.mrf.mxu0
        %v2237 = vadd.f32 %v2188, %v2236
        %2238 = vmatmul.bf16.gmra.mxu0 %v789
        %v2239 = vpop.f32.mrf.mxu0
        %v2240 = vadd.f32 %v2191, %v2239
        %v2241 = vpop.f32.mrf.mxu0
        %v2242 = vadd.f32 %v2193, %v2241
        %2243 = vmatmul.bf16.gmra.mxu0 %v793
        %v2244 = vpop.f32.mrf.mxu0
        %v2245 = vadd.f32 %v2196, %v2244
        %v2246 = vpop.f32.mrf.mxu0
        %v2247 = vadd.f32 %v2198, %v2246
        %2248 = vmatmul.bf16.gmra.mxu0 %v797
        %v2249 = vpop.f32.mrf.mxu0
        %v2250 = vadd.f32 %v2201, %v2249
        %v2251 = vpop.f32.mrf.mxu0
        %v2252 = vadd.f32 %v2203, %v2251
        %2253 = vmatmul.bf16.gmra.mxu0 %v801
        %v2254 = vpop.f32.mrf.mxu0
        %v2255 = vadd.f32 %v2206, %v2254
        %v2256 = vpop.f32.mrf.mxu0
        %v2257 = vadd.f32 %v2208, %v2256
        %2258 = vmatmul.bf16.gmra.mxu0 %v805
        %v2259 = vpop.f32.mrf.mxu0
        %v2260 = vadd.f32 %v2211, %v2259
        %v2261 = vpop.f32.mrf.mxu0
        %v2262 = vadd.f32 %v2213, %v2261
        %2263 = vmatmul.bf16.gmra.mxu0 %v809
        %v2264 = vpop.f32.mrf.mxu0
        %v2265 = vadd.f32 %v2216, %v2264
        %v2266 = vpop.f32.mrf.mxu0
        %v2267 = vadd.f32 %v2218, %v2266
        %2268 = vmatmul.bf16.gmra.mxu0 %v813
        %v2269 = vpop.f32.mrf.mxu0
        %v2270 = vadd.f32 %v2221, %v2269
        %v2271 = vpop.f32.mrf.mxu0
        %v2272 = vadd.f32 %v2223, %v2271
        %2273 = vdwg.mxu0
        %2274 = vmatpush.bf16.msra.mxu0 %v1863
        %2275 = vmatpush.bf16.msra.mxu0 %v1855
        %2276 = vmatpush.bf16.msra.mxu0 %v1847
        %2277 = vmatpush.bf16.msra.mxu0 %v1839
        %2278 = vmatpush.bf16.msra.mxu0 %v1831
        %2279 = vmatpush.bf16.msra.mxu0 %v1823
        %2280 = vmatpush.bf16.msra.mxu0 %v1815
        %2281 = vmatpush.bf16.msra.mxu0 %v1807
        %2282 = vmatmul.bf16.gmra.mxu0 %v786
        %v2283 = vpop.f32.mrf.mxu0
        %v2284 = vadd.f32 %v2235, %v2283
        %v2285 = vpop.f32.mrf.mxu0
        %v2286 = vadd.f32 %v2237, %v2285
        %2287 = vmatmul.bf16.gmra.mxu0 %v790
        %v2288 = vpop.f32.mrf.mxu0
        %v2289 = vadd.f32 %v2240, %v2288
        %v2290 = vpop.f32.mrf.mxu0
        %v2291 = vadd.f32 %v2242, %v2290
        %2292 = vmatmul.bf16.gmra.mxu0 %v794
        %v2293 = vpop.f32.mrf.mxu0
        %v2294 = vadd.f32 %v2245, %v2293
        %v2295 = vpop.f32.mrf.mxu0
        %v2296 = vadd.f32 %v2247, %v2295
        %2297 = vmatmul.bf16.gmra.mxu0 %v798
        %v2298 = vpop.f32.mrf.mxu0
        %v2299 = vadd.f32 %v2250, %v2298
        %v2300 = vpop.f32.mrf.mxu0
        %v2301 = vadd.f32 %v2252, %v2300
        %2302 = vmatmul.bf16.gmra.mxu0 %v802
        %v2303 = vpop.f32.mrf.mxu0
        %v2304 = vadd.f32 %v2255, %v2303
        %v2305 = vpop.f32.mrf.mxu0
        %v2306 = vadd.f32 %v2257, %v2305
        %2307 = vmatmul.bf16.gmra.mxu0 %v806
        %v2308 = vpop.f32.mrf.mxu0
        %v2309 = vadd.f32 %v2260, %v2308
        %v2310 = vpop.f32.mrf.mxu0
        %v2311 = vadd.f32 %v2262, %v2310
        %2312 = vmatmul.bf16.gmra.mxu0 %v810
        %v2313 = vpop.f32.mrf.mxu0
        %v2314 = vadd.f32 %v2265, %v2313
        %v2315 = vpop.f32.mrf.mxu0
        %v2316 = vadd.f32 %v2267, %v2315
        %2317 = vmatmul.bf16.gmra.mxu0 %v814
        %v2318 = vpop.f32.mrf.mxu0
        %v2319 = vadd.f32 %v2270, %v2318
        %v2320 = vpop.f32.mrf.mxu0
        %v2321 = vadd.f32 %v2272, %v2320
        %2322 = vdwg.mxu0
        %2323 = vmatpush.bf16.msra.mxu0 %v1672
        %2324 = vmatpush.bf16.msra.mxu0 %v1664
        %2325 = vmatpush.bf16.msra.mxu0 %v1656
        %2326 = vmatpush.bf16.msra.mxu0 %v1648
        %2327 = vmatpush.bf16.msra.mxu0 %v1640
        %2328 = vmatpush.bf16.msra.mxu0 %v1632
        %2329 = vmatpush.bf16.msra.mxu0 %v1624
        %2330 = vmatpush.bf16.msra.mxu0 %v1616
        %2331 = vmatmul.bf16.gmra.mxu0 %v783
        %v2332 = vpop.f32.mrf.mxu0
        %v2333 = vadd.f32 %v672, %v2332
        %v2334 = vpop.f32.mrf.mxu0
        %v2335 = vadd.f32 %v672, %v2334
        %2336 = vmatmul.bf16.gmra.mxu0 %v787
        %v2337 = vpop.f32.mrf.mxu0
        %v2338 = vadd.f32 %v672, %v2337
        %v2339 = vpop.f32.mrf.mxu0
        %v2340 = vadd.f32 %v672, %v2339
        %2341 = vmatmul.bf16.gmra.mxu0 %v791
        %v2342 = vpop.f32.mrf.mxu0
        %v2343 = vadd.f32 %v672, %v2342
        %v2344 = vpop.f32.mrf.mxu0
        %v2345 = vadd.f32 %v672, %v2344
        %2346 = vmatmul.bf16.gmra.mxu0 %v795
        %v2347 = vpop.f32.mrf.mxu0
        %v2348 = vadd.f32 %v672, %v2347
        %v2349 = vpop.f32.mrf.mxu0
        %v2350 = vadd.f32 %v672, %v2349
        %2351 = vmatmul.bf16.gmra.mxu0 %v799
        %v2352 = vpop.f32.mrf.mxu0
        %v2353 = vadd.f32 %v672, %v2352
        %v2354 = vpop.f32.mrf.mxu0
        %v2355 = vadd.f32 %v672, %v2354
        %2356 = vmatmul.bf16.gmra.mxu0 %v803
        %v2357 = vpop.f32.mrf.mxu0
        %v2358 = vadd.f32 %v672, %v2357
        %v2359 = vpop.f32.mrf.mxu0
        %v2360 = vadd.f32 %v672, %v2359
        %2361 = vmatmul.bf16.gmra.mxu0 %v807
        %v2362 = vpop.f32.mrf.mxu0
        %v2363 = vadd.f32 %v672, %v2362
        %v2364 = vpop.f32.mrf.mxu0
        %v2365 = vadd.f32 %v672, %v2364
        %2366 = vmatmul.bf16.gmra.mxu0 %v811
        %v2367 = vpop.f32.mrf.mxu0
        %v2368 = vadd.f32 %v672, %v2367
        %v2369 = vpop.f32.mrf.mxu0
        %v2370 = vadd.f32 %v672, %v2369
        %2371 = vdwg.mxu0
        %2372 = vmatpush.bf16.msra.mxu0 %v1736
        %2373 = vmatpush.bf16.msra.mxu0 %v1728
        %2374 = vmatpush.bf16.msra.mxu0 %v1720
        %2375 = vmatpush.bf16.msra.mxu0 %v1712
        %2376 = vmatpush.bf16.msra.mxu0 %v1704
        %2377 = vmatpush.bf16.msra.mxu0 %v1696
        %2378 = vmatpush.bf16.msra.mxu0 %v1688
        %2379 = vmatpush.bf16.msra.mxu0 %v1680
        %2380 = vmatmul.bf16.gmra.mxu0 %v784
        %v2381 = vpop.f32.mrf.mxu0
        %v2382 = vadd.f32 %v2333, %v2381
        %v2383 = vpop.f32.mrf.mxu0
        %v2384 = vadd.f32 %v2335, %v2383
        %2385 = vmatmul.bf16.gmra.mxu0 %v788
        %v2386 = vpop.f32.mrf.mxu0
        %v2387 = vadd.f32 %v2338, %v2386
        %v2388 = vpop.f32.mrf.mxu0
        %v2389 = vadd.f32 %v2340, %v2388
        %2390 = vmatmul.bf16.gmra.mxu0 %v792
        %v2391 = vpop.f32.mrf.mxu0
        %v2392 = vadd.f32 %v2343, %v2391
        %v2393 = vpop.f32.mrf.mxu0
        %v2394 = vadd.f32 %v2345, %v2393
        %2395 = vmatmul.bf16.gmra.mxu0 %v796
        %v2396 = vpop.f32.mrf.mxu0
        %v2397 = vadd.f32 %v2348, %v2396
        %v2398 = vpop.f32.mrf.mxu0
        %v2399 = vadd.f32 %v2350, %v2398
        %2400 = vmatmul.bf16.gmra.mxu0 %v800
        %v2401 = vpop.f32.mrf.mxu0
        %v2402 = vadd.f32 %v2353, %v2401
        %v2403 = vpop.f32.mrf.mxu0
        %v2404 = vadd.f32 %v2355, %v2403
        %2405 = vmatmul.bf16.gmra.mxu0 %v804
        %v2406 = vpop.f32.mrf.mxu0
        %v2407 = vadd.f32 %v2358, %v2406
        %v2408 = vpop.f32.mrf.mxu0
        %v2409 = vadd.f32 %v2360, %v2408
        %2410 = vmatmul.bf16.gmra.mxu0 %v808
        %v2411 = vpop.f32.mrf.mxu0
        %v2412 = vadd.f32 %v2363, %v2411
        %v2413 = vpop.f32.mrf.mxu0
        %v2414 = vadd.f32 %v2365, %v2413
        %2415 = vmatmul.bf16.gmra.mxu0 %v812
        %v2416 = vpop.f32.mrf.mxu0
        %v2417 = vadd.f32 %v2368, %v2416
        %v2418 = vpop.f32.mrf.mxu0
        %v2419 = vadd.f32 %v2370, %v2418
        %2420 = vdwg.mxu0
        %2421 = vmatpush.bf16.msra.mxu0 %v1800
        %2422 = vmatpush.bf16.msra.mxu0 %v1792
        %2423 = vmatpush.bf16.msra.mxu0 %v1784
        %2424 = vmatpush.bf16.msra.mxu0 %v1776
        %2425 = vmatpush.bf16.msra.mxu0 %v1768
        %2426 = vmatpush.bf16.msra.mxu0 %v1760
        %2427 = vmatpush.bf16.msra.mxu0 %v1752
        %2428 = vmatpush.bf16.msra.mxu0 %v1744
        %2429 = vmatmul.bf16.gmra.mxu0 %v785
        %v2430 = vpop.f32.mrf.mxu0
        %v2431 = vadd.f32 %v2382, %v2430
        %v2432 = vpop.f32.mrf.mxu0
        %v2433 = vadd.f32 %v2384, %v2432
        %2434 = vmatmul.bf16.gmra.mxu0 %v789
        %v2435 = vpop.f32.mrf.mxu0
        %v2436 = vadd.f32 %v2387, %v2435
        %v2437 = vpop.f32.mrf.mxu0
        %v2438 = vadd.f32 %v2389, %v2437
        %2439 = vmatmul.bf16.gmra.mxu0 %v793
        %v2440 = vpop.f32.mrf.mxu0
        %v2441 = vadd.f32 %v2392, %v2440
        %v2442 = vpop.f32.mrf.mxu0
        %v2443 = vadd.f32 %v2394, %v2442
        %2444 = vmatmul.bf16.gmra.mxu0 %v797
        %v2445 = vpop.f32.mrf.mxu0
        %v2446 = vadd.f32 %v2397, %v2445
        %v2447 = vpop.f32.mrf.mxu0
        %v2448 = vadd.f32 %v2399, %v2447
        %2449 = vmatmul.bf16.gmra.mxu0 %v801
        %v2450 = vpop.f32.mrf.mxu0
        %v2451 = vadd.f32 %v2402, %v2450
        %v2452 = vpop.f32.mrf.mxu0
        %v2453 = vadd.f32 %v2404, %v2452
        %2454 = vmatmul.bf16.gmra.mxu0 %v805
        %v2455 = vpop.f32.mrf.mxu0
        %v2456 = vadd.f32 %v2407, %v2455
        %v2457 = vpop.f32.mrf.mxu0
        %v2458 = vadd.f32 %v2409, %v2457
        %2459 = vmatmul.bf16.gmra.mxu0 %v809
        %v2460 = vpop.f32.mrf.mxu0
        %v2461 = vadd.f32 %v2412, %v2460
        %v2462 = vpop.f32.mrf.mxu0
        %v2463 = vadd.f32 %v2414, %v2462
        %2464 = vmatmul.bf16.gmra.mxu0 %v813
        %v2465 = vpop.f32.mrf.mxu0
        %v2466 = vadd.f32 %v2417, %v2465
        %v2467 = vpop.f32.mrf.mxu0
        %v2468 = vadd.f32 %v2419, %v2467
        %2469 = vdwg.mxu0
        %2470 = vmatpush.bf16.msra.mxu0 %v1864
        %2471 = vmatpush.bf16.msra.mxu0 %v1856
        %2472 = vmatpush.bf16.msra.mxu0 %v1848
        %2473 = vmatpush.bf16.msra.mxu0 %v1840
        %2474 = vmatpush.bf16.msra.mxu0 %v1832
        %2475 = vmatpush.bf16.msra.mxu0 %v1824
        %2476 = vmatpush.bf16.msra.mxu0 %v1816
        %2477 = vmatpush.bf16.msra.mxu0 %v1808
        %2478 = vmatmul.bf16.gmra.mxu0 %v786
        %v2479 = vpop.f32.mrf.mxu0
        %v2480 = vadd.f32 %v2431, %v2479
        %v2481 = vpop.f32.mrf.mxu0
        %v2482 = vadd.f32 %v2433, %v2481
        %2483 = vmatmul.bf16.gmra.mxu0 %v790
        %v2484 = vpop.f32.mrf.mxu0
        %v2485 = vadd.f32 %v2436, %v2484
        %v2486 = vpop.f32.mrf.mxu0
        %v2487 = vadd.f32 %v2438, %v2486
        %2488 = vmatmul.bf16.gmra.mxu0 %v794
        %v2489 = vpop.f32.mrf.mxu0
        %v2490 = vadd.f32 %v2441, %v2489
        %v2491 = vpop.f32.mrf.mxu0
        %v2492 = vadd.f32 %v2443, %v2491
        %2493 = vmatmul.bf16.gmra.mxu0 %v798
        %v2494 = vpop.f32.mrf.mxu0
        %v2495 = vadd.f32 %v2446, %v2494
        %v2496 = vpop.f32.mrf.mxu0
        %v2497 = vadd.f32 %v2448, %v2496
        %2498 = vmatmul.bf16.gmra.mxu0 %v802
        %v2499 = vpop.f32.mrf.mxu0
        %v2500 = vadd.f32 %v2451, %v2499
        %v2501 = vpop.f32.mrf.mxu0
        %v2502 = vadd.f32 %v2453, %v2501
        %2503 = vmatmul.bf16.gmra.mxu0 %v806
        %v2504 = vpop.f32.mrf.mxu0
        %v2505 = vadd.f32 %v2456, %v2504
        %v2506 = vpop.f32.mrf.mxu0
        %v2507 = vadd.f32 %v2458, %v2506
        %2508 = vmatmul.bf16.gmra.mxu0 %v810
        %v2509 = vpop.f32.mrf.mxu0
        %v2510 = vadd.f32 %v2461, %v2509
        %v2511 = vpop.f32.mrf.mxu0
        %v2512 = vadd.f32 %v2463, %v2511
        %2513 = vmatmul.bf16.gmra.mxu0 %v814
        %v2514 = vpop.f32.mrf.mxu0
        %v2515 = vadd.f32 %v2466, %v2514
        %v2516 = vpop.f32.mrf.mxu0
        %v2517 = vadd.f32 %v2468, %v2516
        %2518 = vdwg.mxu0
        %2519 = vmatpush.bf16.msra.mxu0 %v1673
        %2520 = vmatpush.bf16.msra.mxu0 %v1665
        %2521 = vmatpush.bf16.msra.mxu0 %v1657
        %2522 = vmatpush.bf16.msra.mxu0 %v1649
        %2523 = vmatpush.bf16.msra.mxu0 %v1641
        %2524 = vmatpush.bf16.msra.mxu0 %v1633
        %2525 = vmatpush.bf16.msra.mxu0 %v1625
        %2526 = vmatpush.bf16.msra.mxu0 %v1617
        %2527 = vmatmul.bf16.gmra.mxu0 %v783
        %v2528 = vpop.f32.mrf.mxu0
        %v2529 = vadd.f32 %v673, %v2528
        %v2530 = vpop.f32.mrf.mxu0
        %v2531 = vadd.f32 %v673, %v2530
        %2532 = vmatmul.bf16.gmra.mxu0 %v787
        %v2533 = vpop.f32.mrf.mxu0
        %v2534 = vadd.f32 %v673, %v2533
        %v2535 = vpop.f32.mrf.mxu0
        %v2536 = vadd.f32 %v673, %v2535
        %2537 = vmatmul.bf16.gmra.mxu0 %v791
        %v2538 = vpop.f32.mrf.mxu0
        %v2539 = vadd.f32 %v673, %v2538
        %v2540 = vpop.f32.mrf.mxu0
        %v2541 = vadd.f32 %v673, %v2540
        %2542 = vmatmul.bf16.gmra.mxu0 %v795
        %v2543 = vpop.f32.mrf.mxu0
        %v2544 = vadd.f32 %v673, %v2543
        %v2545 = vpop.f32.mrf.mxu0
        %v2546 = vadd.f32 %v673, %v2545
        %2547 = vmatmul.bf16.gmra.mxu0 %v799
        %v2548 = vpop.f32.mrf.mxu0
        %v2549 = vadd.f32 %v673, %v2548
        %v2550 = vpop.f32.mrf.mxu0
        %v2551 = vadd.f32 %v673, %v2550
        %2552 = vmatmul.bf16.gmra.mxu0 %v803
        %v2553 = vpop.f32.mrf.mxu0
        %v2554 = vadd.f32 %v673, %v2553
        %v2555 = vpop.f32.mrf.mxu0
        %v2556 = vadd.f32 %v673, %v2555
        %2557 = vmatmul.bf16.gmra.mxu0 %v807
        %v2558 = vpop.f32.mrf.mxu0
        %v2559 = vadd.f32 %v673, %v2558
        %v2560 = vpop.f32.mrf.mxu0
        %v2561 = vadd.f32 %v673, %v2560
        %2562 = vmatmul.bf16.gmra.mxu0 %v811
        %v2563 = vpop.f32.mrf.mxu0
        %v2564 = vadd.f32 %v673, %v2563
        %v2565 = vpop.f32.mrf.mxu0
        %v2566 = vadd.f32 %v673, %v2565
        %2567 = vdwg.mxu0
        %2568 = vmatpush.bf16.msra.mxu0 %v1737
        %2569 = vmatpush.bf16.msra.mxu0 %v1729
        %2570 = vmatpush.bf16.msra.mxu0 %v1721
        %2571 = vmatpush.bf16.msra.mxu0 %v1713
        %2572 = vmatpush.bf16.msra.mxu0 %v1705
        %2573 = vmatpush.bf16.msra.mxu0 %v1697
        %2574 = vmatpush.bf16.msra.mxu0 %v1689
        %2575 = vmatpush.bf16.msra.mxu0 %v1681
        %2576 = vmatmul.bf16.gmra.mxu0 %v784
        %v2577 = vpop.f32.mrf.mxu0
        %v2578 = vadd.f32 %v2529, %v2577
        %v2579 = vpop.f32.mrf.mxu0
        %v2580 = vadd.f32 %v2531, %v2579
        %2581 = vmatmul.bf16.gmra.mxu0 %v788
        %v2582 = vpop.f32.mrf.mxu0
        %v2583 = vadd.f32 %v2534, %v2582
        %v2584 = vpop.f32.mrf.mxu0
        %v2585 = vadd.f32 %v2536, %v2584
        %2586 = vmatmul.bf16.gmra.mxu0 %v792
        %v2587 = vpop.f32.mrf.mxu0
        %v2588 = vadd.f32 %v2539, %v2587
        %v2589 = vpop.f32.mrf.mxu0
        %v2590 = vadd.f32 %v2541, %v2589
        %2591 = vmatmul.bf16.gmra.mxu0 %v796
        %v2592 = vpop.f32.mrf.mxu0
        %v2593 = vadd.f32 %v2544, %v2592
        %v2594 = vpop.f32.mrf.mxu0
        %v2595 = vadd.f32 %v2546, %v2594
        %2596 = vmatmul.bf16.gmra.mxu0 %v800
        %v2597 = vpop.f32.mrf.mxu0
        %v2598 = vadd.f32 %v2549, %v2597
        %v2599 = vpop.f32.mrf.mxu0
        %v2600 = vadd.f32 %v2551, %v2599
        %2601 = vmatmul.bf16.gmra.mxu0 %v804
        %v2602 = vpop.f32.mrf.mxu0
        %v2603 = vadd.f32 %v2554, %v2602
        %v2604 = vpop.f32.mrf.mxu0
        %v2605 = vadd.f32 %v2556, %v2604
        %2606 = vmatmul.bf16.gmra.mxu0 %v808
        %v2607 = vpop.f32.mrf.mxu0
        %v2608 = vadd.f32 %v2559, %v2607
        %v2609 = vpop.f32.mrf.mxu0
        %v2610 = vadd.f32 %v2561, %v2609
        %2611 = vmatmul.bf16.gmra.mxu0 %v812
        %v2612 = vpop.f32.mrf.mxu0
        %v2613 = vadd.f32 %v2564, %v2612
        %v2614 = vpop.f32.mrf.mxu0
        %v2615 = vadd.f32 %v2566, %v2614
        %2616 = vdwg.mxu0
        %2617 = vmatpush.bf16.msra.mxu0 %v1801
        %2618 = vmatpush.bf16.msra.mxu0 %v1793
        %2619 = vmatpush.bf16.msra.mxu0 %v1785
        %2620 = vmatpush.bf16.msra.mxu0 %v1777
        %2621 = vmatpush.bf16.msra.mxu0 %v1769
        %2622 = vmatpush.bf16.msra.mxu0 %v1761
        %2623 = vmatpush.bf16.msra.mxu0 %v1753
        %2624 = vmatpush.bf16.msra.mxu0 %v1745
        %2625 = vmatmul.bf16.gmra.mxu0 %v785
        %v2626 = vpop.f32.mrf.mxu0
        %v2627 = vadd.f32 %v2578, %v2626
        %v2628 = vpop.f32.mrf.mxu0
        %v2629 = vadd.f32 %v2580, %v2628
        %2630 = vmatmul.bf16.gmra.mxu0 %v789
        %v2631 = vpop.f32.mrf.mxu0
        %v2632 = vadd.f32 %v2583, %v2631
        %v2633 = vpop.f32.mrf.mxu0
        %v2634 = vadd.f32 %v2585, %v2633
        %2635 = vmatmul.bf16.gmra.mxu0 %v793
        %v2636 = vpop.f32.mrf.mxu0
        %v2637 = vadd.f32 %v2588, %v2636
        %v2638 = vpop.f32.mrf.mxu0
        %v2639 = vadd.f32 %v2590, %v2638
        %2640 = vmatmul.bf16.gmra.mxu0 %v797
        %v2641 = vpop.f32.mrf.mxu0
        %v2642 = vadd.f32 %v2593, %v2641
        %v2643 = vpop.f32.mrf.mxu0
        %v2644 = vadd.f32 %v2595, %v2643
        %2645 = vmatmul.bf16.gmra.mxu0 %v801
        %v2646 = vpop.f32.mrf.mxu0
        %v2647 = vadd.f32 %v2598, %v2646
        %v2648 = vpop.f32.mrf.mxu0
        %v2649 = vadd.f32 %v2600, %v2648
        %2650 = vmatmul.bf16.gmra.mxu0 %v805
        %v2651 = vpop.f32.mrf.mxu0
        %v2652 = vadd.f32 %v2603, %v2651
        %v2653 = vpop.f32.mrf.mxu0
        %v2654 = vadd.f32 %v2605, %v2653
        %2655 = vmatmul.bf16.gmra.mxu0 %v809
        %v2656 = vpop.f32.mrf.mxu0
        %v2657 = vadd.f32 %v2608, %v2656
        %v2658 = vpop.f32.mrf.mxu0
        %v2659 = vadd.f32 %v2610, %v2658
        %2660 = vmatmul.bf16.gmra.mxu0 %v813
        %v2661 = vpop.f32.mrf.mxu0
        %v2662 = vadd.f32 %v2613, %v2661
        %v2663 = vpop.f32.mrf.mxu0
        %v2664 = vadd.f32 %v2615, %v2663
        %2665 = vdwg.mxu0
        %2666 = vmatpush.bf16.msra.mxu0 %v1865
        %2667 = vmatpush.bf16.msra.mxu0 %v1857
        %2668 = vmatpush.bf16.msra.mxu0 %v1849
        %2669 = vmatpush.bf16.msra.mxu0 %v1841
        %2670 = vmatpush.bf16.msra.mxu0 %v1833
        %2671 = vmatpush.bf16.msra.mxu0 %v1825
        %2672 = vmatpush.bf16.msra.mxu0 %v1817
        %2673 = vmatpush.bf16.msra.mxu0 %v1809
        %2674 = vmatmul.bf16.gmra.mxu0 %v786
        %v2675 = vpop.f32.mrf.mxu0
        %v2676 = vadd.f32 %v2627, %v2675
        %v2677 = vpop.f32.mrf.mxu0
        %v2678 = vadd.f32 %v2629, %v2677
        %2679 = vmatmul.bf16.gmra.mxu0 %v790
        %v2680 = vpop.f32.mrf.mxu0
        %v2681 = vadd.f32 %v2632, %v2680
        %v2682 = vpop.f32.mrf.mxu0
        %v2683 = vadd.f32 %v2634, %v2682
        %2684 = vmatmul.bf16.gmra.mxu0 %v794
        %v2685 = vpop.f32.mrf.mxu0
        %v2686 = vadd.f32 %v2637, %v2685
        %v2687 = vpop.f32.mrf.mxu0
        %v2688 = vadd.f32 %v2639, %v2687
        %2689 = vmatmul.bf16.gmra.mxu0 %v798
        %v2690 = vpop.f32.mrf.mxu0
        %v2691 = vadd.f32 %v2642, %v2690
        %v2692 = vpop.f32.mrf.mxu0
        %v2693 = vadd.f32 %v2644, %v2692
        %2694 = vmatmul.bf16.gmra.mxu0 %v802
        %v2695 = vpop.f32.mrf.mxu0
        %v2696 = vadd.f32 %v2647, %v2695
        %v2697 = vpop.f32.mrf.mxu0
        %v2698 = vadd.f32 %v2649, %v2697
        %2699 = vmatmul.bf16.gmra.mxu0 %v806
        %v2700 = vpop.f32.mrf.mxu0
        %v2701 = vadd.f32 %v2652, %v2700
        %v2702 = vpop.f32.mrf.mxu0
        %v2703 = vadd.f32 %v2654, %v2702
        %2704 = vmatmul.bf16.gmra.mxu0 %v810
        %v2705 = vpop.f32.mrf.mxu0
        %v2706 = vadd.f32 %v2657, %v2705
        %v2707 = vpop.f32.mrf.mxu0
        %v2708 = vadd.f32 %v2659, %v2707
        %2709 = vmatmul.bf16.gmra.mxu0 %v814
        %v2710 = vpop.f32.mrf.mxu0
        %v2711 = vadd.f32 %v2662, %v2710
        %v2712 = vpop.f32.mrf.mxu0
        %v2713 = vadd.f32 %v2664, %v2712
        %2714 = vdwg.mxu0
        %2715 = vmatpush.bf16.msra.mxu0 %v1674
        %2716 = vmatpush.bf16.msra.mxu0 %v1666
        %2717 = vmatpush.bf16.msra.mxu0 %v1658
        %2718 = vmatpush.bf16.msra.mxu0 %v1650
        %2719 = vmatpush.bf16.msra.mxu0 %v1642
        %2720 = vmatpush.bf16.msra.mxu0 %v1634
        %2721 = vmatpush.bf16.msra.mxu0 %v1626
        %2722 = vmatpush.bf16.msra.mxu0 %v1618
        %2723 = vmatmul.bf16.gmra.mxu0 %v783
        %v2724 = vpop.f32.mrf.mxu0
        %v2725 = vadd.f32 %v674, %v2724
        %v2726 = vpop.f32.mrf.mxu0
        %v2727 = vadd.f32 %v674, %v2726
        %2728 = vmatmul.bf16.gmra.mxu0 %v787
        %v2729 = vpop.f32.mrf.mxu0
        %v2730 = vadd.f32 %v674, %v2729
        %v2731 = vpop.f32.mrf.mxu0
        %v2732 = vadd.f32 %v674, %v2731
        %2733 = vmatmul.bf16.gmra.mxu0 %v791
        %v2734 = vpop.f32.mrf.mxu0
        %v2735 = vadd.f32 %v674, %v2734
        %v2736 = vpop.f32.mrf.mxu0
        %v2737 = vadd.f32 %v674, %v2736
        %2738 = vmatmul.bf16.gmra.mxu0 %v795
        %v2739 = vpop.f32.mrf.mxu0
        %v2740 = vadd.f32 %v674, %v2739
        %v2741 = vpop.f32.mrf.mxu0
        %v2742 = vadd.f32 %v674, %v2741
        %2743 = vmatmul.bf16.gmra.mxu0 %v799
        %v2744 = vpop.f32.mrf.mxu0
        %v2745 = vadd.f32 %v674, %v2744
        %v2746 = vpop.f32.mrf.mxu0
        %v2747 = vadd.f32 %v674, %v2746
        %2748 = vmatmul.bf16.gmra.mxu0 %v803
        %v2749 = vpop.f32.mrf.mxu0
        %v2750 = vadd.f32 %v674, %v2749
        %v2751 = vpop.f32.mrf.mxu0
        %v2752 = vadd.f32 %v674, %v2751
        %2753 = vmatmul.bf16.gmra.mxu0 %v807
        %v2754 = vpop.f32.mrf.mxu0
        %v2755 = vadd.f32 %v674, %v2754
        %v2756 = vpop.f32.mrf.mxu0
        %v2757 = vadd.f32 %v674, %v2756
        %2758 = vmatmul.bf16.gmra.mxu0 %v811
        %v2759 = vpop.f32.mrf.mxu0
        %v2760 = vadd.f32 %v674, %v2759
        %v2761 = vpop.f32.mrf.mxu0
        %v2762 = vadd.f32 %v674, %v2761
        %2763 = vdwg.mxu0
        %2764 = vmatpush.bf16.msra.mxu0 %v1738
        %2765 = vmatpush.bf16.msra.mxu0 %v1730
        %2766 = vmatpush.bf16.msra.mxu0 %v1722
        %2767 = vmatpush.bf16.msra.mxu0 %v1714
        %2768 = vmatpush.bf16.msra.mxu0 %v1706
        %2769 = vmatpush.bf16.msra.mxu0 %v1698
        %2770 = vmatpush.bf16.msra.mxu0 %v1690
        %2771 = vmatpush.bf16.msra.mxu0 %v1682
        %2772 = vmatmul.bf16.gmra.mxu0 %v784
        %v2773 = vpop.f32.mrf.mxu0
        %v2774 = vadd.f32 %v2725, %v2773
        %v2775 = vpop.f32.mrf.mxu0
        %v2776 = vadd.f32 %v2727, %v2775
        %2777 = vmatmul.bf16.gmra.mxu0 %v788
        %v2778 = vpop.f32.mrf.mxu0
        %v2779 = vadd.f32 %v2730, %v2778
        %v2780 = vpop.f32.mrf.mxu0
        %v2781 = vadd.f32 %v2732, %v2780
        %2782 = vmatmul.bf16.gmra.mxu0 %v792
        %v2783 = vpop.f32.mrf.mxu0
        %v2784 = vadd.f32 %v2735, %v2783
        %v2785 = vpop.f32.mrf.mxu0
        %v2786 = vadd.f32 %v2737, %v2785
        %2787 = vmatmul.bf16.gmra.mxu0 %v796
        %v2788 = vpop.f32.mrf.mxu0
        %v2789 = vadd.f32 %v2740, %v2788
        %v2790 = vpop.f32.mrf.mxu0
        %v2791 = vadd.f32 %v2742, %v2790
        %2792 = vmatmul.bf16.gmra.mxu0 %v800
        %v2793 = vpop.f32.mrf.mxu0
        %v2794 = vadd.f32 %v2745, %v2793
        %v2795 = vpop.f32.mrf.mxu0
        %v2796 = vadd.f32 %v2747, %v2795
        %2797 = vmatmul.bf16.gmra.mxu0 %v804
        %v2798 = vpop.f32.mrf.mxu0
        %v2799 = vadd.f32 %v2750, %v2798
        %v2800 = vpop.f32.mrf.mxu0
        %v2801 = vadd.f32 %v2752, %v2800
        %2802 = vmatmul.bf16.gmra.mxu0 %v808
        %v2803 = vpop.f32.mrf.mxu0
        %v2804 = vadd.f32 %v2755, %v2803
        %v2805 = vpop.f32.mrf.mxu0
        %v2806 = vadd.f32 %v2757, %v2805
        %2807 = vmatmul.bf16.gmra.mxu0 %v812
        %v2808 = vpop.f32.mrf.mxu0
        %v2809 = vadd.f32 %v2760, %v2808
        %v2810 = vpop.f32.mrf.mxu0
        %v2811 = vadd.f32 %v2762, %v2810
        %2812 = vdwg.mxu0
        %2813 = vmatpush.bf16.msra.mxu0 %v1802
        %2814 = vmatpush.bf16.msra.mxu0 %v1794
        %2815 = vmatpush.bf16.msra.mxu0 %v1786
        %2816 = vmatpush.bf16.msra.mxu0 %v1778
        %2817 = vmatpush.bf16.msra.mxu0 %v1770
        %2818 = vmatpush.bf16.msra.mxu0 %v1762
        %2819 = vmatpush.bf16.msra.mxu0 %v1754
        %2820 = vmatpush.bf16.msra.mxu0 %v1746
        %2821 = vmatmul.bf16.gmra.mxu0 %v785
        %v2822 = vpop.f32.mrf.mxu0
        %v2823 = vadd.f32 %v2774, %v2822
        %v2824 = vpop.f32.mrf.mxu0
        %v2825 = vadd.f32 %v2776, %v2824
        %2826 = vmatmul.bf16.gmra.mxu0 %v789
        %v2827 = vpop.f32.mrf.mxu0
        %v2828 = vadd.f32 %v2779, %v2827
        %v2829 = vpop.f32.mrf.mxu0
        %v2830 = vadd.f32 %v2781, %v2829
        %2831 = vmatmul.bf16.gmra.mxu0 %v793
        %v2832 = vpop.f32.mrf.mxu0
        %v2833 = vadd.f32 %v2784, %v2832
        %v2834 = vpop.f32.mrf.mxu0
        %v2835 = vadd.f32 %v2786, %v2834
        %2836 = vmatmul.bf16.gmra.mxu0 %v797
        %v2837 = vpop.f32.mrf.mxu0
        %v2838 = vadd.f32 %v2789, %v2837
        %v2839 = vpop.f32.mrf.mxu0
        %v2840 = vadd.f32 %v2791, %v2839
        %2841 = vmatmul.bf16.gmra.mxu0 %v801
        %v2842 = vpop.f32.mrf.mxu0
        %v2843 = vadd.f32 %v2794, %v2842
        %v2844 = vpop.f32.mrf.mxu0
        %v2845 = vadd.f32 %v2796, %v2844
        %2846 = vmatmul.bf16.gmra.mxu0 %v805
        %v2847 = vpop.f32.mrf.mxu0
        %v2848 = vadd.f32 %v2799, %v2847
        %v2849 = vpop.f32.mrf.mxu0
        %v2850 = vadd.f32 %v2801, %v2849
        %2851 = vmatmul.bf16.gmra.mxu0 %v809
        %v2852 = vpop.f32.mrf.mxu0
        %v2853 = vadd.f32 %v2804, %v2852
        %v2854 = vpop.f32.mrf.mxu0
        %v2855 = vadd.f32 %v2806, %v2854
        %2856 = vmatmul.bf16.gmra.mxu0 %v813
        %v2857 = vpop.f32.mrf.mxu0
        %v2858 = vadd.f32 %v2809, %v2857
        %v2859 = vpop.f32.mrf.mxu0
        %v2860 = vadd.f32 %v2811, %v2859
        %2861 = vdwg.mxu0
        %2862 = vmatpush.bf16.msra.mxu0 %v1866
        %2863 = vmatpush.bf16.msra.mxu0 %v1858
        %2864 = vmatpush.bf16.msra.mxu0 %v1850
        %2865 = vmatpush.bf16.msra.mxu0 %v1842
        %2866 = vmatpush.bf16.msra.mxu0 %v1834
        %2867 = vmatpush.bf16.msra.mxu0 %v1826
        %2868 = vmatpush.bf16.msra.mxu0 %v1818
        %2869 = vmatpush.bf16.msra.mxu0 %v1810
        %2870 = vmatmul.bf16.gmra.mxu0 %v786
        %v2871 = vpop.f32.mrf.mxu0
        %v2872 = vadd.f32 %v2823, %v2871
        %v2873 = vpop.f32.mrf.mxu0
        %v2874 = vadd.f32 %v2825, %v2873
        %2875 = vmatmul.bf16.gmra.mxu0 %v790
        %v2876 = vpop.f32.mrf.mxu0
        %v2877 = vadd.f32 %v2828, %v2876
        %v2878 = vpop.f32.mrf.mxu0
        %v2879 = vadd.f32 %v2830, %v2878
        %2880 = vmatmul.bf16.gmra.mxu0 %v794
        %v2881 = vpop.f32.mrf.mxu0
        %v2882 = vadd.f32 %v2833, %v2881
        %v2883 = vpop.f32.mrf.mxu0
        %v2884 = vadd.f32 %v2835, %v2883
        %2885 = vmatmul.bf16.gmra.mxu0 %v798
        %v2886 = vpop.f32.mrf.mxu0
        %v2887 = vadd.f32 %v2838, %v2886
        %v2888 = vpop.f32.mrf.mxu0
        %v2889 = vadd.f32 %v2840, %v2888
        %2890 = vmatmul.bf16.gmra.mxu0 %v802
        %v2891 = vpop.f32.mrf.mxu0
        %v2892 = vadd.f32 %v2843, %v2891
        %v2893 = vpop.f32.mrf.mxu0
        %v2894 = vadd.f32 %v2845, %v2893
        %2895 = vmatmul.bf16.gmra.mxu0 %v806
        %v2896 = vpop.f32.mrf.mxu0
        %v2897 = vadd.f32 %v2848, %v2896
        %v2898 = vpop.f32.mrf.mxu0
        %v2899 = vadd.f32 %v2850, %v2898
        %2900 = vmatmul.bf16.gmra.mxu0 %v810
        %v2901 = vpop.f32.mrf.mxu0
        %v2902 = vadd.f32 %v2853, %v2901
        %v2903 = vpop.f32.mrf.mxu0
        %v2904 = vadd.f32 %v2855, %v2903
        %2905 = vmatmul.bf16.gmra.mxu0 %v814
        %v2906 = vpop.f32.mrf.mxu0
        %v2907 = vadd.f32 %v2858, %v2906
        %v2908 = vpop.f32.mrf.mxu0
        %v2909 = vadd.f32 %v2860, %v2908
        %2910 = vdwg.mxu0
        %2911 = vmatpush.bf16.msra.mxu0 %v1675
        %2912 = vmatpush.bf16.msra.mxu0 %v1667
        %2913 = vmatpush.bf16.msra.mxu0 %v1659
        %2914 = vmatpush.bf16.msra.mxu0 %v1651
        %2915 = vmatpush.bf16.msra.mxu0 %v1643
        %2916 = vmatpush.bf16.msra.mxu0 %v1635
        %2917 = vmatpush.bf16.msra.mxu0 %v1627
        %2918 = vmatpush.bf16.msra.mxu0 %v1619
        %2919 = vmatmul.bf16.gmra.mxu0 %v783
        %v2920 = vpop.f32.mrf.mxu0
        %v2921 = vadd.f32 %v675, %v2920
        %v2922 = vpop.f32.mrf.mxu0
        %v2923 = vadd.f32 %v675, %v2922
        %2924 = vmatmul.bf16.gmra.mxu0 %v787
        %v2925 = vpop.f32.mrf.mxu0
        %v2926 = vadd.f32 %v675, %v2925
        %v2927 = vpop.f32.mrf.mxu0
        %v2928 = vadd.f32 %v675, %v2927
        %2929 = vmatmul.bf16.gmra.mxu0 %v791
        %v2930 = vpop.f32.mrf.mxu0
        %v2931 = vadd.f32 %v675, %v2930
        %v2932 = vpop.f32.mrf.mxu0
        %v2933 = vadd.f32 %v675, %v2932
        %2934 = vmatmul.bf16.gmra.mxu0 %v795
        %v2935 = vpop.f32.mrf.mxu0
        %v2936 = vadd.f32 %v675, %v2935
        %v2937 = vpop.f32.mrf.mxu0
        %v2938 = vadd.f32 %v675, %v2937
        %2939 = vmatmul.bf16.gmra.mxu0 %v799
        %v2940 = vpop.f32.mrf.mxu0
        %v2941 = vadd.f32 %v675, %v2940
        %v2942 = vpop.f32.mrf.mxu0
        %v2943 = vadd.f32 %v675, %v2942
        %2944 = vmatmul.bf16.gmra.mxu0 %v803
        %v2945 = vpop.f32.mrf.mxu0
        %v2946 = vadd.f32 %v675, %v2945
        %v2947 = vpop.f32.mrf.mxu0
        %v2948 = vadd.f32 %v675, %v2947
        %2949 = vmatmul.bf16.gmra.mxu0 %v807
        %v2950 = vpop.f32.mrf.mxu0
        %v2951 = vadd.f32 %v675, %v2950
        %v2952 = vpop.f32.mrf.mxu0
        %v2953 = vadd.f32 %v675, %v2952
        %2954 = vmatmul.bf16.gmra.mxu0 %v811
        %v2955 = vpop.f32.mrf.mxu0
        %v2956 = vadd.f32 %v675, %v2955
        %v2957 = vpop.f32.mrf.mxu0
        %v2958 = vadd.f32 %v675, %v2957
        %2959 = vdwg.mxu0
        %2960 = vmatpush.bf16.msra.mxu0 %v1739
        %2961 = vmatpush.bf16.msra.mxu0 %v1731
        %2962 = vmatpush.bf16.msra.mxu0 %v1723
        %2963 = vmatpush.bf16.msra.mxu0 %v1715
        %2964 = vmatpush.bf16.msra.mxu0 %v1707
        %2965 = vmatpush.bf16.msra.mxu0 %v1699
        %2966 = vmatpush.bf16.msra.mxu0 %v1691
        %2967 = vmatpush.bf16.msra.mxu0 %v1683
        %2968 = vmatmul.bf16.gmra.mxu0 %v784
        %v2969 = vpop.f32.mrf.mxu0
        %v2970 = vadd.f32 %v2921, %v2969
        %v2971 = vpop.f32.mrf.mxu0
        %v2972 = vadd.f32 %v2923, %v2971
        %2973 = vmatmul.bf16.gmra.mxu0 %v788
        %v2974 = vpop.f32.mrf.mxu0
        %v2975 = vadd.f32 %v2926, %v2974
        %v2976 = vpop.f32.mrf.mxu0
        %v2977 = vadd.f32 %v2928, %v2976
        %2978 = vmatmul.bf16.gmra.mxu0 %v792
        %v2979 = vpop.f32.mrf.mxu0
        %v2980 = vadd.f32 %v2931, %v2979
        %v2981 = vpop.f32.mrf.mxu0
        %v2982 = vadd.f32 %v2933, %v2981
        %2983 = vmatmul.bf16.gmra.mxu0 %v796
        %v2984 = vpop.f32.mrf.mxu0
        %v2985 = vadd.f32 %v2936, %v2984
        %v2986 = vpop.f32.mrf.mxu0
        %v2987 = vadd.f32 %v2938, %v2986
        %2988 = vmatmul.bf16.gmra.mxu0 %v800
        %v2989 = vpop.f32.mrf.mxu0
        %v2990 = vadd.f32 %v2941, %v2989
        %v2991 = vpop.f32.mrf.mxu0
        %v2992 = vadd.f32 %v2943, %v2991
        %2993 = vmatmul.bf16.gmra.mxu0 %v804
        %v2994 = vpop.f32.mrf.mxu0
        %v2995 = vadd.f32 %v2946, %v2994
        %v2996 = vpop.f32.mrf.mxu0
        %v2997 = vadd.f32 %v2948, %v2996
        %2998 = vmatmul.bf16.gmra.mxu0 %v808
        %v2999 = vpop.f32.mrf.mxu0
        %v3000 = vadd.f32 %v2951, %v2999
        %v3001 = vpop.f32.mrf.mxu0
        %v3002 = vadd.f32 %v2953, %v3001
        %3003 = vmatmul.bf16.gmra.mxu0 %v812
        %v3004 = vpop.f32.mrf.mxu0
        %v3005 = vadd.f32 %v2956, %v3004
        %v3006 = vpop.f32.mrf.mxu0
        %v3007 = vadd.f32 %v2958, %v3006
        %3008 = vdwg.mxu0
        %3009 = vmatpush.bf16.msra.mxu0 %v1803
        %3010 = vmatpush.bf16.msra.mxu0 %v1795
        %3011 = vmatpush.bf16.msra.mxu0 %v1787
        %3012 = vmatpush.bf16.msra.mxu0 %v1779
        %3013 = vmatpush.bf16.msra.mxu0 %v1771
        %3014 = vmatpush.bf16.msra.mxu0 %v1763
        %3015 = vmatpush.bf16.msra.mxu0 %v1755
        %3016 = vmatpush.bf16.msra.mxu0 %v1747
        %3017 = vmatmul.bf16.gmra.mxu0 %v785
        %v3018 = vpop.f32.mrf.mxu0
        %v3019 = vadd.f32 %v2970, %v3018
        %v3020 = vpop.f32.mrf.mxu0
        %v3021 = vadd.f32 %v2972, %v3020
        %3022 = vmatmul.bf16.gmra.mxu0 %v789
        %v3023 = vpop.f32.mrf.mxu0
        %v3024 = vadd.f32 %v2975, %v3023
        %v3025 = vpop.f32.mrf.mxu0
        %v3026 = vadd.f32 %v2977, %v3025
        %3027 = vmatmul.bf16.gmra.mxu0 %v793
        %v3028 = vpop.f32.mrf.mxu0
        %v3029 = vadd.f32 %v2980, %v3028
        %v3030 = vpop.f32.mrf.mxu0
        %v3031 = vadd.f32 %v2982, %v3030
        %3032 = vmatmul.bf16.gmra.mxu0 %v797
        %v3033 = vpop.f32.mrf.mxu0
        %v3034 = vadd.f32 %v2985, %v3033
        %v3035 = vpop.f32.mrf.mxu0
        %v3036 = vadd.f32 %v2987, %v3035
        %3037 = vmatmul.bf16.gmra.mxu0 %v801
        %v3038 = vpop.f32.mrf.mxu0
        %v3039 = vadd.f32 %v2990, %v3038
        %v3040 = vpop.f32.mrf.mxu0
        %v3041 = vadd.f32 %v2992, %v3040
        %3042 = vmatmul.bf16.gmra.mxu0 %v805
        %v3043 = vpop.f32.mrf.mxu0
        %v3044 = vadd.f32 %v2995, %v3043
        %v3045 = vpop.f32.mrf.mxu0
        %v3046 = vadd.f32 %v2997, %v3045
        %3047 = vmatmul.bf16.gmra.mxu0 %v809
        %v3048 = vpop.f32.mrf.mxu0
        %v3049 = vadd.f32 %v3000, %v3048
        %v3050 = vpop.f32.mrf.mxu0
        %v3051 = vadd.f32 %v3002, %v3050
        %3052 = vmatmul.bf16.gmra.mxu0 %v813
        %v3053 = vpop.f32.mrf.mxu0
        %v3054 = vadd.f32 %v3005, %v3053
        %v3055 = vpop.f32.mrf.mxu0
        %v3056 = vadd.f32 %v3007, %v3055
        %3057 = vdwg.mxu0
        %3058 = vmatpush.bf16.msra.mxu0 %v1867
        %3059 = vmatpush.bf16.msra.mxu0 %v1859
        %3060 = vmatpush.bf16.msra.mxu0 %v1851
        %3061 = vmatpush.bf16.msra.mxu0 %v1843
        %3062 = vmatpush.bf16.msra.mxu0 %v1835
        %3063 = vmatpush.bf16.msra.mxu0 %v1827
        %3064 = vmatpush.bf16.msra.mxu0 %v1819
        %3065 = vmatpush.bf16.msra.mxu0 %v1811
        %3066 = vmatmul.bf16.gmra.mxu0 %v786
        %v3067 = vpop.f32.mrf.mxu0
        %v3068 = vadd.f32 %v3019, %v3067
        %v3069 = vpop.f32.mrf.mxu0
        %v3070 = vadd.f32 %v3021, %v3069
        %3071 = vmatmul.bf16.gmra.mxu0 %v790
        %v3072 = vpop.f32.mrf.mxu0
        %v3073 = vadd.f32 %v3024, %v3072
        %v3074 = vpop.f32.mrf.mxu0
        %v3075 = vadd.f32 %v3026, %v3074
        %3076 = vmatmul.bf16.gmra.mxu0 %v794
        %v3077 = vpop.f32.mrf.mxu0
        %v3078 = vadd.f32 %v3029, %v3077
        %v3079 = vpop.f32.mrf.mxu0
        %v3080 = vadd.f32 %v3031, %v3079
        %3081 = vmatmul.bf16.gmra.mxu0 %v798
        %v3082 = vpop.f32.mrf.mxu0
        %v3083 = vadd.f32 %v3034, %v3082
        %v3084 = vpop.f32.mrf.mxu0
        %v3085 = vadd.f32 %v3036, %v3084
        %3086 = vmatmul.bf16.gmra.mxu0 %v802
        %v3087 = vpop.f32.mrf.mxu0
        %v3088 = vadd.f32 %v3039, %v3087
        %v3089 = vpop.f32.mrf.mxu0
        %v3090 = vadd.f32 %v3041, %v3089
        %3091 = vmatmul.bf16.gmra.mxu0 %v806
        %v3092 = vpop.f32.mrf.mxu0
        %v3093 = vadd.f32 %v3044, %v3092
        %v3094 = vpop.f32.mrf.mxu0
        %v3095 = vadd.f32 %v3046, %v3094
        %3096 = vmatmul.bf16.gmra.mxu0 %v810
        %v3097 = vpop.f32.mrf.mxu0
        %v3098 = vadd.f32 %v3049, %v3097
        %v3099 = vpop.f32.mrf.mxu0
        %v3100 = vadd.f32 %v3051, %v3099
        %3101 = vmatmul.bf16.gmra.mxu0 %v814
        %v3102 = vpop.f32.mrf.mxu0
        %v3103 = vadd.f32 %v3054, %v3102
        %v3104 = vpop.f32.mrf.mxu0
        %v3105 = vadd.f32 %v3056, %v3104
        %3106 = vdwg.mxu0
        %3107 = vmatpush.bf16.msra.mxu0 %v1676
        %3108 = vmatpush.bf16.msra.mxu0 %v1668
        %3109 = vmatpush.bf16.msra.mxu0 %v1660
        %3110 = vmatpush.bf16.msra.mxu0 %v1652
        %3111 = vmatpush.bf16.msra.mxu0 %v1644
        %3112 = vmatpush.bf16.msra.mxu0 %v1636
        %3113 = vmatpush.bf16.msra.mxu0 %v1628
        %3114 = vmatpush.bf16.msra.mxu0 %v1620
        %3115 = vmatmul.bf16.gmra.mxu0 %v783
        %v3116 = vpop.f32.mrf.mxu0
        %v3117 = vadd.f32 %v676, %v3116
        %v3118 = vpop.f32.mrf.mxu0
        %v3119 = vadd.f32 %v676, %v3118
        %3120 = vmatmul.bf16.gmra.mxu0 %v787
        %v3121 = vpop.f32.mrf.mxu0
        %v3122 = vadd.f32 %v676, %v3121
        %v3123 = vpop.f32.mrf.mxu0
        %v3124 = vadd.f32 %v676, %v3123
        %3125 = vmatmul.bf16.gmra.mxu0 %v791
        %v3126 = vpop.f32.mrf.mxu0
        %v3127 = vadd.f32 %v676, %v3126
        %v3128 = vpop.f32.mrf.mxu0
        %v3129 = vadd.f32 %v676, %v3128
        %3130 = vmatmul.bf16.gmra.mxu0 %v795
        %v3131 = vpop.f32.mrf.mxu0
        %v3132 = vadd.f32 %v676, %v3131
        %v3133 = vpop.f32.mrf.mxu0
        %v3134 = vadd.f32 %v676, %v3133
        %3135 = vmatmul.bf16.gmra.mxu0 %v799
        %v3136 = vpop.f32.mrf.mxu0
        %v3137 = vadd.f32 %v676, %v3136
        %v3138 = vpop.f32.mrf.mxu0
        %v3139 = vadd.f32 %v676, %v3138
        %3140 = vmatmul.bf16.gmra.mxu0 %v803
        %v3141 = vpop.f32.mrf.mxu0
        %v3142 = vadd.f32 %v676, %v3141
        %v3143 = vpop.f32.mrf.mxu0
        %v3144 = vadd.f32 %v676, %v3143
        %3145 = vmatmul.bf16.gmra.mxu0 %v807
        %v3146 = vpop.f32.mrf.mxu0
        %v3147 = vadd.f32 %v676, %v3146
        %v3148 = vpop.f32.mrf.mxu0
        %v3149 = vadd.f32 %v676, %v3148
        %3150 = vmatmul.bf16.gmra.mxu0 %v811
        %v3151 = vpop.f32.mrf.mxu0
        %v3152 = vadd.f32 %v676, %v3151
        %v3153 = vpop.f32.mrf.mxu0
        %v3154 = vadd.f32 %v676, %v3153
        %3155 = vdwg.mxu0
        %3156 = vmatpush.bf16.msra.mxu0 %v1740
        %3157 = vmatpush.bf16.msra.mxu0 %v1732
        %3158 = vmatpush.bf16.msra.mxu0 %v1724
        %3159 = vmatpush.bf16.msra.mxu0 %v1716
        %3160 = vmatpush.bf16.msra.mxu0 %v1708
        %3161 = vmatpush.bf16.msra.mxu0 %v1700
        %3162 = vmatpush.bf16.msra.mxu0 %v1692
        %3163 = vmatpush.bf16.msra.mxu0 %v1684
        %3164 = vmatmul.bf16.gmra.mxu0 %v784
        %v3165 = vpop.f32.mrf.mxu0
        %v3166 = vadd.f32 %v3117, %v3165
        %v3167 = vpop.f32.mrf.mxu0
        %v3168 = vadd.f32 %v3119, %v3167
        %3169 = vmatmul.bf16.gmra.mxu0 %v788
        %v3170 = vpop.f32.mrf.mxu0
        %v3171 = vadd.f32 %v3122, %v3170
        %v3172 = vpop.f32.mrf.mxu0
        %v3173 = vadd.f32 %v3124, %v3172
        %3174 = vmatmul.bf16.gmra.mxu0 %v792
        %v3175 = vpop.f32.mrf.mxu0
        %v3176 = vadd.f32 %v3127, %v3175
        %v3177 = vpop.f32.mrf.mxu0
        %v3178 = vadd.f32 %v3129, %v3177
        %3179 = vmatmul.bf16.gmra.mxu0 %v796
        %v3180 = vpop.f32.mrf.mxu0
        %v3181 = vadd.f32 %v3132, %v3180
        %v3182 = vpop.f32.mrf.mxu0
        %v3183 = vadd.f32 %v3134, %v3182
        %3184 = vmatmul.bf16.gmra.mxu0 %v800
        %v3185 = vpop.f32.mrf.mxu0
        %v3186 = vadd.f32 %v3137, %v3185
        %v3187 = vpop.f32.mrf.mxu0
        %v3188 = vadd.f32 %v3139, %v3187
        %3189 = vmatmul.bf16.gmra.mxu0 %v804
        %v3190 = vpop.f32.mrf.mxu0
        %v3191 = vadd.f32 %v3142, %v3190
        %v3192 = vpop.f32.mrf.mxu0
        %v3193 = vadd.f32 %v3144, %v3192
        %3194 = vmatmul.bf16.gmra.mxu0 %v808
        %v3195 = vpop.f32.mrf.mxu0
        %v3196 = vadd.f32 %v3147, %v3195
        %v3197 = vpop.f32.mrf.mxu0
        %v3198 = vadd.f32 %v3149, %v3197
        %3199 = vmatmul.bf16.gmra.mxu0 %v812
        %v3200 = vpop.f32.mrf.mxu0
        %v3201 = vadd.f32 %v3152, %v3200
        %v3202 = vpop.f32.mrf.mxu0
        %v3203 = vadd.f32 %v3154, %v3202
        %3204 = vdwg.mxu0
        %3205 = vmatpush.bf16.msra.mxu0 %v1804
        %3206 = vmatpush.bf16.msra.mxu0 %v1796
        %3207 = vmatpush.bf16.msra.mxu0 %v1788
        %3208 = vmatpush.bf16.msra.mxu0 %v1780
        %3209 = vmatpush.bf16.msra.mxu0 %v1772
        %3210 = vmatpush.bf16.msra.mxu0 %v1764
        %3211 = vmatpush.bf16.msra.mxu0 %v1756
        %3212 = vmatpush.bf16.msra.mxu0 %v1748
        %3213 = vmatmul.bf16.gmra.mxu0 %v785
        %v3214 = vpop.f32.mrf.mxu0
        %v3215 = vadd.f32 %v3166, %v3214
        %v3216 = vpop.f32.mrf.mxu0
        %v3217 = vadd.f32 %v3168, %v3216
        %3218 = vmatmul.bf16.gmra.mxu0 %v789
        %v3219 = vpop.f32.mrf.mxu0
        %v3220 = vadd.f32 %v3171, %v3219
        %v3221 = vpop.f32.mrf.mxu0
        %v3222 = vadd.f32 %v3173, %v3221
        %3223 = vmatmul.bf16.gmra.mxu0 %v793
        %v3224 = vpop.f32.mrf.mxu0
        %v3225 = vadd.f32 %v3176, %v3224
        %v3226 = vpop.f32.mrf.mxu0
        %v3227 = vadd.f32 %v3178, %v3226
        %3228 = vmatmul.bf16.gmra.mxu0 %v797
        %v3229 = vpop.f32.mrf.mxu0
        %v3230 = vadd.f32 %v3181, %v3229
        %v3231 = vpop.f32.mrf.mxu0
        %v3232 = vadd.f32 %v3183, %v3231
        %3233 = vmatmul.bf16.gmra.mxu0 %v801
        %v3234 = vpop.f32.mrf.mxu0
        %v3235 = vadd.f32 %v3186, %v3234
        %v3236 = vpop.f32.mrf.mxu0
        %v3237 = vadd.f32 %v3188, %v3236
        %3238 = vmatmul.bf16.gmra.mxu0 %v805
        %v3239 = vpop.f32.mrf.mxu0
        %v3240 = vadd.f32 %v3191, %v3239
        %v3241 = vpop.f32.mrf.mxu0
        %v3242 = vadd.f32 %v3193, %v3241
        %3243 = vmatmul.bf16.gmra.mxu0 %v809
        %v3244 = vpop.f32.mrf.mxu0
        %v3245 = vadd.f32 %v3196, %v3244
        %v3246 = vpop.f32.mrf.mxu0
        %v3247 = vadd.f32 %v3198, %v3246
        %3248 = vmatmul.bf16.gmra.mxu0 %v813
        %v3249 = vpop.f32.mrf.mxu0
        %v3250 = vadd.f32 %v3201, %v3249
        %v3251 = vpop.f32.mrf.mxu0
        %v3252 = vadd.f32 %v3203, %v3251
        %3253 = vdwg.mxu0
        %3254 = vmatpush.bf16.msra.mxu0 %v1868
        %3255 = vmatpush.bf16.msra.mxu0 %v1860
        %3256 = vmatpush.bf16.msra.mxu0 %v1852
        %3257 = vmatpush.bf16.msra.mxu0 %v1844
        %3258 = vmatpush.bf16.msra.mxu0 %v1836
        %3259 = vmatpush.bf16.msra.mxu0 %v1828
        %3260 = vmatpush.bf16.msra.mxu0 %v1820
        %3261 = vmatpush.bf16.msra.mxu0 %v1812
        %3262 = vmatmul.bf16.gmra.mxu0 %v786
        %v3263 = vpop.f32.mrf.mxu0
        %v3264 = vadd.f32 %v3215, %v3263
        %v3265 = vpop.f32.mrf.mxu0
        %v3266 = vadd.f32 %v3217, %v3265
        %3267 = vmatmul.bf16.gmra.mxu0 %v790
        %v3268 = vpop.f32.mrf.mxu0
        %v3269 = vadd.f32 %v3220, %v3268
        %v3270 = vpop.f32.mrf.mxu0
        %v3271 = vadd.f32 %v3222, %v3270
        %3272 = vmatmul.bf16.gmra.mxu0 %v794
        %v3273 = vpop.f32.mrf.mxu0
        %v3274 = vadd.f32 %v3225, %v3273
        %v3275 = vpop.f32.mrf.mxu0
        %v3276 = vadd.f32 %v3227, %v3275
        %3277 = vmatmul.bf16.gmra.mxu0 %v798
        %v3278 = vpop.f32.mrf.mxu0
        %v3279 = vadd.f32 %v3230, %v3278
        %v3280 = vpop.f32.mrf.mxu0
        %v3281 = vadd.f32 %v3232, %v3280
        %3282 = vmatmul.bf16.gmra.mxu0 %v802
        %v3283 = vpop.f32.mrf.mxu0
        %v3284 = vadd.f32 %v3235, %v3283
        %v3285 = vpop.f32.mrf.mxu0
        %v3286 = vadd.f32 %v3237, %v3285
        %3287 = vmatmul.bf16.gmra.mxu0 %v806
        %v3288 = vpop.f32.mrf.mxu0
        %v3289 = vadd.f32 %v3240, %v3288
        %v3290 = vpop.f32.mrf.mxu0
        %v3291 = vadd.f32 %v3242, %v3290
        %3292 = vmatmul.bf16.gmra.mxu0 %v810
        %v3293 = vpop.f32.mrf.mxu0
        %v3294 = vadd.f32 %v3245, %v3293
        %v3295 = vpop.f32.mrf.mxu0
        %v3296 = vadd.f32 %v3247, %v3295
        %3297 = vmatmul.bf16.gmra.mxu0 %v814
        %v3298 = vpop.f32.mrf.mxu0
        %v3299 = vadd.f32 %v3250, %v3298
        %v3300 = vpop.f32.mrf.mxu0
        %v3301 = vadd.f32 %v3252, %v3300
        %3302 = vdwg.mxu0
        %3303 = vmatpush.bf16.msra.mxu0 %v1677
        %3304 = vmatpush.bf16.msra.mxu0 %v1669
        %3305 = vmatpush.bf16.msra.mxu0 %v1661
        %3306 = vmatpush.bf16.msra.mxu0 %v1653
        %3307 = vmatpush.bf16.msra.mxu0 %v1645
        %3308 = vmatpush.bf16.msra.mxu0 %v1637
        %3309 = vmatpush.bf16.msra.mxu0 %v1629
        %3310 = vmatpush.bf16.msra.mxu0 %v1621
        %3311 = vmatmul.bf16.gmra.mxu0 %v783
        %v3312 = vpop.f32.mrf.mxu0
        %v3313 = vadd.f32 %v677, %v3312
        %v3314 = vpop.f32.mrf.mxu0
        %v3315 = vadd.f32 %v677, %v3314
        %3316 = vmatmul.bf16.gmra.mxu0 %v787
        %v3317 = vpop.f32.mrf.mxu0
        %v3318 = vadd.f32 %v677, %v3317
        %v3319 = vpop.f32.mrf.mxu0
        %v3320 = vadd.f32 %v677, %v3319
        %3321 = vmatmul.bf16.gmra.mxu0 %v791
        %v3322 = vpop.f32.mrf.mxu0
        %v3323 = vadd.f32 %v677, %v3322
        %v3324 = vpop.f32.mrf.mxu0
        %v3325 = vadd.f32 %v677, %v3324
        %3326 = vmatmul.bf16.gmra.mxu0 %v795
        %v3327 = vpop.f32.mrf.mxu0
        %v3328 = vadd.f32 %v677, %v3327
        %v3329 = vpop.f32.mrf.mxu0
        %v3330 = vadd.f32 %v677, %v3329
        %3331 = vmatmul.bf16.gmra.mxu0 %v799
        %v3332 = vpop.f32.mrf.mxu0
        %v3333 = vadd.f32 %v677, %v3332
        %v3334 = vpop.f32.mrf.mxu0
        %v3335 = vadd.f32 %v677, %v3334
        %3336 = vmatmul.bf16.gmra.mxu0 %v803
        %v3337 = vpop.f32.mrf.mxu0
        %v3338 = vadd.f32 %v677, %v3337
        %v3339 = vpop.f32.mrf.mxu0
        %v3340 = vadd.f32 %v677, %v3339
        %3341 = vmatmul.bf16.gmra.mxu0 %v807
        %v3342 = vpop.f32.mrf.mxu0
        %v3343 = vadd.f32 %v677, %v3342
        %v3344 = vpop.f32.mrf.mxu0
        %v3345 = vadd.f32 %v677, %v3344
        %3346 = vmatmul.bf16.gmra.mxu0 %v811
        %v3347 = vpop.f32.mrf.mxu0
        %v3348 = vadd.f32 %v677, %v3347
        %v3349 = vpop.f32.mrf.mxu0
        %v3350 = vadd.f32 %v677, %v3349
        %3351 = vdwg.mxu0
        %3352 = vmatpush.bf16.msra.mxu0 %v1741
        %3353 = vmatpush.bf16.msra.mxu0 %v1733
        %3354 = vmatpush.bf16.msra.mxu0 %v1725
        %3355 = vmatpush.bf16.msra.mxu0 %v1717
        %3356 = vmatpush.bf16.msra.mxu0 %v1709
        %3357 = vmatpush.bf16.msra.mxu0 %v1701
        %3358 = vmatpush.bf16.msra.mxu0 %v1693
        %3359 = vmatpush.bf16.msra.mxu0 %v1685
        %3360 = vmatmul.bf16.gmra.mxu0 %v784
        %v3361 = vpop.f32.mrf.mxu0
        %v3362 = vadd.f32 %v3313, %v3361
        %v3363 = vpop.f32.mrf.mxu0
        %v3364 = vadd.f32 %v3315, %v3363
        %3365 = vmatmul.bf16.gmra.mxu0 %v788
        %v3366 = vpop.f32.mrf.mxu0
        %v3367 = vadd.f32 %v3318, %v3366
        %v3368 = vpop.f32.mrf.mxu0
        %v3369 = vadd.f32 %v3320, %v3368
        %3370 = vmatmul.bf16.gmra.mxu0 %v792
        %v3371 = vpop.f32.mrf.mxu0
        %v3372 = vadd.f32 %v3323, %v3371
        %v3373 = vpop.f32.mrf.mxu0
        %v3374 = vadd.f32 %v3325, %v3373
        %3375 = vmatmul.bf16.gmra.mxu0 %v796
        %v3376 = vpop.f32.mrf.mxu0
        %v3377 = vadd.f32 %v3328, %v3376
        %v3378 = vpop.f32.mrf.mxu0
        %v3379 = vadd.f32 %v3330, %v3378
        %3380 = vmatmul.bf16.gmra.mxu0 %v800
        %v3381 = vpop.f32.mrf.mxu0
        %v3382 = vadd.f32 %v3333, %v3381
        %v3383 = vpop.f32.mrf.mxu0
        %v3384 = vadd.f32 %v3335, %v3383
        %3385 = vmatmul.bf16.gmra.mxu0 %v804
        %v3386 = vpop.f32.mrf.mxu0
        %v3387 = vadd.f32 %v3338, %v3386
        %v3388 = vpop.f32.mrf.mxu0
        %v3389 = vadd.f32 %v3340, %v3388
        %3390 = vmatmul.bf16.gmra.mxu0 %v808
        %v3391 = vpop.f32.mrf.mxu0
        %v3392 = vadd.f32 %v3343, %v3391
        %v3393 = vpop.f32.mrf.mxu0
        %v3394 = vadd.f32 %v3345, %v3393
        %3395 = vmatmul.bf16.gmra.mxu0 %v812
        %v3396 = vpop.f32.mrf.mxu0
        %v3397 = vadd.f32 %v3348, %v3396
        %v3398 = vpop.f32.mrf.mxu0
        %v3399 = vadd.f32 %v3350, %v3398
        %3400 = vdwg.mxu0
        %3401 = vmatpush.bf16.msra.mxu0 %v1805
        %3402 = vmatpush.bf16.msra.mxu0 %v1797
        %3403 = vmatpush.bf16.msra.mxu0 %v1789
        %3404 = vmatpush.bf16.msra.mxu0 %v1781
        %3405 = vmatpush.bf16.msra.mxu0 %v1773
        %3406 = vmatpush.bf16.msra.mxu0 %v1765
        %3407 = vmatpush.bf16.msra.mxu0 %v1757
        %3408 = vmatpush.bf16.msra.mxu0 %v1749
        %3409 = vmatmul.bf16.gmra.mxu0 %v785
        %v3410 = vpop.f32.mrf.mxu0
        %v3411 = vadd.f32 %v3362, %v3410
        %v3412 = vpop.f32.mrf.mxu0
        %v3413 = vadd.f32 %v3364, %v3412
        %3414 = vmatmul.bf16.gmra.mxu0 %v789
        %v3415 = vpop.f32.mrf.mxu0
        %v3416 = vadd.f32 %v3367, %v3415
        %v3417 = vpop.f32.mrf.mxu0
        %v3418 = vadd.f32 %v3369, %v3417
        %3419 = vmatmul.bf16.gmra.mxu0 %v793
        %v3420 = vpop.f32.mrf.mxu0
        %v3421 = vadd.f32 %v3372, %v3420
        %v3422 = vpop.f32.mrf.mxu0
        %v3423 = vadd.f32 %v3374, %v3422
        %3424 = vmatmul.bf16.gmra.mxu0 %v797
        %v3425 = vpop.f32.mrf.mxu0
        %v3426 = vadd.f32 %v3377, %v3425
        %v3427 = vpop.f32.mrf.mxu0
        %v3428 = vadd.f32 %v3379, %v3427
        %3429 = vmatmul.bf16.gmra.mxu0 %v801
        %v3430 = vpop.f32.mrf.mxu0
        %v3431 = vadd.f32 %v3382, %v3430
        %v3432 = vpop.f32.mrf.mxu0
        %v3433 = vadd.f32 %v3384, %v3432
        %3434 = vmatmul.bf16.gmra.mxu0 %v805
        %v3435 = vpop.f32.mrf.mxu0
        %v3436 = vadd.f32 %v3387, %v3435
        %v3437 = vpop.f32.mrf.mxu0
        %v3438 = vadd.f32 %v3389, %v3437
        %3439 = vmatmul.bf16.gmra.mxu0 %v809
        %v3440 = vpop.f32.mrf.mxu0
        %v3441 = vadd.f32 %v3392, %v3440
        %v3442 = vpop.f32.mrf.mxu0
        %v3443 = vadd.f32 %v3394, %v3442
        %3444 = vmatmul.bf16.gmra.mxu0 %v813
        %v3445 = vpop.f32.mrf.mxu0
        %v3446 = vadd.f32 %v3397, %v3445
        %v3447 = vpop.f32.mrf.mxu0
        %v3448 = vadd.f32 %v3399, %v3447
        %3449 = vdwg.mxu0
        %3450 = vmatpush.bf16.msra.mxu0 %v1869
        %3451 = vmatpush.bf16.msra.mxu0 %v1861
        %3452 = vmatpush.bf16.msra.mxu0 %v1853
        %3453 = vmatpush.bf16.msra.mxu0 %v1845
        %3454 = vmatpush.bf16.msra.mxu0 %v1837
        %3455 = vmatpush.bf16.msra.mxu0 %v1829
        %3456 = vmatpush.bf16.msra.mxu0 %v1821
        %3457 = vmatpush.bf16.msra.mxu0 %v1813
        %3458 = vmatmul.bf16.gmra.mxu0 %v786
        %v3459 = vpop.f32.mrf.mxu0
        %v3460 = vadd.f32 %v3411, %v3459
        %v3461 = vpop.f32.mrf.mxu0
        %v3462 = vadd.f32 %v3413, %v3461
        %3463 = vmatmul.bf16.gmra.mxu0 %v790
        %v3464 = vpop.f32.mrf.mxu0
        %v3465 = vadd.f32 %v3416, %v3464
        %v3466 = vpop.f32.mrf.mxu0
        %v3467 = vadd.f32 %v3418, %v3466
        %3468 = vmatmul.bf16.gmra.mxu0 %v794
        %v3469 = vpop.f32.mrf.mxu0
        %v3470 = vadd.f32 %v3421, %v3469
        %v3471 = vpop.f32.mrf.mxu0
        %v3472 = vadd.f32 %v3423, %v3471
        %3473 = vmatmul.bf16.gmra.mxu0 %v798
        %v3474 = vpop.f32.mrf.mxu0
        %v3475 = vadd.f32 %v3426, %v3474
        %v3476 = vpop.f32.mrf.mxu0
        %v3477 = vadd.f32 %v3428, %v3476
        %3478 = vmatmul.bf16.gmra.mxu0 %v802
        %v3479 = vpop.f32.mrf.mxu0
        %v3480 = vadd.f32 %v3431, %v3479
        %v3481 = vpop.f32.mrf.mxu0
        %v3482 = vadd.f32 %v3433, %v3481
        %3483 = vmatmul.bf16.gmra.mxu0 %v806
        %v3484 = vpop.f32.mrf.mxu0
        %v3485 = vadd.f32 %v3436, %v3484
        %v3486 = vpop.f32.mrf.mxu0
        %v3487 = vadd.f32 %v3438, %v3486
        %3488 = vmatmul.bf16.gmra.mxu0 %v810
        %v3489 = vpop.f32.mrf.mxu0
        %v3490 = vadd.f32 %v3441, %v3489
        %v3491 = vpop.f32.mrf.mxu0
        %v3492 = vadd.f32 %v3443, %v3491
        %3493 = vmatmul.bf16.gmra.mxu0 %v814
        %v3494 = vpop.f32.mrf.mxu0
        %v3495 = vadd.f32 %v3446, %v3494
        %v3496 = vpop.f32.mrf.mxu0
        %v3497 = vadd.f32 %v3448, %v3496
        %3498 = vdwg.mxu0
        %3499 = vmatpush.bf16.msra.mxu0 %v1678
        %3500 = vmatpush.bf16.msra.mxu0 %v1670
        %3501 = vmatpush.bf16.msra.mxu0 %v1662
        %3502 = vmatpush.bf16.msra.mxu0 %v1654
        %3503 = vmatpush.bf16.msra.mxu0 %v1646
        %3504 = vmatpush.bf16.msra.mxu0 %v1638
        %3505 = vmatpush.bf16.msra.mxu0 %v1630
        %3506 = vmatpush.bf16.msra.mxu0 %v1622
        %3507 = vmatmul.bf16.gmra.mxu0 %v783
        %v3508 = vpop.f32.mrf.mxu0
        %v3509 = vadd.f32 %v678, %v3508
        %v3510 = vpop.f32.mrf.mxu0
        %v3511 = vadd.f32 %v678, %v3510
        %3512 = vmatmul.bf16.gmra.mxu0 %v787
        %v3513 = vpop.f32.mrf.mxu0
        %v3514 = vadd.f32 %v678, %v3513
        %v3515 = vpop.f32.mrf.mxu0
        %v3516 = vadd.f32 %v678, %v3515
        %3517 = vmatmul.bf16.gmra.mxu0 %v791
        %v3518 = vpop.f32.mrf.mxu0
        %v3519 = vadd.f32 %v678, %v3518
        %v3520 = vpop.f32.mrf.mxu0
        %v3521 = vadd.f32 %v678, %v3520
        %3522 = vmatmul.bf16.gmra.mxu0 %v795
        %v3523 = vpop.f32.mrf.mxu0
        %v3524 = vadd.f32 %v678, %v3523
        %v3525 = vpop.f32.mrf.mxu0
        %v3526 = vadd.f32 %v678, %v3525
        %3527 = vmatmul.bf16.gmra.mxu0 %v799
        %v3528 = vpop.f32.mrf.mxu0
        %v3529 = vadd.f32 %v678, %v3528
        %v3530 = vpop.f32.mrf.mxu0
        %v3531 = vadd.f32 %v678, %v3530
        %3532 = vmatmul.bf16.gmra.mxu0 %v803
        %v3533 = vpop.f32.mrf.mxu0
        %v3534 = vadd.f32 %v678, %v3533
        %v3535 = vpop.f32.mrf.mxu0
        %v3536 = vadd.f32 %v678, %v3535
        %3537 = vmatmul.bf16.gmra.mxu0 %v807
        %v3538 = vpop.f32.mrf.mxu0
        %v3539 = vadd.f32 %v678, %v3538
        %v3540 = vpop.f32.mrf.mxu0
        %v3541 = vadd.f32 %v678, %v3540
        %3542 = vmatmul.bf16.gmra.mxu0 %v811
        %v3543 = vpop.f32.mrf.mxu0
        %v3544 = vadd.f32 %v678, %v3543
        %v3545 = vpop.f32.mrf.mxu0
        %v3546 = vadd.f32 %v678, %v3545
        %3547 = vdwg.mxu0
        %3548 = vmatpush.bf16.msra.mxu0 %v1742
        %3549 = vmatpush.bf16.msra.mxu0 %v1734
        %3550 = vmatpush.bf16.msra.mxu0 %v1726
        %3551 = vmatpush.bf16.msra.mxu0 %v1718
        %3552 = vmatpush.bf16.msra.mxu0 %v1710
        %3553 = vmatpush.bf16.msra.mxu0 %v1702
        %3554 = vmatpush.bf16.msra.mxu0 %v1694
        %3555 = vmatpush.bf16.msra.mxu0 %v1686
        %3556 = vmatmul.bf16.gmra.mxu0 %v784
        %v3557 = vpop.f32.mrf.mxu0
        %v3558 = vadd.f32 %v3509, %v3557
        %v3559 = vpop.f32.mrf.mxu0
        %v3560 = vadd.f32 %v3511, %v3559
        %3561 = vmatmul.bf16.gmra.mxu0 %v788
        %v3562 = vpop.f32.mrf.mxu0
        %v3563 = vadd.f32 %v3514, %v3562
        %v3564 = vpop.f32.mrf.mxu0
        %v3565 = vadd.f32 %v3516, %v3564
        %3566 = vmatmul.bf16.gmra.mxu0 %v792
        %v3567 = vpop.f32.mrf.mxu0
        %v3568 = vadd.f32 %v3519, %v3567
        %v3569 = vpop.f32.mrf.mxu0
        %v3570 = vadd.f32 %v3521, %v3569
        %3571 = vmatmul.bf16.gmra.mxu0 %v796
        %v3572 = vpop.f32.mrf.mxu0
        %v3573 = vadd.f32 %v3524, %v3572
        %v3574 = vpop.f32.mrf.mxu0
        %v3575 = vadd.f32 %v3526, %v3574
        %3576 = vmatmul.bf16.gmra.mxu0 %v800
        %v3577 = vpop.f32.mrf.mxu0
        %v3578 = vadd.f32 %v3529, %v3577
        %v3579 = vpop.f32.mrf.mxu0
        %v3580 = vadd.f32 %v3531, %v3579
        %3581 = vmatmul.bf16.gmra.mxu0 %v804
        %v3582 = vpop.f32.mrf.mxu0
        %v3583 = vadd.f32 %v3534, %v3582
        %v3584 = vpop.f32.mrf.mxu0
        %v3585 = vadd.f32 %v3536, %v3584
        %3586 = vmatmul.bf16.gmra.mxu0 %v808
        %v3587 = vpop.f32.mrf.mxu0
        %v3588 = vadd.f32 %v3539, %v3587
        %v3589 = vpop.f32.mrf.mxu0
        %v3590 = vadd.f32 %v3541, %v3589
        %3591 = vmatmul.bf16.gmra.mxu0 %v812
        %v3592 = vpop.f32.mrf.mxu0
        %v3593 = vadd.f32 %v3544, %v3592
        %v3594 = vpop.f32.mrf.mxu0
        %v3595 = vadd.f32 %v3546, %v3594
        %3596 = vdwg.mxu0
        %3597 = vmatpush.bf16.msra.mxu0 %v1806
        %3598 = vmatpush.bf16.msra.mxu0 %v1798
        %3599 = vmatpush.bf16.msra.mxu0 %v1790
        %3600 = vmatpush.bf16.msra.mxu0 %v1782
        %3601 = vmatpush.bf16.msra.mxu0 %v1774
        %3602 = vmatpush.bf16.msra.mxu0 %v1766
        %3603 = vmatpush.bf16.msra.mxu0 %v1758
        %3604 = vmatpush.bf16.msra.mxu0 %v1750
        %3605 = vmatmul.bf16.gmra.mxu0 %v785
        %v3606 = vpop.f32.mrf.mxu0
        %v3607 = vadd.f32 %v3558, %v3606
        %v3608 = vpop.f32.mrf.mxu0
        %v3609 = vadd.f32 %v3560, %v3608
        %3610 = vmatmul.bf16.gmra.mxu0 %v789
        %v3611 = vpop.f32.mrf.mxu0
        %v3612 = vadd.f32 %v3563, %v3611
        %v3613 = vpop.f32.mrf.mxu0
        %v3614 = vadd.f32 %v3565, %v3613
        %3615 = vmatmul.bf16.gmra.mxu0 %v793
        %v3616 = vpop.f32.mrf.mxu0
        %v3617 = vadd.f32 %v3568, %v3616
        %v3618 = vpop.f32.mrf.mxu0
        %v3619 = vadd.f32 %v3570, %v3618
        %3620 = vmatmul.bf16.gmra.mxu0 %v797
        %v3621 = vpop.f32.mrf.mxu0
        %v3622 = vadd.f32 %v3573, %v3621
        %v3623 = vpop.f32.mrf.mxu0
        %v3624 = vadd.f32 %v3575, %v3623
        %3625 = vmatmul.bf16.gmra.mxu0 %v801
        %v3626 = vpop.f32.mrf.mxu0
        %v3627 = vadd.f32 %v3578, %v3626
        %v3628 = vpop.f32.mrf.mxu0
        %v3629 = vadd.f32 %v3580, %v3628
        %3630 = vmatmul.bf16.gmra.mxu0 %v805
        %v3631 = vpop.f32.mrf.mxu0
        %v3632 = vadd.f32 %v3583, %v3631
        %v3633 = vpop.f32.mrf.mxu0
        %v3634 = vadd.f32 %v3585, %v3633
        %3635 = vmatmul.bf16.gmra.mxu0 %v809
        %v3636 = vpop.f32.mrf.mxu0
        %v3637 = vadd.f32 %v3588, %v3636
        %v3638 = vpop.f32.mrf.mxu0
        %v3639 = vadd.f32 %v3590, %v3638
        %3640 = vmatmul.bf16.gmra.mxu0 %v813
        %v3641 = vpop.f32.mrf.mxu0
        %v3642 = vadd.f32 %v3593, %v3641
        %v3643 = vpop.f32.mrf.mxu0
        %v3644 = vadd.f32 %v3595, %v3643
        %3645 = vdwg.mxu0
        %3646 = vmatpush.bf16.msra.mxu0 %v1870
        %3647 = vmatpush.bf16.msra.mxu0 %v1862
        %3648 = vmatpush.bf16.msra.mxu0 %v1854
        %3649 = vmatpush.bf16.msra.mxu0 %v1846
        %3650 = vmatpush.bf16.msra.mxu0 %v1838
        %3651 = vmatpush.bf16.msra.mxu0 %v1830
        %3652 = vmatpush.bf16.msra.mxu0 %v1822
        %3653 = vmatpush.bf16.msra.mxu0 %v1814
        %3654 = vmatmul.bf16.gmra.mxu0 %v786
        %v3655 = vpop.f32.mrf.mxu0
        %v3656 = vadd.f32 %v3607, %v3655
        %v3657 = vpop.f32.mrf.mxu0
        %v3658 = vadd.f32 %v3609, %v3657
        %3659 = vmatmul.bf16.gmra.mxu0 %v790
        %v3660 = vpop.f32.mrf.mxu0
        %v3661 = vadd.f32 %v3612, %v3660
        %v3662 = vpop.f32.mrf.mxu0
        %v3663 = vadd.f32 %v3614, %v3662
        %3664 = vmatmul.bf16.gmra.mxu0 %v794
        %v3665 = vpop.f32.mrf.mxu0
        %v3666 = vadd.f32 %v3617, %v3665
        %v3667 = vpop.f32.mrf.mxu0
        %v3668 = vadd.f32 %v3619, %v3667
        %3669 = vmatmul.bf16.gmra.mxu0 %v798
        %v3670 = vpop.f32.mrf.mxu0
        %v3671 = vadd.f32 %v3622, %v3670
        %v3672 = vpop.f32.mrf.mxu0
        %v3673 = vadd.f32 %v3624, %v3672
        %3674 = vmatmul.bf16.gmra.mxu0 %v802
        %v3675 = vpop.f32.mrf.mxu0
        %v3676 = vadd.f32 %v3627, %v3675
        %v3677 = vpop.f32.mrf.mxu0
        %v3678 = vadd.f32 %v3629, %v3677
        %3679 = vmatmul.bf16.gmra.mxu0 %v806
        %v3680 = vpop.f32.mrf.mxu0
        %v3681 = vadd.f32 %v3632, %v3680
        %v3682 = vpop.f32.mrf.mxu0
        %v3683 = vadd.f32 %v3634, %v3682
        %3684 = vmatmul.bf16.gmra.mxu0 %v810
        %v3685 = vpop.f32.mrf.mxu0
        %v3686 = vadd.f32 %v3637, %v3685
        %v3687 = vpop.f32.mrf.mxu0
        %v3688 = vadd.f32 %v3639, %v3687
        %3689 = vmatmul.bf16.gmra.mxu0 %v814
        %v3690 = vpop.f32.mrf.mxu0
        %v3691 = vadd.f32 %v3642, %v3690
        %v3692 = vpop.f32.mrf.mxu0
        %v3693 = vadd.f32 %v3644, %v3692
        %3694 = vdwg.mxu0
        %v3695 = vmul.f32 %v2284, 0.2
        %v3696 = vmul.f32 %v2480, 0.2
        %v3697 = vmul.f32 %v2676, 0.2
        %v3698 = vmul.f32 %v2872, 0.2
        %v3699 = vmul.f32 %v3068, 0.2
        %v3700 = vmul.f32 %v3264, 0.2
        %v3701 = vmul.f32 %v3460, 0.2
        %v3702 = vmul.f32 %v3656, 0.2
        %v3703 = vmul.f32 %v2286, 0.2
        %v3704 = vmul.f32 %v2482, 0.2
        %v3705 = vmul.f32 %v2678, 0.2
        %v3706 = vmul.f32 %v2874, 0.2
        %v3707 = vmul.f32 %v3070, 0.2
        %v3708 = vmul.f32 %v3266, 0.2
        %v3709 = vmul.f32 %v3462, 0.2
        %v3710 = vmul.f32 %v3658, 0.2
        %v3711 = vmul.f32 %v2289, 0.2
        %v3712 = vmul.f32 %v2485, 0.2
        %v3713 = vmul.f32 %v2681, 0.2
        %v3714 = vmul.f32 %v2877, 0.2
        %v3715 = vmul.f32 %v3073, 0.2
        %v3716 = vmul.f32 %v3269, 0.2
        %v3717 = vmul.f32 %v3465, 0.2
        %v3718 = vmul.f32 %v3661, 0.2
        %v3719 = vmul.f32 %v2291, 0.2
        %v3720 = vmul.f32 %v2487, 0.2
        %v3721 = vmul.f32 %v2683, 0.2
        %v3722 = vmul.f32 %v2879, 0.2
        %v3723 = vmul.f32 %v3075, 0.2
        %v3724 = vmul.f32 %v3271, 0.2
        %v3725 = vmul.f32 %v3467, 0.2
        %v3726 = vmul.f32 %v3663, 0.2
        %v3727 = vmul.f32 %v2294, 0.2
        %v3728 = vmul.f32 %v2490, 0.2
        %v3729 = vmul.f32 %v2686, 0.2
        %v3730 = vmul.f32 %v2882, 0.2
        %v3731 = vmul.f32 %v3078, 0.2
        %v3732 = vmul.f32 %v3274, 0.2
        %v3733 = vmul.f32 %v3470, 0.2
        %v3734 = vmul.f32 %v3666, 0.2
        %v3735 = vmul.f32 %v2296, 0.2
        %v3736 = vmul.f32 %v2492, 0.2
        %v3737 = vmul.f32 %v2688, 0.2
        %v3738 = vmul.f32 %v2884, 0.2
        %v3739 = vmul.f32 %v3080, 0.2
        %v3740 = vmul.f32 %v3276, 0.2
        %v3741 = vmul.f32 %v3472, 0.2
        %v3742 = vmul.f32 %v3668, 0.2
        %v3743 = vmul.f32 %v2299, 0.2
        %v3744 = vmul.f32 %v2495, 0.2
        %v3745 = vmul.f32 %v2691, 0.2
        %v3746 = vmul.f32 %v2887, 0.2
        %v3747 = vmul.f32 %v3083, 0.2
        %v3748 = vmul.f32 %v3279, 0.2
        %v3749 = vmul.f32 %v3475, 0.2
        %v3750 = vmul.f32 %v3671, 0.2
        %v3751 = vmul.f32 %v2301, 0.2
        %v3752 = vmul.f32 %v2497, 0.2
        %v3753 = vmul.f32 %v2693, 0.2
        %v3754 = vmul.f32 %v2889, 0.2
        %v3755 = vmul.f32 %v3085, 0.2
        %v3756 = vmul.f32 %v3281, 0.2
        %v3757 = vmul.f32 %v3477, 0.2
        %v3758 = vmul.f32 %v3673, 0.2
        %v3759 = vmul.f32 %v2304, 0.2
        %v3760 = vmul.f32 %v2500, 0.2
        %v3761 = vmul.f32 %v2696, 0.2
        %v3762 = vmul.f32 %v2892, 0.2
        %v3763 = vmul.f32 %v3088, 0.2
        %v3764 = vmul.f32 %v3284, 0.2
        %v3765 = vmul.f32 %v3480, 0.2
        %v3766 = vmul.f32 %v3676, 0.2
        %v3767 = vmul.f32 %v2306, 0.2
        %v3768 = vmul.f32 %v2502, 0.2
        %v3769 = vmul.f32 %v2698, 0.2
        %v3770 = vmul.f32 %v2894, 0.2
        %v3771 = vmul.f32 %v3090, 0.2
        %v3772 = vmul.f32 %v3286, 0.2
        %v3773 = vmul.f32 %v3482, 0.2
        %v3774 = vmul.f32 %v3678, 0.2
        %v3775 = vmul.f32 %v2309, 0.2
        %v3776 = vmul.f32 %v2505, 0.2
        %v3777 = vmul.f32 %v2701, 0.2
        %v3778 = vmul.f32 %v2897, 0.2
        %v3779 = vmul.f32 %v3093, 0.2
        %v3780 = vmul.f32 %v3289, 0.2
        %v3781 = vmul.f32 %v3485, 0.2
        %v3782 = vmul.f32 %v3681, 0.2
        %v3783 = vmul.f32 %v2311, 0.2
        %v3784 = vmul.f32 %v2507, 0.2
        %v3785 = vmul.f32 %v2703, 0.2
        %v3786 = vmul.f32 %v2899, 0.2
        %v3787 = vmul.f32 %v3095, 0.2
        %v3788 = vmul.f32 %v3291, 0.2
        %v3789 = vmul.f32 %v3487, 0.2
        %v3790 = vmul.f32 %v3683, 0.2
        %v3791 = vmul.f32 %v2314, 0.2
        %v3792 = vmul.f32 %v2510, 0.2
        %v3793 = vmul.f32 %v2706, 0.2
        %v3794 = vmul.f32 %v2902, 0.2
        %v3795 = vmul.f32 %v3098, 0.2
        %v3796 = vmul.f32 %v3294, 0.2
        %v3797 = vmul.f32 %v3490, 0.2
        %v3798 = vmul.f32 %v3686, 0.2
        %v3799 = vmul.f32 %v2316, 0.2
        %v3800 = vmul.f32 %v2512, 0.2
        %v3801 = vmul.f32 %v2708, 0.2
        %v3802 = vmul.f32 %v2904, 0.2
        %v3803 = vmul.f32 %v3100, 0.2
        %v3804 = vmul.f32 %v3296, 0.2
        %v3805 = vmul.f32 %v3492, 0.2
        %v3806 = vmul.f32 %v3688, 0.2
        %v3807 = vmul.f32 %v2319, 0.2
        %v3808 = vmul.f32 %v2515, 0.2
        %v3809 = vmul.f32 %v2711, 0.2
        %v3810 = vmul.f32 %v2907, 0.2
        %v3811 = vmul.f32 %v3103, 0.2
        %v3812 = vmul.f32 %v3299, 0.2
        %v3813 = vmul.f32 %v3495, 0.2
        %v3814 = vmul.f32 %v3691, 0.2
        %v3815 = vmul.f32 %v2321, 0.2
        %v3816 = vmul.f32 %v2517, 0.2
        %v3817 = vmul.f32 %v2713, 0.2
        %v3818 = vmul.f32 %v2909, 0.2
        %v3819 = vmul.f32 %v3105, 0.2
        %v3820 = vmul.f32 %v3301, 0.2
        %v3821 = vmul.f32 %v3497, 0.2
        %v3822 = vmul.f32 %v3693, 0.2
        %v3823 = vmax.f32 %v2284, %v3695
        %v3824 = vmax.f32 %v2480, %v3696
        %v3825 = vmax.f32 %v2676, %v3697
        %v3826 = vmax.f32 %v2872, %v3698
        %v3827 = vmax.f32 %v3068, %v3699
        %v3828 = vmax.f32 %v3264, %v3700
        %v3829 = vmax.f32 %v3460, %v3701
        %v3830 = vmax.f32 %v3656, %v3702
        %v3831 = vmax.f32 %v2286, %v3703
        %v3832 = vmax.f32 %v2482, %v3704
        %v3833 = vmax.f32 %v2678, %v3705
        %v3834 = vmax.f32 %v2874, %v3706
        %v3835 = vmax.f32 %v3070, %v3707
        %v3836 = vmax.f32 %v3266, %v3708
        %v3837 = vmax.f32 %v3462, %v3709
        %v3838 = vmax.f32 %v3658, %v3710
        %v3839 = vmax.f32 %v2289, %v3711
        %v3840 = vmax.f32 %v2485, %v3712
        %v3841 = vmax.f32 %v2681, %v3713
        %v3842 = vmax.f32 %v2877, %v3714
        %v3843 = vmax.f32 %v3073, %v3715
        %v3844 = vmax.f32 %v3269, %v3716
        %v3845 = vmax.f32 %v3465, %v3717
        %v3846 = vmax.f32 %v3661, %v3718
        %v3847 = vmax.f32 %v2291, %v3719
        %v3848 = vmax.f32 %v2487, %v3720
        %v3849 = vmax.f32 %v2683, %v3721
        %v3850 = vmax.f32 %v2879, %v3722
        %v3851 = vmax.f32 %v3075, %v3723
        %v3852 = vmax.f32 %v3271, %v3724
        %v3853 = vmax.f32 %v3467, %v3725
        %v3854 = vmax.f32 %v3663, %v3726
        %v3855 = vmax.f32 %v2294, %v3727
        %v3856 = vmax.f32 %v2490, %v3728
        %v3857 = vmax.f32 %v2686, %v3729
        %v3858 = vmax.f32 %v2882, %v3730
        %v3859 = vmax.f32 %v3078, %v3731
        %v3860 = vmax.f32 %v3274, %v3732
        %v3861 = vmax.f32 %v3470, %v3733
        %v3862 = vmax.f32 %v3666, %v3734
        %v3863 = vmax.f32 %v2296, %v3735
        %v3864 = vmax.f32 %v2492, %v3736
        %v3865 = vmax.f32 %v2688, %v3737
        %v3866 = vmax.f32 %v2884, %v3738
        %v3867 = vmax.f32 %v3080, %v3739
        %v3868 = vmax.f32 %v3276, %v3740
        %v3869 = vmax.f32 %v3472, %v3741
        %v3870 = vmax.f32 %v3668, %v3742
        %v3871 = vmax.f32 %v2299, %v3743
        %v3872 = vmax.f32 %v2495, %v3744
        %v3873 = vmax.f32 %v2691, %v3745
        %v3874 = vmax.f32 %v2887, %v3746
        %v3875 = vmax.f32 %v3083, %v3747
        %v3876 = vmax.f32 %v3279, %v3748
        %v3877 = vmax.f32 %v3475, %v3749
        %v3878 = vmax.f32 %v3671, %v3750
        %v3879 = vmax.f32 %v2301, %v3751
        %v3880 = vmax.f32 %v2497, %v3752
        %v3881 = vmax.f32 %v2693, %v3753
        %v3882 = vmax.f32 %v2889, %v3754
        %v3883 = vmax.f32 %v3085, %v3755
        %v3884 = vmax.f32 %v3281, %v3756
        %v3885 = vmax.f32 %v3477, %v3757
        %v3886 = vmax.f32 %v3673, %v3758
        %v3887 = vmax.f32 %v2304, %v3759
        %v3888 = vmax.f32 %v2500, %v3760
        %v3889 = vmax.f32 %v2696, %v3761
        %v3890 = vmax.f32 %v2892, %v3762
        %v3891 = vmax.f32 %v3088, %v3763
        %v3892 = vmax.f32 %v3284, %v3764
        %v3893 = vmax.f32 %v3480, %v3765
        %v3894 = vmax.f32 %v3676, %v3766
        %v3895 = vmax.f32 %v2306, %v3767
        %v3896 = vmax.f32 %v2502, %v3768
        %v3897 = vmax.f32 %v2698, %v3769
        %v3898 = vmax.f32 %v2894, %v3770
        %v3899 = vmax.f32 %v3090, %v3771
        %v3900 = vmax.f32 %v3286, %v3772
        %v3901 = vmax.f32 %v3482, %v3773
        %v3902 = vmax.f32 %v3678, %v3774
        %v3903 = vmax.f32 %v2309, %v3775
        %v3904 = vmax.f32 %v2505, %v3776
        %v3905 = vmax.f32 %v2701, %v3777
        %v3906 = vmax.f32 %v2897, %v3778
        %v3907 = vmax.f32 %v3093, %v3779
        %v3908 = vmax.f32 %v3289, %v3780
        %v3909 = vmax.f32 %v3485, %v3781
        %v3910 = vmax.f32 %v3681, %v3782
        %v3911 = vmax.f32 %v2311, %v3783
        %v3912 = vmax.f32 %v2507, %v3784
        %v3913 = vmax.f32 %v2703, %v3785
        %v3914 = vmax.f32 %v2899, %v3786
        %v3915 = vmax.f32 %v3095, %v3787
        %v3916 = vmax.f32 %v3291, %v3788
        %v3917 = vmax.f32 %v3487, %v3789
        %v3918 = vmax.f32 %v3683, %v3790
        %v3919 = vmax.f32 %v2314, %v3791
        %v3920 = vmax.f32 %v2510, %v3792
        %v3921 = vmax.f32 %v2706, %v3793
        %v3922 = vmax.f32 %v2902, %v3794
        %v3923 = vmax.f32 %v3098, %v3795
        %v3924 = vmax.f32 %v3294, %v3796
        %v3925 = vmax.f32 %v3490, %v3797
        %v3926 = vmax.f32 %v3686, %v3798
        %v3927 = vmax.f32 %v2316, %v3799
        %v3928 = vmax.f32 %v2512, %v3800
        %v3929 = vmax.f32 %v2708, %v3801
        %v3930 = vmax.f32 %v2904, %v3802
        %v3931 = vmax.f32 %v3100, %v3803
        %v3932 = vmax.f32 %v3296, %v3804
        %v3933 = vmax.f32 %v3492, %v3805
        %v3934 = vmax.f32 %v3688, %v3806
        %v3935 = vmax.f32 %v2319, %v3807
        %v3936 = vmax.f32 %v2515, %v3808
        %v3937 = vmax.f32 %v2711, %v3809
        %v3938 = vmax.f32 %v2907, %v3810
        %v3939 = vmax.f32 %v3103, %v3811
        %v3940 = vmax.f32 %v3299, %v3812
        %v3941 = vmax.f32 %v3495, %v3813
        %v3942 = vmax.f32 %v3691, %v3814
        %v3943 = vmax.f32 %v2321, %v3815
        %v3944 = vmax.f32 %v2517, %v3816
        %v3945 = vmax.f32 %v2713, %v3817
        %v3946 = vmax.f32 %v2909, %v3818
        %v3947 = vmax.f32 %v3105, %v3819
        %v3948 = vmax.f32 %v3301, %v3820
        %v3949 = vmax.f32 %v3497, %v3821
        %v3950 = vmax.f32 %v3693, %v3822
        %v3951 = vpack.c.bf16 %v3831, %v3823
        %v3952 = vpack.c.bf16 %v3832, %v3824
        %v3953 = vpack.c.bf16 %v3833, %v3825
        %v3954 = vpack.c.bf16 %v3834, %v3826
        %v3955 = vpack.c.bf16 %v3835, %v3827
        %v3956 = vpack.c.bf16 %v3836, %v3828
        %v3957 = vpack.c.bf16 %v3837, %v3829
        %v3958 = vpack.c.bf16 %v3838, %v3830
        %v3959 = vpack.c.bf16 %v3847, %v3839
        %v3960 = vpack.c.bf16 %v3848, %v3840
        %v3961 = vpack.c.bf16 %v3849, %v3841
        %v3962 = vpack.c.bf16 %v3850, %v3842
        %v3963 = vpack.c.bf16 %v3851, %v3843
        %v3964 = vpack.c.bf16 %v3852, %v3844
        %v3965 = vpack.c.bf16 %v3853, %v3845
        %v3966 = vpack.c.bf16 %v3854, %v3846
        %v3967 = vpack.c.bf16 %v3863, %v3855
        %v3968 = vpack.c.bf16 %v3864, %v3856
        %v3969 = vpack.c.bf16 %v3865, %v3857
        %v3970 = vpack.c.bf16 %v3866, %v3858
        %v3971 = vpack.c.bf16 %v3867, %v3859
        %v3972 = vpack.c.bf16 %v3868, %v3860
        %v3973 = vpack.c.bf16 %v3869, %v3861
        %v3974 = vpack.c.bf16 %v3870, %v3862
        %v3975 = vpack.c.bf16 %v3879, %v3871
        %v3976 = vpack.c.bf16 %v3880, %v3872
        %v3977 = vpack.c.bf16 %v3881, %v3873
        %v3978 = vpack.c.bf16 %v3882, %v3874
        %v3979 = vpack.c.bf16 %v3883, %v3875
        %v3980 = vpack.c.bf16 %v3884, %v3876
        %v3981 = vpack.c.bf16 %v3885, %v3877
        %v3982 = vpack.c.bf16 %v3886, %v3878
        %v3983 = vpack.c.bf16 %v3895, %v3887
        %v3984 = vpack.c.bf16 %v3896, %v3888
        %v3985 = vpack.c.bf16 %v3897, %v3889
        %v3986 = vpack.c.bf16 %v3898, %v3890
        %v3987 = vpack.c.bf16 %v3899, %v3891
        %v3988 = vpack.c.bf16 %v3900, %v3892
        %v3989 = vpack.c.bf16 %v3901, %v3893
        %v3990 = vpack.c.bf16 %v3902, %v3894
        %v3991 = vpack.c.bf16 %v3911, %v3903
        %v3992 = vpack.c.bf16 %v3912, %v3904
        %v3993 = vpack.c.bf16 %v3913, %v3905
        %v3994 = vpack.c.bf16 %v3914, %v3906
        %v3995 = vpack.c.bf16 %v3915, %v3907
        %v3996 = vpack.c.bf16 %v3916, %v3908
        %v3997 = vpack.c.bf16 %v3917, %v3909
        %v3998 = vpack.c.bf16 %v3918, %v3910
        %v3999 = vpack.c.bf16 %v3927, %v3919
        %v4000 = vpack.c.bf16 %v3928, %v3920
        %v4001 = vpack.c.bf16 %v3929, %v3921
        %v4002 = vpack.c.bf16 %v3930, %v3922
        %v4003 = vpack.c.bf16 %v3931, %v3923
        %v4004 = vpack.c.bf16 %v3932, %v3924
        %v4005 = vpack.c.bf16 %v3933, %v3925
        %v4006 = vpack.c.bf16 %v3934, %v3926
        %v4007 = vpack.c.bf16 %v3943, %v3935
        %v4008 = vpack.c.bf16 %v3944, %v3936
        %v4009 = vpack.c.bf16 %v3945, %v3937
        %v4010 = vpack.c.bf16 %v3946, %v3938
        %v4011 = vpack.c.bf16 %v3947, %v3939
        %v4012 = vpack.c.bf16 %v3948, %v3940
        %v4013 = vpack.c.bf16 %v3949, %v3941
        %v4014 = vpack.c.bf16 %v3950, %v3942
        %v4015 = vld [vmem:[%s3] sm:$0xff]
        %v4016 = vld [vmem:[%s3 + $0x8] sm:$0xff]
        %v4017 = vld [vmem:[%s3 + $0x10] sm:$0xff]
        %v4018 = vld [vmem:[%s3 + $0x18] sm:$0xff]
        %v4019 = vld [vmem:[%s3 + $0x20] sm:$0xff]
        %v4020 = vld [vmem:[%s3 + $0x28] sm:$0xff]
        %v4021 = vld [vmem:[%s3 + $0x30] sm:$0xff]
        %v4022 = vld [vmem:[%s3 + $0x38] sm:$0xff]
        %v4023 = vld [vmem:[%s3 + $0x40] sm:$0xff]
        %v4024 = vld [vmem:[%s3 + $0x48] sm:$0xff]
        %v4025 = vld [vmem:[%s3 + $0x50] sm:$0xff]
        %v4026 = vld [vmem:[%s3 + $0x58] sm:$0xff]
        %v4027 = vld [vmem:[%s3 + $0x60] sm:$0xff]
        %v4028 = vld [vmem:[%s3 + $0x68] sm:$0xff]
        %v4029 = vld [vmem:[%s3 + $0x70] sm:$0xff]
        %v4030 = vld [vmem:[%s3 + $0x78] sm:$0xff]
        %v4031 = vld [vmem:[%s3 + $0x80] sm:$0xff]
        %v4032 = vld [vmem:[%s3 + $0x88] sm:$0xff]
        %v4033 = vld [vmem:[%s3 + $0x90] sm:$0xff]
        %v4034 = vld [vmem:[%s3 + $0x98] sm:$0xff]
        %v4035 = vld [vmem:[%s3 + $0xa0] sm:$0xff]
        %v4036 = vld [vmem:[%s3 + $0xa8] sm:$0xff]
        %v4037 = vld [vmem:[%s3 + $0xb0] sm:$0xff]
        %v4038 = vld [vmem:[%s3 + $0xb8] sm:$0xff]
        %v4039 = vld [vmem:[%s3 + $0xc0] sm:$0xff]
        %v4040 = vld [vmem:[%s3 + $0xc8] sm:$0xff]
        %v4041 = vld [vmem:[%s3 + $0xd0] sm:$0xff]
        %v4042 = vld [vmem:[%s3 + $0xd8] sm:$0xff]
        %v4043 = vld [vmem:[%s3 + $0xe0] sm:$0xff]
        %v4044 = vld [vmem:[%s3 + $0xe8] sm:$0xff]
        %v4045 = vld [vmem:[%s3 + $0xf0] sm:$0xff]
        %v4046 = vld [vmem:[%s3 + $0xf8] sm:$0xff]
        %v4047 = vld [vmem:[%s3 + $0x100] sm:$0xff]
        %v4048 = vld [vmem:[%s3 + $0x108] sm:$0xff]
        %v4049 = vld [vmem:[%s3 + $0x110] sm:$0xff]
        %v4050 = vld [vmem:[%s3 + $0x118] sm:$0xff]
        %v4051 = vld [vmem:[%s3 + $0x120] sm:$0xff]
        %v4052 = vld [vmem:[%s3 + $0x128] sm:$0xff]
        %v4053 = vld [vmem:[%s3 + $0x130] sm:$0xff]
        %v4054 = vld [vmem:[%s3 + $0x138] sm:$0xff]
        %v4055 = vld [vmem:[%s3 + $0x140] sm:$0xff]
        %v4056 = vld [vmem:[%s3 + $0x148] sm:$0xff]
        %v4057 = vld [vmem:[%s3 + $0x150] sm:$0xff]
        %v4058 = vld [vmem:[%s3 + $0x158] sm:$0xff]
        %v4059 = vld [vmem:[%s3 + $0x160] sm:$0xff]
        %v4060 = vld [vmem:[%s3 + $0x168] sm:$0xff]
        %v4061 = vld [vmem:[%s3 + $0x170] sm:$0xff]
        %v4062 = vld [vmem:[%s3 + $0x178] sm:$0xff]
        %v4063 = vld [vmem:[%s3 + $0x180] sm:$0xff]
        %v4064 = vld [vmem:[%s3 + $0x188] sm:$0xff]
        %v4065 = vld [vmem:[%s3 + $0x190] sm:$0xff]
        %v4066 = vld [vmem:[%s3 + $0x198] sm:$0xff]
        %v4067 = vld [vmem:[%s3 + $0x1a0] sm:$0xff]
        %v4068 = vld [vmem:[%s3 + $0x1a8] sm:$0xff]
        %v4069 = vld [vmem:[%s3 + $0x1b0] sm:$0xff]
        %v4070 = vld [vmem:[%s3 + $0x1b8] sm:$0xff]
        %v4071 = vld [vmem:[%s3 + $0x1c0] sm:$0xff]
        %v4072 = vld [vmem:[%s3 + $0x1c8] sm:$0xff]
        %v4073 = vld [vmem:[%s3 + $0x1d0] sm:$0xff]
        %v4074 = vld [vmem:[%s3 + $0x1d8] sm:$0xff]
        %v4075 = vld [vmem:[%s3 + $0x1e0] sm:$0xff]
        %v4076 = vld [vmem:[%s3 + $0x1e8] sm:$0xff]
        %v4077 = vld [vmem:[%s3 + $0x1f0] sm:$0xff]
        %v4078 = vld [vmem:[%s3 + $0x1f8] sm:$0xff]
        %v4079 = vld [vmem:[%s3 + $0x200] sm:$0xff]
        %v4080 = vld [vmem:[%s3 + $0x208] sm:$0xff]
        %v4081 = vld [vmem:[%s3 + $0x210] sm:$0xff]
        %v4082 = vld [vmem:[%s3 + $0x218] sm:$0xff]
        %v4083 = vld [vmem:[%s3 + $0x220] sm:$0xff]
        %v4084 = vld [vmem:[%s3 + $0x228] sm:$0xff]
        %v4085 = vld [vmem:[%s3 + $0x230] sm:$0xff]
        %v4086 = vld [vmem:[%s3 + $0x238] sm:$0xff]
        %v4087 = vld [vmem:[%s3 + $0x240] sm:$0xff]
        %v4088 = vld [vmem:[%s3 + $0x248] sm:$0xff]
        %v4089 = vld [vmem:[%s3 + $0x250] sm:$0xff]
        %v4090 = vld [vmem:[%s3 + $0x258] sm:$0xff]
        %v4091 = vld [vmem:[%s3 + $0x260] sm:$0xff]
        %v4092 = vld [vmem:[%s3 + $0x268] sm:$0xff]
        %v4093 = vld [vmem:[%s3 + $0x270] sm:$0xff]
        %v4094 = vld [vmem:[%s3 + $0x278] sm:$0xff]
        %v4095 = vld [vmem:[%s3 + $0x280] sm:$0xff]
        %v4096 = vld [vmem:[%s3 + $0x288] sm:$0xff]
        %v4097 = vld [vmem:[%s3 + $0x290] sm:$0xff]
        %v4098 = vld [vmem:[%s3 + $0x298] sm:$0xff]
        %v4099 = vld [vmem:[%s3 + $0x2a0] sm:$0xff]
        %v4100 = vld [vmem:[%s3 + $0x2a8] sm:$0xff]
        %v4101 = vld [vmem:[%s3 + $0x2b0] sm:$0xff]
        %v4102 = vld [vmem:[%s3 + $0x2b8] sm:$0xff]
        %v4103 = vld [vmem:[%s3 + $0x2c0] sm:$0xff]
        %v4104 = vld [vmem:[%s3 + $0x2c8] sm:$0xff]
        %v4105 = vld [vmem:[%s3 + $0x2d0] sm:$0xff]
        %v4106 = vld [vmem:[%s3 + $0x2d8] sm:$0xff]
        %v4107 = vld [vmem:[%s3 + $0x2e0] sm:$0xff]
        %v4108 = vld [vmem:[%s3 + $0x2e8] sm:$0xff]
        %v4109 = vld [vmem:[%s3 + $0x2f0] sm:$0xff]
        %v4110 = vld [vmem:[%s3 + $0x2f8] sm:$0xff]
        %v4111 = vld [vmem:[%s3 + $0x300] sm:$0xff]
        %v4112 = vld [vmem:[%s3 + $0x308] sm:$0xff]
        %v4113 = vld [vmem:[%s3 + $0x310] sm:$0xff]
        %v4114 = vld [vmem:[%s3 + $0x318] sm:$0xff]
        %v4115 = vld [vmem:[%s3 + $0x320] sm:$0xff]
        %v4116 = vld [vmem:[%s3 + $0x328] sm:$0xff]
        %v4117 = vld [vmem:[%s3 + $0x330] sm:$0xff]
        %v4118 = vld [vmem:[%s3 + $0x338] sm:$0xff]
        %v4119 = vld [vmem:[%s3 + $0x340] sm:$0xff]
        %v4120 = vld [vmem:[%s3 + $0x348] sm:$0xff]
        %v4121 = vld [vmem:[%s3 + $0x350] sm:$0xff]
        %v4122 = vld [vmem:[%s3 + $0x358] sm:$0xff]
        %v4123 = vld [vmem:[%s3 + $0x360] sm:$0xff]
        %v4124 = vld [vmem:[%s3 + $0x368] sm:$0xff]
        %v4125 = vld [vmem:[%s3 + $0x370] sm:$0xff]
        %v4126 = vld [vmem:[%s3 + $0x378] sm:$0xff]
        %v4127 = vld [vmem:[%s3 + $0x380] sm:$0xff]
        %v4128 = vld [vmem:[%s3 + $0x388] sm:$0xff]
        %v4129 = vld [vmem:[%s3 + $0x390] sm:$0xff]
        %v4130 = vld [vmem:[%s3 + $0x398] sm:$0xff]
        %v4131 = vld [vmem:[%s3 + $0x3a0] sm:$0xff]
        %v4132 = vld [vmem:[%s3 + $0x3a8] sm:$0xff]
        %v4133 = vld [vmem:[%s3 + $0x3b0] sm:$0xff]
        %v4134 = vld [vmem:[%s3 + $0x3b8] sm:$0xff]
        %v4135 = vld [vmem:[%s3 + $0x3c0] sm:$0xff]
        %v4136 = vld [vmem:[%s3 + $0x3c8] sm:$0xff]
        %v4137 = vld [vmem:[%s3 + $0x3d0] sm:$0xff]
        %v4138 = vld [vmem:[%s3 + $0x3d8] sm:$0xff]
        %v4139 = vld [vmem:[%s3 + $0x3e0] sm:$0xff]
        %v4140 = vld [vmem:[%s3 + $0x3e8] sm:$0xff]
        %v4141 = vld [vmem:[%s3 + $0x3f0] sm:$0xff]
        %v4142 = vld [vmem:[%s3 + $0x3f8] sm:$0xff]
        %v4143 = vld [vmem:[%s4] sm:$0x3]
        %v4145 = vperm.slane %v4143, 0
        %v4146 = vperm.slane %v4143, 1
        %v4277 = vunpack.c.l.b16 %v4015
        %v4278 = vunpack.c.h.b16 %v4015
        %v4279 = vunpack.c.l.b16 %v4016
        %v4280 = vunpack.c.h.b16 %v4016
        %v4281 = vunpack.c.l.b16 %v4017
        %v4282 = vunpack.c.h.b16 %v4017
        %v4283 = vunpack.c.l.b16 %v4018
        %v4284 = vunpack.c.h.b16 %v4018
        %v4285 = vunpack.c.l.b16 %v4019
        %v4286 = vunpack.c.h.b16 %v4019
        %v4287 = vunpack.c.l.b16 %v4020
        %v4288 = vunpack.c.h.b16 %v4020
        %v4289 = vunpack.c.l.b16 %v4021
        %v4290 = vunpack.c.h.b16 %v4021
        %v4291 = vunpack.c.l.b16 %v4022
        %v4292 = vunpack.c.h.b16 %v4022
        %v4293 = vunpack.c.l.b16 %v4023
        %v4294 = vunpack.c.h.b16 %v4023
        %v4295 = vunpack.c.l.b16 %v4024
        %v4296 = vunpack.c.h.b16 %v4024
        %v4297 = vunpack.c.l.b16 %v4025
        %v4298 = vunpack.c.h.b16 %v4025
        %v4299 = vunpack.c.l.b16 %v4026
        %v4300 = vunpack.c.h.b16 %v4026
        %v4301 = vunpack.c.l.b16 %v4027
        %v4302 = vunpack.c.h.b16 %v4027
        %v4303 = vunpack.c.l.b16 %v4028
        %v4304 = vunpack.c.h.b16 %v4028
        %v4305 = vunpack.c.l.b16 %v4029
        %v4306 = vunpack.c.h.b16 %v4029
        %v4307 = vunpack.c.l.b16 %v4030
        %v4308 = vunpack.c.h.b16 %v4030
        %v4309 = vunpack.c.l.b16 %v4031
        %v4310 = vunpack.c.h.b16 %v4031
        %v4311 = vunpack.c.l.b16 %v4032
        %v4312 = vunpack.c.h.b16 %v4032
        %v4313 = vunpack.c.l.b16 %v4033
        %v4314 = vunpack.c.h.b16 %v4033
        %v4315 = vunpack.c.l.b16 %v4034
        %v4316 = vunpack.c.h.b16 %v4034
        %v4317 = vunpack.c.l.b16 %v4035
        %v4318 = vunpack.c.h.b16 %v4035
        %v4319 = vunpack.c.l.b16 %v4036
        %v4320 = vunpack.c.h.b16 %v4036
        %v4321 = vunpack.c.l.b16 %v4037
        %v4322 = vunpack.c.h.b16 %v4037
        %v4323 = vunpack.c.l.b16 %v4038
        %v4324 = vunpack.c.h.b16 %v4038
        %v4325 = vunpack.c.l.b16 %v4039
        %v4326 = vunpack.c.h.b16 %v4039
        %v4327 = vunpack.c.l.b16 %v4040
        %v4328 = vunpack.c.h.b16 %v4040
        %v4329 = vunpack.c.l.b16 %v4041
        %v4330 = vunpack.c.h.b16 %v4041
        %v4331 = vunpack.c.l.b16 %v4042
        %v4332 = vunpack.c.h.b16 %v4042
        %v4333 = vunpack.c.l.b16 %v4043
        %v4334 = vunpack.c.h.b16 %v4043
        %v4335 = vunpack.c.l.b16 %v4044
        %v4336 = vunpack.c.h.b16 %v4044
        %v4337 = vunpack.c.l.b16 %v4045
        %v4338 = vunpack.c.h.b16 %v4045
        %v4339 = vunpack.c.l.b16 %v4046
        %v4340 = vunpack.c.h.b16 %v4046
        %v4341 = vunpack.c.l.b16 %v4047
        %v4342 = vunpack.c.h.b16 %v4047
        %v4343 = vunpack.c.l.b16 %v4048
        %v4344 = vunpack.c.h.b16 %v4048
        %v4345 = vunpack.c.l.b16 %v4049
        %v4346 = vunpack.c.h.b16 %v4049
        %v4347 = vunpack.c.l.b16 %v4050
        %v4348 = vunpack.c.h.b16 %v4050
        %v4349 = vunpack.c.l.b16 %v4051
        %v4350 = vunpack.c.h.b16 %v4051
        %v4351 = vunpack.c.l.b16 %v4052
        %v4352 = vunpack.c.h.b16 %v4052
        %v4353 = vunpack.c.l.b16 %v4053
        %v4354 = vunpack.c.h.b16 %v4053
        %v4355 = vunpack.c.l.b16 %v4054
        %v4356 = vunpack.c.h.b16 %v4054
        %v4357 = vunpack.c.l.b16 %v4055
        %v4358 = vunpack.c.h.b16 %v4055
        %v4359 = vunpack.c.l.b16 %v4056
        %v4360 = vunpack.c.h.b16 %v4056
        %v4361 = vunpack.c.l.b16 %v4057
        %v4362 = vunpack.c.h.b16 %v4057
        %v4363 = vunpack.c.l.b16 %v4058
        %v4364 = vunpack.c.h.b16 %v4058
        %v4365 = vunpack.c.l.b16 %v4059
        %v4366 = vunpack.c.h.b16 %v4059
        %v4367 = vunpack.c.l.b16 %v4060
        %v4368 = vunpack.c.h.b16 %v4060
        %v4369 = vunpack.c.l.b16 %v4061
        %v4370 = vunpack.c.h.b16 %v4061
        %v4371 = vunpack.c.l.b16 %v4062
        %v4372 = vunpack.c.h.b16 %v4062
        %v4373 = vunpack.c.l.b16 %v4063
        %v4374 = vunpack.c.h.b16 %v4063
        %v4375 = vunpack.c.l.b16 %v4064
        %v4376 = vunpack.c.h.b16 %v4064
        %v4377 = vunpack.c.l.b16 %v4065
        %v4378 = vunpack.c.h.b16 %v4065
        %v4379 = vunpack.c.l.b16 %v4066
        %v4380 = vunpack.c.h.b16 %v4066
        %v4381 = vunpack.c.l.b16 %v4067
        %v4382 = vunpack.c.h.b16 %v4067
        %v4383 = vunpack.c.l.b16 %v4068
        %v4384 = vunpack.c.h.b16 %v4068
        %v4385 = vunpack.c.l.b16 %v4069
        %v4386 = vunpack.c.h.b16 %v4069
        %v4387 = vunpack.c.l.b16 %v4070
        %v4388 = vunpack.c.h.b16 %v4070
        %v4389 = vunpack.c.l.b16 %v4071
        %v4390 = vunpack.c.h.b16 %v4071
        %v4391 = vunpack.c.l.b16 %v4072
        %v4392 = vunpack.c.h.b16 %v4072
        %v4393 = vunpack.c.l.b16 %v4073
        %v4394 = vunpack.c.h.b16 %v4073
        %v4395 = vunpack.c.l.b16 %v4074
        %v4396 = vunpack.c.h.b16 %v4074
        %v4397 = vunpack.c.l.b16 %v4075
        %v4398 = vunpack.c.h.b16 %v4075
        %v4399 = vunpack.c.l.b16 %v4076
        %v4400 = vunpack.c.h.b16 %v4076
        %v4401 = vunpack.c.l.b16 %v4077
        %v4402 = vunpack.c.h.b16 %v4077
        %v4403 = vunpack.c.l.b16 %v4078
        %v4404 = vunpack.c.h.b16 %v4078
        %v4405 = vunpack.c.l.b16 %v4079
        %v4406 = vunpack.c.h.b16 %v4079
        %v4407 = vunpack.c.l.b16 %v4080
        %v4408 = vunpack.c.h.b16 %v4080
        %v4409 = vunpack.c.l.b16 %v4081
        %v4410 = vunpack.c.h.b16 %v4081
        %v4411 = vunpack.c.l.b16 %v4082
        %v4412 = vunpack.c.h.b16 %v4082
        %v4413 = vunpack.c.l.b16 %v4083
        %v4414 = vunpack.c.h.b16 %v4083
        %v4415 = vunpack.c.l.b16 %v4084
        %v4416 = vunpack.c.h.b16 %v4084
        %v4417 = vunpack.c.l.b16 %v4085
        %v4418 = vunpack.c.h.b16 %v4085
        %v4419 = vunpack.c.l.b16 %v4086
        %v4420 = vunpack.c.h.b16 %v4086
        %v4421 = vunpack.c.l.b16 %v4087
        %v4422 = vunpack.c.h.b16 %v4087
        %v4423 = vunpack.c.l.b16 %v4088
        %v4424 = vunpack.c.h.b16 %v4088
        %v4425 = vunpack.c.l.b16 %v4089
        %v4426 = vunpack.c.h.b16 %v4089
        %v4427 = vunpack.c.l.b16 %v4090
        %v4428 = vunpack.c.h.b16 %v4090
        %v4429 = vunpack.c.l.b16 %v4091
        %v4430 = vunpack.c.h.b16 %v4091
        %v4431 = vunpack.c.l.b16 %v4092
        %v4432 = vunpack.c.h.b16 %v4092
        %v4433 = vunpack.c.l.b16 %v4093
        %v4434 = vunpack.c.h.b16 %v4093
        %v4435 = vunpack.c.l.b16 %v4094
        %v4436 = vunpack.c.h.b16 %v4094
        %v4437 = vunpack.c.l.b16 %v4095
        %v4438 = vunpack.c.h.b16 %v4095
        %v4439 = vunpack.c.l.b16 %v4096
        %v4440 = vunpack.c.h.b16 %v4096
        %v4441 = vunpack.c.l.b16 %v4097
        %v4442 = vunpack.c.h.b16 %v4097
        %v4443 = vunpack.c.l.b16 %v4098
        %v4444 = vunpack.c.h.b16 %v4098
        %v4445 = vunpack.c.l.b16 %v4099
        %v4446 = vunpack.c.h.b16 %v4099
        %v4447 = vunpack.c.l.b16 %v4100
        %v4448 = vunpack.c.h.b16 %v4100
        %v4449 = vunpack.c.l.b16 %v4101
        %v4450 = vunpack.c.h.b16 %v4101
        %v4451 = vunpack.c.l.b16 %v4102
        %v4452 = vunpack.c.h.b16 %v4102
        %v4453 = vunpack.c.l.b16 %v4103
        %v4454 = vunpack.c.h.b16 %v4103
        %v4455 = vunpack.c.l.b16 %v4104
        %v4456 = vunpack.c.h.b16 %v4104
        %v4457 = vunpack.c.l.b16 %v4105
        %v4458 = vunpack.c.h.b16 %v4105
        %v4459 = vunpack.c.l.b16 %v4106
        %v4460 = vunpack.c.h.b16 %v4106
        %v4461 = vunpack.c.l.b16 %v4107
        %v4462 = vunpack.c.h.b16 %v4107
        %v4463 = vunpack.c.l.b16 %v4108
        %v4464 = vunpack.c.h.b16 %v4108
        %v4465 = vunpack.c.l.b16 %v4109
        %v4466 = vunpack.c.h.b16 %v4109
        %v4467 = vunpack.c.l.b16 %v4110
        %v4468 = vunpack.c.h.b16 %v4110
        %v4469 = vunpack.c.l.b16 %v4111
        %v4470 = vunpack.c.h.b16 %v4111
        %v4471 = vunpack.c.l.b16 %v4112
        %v4472 = vunpack.c.h.b16 %v4112
        %v4473 = vunpack.c.l.b16 %v4113
        %v4474 = vunpack.c.h.b16 %v4113
        %v4475 = vunpack.c.l.b16 %v4114
        %v4476 = vunpack.c.h.b16 %v4114
        %v4477 = vunpack.c.l.b16 %v4115
        %v4478 = vunpack.c.h.b16 %v4115
        %v4479 = vunpack.c.l.b16 %v4116
        %v4480 = vunpack.c.h.b16 %v4116
        %v4481 = vunpack.c.l.b16 %v4117
        %v4482 = vunpack.c.h.b16 %v4117
        %v4483 = vunpack.c.l.b16 %v4118
        %v4484 = vunpack.c.h.b16 %v4118
        %v4485 = vunpack.c.l.b16 %v4119
        %v4486 = vunpack.c.h.b16 %v4119
        %v4487 = vunpack.c.l.b16 %v4120
        %v4488 = vunpack.c.h.b16 %v4120
        %v4489 = vunpack.c.l.b16 %v4121
        %v4490 = vunpack.c.h.b16 %v4121
        %v4491 = vunpack.c.l.b16 %v4122
        %v4492 = vunpack.c.h.b16 %v4122
        %v4493 = vunpack.c.l.b16 %v4123
        %v4494 = vunpack.c.h.b16 %v4123
        %v4495 = vunpack.c.l.b16 %v4124
        %v4496 = vunpack.c.h.b16 %v4124
        %v4497 = vunpack.c.l.b16 %v4125
        %v4498 = vunpack.c.h.b16 %v4125
        %v4499 = vunpack.c.l.b16 %v4126
        %v4500 = vunpack.c.h.b16 %v4126
        %v4501 = vunpack.c.l.b16 %v4127
        %v4502 = vunpack.c.h.b16 %v4127
        %v4503 = vunpack.c.l.b16 %v4128
        %v4504 = vunpack.c.h.b16 %v4128
        %v4505 = vunpack.c.l.b16 %v4129
        %v4506 = vunpack.c.h.b16 %v4129
        %v4507 = vunpack.c.l.b16 %v4130
        %v4508 = vunpack.c.h.b16 %v4130
        %v4509 = vunpack.c.l.b16 %v4131
        %v4510 = vunpack.c.h.b16 %v4131
        %v4511 = vunpack.c.l.b16 %v4132
        %v4512 = vunpack.c.h.b16 %v4132
        %v4513 = vunpack.c.l.b16 %v4133
        %v4514 = vunpack.c.h.b16 %v4133
        %v4515 = vunpack.c.l.b16 %v4134
        %v4516 = vunpack.c.h.b16 %v4134
        %v4517 = vunpack.c.l.b16 %v4135
        %v4518 = vunpack.c.h.b16 %v4135
        %v4519 = vunpack.c.l.b16 %v4136
        %v4520 = vunpack.c.h.b16 %v4136
        %v4521 = vunpack.c.l.b16 %v4137
        %v4522 = vunpack.c.h.b16 %v4137
        %v4523 = vunpack.c.l.b16 %v4138
        %v4524 = vunpack.c.h.b16 %v4138
        %v4525 = vunpack.c.l.b16 %v4139
        %v4526 = vunpack.c.h.b16 %v4139
        %v4527 = vunpack.c.l.b16 %v4140
        %v4528 = vunpack.c.h.b16 %v4140
        %v4529 = vunpack.c.l.b16 %v4141
        %v4530 = vunpack.c.h.b16 %v4141
        %v4531 = vunpack.c.l.b16 %v4142
        %v4532 = vunpack.c.h.b16 %v4142
        %v4533 = vpack.c.b16 %v4279, %v4277
        %v4534 = vpack.c.b16 %v4280, %v4278
        %v4535 = vpack.c.b16 %v4283, %v4281
        %v4536 = vpack.c.b16 %v4284, %v4282
        %v4537 = vpack.c.b16 %v4287, %v4285
        %v4538 = vpack.c.b16 %v4288, %v4286
        %v4539 = vpack.c.b16 %v4291, %v4289
        %v4540 = vpack.c.b16 %v4292, %v4290
        %v4541 = vpack.c.b16 %v4295, %v4293
        %v4542 = vpack.c.b16 %v4296, %v4294
        %v4543 = vpack.c.b16 %v4299, %v4297
        %v4544 = vpack.c.b16 %v4300, %v4298
        %v4545 = vpack.c.b16 %v4303, %v4301
        %v4546 = vpack.c.b16 %v4304, %v4302
        %v4547 = vpack.c.b16 %v4307, %v4305
        %v4548 = vpack.c.b16 %v4308, %v4306
        %v4549 = vpack.c.b16 %v4311, %v4309
        %v4550 = vpack.c.b16 %v4312, %v4310
        %v4551 = vpack.c.b16 %v4315, %v4313
        %v4552 = vpack.c.b16 %v4316, %v4314
        %v4553 = vpack.c.b16 %v4319, %v4317
        %v4554 = vpack.c.b16 %v4320, %v4318
        %v4555 = vpack.c.b16 %v4323, %v4321
        %v4556 = vpack.c.b16 %v4324, %v4322
        %v4557 = vpack.c.b16 %v4327, %v4325
        %v4558 = vpack.c.b16 %v4328, %v4326
        %v4559 = vpack.c.b16 %v4331, %v4329
        %v4560 = vpack.c.b16 %v4332, %v4330
        %v4561 = vpack.c.b16 %v4335, %v4333
        %v4562 = vpack.c.b16 %v4336, %v4334
        %v4563 = vpack.c.b16 %v4339, %v4337
        %v4564 = vpack.c.b16 %v4340, %v4338
        %v4565 = vpack.c.b16 %v4343, %v4341
        %v4566 = vpack.c.b16 %v4344, %v4342
        %v4567 = vpack.c.b16 %v4347, %v4345
        %v4568 = vpack.c.b16 %v4348, %v4346
        %v4569 = vpack.c.b16 %v4351, %v4349
        %v4570 = vpack.c.b16 %v4352, %v4350
        %v4571 = vpack.c.b16 %v4355, %v4353
        %v4572 = vpack.c.b16 %v4356, %v4354
        %v4573 = vpack.c.b16 %v4359, %v4357
        %v4574 = vpack.c.b16 %v4360, %v4358
        %v4575 = vpack.c.b16 %v4363, %v4361
        %v4576 = vpack.c.b16 %v4364, %v4362
        %v4577 = vpack.c.b16 %v4367, %v4365
        %v4578 = vpack.c.b16 %v4368, %v4366
        %v4579 = vpack.c.b16 %v4371, %v4369
        %v4580 = vpack.c.b16 %v4372, %v4370
        %v4581 = vpack.c.b16 %v4375, %v4373
        %v4582 = vpack.c.b16 %v4376, %v4374
        %v4583 = vpack.c.b16 %v4379, %v4377
        %v4584 = vpack.c.b16 %v4380, %v4378
        %v4585 = vpack.c.b16 %v4383, %v4381
        %v4586 = vpack.c.b16 %v4384, %v4382
        %v4587 = vpack.c.b16 %v4387, %v4385
        %v4588 = vpack.c.b16 %v4388, %v4386
        %v4589 = vpack.c.b16 %v4391, %v4389
        %v4590 = vpack.c.b16 %v4392, %v4390
        %v4591 = vpack.c.b16 %v4395, %v4393
        %v4592 = vpack.c.b16 %v4396, %v4394
        %v4593 = vpack.c.b16 %v4399, %v4397
        %v4594 = vpack.c.b16 %v4400, %v4398
        %v4595 = vpack.c.b16 %v4403, %v4401
        %v4596 = vpack.c.b16 %v4404, %v4402
        %v4597 = vpack.c.b16 %v4407, %v4405
        %v4598 = vpack.c.b16 %v4408, %v4406
        %v4599 = vpack.c.b16 %v4411, %v4409
        %v4600 = vpack.c.b16 %v4412, %v4410
        %v4601 = vpack.c.b16 %v4415, %v4413
        %v4602 = vpack.c.b16 %v4416, %v4414
        %v4603 = vpack.c.b16 %v4419, %v4417
        %v4604 = vpack.c.b16 %v4420, %v4418
        %v4605 = vpack.c.b16 %v4423, %v4421
        %v4606 = vpack.c.b16 %v4424, %v4422
        %v4607 = vpack.c.b16 %v4427, %v4425
        %v4608 = vpack.c.b16 %v4428, %v4426
        %v4609 = vpack.c.b16 %v4431, %v4429
        %v4610 = vpack.c.b16 %v4432, %v4430
        %v4611 = vpack.c.b16 %v4435, %v4433
        %v4612 = vpack.c.b16 %v4436, %v4434
        %v4613 = vpack.c.b16 %v4439, %v4437
        %v4614 = vpack.c.b16 %v4440, %v4438
        %v4615 = vpack.c.b16 %v4443, %v4441
        %v4616 = vpack.c.b16 %v4444, %v4442
        %v4617 = vpack.c.b16 %v4447, %v4445
        %v4618 = vpack.c.b16 %v4448, %v4446
        %v4619 = vpack.c.b16 %v4451, %v4449
        %v4620 = vpack.c.b16 %v4452, %v4450
        %v4621 = vpack.c.b16 %v4455, %v4453
        %v4622 = vpack.c.b16 %v4456, %v4454
        %v4623 = vpack.c.b16 %v4459, %v4457
        %v4624 = vpack.c.b16 %v4460, %v4458
        %v4625 = vpack.c.b16 %v4463, %v4461
        %v4626 = vpack.c.b16 %v4464, %v4462
        %v4627 = vpack.c.b16 %v4467, %v4465
        %v4628 = vpack.c.b16 %v4468, %v4466
        %v4629 = vpack.c.b16 %v4471, %v4469
        %v4630 = vpack.c.b16 %v4472, %v4470
        %v4631 = vpack.c.b16 %v4475, %v4473
        %v4632 = vpack.c.b16 %v4476, %v4474
        %v4633 = vpack.c.b16 %v4479, %v4477
        %v4634 = vpack.c.b16 %v4480, %v4478
        %v4635 = vpack.c.b16 %v4483, %v4481
        %v4636 = vpack.c.b16 %v4484, %v4482
        %v4637 = vpack.c.b16 %v4487, %v4485
        %v4638 = vpack.c.b16 %v4488, %v4486
        %v4639 = vpack.c.b16 %v4491, %v4489
        %v4640 = vpack.c.b16 %v4492, %v4490
        %v4641 = vpack.c.b16 %v4495, %v4493
        %v4642 = vpack.c.b16 %v4496, %v4494
        %v4643 = vpack.c.b16 %v4499, %v4497
        %v4644 = vpack.c.b16 %v4500, %v4498
        %v4645 = vpack.c.b16 %v4503, %v4501
        %v4646 = vpack.c.b16 %v4504, %v4502
        %v4647 = vpack.c.b16 %v4507, %v4505
        %v4648 = vpack.c.b16 %v4508, %v4506
        %v4649 = vpack.c.b16 %v4511, %v4509
        %v4650 = vpack.c.b16 %v4512, %v4510
        %v4651 = vpack.c.b16 %v4515, %v4513
        %v4652 = vpack.c.b16 %v4516, %v4514
        %v4653 = vpack.c.b16 %v4519, %v4517
        %v4654 = vpack.c.b16 %v4520, %v4518
        %v4655 = vpack.c.b16 %v4523, %v4521
        %v4656 = vpack.c.b16 %v4524, %v4522
        %v4657 = vpack.c.b16 %v4527, %v4525
        %v4658 = vpack.c.b16 %v4528, %v4526
        %v4659 = vpack.c.b16 %v4531, %v4529
        %v4660 = vpack.c.b16 %v4532, %v4530
        %4789 = vmatpush.bf16.msra.mxu0 %v4547
        %4790 = vmatpush.bf16.msra.mxu0 %v4545
        %4791 = vmatpush.bf16.msra.mxu0 %v4543
        %4792 = vmatpush.bf16.msra.mxu0 %v4541
        %4793 = vmatpush.bf16.msra.mxu0 %v4539
        %4794 = vmatpush.bf16.msra.mxu0 %v4537
        %4795 = vmatpush.bf16.msra.mxu0 %v4535
        %4796 = vmatpush.bf16.msra.mxu0 %v4533
        %4797 = vmatmul.bf16.gmra.mxu0 %v3951
        %v4798 = vpop.f32.mrf.mxu0
        %v4799 = vadd.f32 %v4145, %v4798
        %v4800 = vpop.f32.mrf.mxu0
        %v4801 = vadd.f32 %v4145, %v4800
        %4802 = vmatmul.bf16.gmra.mxu0 %v3959
        %v4803 = vpop.f32.mrf.mxu0
        %v4804 = vadd.f32 %v4145, %v4803
        %v4805 = vpop.f32.mrf.mxu0
        %v4806 = vadd.f32 %v4145, %v4805
        %4807 = vmatmul.bf16.gmra.mxu0 %v3967
        %v4808 = vpop.f32.mrf.mxu0
        %v4809 = vadd.f32 %v4145, %v4808
        %v4810 = vpop.f32.mrf.mxu0
        %v4811 = vadd.f32 %v4145, %v4810
        %4812 = vmatmul.bf16.gmra.mxu0 %v3975
        %v4813 = vpop.f32.mrf.mxu0
        %v4814 = vadd.f32 %v4145, %v4813
        %v4815 = vpop.f32.mrf.mxu0
        %v4816 = vadd.f32 %v4145, %v4815
        %4817 = vmatmul.bf16.gmra.mxu0 %v3983
        %v4818 = vpop.f32.mrf.mxu0
        %v4819 = vadd.f32 %v4145, %v4818
        %v4820 = vpop.f32.mrf.mxu0
        %v4821 = vadd.f32 %v4145, %v4820
        %4822 = vmatmul.bf16.gmra.mxu0 %v3991
        %v4823 = vpop.f32.mrf.mxu0
        %v4824 = vadd.f32 %v4145, %v4823
        %v4825 = vpop.f32.mrf.mxu0
        %v4826 = vadd.f32 %v4145, %v4825
        %4827 = vmatmul.bf16.gmra.mxu0 %v3999
        %v4828 = vpop.f32.mrf.mxu0
        %v4829 = vadd.f32 %v4145, %v4828
        %v4830 = vpop.f32.mrf.mxu0
        %v4831 = vadd.f32 %v4145, %v4830
        %4832 = vmatmul.bf16.gmra.mxu0 %v4007
        %v4833 = vpop.f32.mrf.mxu0
        %v4834 = vadd.f32 %v4145, %v4833
        %v4835 = vpop.f32.mrf.mxu0
        %v4836 = vadd.f32 %v4145, %v4835
        %4837 = vdwg.mxu0
        %4838 = vmatpush.bf16.msra.mxu0 %v4563
        %4839 = vmatpush.bf16.msra.mxu0 %v4561
        %4840 = vmatpush.bf16.msra.mxu0 %v4559
        %4841 = vmatpush.bf16.msra.mxu0 %v4557
        %4842 = vmatpush.bf16.msra.mxu0 %v4555
        %4843 = vmatpush.bf16.msra.mxu0 %v4553
        %4844 = vmatpush.bf16.msra.mxu0 %v4551
        %4845 = vmatpush.bf16.msra.mxu0 %v4549
        %4846 = vmatmul.bf16.gmra.mxu0 %v3952
        %v4847 = vpop.f32.mrf.mxu0
        %v4848 = vadd.f32 %v4799, %v4847
        %v4849 = vpop.f32.mrf.mxu0
        %v4850 = vadd.f32 %v4801, %v4849
        %4851 = vmatmul.bf16.gmra.mxu0 %v3960
        %v4852 = vpop.f32.mrf.mxu0
        %v4853 = vadd.f32 %v4804, %v4852
        %v4854 = vpop.f32.mrf.mxu0
        %v4855 = vadd.f32 %v4806, %v4854
        %4856 = vmatmul.bf16.gmra.mxu0 %v3968
        %v4857 = vpop.f32.mrf.mxu0
        %v4858 = vadd.f32 %v4809, %v4857
        %v4859 = vpop.f32.mrf.mxu0
        %v4860 = vadd.f32 %v4811, %v4859
        %4861 = vmatmul.bf16.gmra.mxu0 %v3976
        %v4862 = vpop.f32.mrf.mxu0
        %v4863 = vadd.f32 %v4814, %v4862
        %v4864 = vpop.f32.mrf.mxu0
        %v4865 = vadd.f32 %v4816, %v4864
        %4866 = vmatmul.bf16.gmra.mxu0 %v3984
        %v4867 = vpop.f32.mrf.mxu0
        %v4868 = vadd.f32 %v4819, %v4867
        %v4869 = vpop.f32.mrf.mxu0
        %v4870 = vadd.f32 %v4821, %v4869
        %4871 = vmatmul.bf16.gmra.mxu0 %v3992
        %v4872 = vpop.f32.mrf.mxu0
        %v4873 = vadd.f32 %v4824, %v4872
        %v4874 = vpop.f32.mrf.mxu0
        %v4875 = vadd.f32 %v4826, %v4874
        %4876 = vmatmul.bf16.gmra.mxu0 %v4000
        %v4877 = vpop.f32.mrf.mxu0
        %v4878 = vadd.f32 %v4829, %v4877
        %v4879 = vpop.f32.mrf.mxu0
        %v4880 = vadd.f32 %v4831, %v4879
        %4881 = vmatmul.bf16.gmra.mxu0 %v4008
        %v4882 = vpop.f32.mrf.mxu0
        %v4883 = vadd.f32 %v4834, %v4882
        %v4884 = vpop.f32.mrf.mxu0
        %v4885 = vadd.f32 %v4836, %v4884
        %4886 = vdwg.mxu0
        %4887 = vmatpush.bf16.msra.mxu0 %v4579
        %4888 = vmatpush.bf16.msra.mxu0 %v4577
        %4889 = vmatpush.bf16.msra.mxu0 %v4575
        %4890 = vmatpush.bf16.msra.mxu0 %v4573
        %4891 = vmatpush.bf16.msra.mxu0 %v4571
        %4892 = vmatpush.bf16.msra.mxu0 %v4569
        %4893 = vmatpush.bf16.msra.mxu0 %v4567
        %4894 = vmatpush.bf16.msra.mxu0 %v4565
        %4895 = vmatmul.bf16.gmra.mxu0 %v3953
        %v4896 = vpop.f32.mrf.mxu0
        %v4897 = vadd.f32 %v4848, %v4896
        %v4898 = vpop.f32.mrf.mxu0
        %v4899 = vadd.f32 %v4850, %v4898
        %4900 = vmatmul.bf16.gmra.mxu0 %v3961
        %v4901 = vpop.f32.mrf.mxu0
        %v4902 = vadd.f32 %v4853, %v4901
        %v4903 = vpop.f32.mrf.mxu0
        %v4904 = vadd.f32 %v4855, %v4903
        %4905 = vmatmul.bf16.gmra.mxu0 %v3969
        %v4906 = vpop.f32.mrf.mxu0
        %v4907 = vadd.f32 %v4858, %v4906
        %v4908 = vpop.f32.mrf.mxu0
        %v4909 = vadd.f32 %v4860, %v4908
        %4910 = vmatmul.bf16.gmra.mxu0 %v3977
        %v4911 = vpop.f32.mrf.mxu0
        %v4912 = vadd.f32 %v4863, %v4911
        %v4913 = vpop.f32.mrf.mxu0
        %v4914 = vadd.f32 %v4865, %v4913
        %4915 = vmatmul.bf16.gmra.mxu0 %v3985
        %v4916 = vpop.f32.mrf.mxu0
        %v4917 = vadd.f32 %v4868, %v4916
        %v4918 = vpop.f32.mrf.mxu0
        %v4919 = vadd.f32 %v4870, %v4918
        %4920 = vmatmul.bf16.gmra.mxu0 %v3993
        %v4921 = vpop.f32.mrf.mxu0
        %v4922 = vadd.f32 %v4873, %v4921
        %v4923 = vpop.f32.mrf.mxu0
        %v4924 = vadd.f32 %v4875, %v4923
        %4925 = vmatmul.bf16.gmra.mxu0 %v4001
        %v4926 = vpop.f32.mrf.mxu0
        %v4927 = vadd.f32 %v4878, %v4926
        %v4928 = vpop.f32.mrf.mxu0
        %v4929 = vadd.f32 %v4880, %v4928
        %4930 = vmatmul.bf16.gmra.mxu0 %v4009
        %v4931 = vpop.f32.mrf.mxu0
        %v4932 = vadd.f32 %v4883, %v4931
        %v4933 = vpop.f32.mrf.mxu0
        %v4934 = vadd.f32 %v4885, %v4933
        %4935 = vdwg.mxu0
        %4936 = vmatpush.bf16.msra.mxu0 %v4595
        %4937 = vmatpush.bf16.msra.mxu0 %v4593
        %4938 = vmatpush.bf16.msra.mxu0 %v4591
        %4939 = vmatpush.bf16.msra.mxu0 %v4589
        %4940 = vmatpush.bf16.msra.mxu0 %v4587
        %4941 = vmatpush.bf16.msra.mxu0 %v4585
        %4942 = vmatpush.bf16.msra.mxu0 %v4583
        %4943 = vmatpush.bf16.msra.mxu0 %v4581
        %4944 = vmatmul.bf16.gmra.mxu0 %v3954
        %v4945 = vpop.f32.mrf.mxu0
        %v4946 = vadd.f32 %v4897, %v4945
        %v4947 = vpop.f32.mrf.mxu0
        %v4948 = vadd.f32 %v4899, %v4947
        %4949 = vmatmul.bf16.gmra.mxu0 %v3962
        %v4950 = vpop.f32.mrf.mxu0
        %v4951 = vadd.f32 %v4902, %v4950
        %v4952 = vpop.f32.mrf.mxu0
        %v4953 = vadd.f32 %v4904, %v4952
        %4954 = vmatmul.bf16.gmra.mxu0 %v3970
        %v4955 = vpop.f32.mrf.mxu0
        %v4956 = vadd.f32 %v4907, %v4955
        %v4957 = vpop.f32.mrf.mxu0
        %v4958 = vadd.f32 %v4909, %v4957
        %4959 = vmatmul.bf16.gmra.mxu0 %v3978
        %v4960 = vpop.f32.mrf.mxu0
        %v4961 = vadd.f32 %v4912, %v4960
        %v4962 = vpop.f32.mrf.mxu0
        %v4963 = vadd.f32 %v4914, %v4962
        %4964 = vmatmul.bf16.gmra.mxu0 %v3986
        %v4965 = vpop.f32.mrf.mxu0
        %v4966 = vadd.f32 %v4917, %v4965
        %v4967 = vpop.f32.mrf.mxu0
        %v4968 = vadd.f32 %v4919, %v4967
        %4969 = vmatmul.bf16.gmra.mxu0 %v3994
        %v4970 = vpop.f32.mrf.mxu0
        %v4971 = vadd.f32 %v4922, %v4970
        %v4972 = vpop.f32.mrf.mxu0
        %v4973 = vadd.f32 %v4924, %v4972
        %4974 = vmatmul.bf16.gmra.mxu0 %v4002
        %v4975 = vpop.f32.mrf.mxu0
        %v4976 = vadd.f32 %v4927, %v4975
        %v4977 = vpop.f32.mrf.mxu0
        %v4978 = vadd.f32 %v4929, %v4977
        %4979 = vmatmul.bf16.gmra.mxu0 %v4010
        %v4980 = vpop.f32.mrf.mxu0
        %v4981 = vadd.f32 %v4932, %v4980
        %v4982 = vpop.f32.mrf.mxu0
        %v4983 = vadd.f32 %v4934, %v4982
        %4984 = vdwg.mxu0
        %4985 = vmatpush.bf16.msra.mxu0 %v4611
        %4986 = vmatpush.bf16.msra.mxu0 %v4609
        %4987 = vmatpush.bf16.msra.mxu0 %v4607
        %4988 = vmatpush.bf16.msra.mxu0 %v4605
        %4989 = vmatpush.bf16.msra.mxu0 %v4603
        %4990 = vmatpush.bf16.msra.mxu0 %v4601
        %4991 = vmatpush.bf16.msra.mxu0 %v4599
        %4992 = vmatpush.bf16.msra.mxu0 %v4597
        %4993 = vmatmul.bf16.gmra.mxu0 %v3955
        %v4994 = vpop.f32.mrf.mxu0
        %v4995 = vadd.f32 %v4946, %v4994
        %v4996 = vpop.f32.mrf.mxu0
        %v4997 = vadd.f32 %v4948, %v4996
        %4998 = vmatmul.bf16.gmra.mxu0 %v3963
        %v4999 = vpop.f32.mrf.mxu0
        %v5000 = vadd.f32 %v4951, %v4999
        %v5001 = vpop.f32.mrf.mxu0
        %v5002 = vadd.f32 %v4953, %v5001
        %5003 = vmatmul.bf16.gmra.mxu0 %v3971
        %v5004 = vpop.f32.mrf.mxu0
        %v5005 = vadd.f32 %v4956, %v5004
        %v5006 = vpop.f32.mrf.mxu0
        %v5007 = vadd.f32 %v4958, %v5006
        %5008 = vmatmul.bf16.gmra.mxu0 %v3979
        %v5009 = vpop.f32.mrf.mxu0
        %v5010 = vadd.f32 %v4961, %v5009
        %v5011 = vpop.f32.mrf.mxu0
        %v5012 = vadd.f32 %v4963, %v5011
        %5013 = vmatmul.bf16.gmra.mxu0 %v3987
        %v5014 = vpop.f32.mrf.mxu0
        %v5015 = vadd.f32 %v4966, %v5014
        %v5016 = vpop.f32.mrf.mxu0
        %v5017 = vadd.f32 %v4968, %v5016
        %5018 = vmatmul.bf16.gmra.mxu0 %v3995
        %v5019 = vpop.f32.mrf.mxu0
        %v5020 = vadd.f32 %v4971, %v5019
        %v5021 = vpop.f32.mrf.mxu0
        %v5022 = vadd.f32 %v4973, %v5021
        %5023 = vmatmul.bf16.gmra.mxu0 %v4003
        %v5024 = vpop.f32.mrf.mxu0
        %v5025 = vadd.f32 %v4976, %v5024
        %v5026 = vpop.f32.mrf.mxu0
        %v5027 = vadd.f32 %v4978, %v5026
        %5028 = vmatmul.bf16.gmra.mxu0 %v4011
        %v5029 = vpop.f32.mrf.mxu0
        %v5030 = vadd.f32 %v4981, %v5029
        %v5031 = vpop.f32.mrf.mxu0
        %v5032 = vadd.f32 %v4983, %v5031
        %5033 = vdwg.mxu0
        %5034 = vmatpush.bf16.msra.mxu0 %v4627
        %5035 = vmatpush.bf16.msra.mxu0 %v4625
        %5036 = vmatpush.bf16.msra.mxu0 %v4623
        %5037 = vmatpush.bf16.msra.mxu0 %v4621
        %5038 = vmatpush.bf16.msra.mxu0 %v4619
        %5039 = vmatpush.bf16.msra.mxu0 %v4617
        %5040 = vmatpush.bf16.msra.mxu0 %v4615
        %5041 = vmatpush.bf16.msra.mxu0 %v4613
        %5042 = vmatmul.bf16.gmra.mxu0 %v3956
        %v5043 = vpop.f32.mrf.mxu0
        %v5044 = vadd.f32 %v4995, %v5043
        %v5045 = vpop.f32.mrf.mxu0
        %v5046 = vadd.f32 %v4997, %v5045
        %5047 = vmatmul.bf16.gmra.mxu0 %v3964
        %v5048 = vpop.f32.mrf.mxu0
        %v5049 = vadd.f32 %v5000, %v5048
        %v5050 = vpop.f32.mrf.mxu0
        %v5051 = vadd.f32 %v5002, %v5050
        %5052 = vmatmul.bf16.gmra.mxu0 %v3972
        %v5053 = vpop.f32.mrf.mxu0
        %v5054 = vadd.f32 %v5005, %v5053
        %v5055 = vpop.f32.mrf.mxu0
        %v5056 = vadd.f32 %v5007, %v5055
        %5057 = vmatmul.bf16.gmra.mxu0 %v3980
        %v5058 = vpop.f32.mrf.mxu0
        %v5059 = vadd.f32 %v5010, %v5058
        %v5060 = vpop.f32.mrf.mxu0
        %v5061 = vadd.f32 %v5012, %v5060
        %5062 = vmatmul.bf16.gmra.mxu0 %v3988
        %v5063 = vpop.f32.mrf.mxu0
        %v5064 = vadd.f32 %v5015, %v5063
        %v5065 = vpop.f32.mrf.mxu0
        %v5066 = vadd.f32 %v5017, %v5065
        %5067 = vmatmul.bf16.gmra.mxu0 %v3996
        %v5068 = vpop.f32.mrf.mxu0
        %v5069 = vadd.f32 %v5020, %v5068
        %v5070 = vpop.f32.mrf.mxu0
        %v5071 = vadd.f32 %v5022, %v5070
        %5072 = vmatmul.bf16.gmra.mxu0 %v4004
        %v5073 = vpop.f32.mrf.mxu0
        %v5074 = vadd.f32 %v5025, %v5073
        %v5075 = vpop.f32.mrf.mxu0
        %v5076 = vadd.f32 %v5027, %v5075
        %5077 = vmatmul.bf16.gmra.mxu0 %v4012
        %v5078 = vpop.f32.mrf.mxu0
        %v5079 = vadd.f32 %v5030, %v5078
        %v5080 = vpop.f32.mrf.mxu0
        %v5081 = vadd.f32 %v5032, %v5080
        %5082 = vdwg.mxu0
        %5083 = vmatpush.bf16.msra.mxu0 %v4643
        %5084 = vmatpush.bf16.msra.mxu0 %v4641
        %5085 = vmatpush.bf16.msra.mxu0 %v4639
        %5086 = vmatpush.bf16.msra.mxu0 %v4637
        %5087 = vmatpush.bf16.msra.mxu0 %v4635
        %5088 = vmatpush.bf16.msra.mxu0 %v4633
        %5089 = vmatpush.bf16.msra.mxu0 %v4631
        %5090 = vmatpush.bf16.msra.mxu0 %v4629
        %5091 = vmatmul.bf16.gmra.mxu0 %v3957
        %v5092 = vpop.f32.mrf.mxu0
        %v5093 = vadd.f32 %v5044, %v5092
        %v5094 = vpop.f32.mrf.mxu0
        %v5095 = vadd.f32 %v5046, %v5094
        %5096 = vmatmul.bf16.gmra.mxu0 %v3965
        %v5097 = vpop.f32.mrf.mxu0
        %v5098 = vadd.f32 %v5049, %v5097
        %v5099 = vpop.f32.mrf.mxu0
        %v5100 = vadd.f32 %v5051, %v5099
        %5101 = vmatmul.bf16.gmra.mxu0 %v3973
        %v5102 = vpop.f32.mrf.mxu0
        %v5103 = vadd.f32 %v5054, %v5102
        %v5104 = vpop.f32.mrf.mxu0
        %v5105 = vadd.f32 %v5056, %v5104
        %5106 = vmatmul.bf16.gmra.mxu0 %v3981
        %v5107 = vpop.f32.mrf.mxu0
        %v5108 = vadd.f32 %v5059, %v5107
        %v5109 = vpop.f32.mrf.mxu0
        %v5110 = vadd.f32 %v5061, %v5109
        %5111 = vmatmul.bf16.gmra.mxu0 %v3989
        %v5112 = vpop.f32.mrf.mxu0
        %v5113 = vadd.f32 %v5064, %v5112
        %v5114 = vpop.f32.mrf.mxu0
        %v5115 = vadd.f32 %v5066, %v5114
        %5116 = vmatmul.bf16.gmra.mxu0 %v3997
        %v5117 = vpop.f32.mrf.mxu0
        %v5118 = vadd.f32 %v5069, %v5117
        %v5119 = vpop.f32.mrf.mxu0
        %v5120 = vadd.f32 %v5071, %v5119
        %5121 = vmatmul.bf16.gmra.mxu0 %v4005
        %v5122 = vpop.f32.mrf.mxu0
        %v5123 = vadd.f32 %v5074, %v5122
        %v5124 = vpop.f32.mrf.mxu0
        %v5125 = vadd.f32 %v5076, %v5124
        %5126 = vmatmul.bf16.gmra.mxu0 %v4013
        %v5127 = vpop.f32.mrf.mxu0
        %v5128 = vadd.f32 %v5079, %v5127
        %v5129 = vpop.f32.mrf.mxu0
        %v5130 = vadd.f32 %v5081, %v5129
        %5131 = vdwg.mxu0
        %5132 = vmatpush.bf16.msra.mxu0 %v4659
        %5133 = vmatpush.bf16.msra.mxu0 %v4657
        %5134 = vmatpush.bf16.msra.mxu0 %v4655
        %5135 = vmatpush.bf16.msra.mxu0 %v4653
        %5136 = vmatpush.bf16.msra.mxu0 %v4651
        %5137 = vmatpush.bf16.msra.mxu0 %v4649
        %5138 = vmatpush.bf16.msra.mxu0 %v4647
        %5139 = vmatpush.bf16.msra.mxu0 %v4645
        %5140 = vmatmul.bf16.gmra.mxu0 %v3958
        %v5141 = vpop.f32.mrf.mxu0
        %v5142 = vadd.f32 %v5093, %v5141
        %v5143 = vpop.f32.mrf.mxu0
        %v5144 = vadd.f32 %v5095, %v5143
        %5145 = vmatmul.bf16.gmra.mxu0 %v3966
        %v5146 = vpop.f32.mrf.mxu0
        %v5147 = vadd.f32 %v5098, %v5146
        %v5148 = vpop.f32.mrf.mxu0
        %v5149 = vadd.f32 %v5100, %v5148
        %5150 = vmatmul.bf16.gmra.mxu0 %v3974
        %v5151 = vpop.f32.mrf.mxu0
        %v5152 = vadd.f32 %v5103, %v5151
        %v5153 = vpop.f32.mrf.mxu0
        %v5154 = vadd.f32 %v5105, %v5153
        %5155 = vmatmul.bf16.gmra.mxu0 %v3982
        %v5156 = vpop.f32.mrf.mxu0
        %v5157 = vadd.f32 %v5108, %v5156
        %v5158 = vpop.f32.mrf.mxu0
        %v5159 = vadd.f32 %v5110, %v5158
        %5160 = vmatmul.bf16.gmra.mxu0 %v3990
        %v5161 = vpop.f32.mrf.mxu0
        %v5162 = vadd.f32 %v5113, %v5161
        %v5163 = vpop.f32.mrf.mxu0
        %v5164 = vadd.f32 %v5115, %v5163
        %5165 = vmatmul.bf16.gmra.mxu0 %v3998
        %v5166 = vpop.f32.mrf.mxu0
        %v5167 = vadd.f32 %v5118, %v5166
        %v5168 = vpop.f32.mrf.mxu0
        %v5169 = vadd.f32 %v5120, %v5168
        %5170 = vmatmul.bf16.gmra.mxu0 %v4006
        %v5171 = vpop.f32.mrf.mxu0
        %v5172 = vadd.f32 %v5123, %v5171
        %v5173 = vpop.f32.mrf.mxu0
        %v5174 = vadd.f32 %v5125, %v5173
        %5175 = vmatmul.bf16.gmra.mxu0 %v4014
        %v5176 = vpop.f32.mrf.mxu0
        %v5177 = vadd.f32 %v5128, %v5176
        %v5178 = vpop.f32.mrf.mxu0
        %v5179 = vadd.f32 %v5130, %v5178
        %5180 = vdwg.mxu0
        %5181 = vmatpush.bf16.msra.mxu0 %v4548
        %5182 = vmatpush.bf16.msra.mxu0 %v4546
        %5183 = vmatpush.bf16.msra.mxu0 %v4544
        %5184 = vmatpush.bf16.msra.mxu0 %v4542
        %5185 = vmatpush.bf16.msra.mxu0 %v4540
        %5186 = vmatpush.bf16.msra.mxu0 %v4538
        %5187 = vmatpush.bf16.msra.mxu0 %v4536
        %5188 = vmatpush.bf16.msra.mxu0 %v4534
        %5189 = vmatmul.bf16.gmra.mxu0 %v3951
        %v5190 = vpop.f32.mrf.mxu0
        %v5191 = vadd.f32 %v4146, %v5190
        %v5192 = vpop.f32.mrf.mxu0
        %v5193 = vadd.f32 %v4146, %v5192
        %5194 = vmatmul.bf16.gmra.mxu0 %v3959
        %v5195 = vpop.f32.mrf.mxu0
        %v5196 = vadd.f32 %v4146, %v5195
        %v5197 = vpop.f32.mrf.mxu0
        %v5198 = vadd.f32 %v4146, %v5197
        %5199 = vmatmul.bf16.gmra.mxu0 %v3967
        %v5200 = vpop.f32.mrf.mxu0
        %v5201 = vadd.f32 %v4146, %v5200
        %v5202 = vpop.f32.mrf.mxu0
        %v5203 = vadd.f32 %v4146, %v5202
        %5204 = vmatmul.bf16.gmra.mxu0 %v3975
        %v5205 = vpop.f32.mrf.mxu0
        %v5206 = vadd.f32 %v4146, %v5205
        %v5207 = vpop.f32.mrf.mxu0
        %v5208 = vadd.f32 %v4146, %v5207
        %5209 = vmatmul.bf16.gmra.mxu0 %v3983
        %v5210 = vpop.f32.mrf.mxu0
        %v5211 = vadd.f32 %v4146, %v5210
        %v5212 = vpop.f32.mrf.mxu0
        %v5213 = vadd.f32 %v4146, %v5212
        %5214 = vmatmul.bf16.gmra.mxu0 %v3991
        %v5215 = vpop.f32.mrf.mxu0
        %v5216 = vadd.f32 %v4146, %v5215
        %v5217 = vpop.f32.mrf.mxu0
        %v5218 = vadd.f32 %v4146, %v5217
        %5219 = vmatmul.bf16.gmra.mxu0 %v3999
        %v5220 = vpop.f32.mrf.mxu0
        %v5221 = vadd.f32 %v4146, %v5220
        %v5222 = vpop.f32.mrf.mxu0
        %v5223 = vadd.f32 %v4146, %v5222
        %5224 = vmatmul.bf16.gmra.mxu0 %v4007
        %v5225 = vpop.f32.mrf.mxu0
        %v5226 = vadd.f32 %v4146, %v5225
        %v5227 = vpop.f32.mrf.mxu0
        %v5228 = vadd.f32 %v4146, %v5227
        %5229 = vdwg.mxu0
        %5230 = vmatpush.bf16.msra.mxu0 %v4564
        %5231 = vmatpush.bf16.msra.mxu0 %v4562
        %5232 = vmatpush.bf16.msra.mxu0 %v4560
        %5233 = vmatpush.bf16.msra.mxu0 %v4558
        %5234 = vmatpush.bf16.msra.mxu0 %v4556
        %5235 = vmatpush.bf16.msra.mxu0 %v4554
        %5236 = vmatpush.bf16.msra.mxu0 %v4552
        %5237 = vmatpush.bf16.msra.mxu0 %v4550
        %5238 = vmatmul.bf16.gmra.mxu0 %v3952
        %v5239 = vpop.f32.mrf.mxu0
        %v5240 = vadd.f32 %v5191, %v5239
        %v5241 = vpop.f32.mrf.mxu0
        %v5242 = vadd.f32 %v5193, %v5241
        %5243 = vmatmul.bf16.gmra.mxu0 %v3960
        %v5244 = vpop.f32.mrf.mxu0
        %v5245 = vadd.f32 %v5196, %v5244
        %v5246 = vpop.f32.mrf.mxu0
        %v5247 = vadd.f32 %v5198, %v5246
        %5248 = vmatmul.bf16.gmra.mxu0 %v3968
        %v5249 = vpop.f32.mrf.mxu0
        %v5250 = vadd.f32 %v5201, %v5249
        %v5251 = vpop.f32.mrf.mxu0
        %v5252 = vadd.f32 %v5203, %v5251
        %5253 = vmatmul.bf16.gmra.mxu0 %v3976
        %v5254 = vpop.f32.mrf.mxu0
        %v5255 = vadd.f32 %v5206, %v5254
        %v5256 = vpop.f32.mrf.mxu0
        %v5257 = vadd.f32 %v5208, %v5256
        %5258 = vmatmul.bf16.gmra.mxu0 %v3984
        %v5259 = vpop.f32.mrf.mxu0
        %v5260 = vadd.f32 %v5211, %v5259
        %v5261 = vpop.f32.mrf.mxu0
        %v5262 = vadd.f32 %v5213, %v5261
        %5263 = vmatmul.bf16.gmra.mxu0 %v3992
        %v5264 = vpop.f32.mrf.mxu0
        %v5265 = vadd.f32 %v5216, %v5264
        %v5266 = vpop.f32.mrf.mxu0
        %v5267 = vadd.f32 %v5218, %v5266
        %5268 = vmatmul.bf16.gmra.mxu0 %v4000
        %v5269 = vpop.f32.mrf.mxu0
        %v5270 = vadd.f32 %v5221, %v5269
        %v5271 = vpop.f32.mrf.mxu0
        %v5272 = vadd.f32 %v5223, %v5271
        %5273 = vmatmul.bf16.gmra.mxu0 %v4008
        %v5274 = vpop.f32.mrf.mxu0
        %v5275 = vadd.f32 %v5226, %v5274
        %v5276 = vpop.f32.mrf.mxu0
        %v5277 = vadd.f32 %v5228, %v5276
        %5278 = vdwg.mxu0
        %5279 = vmatpush.bf16.msra.mxu0 %v4580
        %5280 = vmatpush.bf16.msra.mxu0 %v4578
        %5281 = vmatpush.bf16.msra.mxu0 %v4576
        %5282 = vmatpush.bf16.msra.mxu0 %v4574
        %5283 = vmatpush.bf16.msra.mxu0 %v4572
        %5284 = vmatpush.bf16.msra.mxu0 %v4570
        %5285 = vmatpush.bf16.msra.mxu0 %v4568
        %5286 = vmatpush.bf16.msra.mxu0 %v4566
        %5287 = vmatmul.bf16.gmra.mxu0 %v3953
        %v5288 = vpop.f32.mrf.mxu0
        %v5289 = vadd.f32 %v5240, %v5288
        %v5290 = vpop.f32.mrf.mxu0
        %v5291 = vadd.f32 %v5242, %v5290
        %5292 = vmatmul.bf16.gmra.mxu0 %v3961
        %v5293 = vpop.f32.mrf.mxu0
        %v5294 = vadd.f32 %v5245, %v5293
        %v5295 = vpop.f32.mrf.mxu0
        %v5296 = vadd.f32 %v5247, %v5295
        %5297 = vmatmul.bf16.gmra.mxu0 %v3969
        %v5298 = vpop.f32.mrf.mxu0
        %v5299 = vadd.f32 %v5250, %v5298
        %v5300 = vpop.f32.mrf.mxu0
        %v5301 = vadd.f32 %v5252, %v5300
        %5302 = vmatmul.bf16.gmra.mxu0 %v3977
        %v5303 = vpop.f32.mrf.mxu0
        %v5304 = vadd.f32 %v5255, %v5303
        %v5305 = vpop.f32.mrf.mxu0
        %v5306 = vadd.f32 %v5257, %v5305
        %5307 = vmatmul.bf16.gmra.mxu0 %v3985
        %v5308 = vpop.f32.mrf.mxu0
        %v5309 = vadd.f32 %v5260, %v5308
        %v5310 = vpop.f32.mrf.mxu0
        %v5311 = vadd.f32 %v5262, %v5310
        %5312 = vmatmul.bf16.gmra.mxu0 %v3993
        %v5313 = vpop.f32.mrf.mxu0
        %v5314 = vadd.f32 %v5265, %v5313
        %v5315 = vpop.f32.mrf.mxu0
        %v5316 = vadd.f32 %v5267, %v5315
        %5317 = vmatmul.bf16.gmra.mxu0 %v4001
        %v5318 = vpop.f32.mrf.mxu0
        %v5319 = vadd.f32 %v5270, %v5318
        %v5320 = vpop.f32.mrf.mxu0
        %v5321 = vadd.f32 %v5272, %v5320
        %5322 = vmatmul.bf16.gmra.mxu0 %v4009
        %v5323 = vpop.f32.mrf.mxu0
        %v5324 = vadd.f32 %v5275, %v5323
        %v5325 = vpop.f32.mrf.mxu0
        %v5326 = vadd.f32 %v5277, %v5325
        %5327 = vdwg.mxu0
        %5328 = vmatpush.bf16.msra.mxu0 %v4596
        %5329 = vmatpush.bf16.msra.mxu0 %v4594
        %5330 = vmatpush.bf16.msra.mxu0 %v4592
        %5331 = vmatpush.bf16.msra.mxu0 %v4590
        %5332 = vmatpush.bf16.msra.mxu0 %v4588
        %5333 = vmatpush.bf16.msra.mxu0 %v4586
        %5334 = vmatpush.bf16.msra.mxu0 %v4584
        %5335 = vmatpush.bf16.msra.mxu0 %v4582
        %5336 = vmatmul.bf16.gmra.mxu0 %v3954
        %v5337 = vpop.f32.mrf.mxu0
        %v5338 = vadd.f32 %v5289, %v5337
        %v5339 = vpop.f32.mrf.mxu0
        %v5340 = vadd.f32 %v5291, %v5339
        %5341 = vmatmul.bf16.gmra.mxu0 %v3962
        %v5342 = vpop.f32.mrf.mxu0
        %v5343 = vadd.f32 %v5294, %v5342
        %v5344 = vpop.f32.mrf.mxu0
        %v5345 = vadd.f32 %v5296, %v5344
        %5346 = vmatmul.bf16.gmra.mxu0 %v3970
        %v5347 = vpop.f32.mrf.mxu0
        %v5348 = vadd.f32 %v5299, %v5347
        %v5349 = vpop.f32.mrf.mxu0
        %v5350 = vadd.f32 %v5301, %v5349
        %5351 = vmatmul.bf16.gmra.mxu0 %v3978
        %v5352 = vpop.f32.mrf.mxu0
        %v5353 = vadd.f32 %v5304, %v5352
        %v5354 = vpop.f32.mrf.mxu0
        %v5355 = vadd.f32 %v5306, %v5354
        %5356 = vmatmul.bf16.gmra.mxu0 %v3986
        %v5357 = vpop.f32.mrf.mxu0
        %v5358 = vadd.f32 %v5309, %v5357
        %v5359 = vpop.f32.mrf.mxu0
        %v5360 = vadd.f32 %v5311, %v5359
        %5361 = vmatmul.bf16.gmra.mxu0 %v3994
        %v5362 = vpop.f32.mrf.mxu0
        %v5363 = vadd.f32 %v5314, %v5362
        %v5364 = vpop.f32.mrf.mxu0
        %v5365 = vadd.f32 %v5316, %v5364
        %5366 = vmatmul.bf16.gmra.mxu0 %v4002
        %v5367 = vpop.f32.mrf.mxu0
        %v5368 = vadd.f32 %v5319, %v5367
        %v5369 = vpop.f32.mrf.mxu0
        %v5370 = vadd.f32 %v5321, %v5369
        %5371 = vmatmul.bf16.gmra.mxu0 %v4010
        %v5372 = vpop.f32.mrf.mxu0
        %v5373 = vadd.f32 %v5324, %v5372
        %v5374 = vpop.f32.mrf.mxu0
        %v5375 = vadd.f32 %v5326, %v5374
        %5376 = vdwg.mxu0
        %5377 = vmatpush.bf16.msra.mxu0 %v4612
        %5378 = vmatpush.bf16.msra.mxu0 %v4610
        %5379 = vmatpush.bf16.msra.mxu0 %v4608
        %5380 = vmatpush.bf16.msra.mxu0 %v4606
        %5381 = vmatpush.bf16.msra.mxu0 %v4604
        %5382 = vmatpush.bf16.msra.mxu0 %v4602
        %5383 = vmatpush.bf16.msra.mxu0 %v4600
        %5384 = vmatpush.bf16.msra.mxu0 %v4598
        %5385 = vmatmul.bf16.gmra.mxu0 %v3955
        %v5386 = vpop.f32.mrf.mxu0
        %v5387 = vadd.f32 %v5338, %v5386
        %v5388 = vpop.f32.mrf.mxu0
        %v5389 = vadd.f32 %v5340, %v5388
        %5390 = vmatmul.bf16.gmra.mxu0 %v3963
        %v5391 = vpop.f32.mrf.mxu0
        %v5392 = vadd.f32 %v5343, %v5391
        %v5393 = vpop.f32.mrf.mxu0
        %v5394 = vadd.f32 %v5345, %v5393
        %5395 = vmatmul.bf16.gmra.mxu0 %v3971
        %v5396 = vpop.f32.mrf.mxu0
        %v5397 = vadd.f32 %v5348, %v5396
        %v5398 = vpop.f32.mrf.mxu0
        %v5399 = vadd.f32 %v5350, %v5398
        %5400 = vmatmul.bf16.gmra.mxu0 %v3979
        %v5401 = vpop.f32.mrf.mxu0
        %v5402 = vadd.f32 %v5353, %v5401
        %v5403 = vpop.f32.mrf.mxu0
        %v5404 = vadd.f32 %v5355, %v5403
        %5405 = vmatmul.bf16.gmra.mxu0 %v3987
        %v5406 = vpop.f32.mrf.mxu0
        %v5407 = vadd.f32 %v5358, %v5406
        %v5408 = vpop.f32.mrf.mxu0
        %v5409 = vadd.f32 %v5360, %v5408
        %5410 = vmatmul.bf16.gmra.mxu0 %v3995
        %v5411 = vpop.f32.mrf.mxu0
        %v5412 = vadd.f32 %v5363, %v5411
        %v5413 = vpop.f32.mrf.mxu0
        %v5414 = vadd.f32 %v5365, %v5413
        %5415 = vmatmul.bf16.gmra.mxu0 %v4003
        %v5416 = vpop.f32.mrf.mxu0
        %v5417 = vadd.f32 %v5368, %v5416
        %v5418 = vpop.f32.mrf.mxu0
        %v5419 = vadd.f32 %v5370, %v5418
        %5420 = vmatmul.bf16.gmra.mxu0 %v4011
        %v5421 = vpop.f32.mrf.mxu0
        %v5422 = vadd.f32 %v5373, %v5421
        %v5423 = vpop.f32.mrf.mxu0
        %v5424 = vadd.f32 %v5375, %v5423
        %5425 = vdwg.mxu0
        %5426 = vmatpush.bf16.msra.mxu0 %v4628
        %5427 = vmatpush.bf16.msra.mxu0 %v4626
        %5428 = vmatpush.bf16.msra.mxu0 %v4624
        %5429 = vmatpush.bf16.msra.mxu0 %v4622
        %5430 = vmatpush.bf16.msra.mxu0 %v4620
        %5431 = vmatpush.bf16.msra.mxu0 %v4618
        %5432 = vmatpush.bf16.msra.mxu0 %v4616
        %5433 = vmatpush.bf16.msra.mxu0 %v4614
        %5434 = vmatmul.bf16.gmra.mxu0 %v3956
        %v5435 = vpop.f32.mrf.mxu0
        %v5436 = vadd.f32 %v5387, %v5435
        %v5437 = vpop.f32.mrf.mxu0
        %v5438 = vadd.f32 %v5389, %v5437
        %5439 = vmatmul.bf16.gmra.mxu0 %v3964
        %v5440 = vpop.f32.mrf.mxu0
        %v5441 = vadd.f32 %v5392, %v5440
        %v5442 = vpop.f32.mrf.mxu0
        %v5443 = vadd.f32 %v5394, %v5442
        %5444 = vmatmul.bf16.gmra.mxu0 %v3972
        %v5445 = vpop.f32.mrf.mxu0
        %v5446 = vadd.f32 %v5397, %v5445
        %v5447 = vpop.f32.mrf.mxu0
        %v5448 = vadd.f32 %v5399, %v5447
        %5449 = vmatmul.bf16.gmra.mxu0 %v3980
        %v5450 = vpop.f32.mrf.mxu0
        %v5451 = vadd.f32 %v5402, %v5450
        %v5452 = vpop.f32.mrf.mxu0
        %v5453 = vadd.f32 %v5404, %v5452
        %5454 = vmatmul.bf16.gmra.mxu0 %v3988
        %v5455 = vpop.f32.mrf.mxu0
        %v5456 = vadd.f32 %v5407, %v5455
        %v5457 = vpop.f32.mrf.mxu0
        %v5458 = vadd.f32 %v5409, %v5457
        %5459 = vmatmul.bf16.gmra.mxu0 %v3996
        %v5460 = vpop.f32.mrf.mxu0
        %v5461 = vadd.f32 %v5412, %v5460
        %v5462 = vpop.f32.mrf.mxu0
        %v5463 = vadd.f32 %v5414, %v5462
        %5464 = vmatmul.bf16.gmra.mxu0 %v4004
        %v5465 = vpop.f32.mrf.mxu0
        %v5466 = vadd.f32 %v5417, %v5465
        %v5467 = vpop.f32.mrf.mxu0
        %v5468 = vadd.f32 %v5419, %v5467
        %5469 = vmatmul.bf16.gmra.mxu0 %v4012
        %v5470 = vpop.f32.mrf.mxu0
        %v5471 = vadd.f32 %v5422, %v5470
        %v5472 = vpop.f32.mrf.mxu0
        %v5473 = vadd.f32 %v5424, %v5472
        %5474 = vdwg.mxu0
        %5475 = vmatpush.bf16.msra.mxu0 %v4644
        %5476 = vmatpush.bf16.msra.mxu0 %v4642
        %5477 = vmatpush.bf16.msra.mxu0 %v4640
        %5478 = vmatpush.bf16.msra.mxu0 %v4638
        %5479 = vmatpush.bf16.msra.mxu0 %v4636
        %5480 = vmatpush.bf16.msra.mxu0 %v4634
        %5481 = vmatpush.bf16.msra.mxu0 %v4632
        %5482 = vmatpush.bf16.msra.mxu0 %v4630
        %5483 = vmatmul.bf16.gmra.mxu0 %v3957
        %v5484 = vpop.f32.mrf.mxu0
        %v5485 = vadd.f32 %v5436, %v5484
        %v5486 = vpop.f32.mrf.mxu0
        %v5487 = vadd.f32 %v5438, %v5486
        %5488 = vmatmul.bf16.gmra.mxu0 %v3965
        %v5489 = vpop.f32.mrf.mxu0
        %v5490 = vadd.f32 %v5441, %v5489
        %v5491 = vpop.f32.mrf.mxu0
        %v5492 = vadd.f32 %v5443, %v5491
        %5493 = vmatmul.bf16.gmra.mxu0 %v3973
        %v5494 = vpop.f32.mrf.mxu0
        %v5495 = vadd.f32 %v5446, %v5494
        %v5496 = vpop.f32.mrf.mxu0
        %v5497 = vadd.f32 %v5448, %v5496
        %5498 = vmatmul.bf16.gmra.mxu0 %v3981
        %v5499 = vpop.f32.mrf.mxu0
        %v5500 = vadd.f32 %v5451, %v5499
        %v5501 = vpop.f32.mrf.mxu0
        %v5502 = vadd.f32 %v5453, %v5501
        %5503 = vmatmul.bf16.gmra.mxu0 %v3989
        %v5504 = vpop.f32.mrf.mxu0
        %v5505 = vadd.f32 %v5456, %v5504
        %v5506 = vpop.f32.mrf.mxu0
        %v5507 = vadd.f32 %v5458, %v5506
        %5508 = vmatmul.bf16.gmra.mxu0 %v3997
        %v5509 = vpop.f32.mrf.mxu0
        %v5510 = vadd.f32 %v5461, %v5509
        %v5511 = vpop.f32.mrf.mxu0
        %v5512 = vadd.f32 %v5463, %v5511
        %5513 = vmatmul.bf16.gmra.mxu0 %v4005
        %v5514 = vpop.f32.mrf.mxu0
        %v5515 = vadd.f32 %v5466, %v5514
        %v5516 = vpop.f32.mrf.mxu0
        %v5517 = vadd.f32 %v5468, %v5516
        %5518 = vmatmul.bf16.gmra.mxu0 %v4013
        %v5519 = vpop.f32.mrf.mxu0
        %v5520 = vadd.f32 %v5471, %v5519
        %v5521 = vpop.f32.mrf.mxu0
        %v5522 = vadd.f32 %v5473, %v5521
        %5523 = vdwg.mxu0
        %5524 = vmatpush.bf16.msra.mxu0 %v4660
        %5525 = vmatpush.bf16.msra.mxu0 %v4658
        %5526 = vmatpush.bf16.msra.mxu0 %v4656
        %5527 = vmatpush.bf16.msra.mxu0 %v4654
        %5528 = vmatpush.bf16.msra.mxu0 %v4652
        %5529 = vmatpush.bf16.msra.mxu0 %v4650
        %5530 = vmatpush.bf16.msra.mxu0 %v4648
        %5531 = vmatpush.bf16.msra.mxu0 %v4646
        %5532 = vmatmul.bf16.gmra.mxu0 %v3958
        %v5533 = vpop.f32.mrf.mxu0
        %v5534 = vadd.f32 %v5485, %v5533
        %v5535 = vpop.f32.mrf.mxu0
        %v5536 = vadd.f32 %v5487, %v5535
        %5537 = vmatmul.bf16.gmra.mxu0 %v3966
        %v5538 = vpop.f32.mrf.mxu0
        %v5539 = vadd.f32 %v5490, %v5538
        %v5540 = vpop.f32.mrf.mxu0
        %v5541 = vadd.f32 %v5492, %v5540
        %5542 = vmatmul.bf16.gmra.mxu0 %v3974
        %v5543 = vpop.f32.mrf.mxu0
        %v5544 = vadd.f32 %v5495, %v5543
        %v5545 = vpop.f32.mrf.mxu0
        %v5546 = vadd.f32 %v5497, %v5545
        %5547 = vmatmul.bf16.gmra.mxu0 %v3982
        %v5548 = vpop.f32.mrf.mxu0
        %v5549 = vadd.f32 %v5500, %v5548
        %v5550 = vpop.f32.mrf.mxu0
        %v5551 = vadd.f32 %v5502, %v5550
        %5552 = vmatmul.bf16.gmra.mxu0 %v3990
        %v5553 = vpop.f32.mrf.mxu0
        %v5554 = vadd.f32 %v5505, %v5553
        %v5555 = vpop.f32.mrf.mxu0
        %v5556 = vadd.f32 %v5507, %v5555
        %5557 = vmatmul.bf16.gmra.mxu0 %v3998
        %v5558 = vpop.f32.mrf.mxu0
        %v5559 = vadd.f32 %v5510, %v5558
        %v5560 = vpop.f32.mrf.mxu0
        %v5561 = vadd.f32 %v5512, %v5560
        %5562 = vmatmul.bf16.gmra.mxu0 %v4006
        %v5563 = vpop.f32.mrf.mxu0
        %v5564 = vadd.f32 %v5515, %v5563
        %v5565 = vpop.f32.mrf.mxu0
        %v5566 = vadd.f32 %v5517, %v5565
        %5567 = vmatmul.bf16.gmra.mxu0 %v4014
        %v5568 = vpop.f32.mrf.mxu0
        %v5569 = vadd.f32 %v5520, %v5568
        %v5570 = vpop.f32.mrf.mxu0
        %v5571 = vadd.f32 %v5522, %v5570
        %5572 = vdwg.mxu0
        %v5573 = vmul.f32 %v5142, 0.2
        %v5574 = vmul.f32 %v5534, 0.2
        %v5575 = vmul.f32 %v5144, 0.2
        %v5576 = vmul.f32 %v5536, 0.2
        %v5577 = vmul.f32 %v5147, 0.2
        %v5578 = vmul.f32 %v5539, 0.2
        %v5579 = vmul.f32 %v5149, 0.2
        %v5580 = vmul.f32 %v5541, 0.2
        %v5581 = vmul.f32 %v5152, 0.2
        %v5582 = vmul.f32 %v5544, 0.2
        %v5583 = vmul.f32 %v5154, 0.2
        %v5584 = vmul.f32 %v5546, 0.2
        %v5585 = vmul.f32 %v5157, 0.2
        %v5586 = vmul.f32 %v5549, 0.2
        %v5587 = vmul.f32 %v5159, 0.2
        %v5588 = vmul.f32 %v5551, 0.2
        %v5589 = vmul.f32 %v5162, 0.2
        %v5590 = vmul.f32 %v5554, 0.2
        %v5591 = vmul.f32 %v5164, 0.2
        %v5592 = vmul.f32 %v5556, 0.2
        %v5593 = vmul.f32 %v5167, 0.2
        %v5594 = vmul.f32 %v5559, 0.2
        %v5595 = vmul.f32 %v5169, 0.2
        %v5596 = vmul.f32 %v5561, 0.2
        %v5597 = vmul.f32 %v5172, 0.2
        %v5598 = vmul.f32 %v5564, 0.2
        %v5599 = vmul.f32 %v5174, 0.2
        %v5600 = vmul.f32 %v5566, 0.2
        %v5601 = vmul.f32 %v5177, 0.2
        %v5602 = vmul.f32 %v5569, 0.2
        %v5603 = vmul.f32 %v5179, 0.2
        %v5604 = vmul.f32 %v5571, 0.2
        %v5605 = vmax.f32 %v5142, %v5573
        %v5606 = vmax.f32 %v5534, %v5574
        %v5607 = vmax.f32 %v5144, %v5575
        %v5608 = vmax.f32 %v5536, %v5576
        %v5609 = vmax.f32 %v5147, %v5577
        %v5610 = vmax.f32 %v5539, %v5578
        %v5611 = vmax.f32 %v5149, %v5579
        %v5612 = vmax.f32 %v5541, %v5580
        %v5613 = vmax.f32 %v5152, %v5581
        %v5614 = vmax.f32 %v5544, %v5582
        %v5615 = vmax.f32 %v5154, %v5583
        %v5616 = vmax.f32 %v5546, %v5584
        %v5617 = vmax.f32 %v5157, %v5585
        %v5618 = vmax.f32 %v5549, %v5586
        %v5619 = vmax.f32 %v5159, %v5587
        %v5620 = vmax.f32 %v5551, %v5588
        %v5621 = vmax.f32 %v5162, %v5589
        %v5622 = vmax.f32 %v5554, %v5590
        %v5623 = vmax.f32 %v5164, %v5591
        %v5624 = vmax.f32 %v5556, %v5592
        %v5625 = vmax.f32 %v5167, %v5593
        %v5626 = vmax.f32 %v5559, %v5594
        %v5627 = vmax.f32 %v5169, %v5595
        %v5628 = vmax.f32 %v5561, %v5596
        %v5629 = vmax.f32 %v5172, %v5597
        %v5630 = vmax.f32 %v5564, %v5598
        %v5631 = vmax.f32 %v5174, %v5599
        %v5632 = vmax.f32 %v5566, %v5600
        %v5633 = vmax.f32 %v5177, %v5601
        %v5634 = vmax.f32 %v5569, %v5602
        %v5635 = vmax.f32 %v5179, %v5603
        %v5636 = vmax.f32 %v5571, %v5604
        %v5637 = vpack.c.bf16 %v5607, %v5605
        %v5638 = vpack.c.bf16 %v5608, %v5606
        %v5639 = vpack.c.bf16 %v5611, %v5609
        %v5640 = vpack.c.bf16 %v5612, %v5610
        %v5641 = vpack.c.bf16 %v5615, %v5613
        %v5642 = vpack.c.bf16 %v5616, %v5614
        %v5643 = vpack.c.bf16 %v5619, %v5617
        %v5644 = vpack.c.bf16 %v5620, %v5618
        %v5645 = vpack.c.bf16 %v5623, %v5621
        %v5646 = vpack.c.bf16 %v5624, %v5622
        %v5647 = vpack.c.bf16 %v5627, %v5625
        %v5648 = vpack.c.bf16 %v5628, %v5626
        %v5649 = vpack.c.bf16 %v5631, %v5629
        %v5650 = vpack.c.bf16 %v5632, %v5630
        %v5651 = vpack.c.bf16 %v5635, %v5633
        %v5652 = vpack.c.bf16 %v5636, %v5634
        %v5653 = vld [vmem:[%s5] sm:$0xf]
        %v5654 = vld [vmem:[%s5 + $0x4] sm:$0xf]
        %v5655 = vld [vmem:[%s5 + $0x8] sm:$0xf]
        %v5656 = vld [vmem:[%s5 + $0xc] sm:$0xf]
        %v5657 = vld [vmem:[%s5 + $0x10] sm:$0xf]
        %v5658 = vld [vmem:[%s5 + $0x14] sm:$0xf]
        %v5659 = vld [vmem:[%s5 + $0x18] sm:$0xf]
        %v5660 = vld [vmem:[%s5 + $0x1c] sm:$0xf]
        %v5661 = vld [vmem:[%s5 + $0x20] sm:$0xf]
        %v5662 = vld [vmem:[%s5 + $0x24] sm:$0xf]
        %v5663 = vld [vmem:[%s5 + $0x28] sm:$0xf]
        %v5664 = vld [vmem:[%s5 + $0x2c] sm:$0xf]
        %v5665 = vld [vmem:[%s5 + $0x30] sm:$0xf]
        %v5666 = vld [vmem:[%s5 + $0x34] sm:$0xf]
        %v5667 = vld [vmem:[%s5 + $0x38] sm:$0xf]
        %v5668 = vld [vmem:[%s5 + $0x3c] sm:$0xf]
        %v5669 = vld [vmem:[%s5 + $0x40] sm:$0xf]
        %v5670 = vld [vmem:[%s5 + $0x44] sm:$0xf]
        %v5671 = vld [vmem:[%s5 + $0x48] sm:$0xf]
        %v5672 = vld [vmem:[%s5 + $0x4c] sm:$0xf]
        %v5673 = vld [vmem:[%s5 + $0x50] sm:$0xf]
        %v5674 = vld [vmem:[%s5 + $0x54] sm:$0xf]
        %v5675 = vld [vmem:[%s5 + $0x58] sm:$0xf]
        %v5676 = vld [vmem:[%s5 + $0x5c] sm:$0xf]
        %v5677 = vld [vmem:[%s5 + $0x60] sm:$0xf]
        %v5678 = vld [vmem:[%s5 + $0x64] sm:$0xf]
        %v5679 = vld [vmem:[%s5 + $0x68] sm:$0xf]
        %v5680 = vld [vmem:[%s5 + $0x6c] sm:$0xf]
        %v5681 = vld [vmem:[%s5 + $0x70] sm:$0xf]
        %v5682 = vld [vmem:[%s5 + $0x74] sm:$0xf]
        %v5683 = vld [vmem:[%s5 + $0x78] sm:$0xf]
        %v5684 = vld [vmem:[%s5 + $0x7c] sm:$0xf]
        %v5685 = vld [vmem:[%s6] sm:$0x1]
        %v5687 = vperm.slane %v5685, 0
        %v5721 = vunpack.c.l.b16 %v5653
        %v5722 = vunpack.c.l.b16 %v5654
        %v5723 = vunpack.c.l.b16 %v5655
        %v5724 = vunpack.c.l.b16 %v5656
        %v5725 = vunpack.c.l.b16 %v5657
        %v5726 = vunpack.c.l.b16 %v5658
        %v5727 = vunpack.c.l.b16 %v5659
        %v5728 = vunpack.c.l.b16 %v5660
        %v5729 = vunpack.c.l.b16 %v5661
        %v5730 = vunpack.c.l.b16 %v5662
        %v5731 = vunpack.c.l.b16 %v5663
        %v5732 = vunpack.c.l.b16 %v5664
        %v5733 = vunpack.c.l.b16 %v5665
        %v5734 = vunpack.c.l.b16 %v5666
        %v5735 = vunpack.c.l.b16 %v5667
        %v5736 = vunpack.c.l.b16 %v5668
        %v5737 = vunpack.c.l.b16 %v5669
        %v5738 = vunpack.c.l.b16 %v5670
        %v5739 = vunpack.c.l.b16 %v5671
        %v5740 = vunpack.c.l.b16 %v5672
        %v5741 = vunpack.c.l.b16 %v5673
        %v5742 = vunpack.c.l.b16 %v5674
        %v5743 = vunpack.c.l.b16 %v5675
        %v5744 = vunpack.c.l.b16 %v5676
        %v5745 = vunpack.c.l.b16 %v5677
        %v5746 = vunpack.c.l.b16 %v5678
        %v5747 = vunpack.c.l.b16 %v5679
        %v5748 = vunpack.c.l.b16 %v5680
        %v5749 = vunpack.c.l.b16 %v5681
        %v5750 = vunpack.c.l.b16 %v5682
        %v5751 = vunpack.c.l.b16 %v5683
        %v5752 = vunpack.c.l.b16 %v5684
        %v5753 = vpack.c.b16 %v5722, %v5721
        %v5754 = vpack.c.b16 %v5724, %v5723
        %v5755 = vpack.c.b16 %v5726, %v5725
        %v5756 = vpack.c.b16 %v5728, %v5727
        %v5757 = vpack.c.b16 %v5730, %v5729
        %v5758 = vpack.c.b16 %v5732, %v5731
        %v5759 = vpack.c.b16 %v5734, %v5733
        %v5760 = vpack.c.b16 %v5736, %v5735
        %v5761 = vpack.c.b16 %v5738, %v5737
        %v5762 = vpack.c.b16 %v5740, %v5739
        %v5763 = vpack.c.b16 %v5742, %v5741
        %v5764 = vpack.c.b16 %v5744, %v5743
        %v5765 = vpack.c.b16 %v5746, %v5745
        %v5766 = vpack.c.b16 %v5748, %v5747
        %v5767 = vpack.c.b16 %v5750, %v5749
        %v5768 = vpack.c.b16 %v5752, %v5751
        %5785 = vmatpush.bf16.msra.mxu0 %v5760
        %5786 = vmatpush.bf16.msra.mxu0 %v5759
        %5787 = vmatpush.bf16.msra.mxu0 %v5758
        %5788 = vmatpush.bf16.msra.mxu0 %v5757
        %5789 = vmatpush.bf16.msra.mxu0 %v5756
        %5790 = vmatpush.bf16.msra.mxu0 %v5755
        %5791 = vmatpush.bf16.msra.mxu0 %v5754
        %5792 = vmatpush.bf16.msra.mxu0 %v5753
        %5793 = vmatmul.bf16.gmra.mxu0 %v5637
        %v5794 = vpop.f32.mrf.mxu0
        %v5795 = vadd.f32 %v5687, %v5794
        %v5796 = vpop.f32.mrf.mxu0
        %v5797 = vadd.f32 %v5687, %v5796
        %5798 = vmatmul.bf16.gmra.mxu0 %v5639
        %v5799 = vpop.f32.mrf.mxu0
        %v5800 = vadd.f32 %v5687, %v5799
        %v5801 = vpop.f32.mrf.mxu0
        %v5802 = vadd.f32 %v5687, %v5801
        %5803 = vmatmul.bf16.gmra.mxu0 %v5641
        %v5804 = vpop.f32.mrf.mxu0
        %v5805 = vadd.f32 %v5687, %v5804
        %v5806 = vpop.f32.mrf.mxu0
        %v5807 = vadd.f32 %v5687, %v5806
        %5808 = vmatmul.bf16.gmra.mxu0 %v5643
        %v5809 = vpop.f32.mrf.mxu0
        %v5810 = vadd.f32 %v5687, %v5809
        %v5811 = vpop.f32.mrf.mxu0
        %v5812 = vadd.f32 %v5687, %v5811
        %5813 = vmatmul.bf16.gmra.mxu0 %v5645
        %v5814 = vpop.f32.mrf.mxu0
        %v5815 = vadd.f32 %v5687, %v5814
        %v5816 = vpop.f32.mrf.mxu0
        %v5817 = vadd.f32 %v5687, %v5816
        %5818 = vmatmul.bf16.gmra.mxu0 %v5647
        %v5819 = vpop.f32.mrf.mxu0
        %v5820 = vadd.f32 %v5687, %v5819
        %v5821 = vpop.f32.mrf.mxu0
        %v5822 = vadd.f32 %v5687, %v5821
        %5823 = vmatmul.bf16.gmra.mxu0 %v5649
        %v5824 = vpop.f32.mrf.mxu0
        %v5825 = vadd.f32 %v5687, %v5824
        %v5826 = vpop.f32.mrf.mxu0
        %v5827 = vadd.f32 %v5687, %v5826
        %5828 = vmatmul.bf16.gmra.mxu0 %v5651
        %v5829 = vpop.f32.mrf.mxu0
        %v5830 = vadd.f32 %v5687, %v5829
        %v5831 = vpop.f32.mrf.mxu0
        %v5832 = vadd.f32 %v5687, %v5831
        %5833 = vdwg.mxu0
        %5834 = vmatpush.bf16.msra.mxu0 %v5768
        %5835 = vmatpush.bf16.msra.mxu0 %v5767
        %5836 = vmatpush.bf16.msra.mxu0 %v5766
        %5837 = vmatpush.bf16.msra.mxu0 %v5765
        %5838 = vmatpush.bf16.msra.mxu0 %v5764
        %5839 = vmatpush.bf16.msra.mxu0 %v5763
        %5840 = vmatpush.bf16.msra.mxu0 %v5762
        %5841 = vmatpush.bf16.msra.mxu0 %v5761
        %5842 = vmatmul.bf16.gmra.mxu0 %v5638
        %v5843 = vpop.f32.mrf.mxu0
        %v5844 = vadd.f32 %v5795, %v5843
        %v5845 = vpop.f32.mrf.mxu0
        %v5846 = vadd.f32 %v5797, %v5845
        %5847 = vmatmul.bf16.gmra.mxu0 %v5640
        %v5848 = vpop.f32.mrf.mxu0
        %v5849 = vadd.f32 %v5800, %v5848
        %v5850 = vpop.f32.mrf.mxu0
        %v5851 = vadd.f32 %v5802, %v5850
        %5852 = vmatmul.bf16.gmra.mxu0 %v5642
        %v5853 = vpop.f32.mrf.mxu0
        %v5854 = vadd.f32 %v5805, %v5853
        %v5855 = vpop.f32.mrf.mxu0
        %v5856 = vadd.f32 %v5807, %v5855
        %5857 = vmatmul.bf16.gmra.mxu0 %v5644
        %v5858 = vpop.f32.mrf.mxu0
        %v5859 = vadd.f32 %v5810, %v5858
        %v5860 = vpop.f32.mrf.mxu0
        %v5861 = vadd.f32 %v5812, %v5860
        %5862 = vmatmul.bf16.gmra.mxu0 %v5646
        %v5863 = vpop.f32.mrf.mxu0
        %v5864 = vadd.f32 %v5815, %v5863
        %v5865 = vpop.f32.mrf.mxu0
        %v5866 = vadd.f32 %v5817, %v5865
        %5867 = vmatmul.bf16.gmra.mxu0 %v5648
        %v5868 = vpop.f32.mrf.mxu0
        %v5869 = vadd.f32 %v5820, %v5868
        %v5870 = vpop.f32.mrf.mxu0
        %v5871 = vadd.f32 %v5822, %v5870
        %5872 = vmatmul.bf16.gmra.mxu0 %v5650
        %v5873 = vpop.f32.mrf.mxu0
        %v5874 = vadd.f32 %v5825, %v5873
        %v5875 = vpop.f32.mrf.mxu0
        %v5876 = vadd.f32 %v5827, %v5875
        %5877 = vmatmul.bf16.gmra.mxu0 %v5652
        %v5878 = vpop.f32.mrf.mxu0
        %v5879 = vadd.f32 %v5830, %v5878
        %v5880 = vpop.f32.mrf.mxu0
        %v5881 = vadd.f32 %v5832, %v5880
        %5882 = vdwg.mxu0
        %v5883 = vmul.f32 %v5844, 0.2
        %v5884 = vmul.f32 %v5846, 0.2
        %v5885 = vmul.f32 %v5849, 0.2
        %v5886 = vmul.f32 %v5851, 0.2
        %v5887 = vmul.f32 %v5854, 0.2
        %v5888 = vmul.f32 %v5856, 0.2
        %v5889 = vmul.f32 %v5859, 0.2
        %v5890 = vmul.f32 %v5861, 0.2
        %v5891 = vmul.f32 %v5864, 0.2
        %v5892 = vmul.f32 %v5866, 0.2
        %v5893 = vmul.f32 %v5869, 0.2
        %v5894 = vmul.f32 %v5871, 0.2
        %v5895 = vmul.f32 %v5874, 0.2
        %v5896 = vmul.f32 %v5876, 0.2
        %v5897 = vmul.f32 %v5879, 0.2
        %v5898 = vmul.f32 %v5881, 0.2
        %v5899 = vmax.f32 %v5844, %v5883
        %v5900 = vmax.f32 %v5846, %v5884
        %v5901 = vmax.f32 %v5849, %v5885
        %v5902 = vmax.f32 %v5851, %v5886
        %v5903 = vmax.f32 %v5854, %v5887
        %v5904 = vmax.f32 %v5856, %v5888
        %v5905 = vmax.f32 %v5859, %v5889
        %v5906 = vmax.f32 %v5861, %v5890
        %v5907 = vmax.f32 %v5864, %v5891
        %v5908 = vmax.f32 %v5866, %v5892
        %v5909 = vmax.f32 %v5869, %v5893
        %v5910 = vmax.f32 %v5871, %v5894
        %v5911 = vmax.f32 %v5874, %v5895
        %v5912 = vmax.f32 %v5876, %v5896
        %v5913 = vmax.f32 %v5879, %v5897
        %v5914 = vmax.f32 %v5881, %v5898
        %v5915 = vld [vmem:[%s7] sm:$0xf]
        %v5916 = vld [vmem:[%s7 + $0x4] sm:$0xf]
        %v5917 = vpack.c.bf16 %v5900, %v5899
        %v5918 = vpack.c.bf16 %v5902, %v5901
        %v5919 = vpack.c.bf16 %v5904, %v5903
        %v5920 = vpack.c.bf16 %v5906, %v5905
        %v5921 = vpack.c.bf16 %v5908, %v5907
        %v5922 = vpack.c.bf16 %v5910, %v5909
        %v5923 = vpack.c.bf16 %v5912, %v5911
        %v5924 = vpack.c.bf16 %v5914, %v5913
        %v5925 = vld [vmem:[%s8] sm:$0xff]
        %v5926 = vld [vmem:[%s8 + $0x8] sm:$0xff]
        %5928 = vset.pattern.permute.xlu0 0
        %5929 = vperm.xlu0 %5928, %v5925
        %v5930 = vpop.permute.xlu0 %5929
        %5933 = vset.pattern.permute.xlu0 0
        %5934 = vperm.xlu0 %5933, %v5926
        %v5935 = vpop.permute.xlu0 %5934
        %v5939 = vunpack.c.l.b16 %v5915
        %v5940 = vunpack.c.l.b16 %v5916
        %v5941 = vpack.c.b16 %v5940, %v5939
        %vm5942 = vcmask 523264
        %v5944 = vsel %vm5942, %v5941, 0
        %v5947 = vsel %vm5942, %v5917, 0
        %v5950 = vsel %vm5942, %v5918, 0
        %v5953 = vsel %vm5942, %v5919, 0
        %v5956 = vsel %vm5942, %v5920, 0
        %v5959 = vsel %vm5942, %v5921, 0
        %v5962 = vsel %vm5942, %v5922, 0
        %v5965 = vsel %vm5942, %v5923, 0
        %v5968 = vsel %vm5942, %v5924, 0
        %5970 = vmatpush.bf16.xpose.msra.mxu0 %v5968
        %5971 = vmatpush.bf16.xpose.msra.mxu0 %v5965
        %5972 = vmatpush.bf16.xpose.msra.mxu0 %v5962
        %5973 = vmatpush.bf16.xpose.msra.mxu0 %v5959
        %5974 = vmatpush.bf16.xpose.msra.mxu0 %v5956
        %5975 = vmatpush.bf16.xpose.msra.mxu0 %v5953
        %5976 = vmatpush.bf16.xpose.msra.mxu0 %v5950
        %5977 = vmatpush.bf16.xpose.msra.mxu0 %v5947
        %5978 = vmatmul.bf16.gmra.mxu0 %v5944
        %v5979 = vpop.f32.mrf.mxu0
        %v5980 = vadd.f32 %v5930, %v5979
        %v5981 = vpop.f32.mrf.mxu0
        %v5982 = vadd.f32 %v5935, %v5981
        %5983 = vdwg.mxu0
        %5984 = vst [vmem:[%s365] sm:$0xff] %v5980
        %5985 = vst [vmem:[%s365 + $0x8] sm:$0xff] %v5982
        %s5986 = sand.u32 %s246, 1
        %s5987 = scalar_lea.sflag [#allocation3], %s5986
        %s5988 = sand.u32 %s246, 1
        %s5989 = smul.addr %s5988, 16
        %s5990 = scalar_lea.vmem [#allocation2], %s5989
        // Predicated region
        $region57: #{weight_binding_net_forward.15} parent=55 // pred_check
          %p5991 = pneg %p256
        $region58: #{weight_binding_net_forward.15} parent=55 // pred_check_branch
          %5993 = sbr.rel (%p5991) target = $region60
        $region59: #{weight_binding_net_forward.15} parent=55 // pred_region
          %5995 = vsyncadd %s5987, 0
          %s5996 = smul.addr %s27, 2
          %s5997 = sadd.s32 %s28, %s5996
          %s5998 = smul.addr %s5997, 8
          %s5999 = scalar_lea.hbm %s9, %s5998
          %s6000 = sshll.u32 %s5990, 4
          %s6001 = int_to_ptr.vmem [resolvable:$true] %s6000
          %s6002 = sshll.u32 %s5999, 4
          %s6003 = int_to_ptr.hbm [resolvable:$true] %s6002
          %6008 = dma.vmem_to_hbm [thread:$0]  %s6001, 256, %s6003, %s5987, 128, 128, 8
        $region60: #{weight_binding_net_forward.15} parent=55 // pred_fallthru
          _
      $region56: #{weight_binding_net_forward.15} parent=5 // pred_fallthru
        _
      %p6009 = scmp.le.s32.totalorder 2, %s18
      // Predicated region
      $region61: #{weight_binding_net_forward.15} parent=5 // pred_check
        %p6010 = pneg %p6009
      $region62: #{weight_binding_net_forward.15} parent=5 // pred_check_branch
        %6012 = sbr.rel (%p6010) target = $region64
      $region63: #{weight_binding_net_forward.15} parent=5 // pred_region
        %s6013 = ssub.s32 %s18, 2
        // Predicated region
        $region65: #{weight_binding_net_forward.15} parent=63 // pred_check
          %p6014 = pneg %p262
        $region66: #{weight_binding_net_forward.15} parent=63 // pred_check_branch
          %6016 = sbr.rel (%p6014) target = $region68
        $region67: #{weight_binding_net_forward.15} parent=63 // pred_region
          %s6017 = sand.u32 %s247, 1
          %s6018 = scalar_lea.sflag [#allocation3], %s6017
          %s6019 = sand.u32 %s247, 1
          %s6020 = smul.addr %s6019, 16
          %s6021 = scalar_lea.vmem [#allocation2], %s6020
          %6023 = dma.done %s6018, 256
        $region68: #{weight_binding_net_forward.15} parent=63 // pred_fallthru
          _
      $region64: #{weight_binding_net_forward.15} parent=5 // pred_fallthru
        _
    $region6: #{weight_binding_net_forward.15} parent=1 // loop_footer
      %s22 = sadd.s32 1, %s18
    $region7: #{weight_binding_net_forward.15} parent=1 // loop_footer_branch
      %17 = sbr.rel target = $region3
    $region8: #{weight_binding_net_forward.15} parent=1 // loop_exit
      _
    %6024 = vsyncpa [#allocation3], 1
    %s6025 = scalar_lea.sflag [#allocation3], 1
    %6026 = vsyncpa %s6025, 1

</llo_original>
